<compile_context>
chip_gen: v7x
topology: tpu7x:2x2x1
jax: 0.10.0
libtpu: 0.0.40
codegen_flags: <defaults>
</compile_context>

<pallas_src>
import functools
import math

import jax
import jax.numpy as jnp
import numpy as np
from jax import lax
from jax.experimental import pallas as pl
from jax.experimental.pallas import tpu as pltpu

LN_EPS = 1e-5
NEG_INF = -1e30
COMPUTE_DTYPE = jnp.bfloat16   # MXU operand dtype (accumulation stays f32)


def _layernorm(x, w, b):
    mu = jnp.mean(x, axis=-1, keepdims=True)
    var = jnp.mean((x - mu) ** 2, axis=-1, keepdims=True)
    return (x - mu) * lax.rsqrt(var + LN_EPS) * w + b


def _gelu_tanh(x):
    c = math.sqrt(2.0 / math.pi)
    return 0.5 * x * (1.0 + jnp.tanh(c * (x + 0.044715 * x * x * x)))


def block_kernel(x_ref,
                 ln1_w_ref, ln1_b_ref,
                 w_attn_ref, b_attn_ref,
                 w_aproj_ref, b_aproj_ref,
                 ln2_w_ref, ln2_b_ref,
                 w_fc_ref, b_fc_ref,
                 w_mproj_ref, b_mproj_ref,
                 out_ref,
                 qkv_scr, y_scr,
                 *, n_head, b_tile, kv_tile, mlp_row_tile):
    rows, C = x_ref.shape                      # (b_tile*T, C)  (leading batch-group dim squeezed)
    T = rows // b_tile
    hd = C // n_head
    n_kv = T // kv_tile
    n_mlp = rows // mlp_row_tile

    # ---------------- ln_1 (f32 on VPU) + QKV projection ----------------
    # One GEMM per q/k/v third: the transient f32 result is (rows, C), never (rows, 3C),
    # and no bf16 duplicate of a full f32 qkv slab is live.  The 1/sqrt(hd) scale was
    # folded into the q columns of w_attn / b_attn by the wrapper.
    x = x_ref[...].astype(jnp.float32)
    xn_c = _layernorm(x, ln1_w_ref[...], ln1_b_ref[...]).astype(COMPUTE_DTYPE)
    for lo in (0, C, 2 * C):                                   # static lane offsets
        third = jnp.dot(xn_c, w_attn_ref[:, lo:lo + C],
                        preferred_element_type=jnp.float32) + b_attn_ref[:, lo:lo + C]
        qkv_scr[:, lo:lo + C] = third.astype(COMPUTE_DTYPE)

    # ---------------- causal self-attention: kv-tiled online softmax ----------------
    row_idx = lax.broadcasted_iota(jnp.int32, (T, kv_tile), 0)   # hoisted out of all loops

    @pl.loop(0, b_tile)
    def _(bi):
        r0 = pl.multiple_of(bi * T, T)
        # Heads statically unrolled: head slices are static lane offsets (zero-cost ref
        # views); the kv fori_loop below bounds the big per-head intermediates.
        for h in range(n_head):
            c_lo = h * hd
            q_h = qkv_scr[pl.ds(r0, T), c_lo:c_lo + hd]          # (T, hd) bf16, pre-scaled

            def kv_step(j, carry):
                m_p, l_p, acc_p = carry
                c0 = pl.multiple_of(j * kv_tile, kv_tile)
                k_j = qkv_scr[pl.ds(r0 + c0, kv_tile), C + c_lo:C + c_lo + hd]
                v_j = qkv_scr[pl.ds(r0 + c0, kv_tile), 2 * C + c_lo:2 * C + c_lo + hd]
                s = lax.dot_general(q_h, k_j, (((1,), (1,)), ((), ())),
                                    preferred_element_type=jnp.float32)   # (T, kv_tile)
                col_idx = c0 + lax.broadcasted_iota(jnp.int32, (T, kv_tile), 1)
                s = jnp.where(col_idx <= row_idx, s, NEG_INF)
                m_n = jnp.maximum(m_p, jnp.max(s, axis=-1, keepdims=True))
                alpha = jnp.exp(m_p - m_n)
                p = jnp.exp(s - m_n)                                      # unnormalized
                l_n = alpha * l_p + jnp.sum(p, axis=-1, keepdims=True)
                acc_n = alpha * acc_p + jnp.dot(p.astype(COMPUTE_DTYPE), v_j,
                                                preferred_element_type=jnp.float32)
                return m_n, l_n, acc_n

            m0 = jnp.full((T, 1), NEG_INF, jnp.float32)
            l0 = jnp.zeros((T, 1), jnp.float32)
            a0 = jnp.zeros((T, hd), jnp.float32)
            _m, l_f, acc_f = lax.fori_loop(0, n_kv, kv_step, (m0, l0, a0))
            # deferred normalization: scale the (T, hd) PV result instead of (T, T) probs
            inv = pl.reciprocal(l_f, approx=True)
            y_scr[pl.ds(r0, T), c_lo:c_lo + hd] = (acc_f * inv).astype(COMPUTE_DTYPE)

    # ------- attn c_proj + residual-1 + ln_2 + MLP + residual-2, row-chunked -------
    # Full-depth (chunk, C) @ (C, C) output projection (MXU K = C) and a bounded
    # (chunk, 4C) f32 MLP intermediate.
    @pl.loop(0, n_mlp)
    def _(i):
        r0 = pl.multiple_of(i * mlp_row_tile, mlp_row_tile)
        xc = x_ref[pl.ds(r0, mlp_row_tile), :].astype(jnp.float32)
        yc = y_scr[pl.ds(r0, mlp_row_tile), :]
        x1 = xc + jnp.dot(yc, w_aproj_ref[...],
                          preferred_element_type=jnp.float32) + b_aproj_ref[...]
        x2n = _layernorm(x1, ln2_w_ref[...], ln2_b_ref[...]).astype(COMPUTE_DTYPE)
        h1 = jnp.dot(x2n, w_fc_ref[...],
                     preferred_element_type=jnp.float32) + b_fc_ref[...]
        h1 = _gelu_tanh(h1).astype(COMPUTE_DTYPE)
        h2 = jnp.dot(h1, w_mproj_ref[...],
                     preferred_element_type=jnp.float32) + b_mproj_ref[...]
        out_ref[pl.ds(r0, mlp_row_tile), :] = (x1 + h2).astype(out_ref.dtype)


def _derive_vmem_limit_bytes():
    cap = None
    try:
        cap = getattr(pltpu.get_tpu_info(), "vmem_capacity_bytes", None)
    except Exception:
        cap = None
    if not cap:
        cap = 128 * 1024 * 1024
    # leave headroom for compiler-internal scratch / IO buffers; cap at ~110 MiB
    return int(max(32 * 1024 * 1024, min(int(cap * 0.82), 110 * 1024 * 1024)))


def _pick_b_tile(B, T, max_rows=512):
    # Cap the packed row slab (v7x VMEM guidance; 512 rows still fills the MXU M dim) and
    # keep n_tiles >= 2 so the "parallel" grid axis shards across both v7x TensorCores.
    cap = max(1, min(B, max_rows // max(T, 1)))
    if B >= 2:
        cap = max(1, min(cap, B // 2))
    for d in range(cap, 0, -1):
        if B % d == 0:
            return d
    return 1


def gpt2_block(x, params, n_head, *, b_tile=None, kv_tile=None, mlp_row_tile=None):
    B, T, C = x.shape
    assert C % n_head == 0
    hd = C // n_head
    assert T % 16 == 0, "sequence length must be a multiple of 16 (bf16 sublane tiling)"
    assert C % 128 == 0, "n_embed must be a multiple of 128 (lane tiling)"

    if b_tile is None:
        b_tile = _pick_b_tile(B, T)
    assert B % b_tile == 0
    rows = b_tile * T
    n_tiles = B // b_tile

    if kv_tile is None:
        kv_tile = min(T, 512)
    assert T % kv_tile == 0 and kv_tile % 16 == 0

    if mlp_row_tile is None:
        mlp_row_tile = 256 if (rows > 256 and rows % 256 == 0) else rows
    assert rows % mlp_row_tile == 0 and mlp_row_tile % 8 == 0

    cd = COMPUTE_DTYPE
    f32 = jnp.float32

    # fold the 1/sqrt(hd) attention scale into the q columns of c_attn (zero kernel cost)
    scale = 1.0 / math.sqrt(hd)
    w_attn = params["w_attn"].astype(f32).at[:, :C].multiply(scale)
    b_attn = params["b_attn"].astype(f32).at[:, :C].multiply(scale)

    weight_list = [
        params["ln1_w"].astype(f32), params["ln1_b"].astype(f32),
        w_attn.astype(cd), b_attn,
        params["w_aproj"].astype(cd), params["b_aproj"].astype(f32),
        params["ln2_w"].astype(f32), params["ln2_b"].astype(f32),
        params["w_fc"].astype(cd), params["b_fc"].astype(f32),
        params["w_mproj"].astype(cd), params["b_mproj"].astype(f32),
    ]

    kernel = functools.partial(block_kernel, n_head=n_head, b_tile=b_tile,
                               kv_tile=kv_tile, mlp_row_tile=mlp_row_tile)

    xg = x.reshape(n_tiles, rows, C)   # pack b_tile batch elements into the row dim (free)

    def build_and_run(single_buffer_weights):
        def weight_spec(a):
            nd = a.ndim
            idx = lambda g, _n=nd: (0,) * _n
            if single_buffer_weights and hasattr(pl, "Buffered"):
                try:
                    # grid-invariant weights: single-buffer to halve their VMEM footprint
                    return pl.BlockSpec(a.shape, idx, pipeline_mode=pl.Buffered(1))
                except TypeError:
                    pass
            return pl.BlockSpec(a.shape, idx)

        return pl.pallas_call(
            kernel,
            out_shape=jax.ShapeDtypeStruct((n_tiles, rows, C), x.dtype),
            grid_spec=pltpu.PrefetchScalarGridSpec(
                num_scalar_prefetch=0,
                grid=(n_tiles,),
                in_specs=[pl.BlockSpec((None, rows, C), lambda g: (g, 0, 0))]
                         + [weight_spec(w) for w in weight_list],
                out_specs=pl.BlockSpec((None, rows, C), lambda g: (g, 0, 0)),
                scratch_shapes=[pltpu.VMEM((rows, 3 * C), cd),   # qkv slab (q pre-scaled), bf16
                                pltpu.VMEM((rows, C), cd)],      # per-head attention outputs
            ),
            compiler_params=pltpu.CompilerParams(
                dimension_semantics=("parallel",),
                vmem_limit_bytes=_derive_vmem_limit_bytes(),
            ),
        )(xg, *weight_list)

    try:
        out = build_and_run(True)
    except Exception:
        # fall back to default double-buffered weights if single-buffering is unsupported
        out = build_and_run(False)
    return out.reshape(B, T, C)


# ---------------- pure-JAX f32 reference (for correctness check) ----------------
def ref_block(x, p, n_head):
    B, T, C = x.shape
    hd = C // n_head

    def ln(z, w, b):
        mu = jnp.mean(z, axis=-1, keepdims=True)
        var = jnp.mean((z - mu) ** 2, axis=-1, keepdims=True)
        return (z - mu) * lax.rsqrt(var + LN_EPS) * w[0] + b[0]

    xn = ln(x, p["ln1_w"], p["ln1_b"])
    qkv = xn @ p["w_attn"] + p["b_attn"][0]
    q, k, v = jnp.split(qkv, 3, axis=-1)
    q = q.reshape(B, T, n_head, hd).transpose(0, 2, 1, 3)
    k = k.reshape(B, T, n_head, hd).transpose(0, 2, 1, 3)
    v = v.reshape(B, T, n_head, hd).transpose(0, 2, 1, 3)
    s = jnp.einsum("bhtd,bhsd->bhts", q, k) / math.sqrt(hd)
    mask = jnp.tril(jnp.ones((T, T), dtype=bool))
    s = jnp.where(mask[None, None], s, -1e30)
    pattn = jax.nn.softmax(s, axis=-1)
    y = jnp.einsum("bhts,bhsd->bhtd", pattn, v)
    y = y.transpose(0, 2, 1, 3).reshape(B, T, C)
    y = y @ p["w_aproj"] + p["b_aproj"][0]
    x1 = x + y
    x2n = ln(x1, p["ln2_w"], p["ln2_b"])
    h = x2n @ p["w_fc"] + p["b_fc"][0]
    c = math.sqrt(2.0 / math.pi)
    h = 0.5 * h * (1.0 + jnp.tanh(c * (h + 0.044715 * h ** 3)))
    h = h @ p["w_mproj"] + p["b_mproj"][0]
    return x1 + h


if __name__ == "__main__":
    # small GPT-2-like shapes, lane/sublane aligned: batch=4, seq=32, n_embed=128, heads=4
    B, T, C, n_head = 4, 32, 128, 4

    keys = jax.random.split(jax.random.PRNGKey(0), 13)
    std = 0.02
    params = {
        "ln1_w": 1.0 + 0.1 * jax.random.normal(keys[0], (1, C), jnp.float32),
        "ln1_b": 0.1 * jax.random.normal(keys[1], (1, C), jnp.float32),
        # Linear weights stored as (in, out) == W^T of the PyTorch (out, in) layout
        "w_attn": std * jax.random.normal(keys[2], (C, 3 * C), jnp.float32),
        "b_attn": std * jax.random.normal(keys[3], (1, 3 * C), jnp.float32),
        "w_aproj": std * jax.random.normal(keys[4], (C, C), jnp.float32),
        "b_aproj": std * jax.random.normal(keys[5], (1, C), jnp.float32),
        "ln2_w": 1.0 + 0.1 * jax.random.normal(keys[6], (1, C), jnp.float32),
        "ln2_b": 0.1 * jax.random.normal(keys[7], (1, C), jnp.float32),
        "w_fc": std * jax.random.normal(keys[8], (C, 4 * C), jnp.float32),
        "b_fc": std * jax.random.normal(keys[9], (1, 4 * C), jnp.float32),
        "w_mproj": std * jax.random.normal(keys[10], (4 * C, C), jnp.float32),
        "b_mproj": std * jax.random.normal(keys[11], (1, C), jnp.float32),
    }
    x = jax.random.normal(keys[12], (B, T, C), jnp.float32)

    # kv_tile=16 / mlp_row_tile=32 exercise the flash (online-softmax) and MLP row-chunk
    # loops with >1 iteration even at these small test shapes.
    out = jax.block_until_ready(gpt2_block(x, params, n_head, kv_tile=16, mlp_row_tile=32))
    expected = jax.block_until_ready(ref_block(x, params, n_head))

    # kernel is mixed-precision (bf16 MXU operands, f32 accumulation, approx reciprocal)
    # vs the f32 reference
    np.testing.assert_allclose(np.asarray(out), np.asarray(expected), rtol=2e-2, atol=2e-2)

    print("KERNEL_OK")
</pallas_src>

<mosaic_0001>
module attributes {stable_mosaic.version = 11 : i64} {
  func.func @block_kernel(%arg0: i32, %arg1: memref<1x64x128xf32, #tpu.memory_space<vmem>>, %arg2: memref<1x128xf32, #tpu.memory_space<vmem>>, %arg3: memref<1x128xf32, #tpu.memory_space<vmem>>, %arg4: memref<128x384xbf16, #tpu.memory_space<vmem>>, %arg5: memref<1x384xf32, #tpu.memory_space<vmem>>, %arg6: memref<128x128xbf16, #tpu.memory_space<vmem>>, %arg7: memref<1x128xf32, #tpu.memory_space<vmem>>, %arg8: memref<1x128xf32, #tpu.memory_space<vmem>>, %arg9: memref<1x128xf32, #tpu.memory_space<vmem>>, %arg10: memref<128x512xbf16, #tpu.memory_space<vmem>>, %arg11: memref<1x512xf32, #tpu.memory_space<vmem>>, %arg12: memref<512x128xbf16, #tpu.memory_space<vmem>>, %arg13: memref<1x128xf32, #tpu.memory_space<vmem>>, %arg14: memref<1x64x128xf32, #tpu.memory_space<vmem>>, %arg15: memref<64x384xbf16, #tpu.memory_space<vmem>>, %arg16: memref<64x128xbf16, #tpu.memory_space<vmem>>) attributes {dimension_semantics = [#tpu.dimension_semantics<parallel>], iteration_bounds = array<i64: 2>, scalar_prefetch = 0 : i64, scratch_operands = 2 : i64, tpu.core_type = #tpu.core_type<tc>, window_params = [{transform_indices = @transform_0, window_bounds = array<i64: 1, 64, 128>}, {pipeline_mode = #tpu.pipeline_mode<synchronous>, transform_indices = @transform_1, window_bounds = array<i64: 1, 128>}, {pipeline_mode = #tpu.pipeline_mode<synchronous>, transform_indices = @transform_2, window_bounds = array<i64: 1, 128>}, {pipeline_mode = #tpu.pipeline_mode<synchronous>, transform_indices = @transform_3, window_bounds = array<i64: 128, 384>}, {pipeline_mode = #tpu.pipeline_mode<synchronous>, transform_indices = @transform_4, window_bounds = array<i64: 1, 384>}, {pipeline_mode = #tpu.pipeline_mode<synchronous>, transform_indices = @transform_5, window_bounds = array<i64: 128, 128>}, {pipeline_mode = #tpu.pipeline_mode<synchronous>, transform_indices = @transform_6, window_bounds = array<i64: 1, 128>}, {pipeline_mode = #tpu.pipeline_mode<synchronous>, transform_indices = @transform_7, window_bounds = array<i64: 1, 128>}, {pipeline_mode = #tpu.pipeline_mode<synchronous>, transform_indices = @transform_8, window_bounds = array<i64: 1, 128>}, {pipeline_mode = #tpu.pipeline_mode<synchronous>, transform_indices = @transform_9, window_bounds = array<i64: 128, 512>}, {pipeline_mode = #tpu.pipeline_mode<synchronous>, transform_indices = @transform_10, window_bounds = array<i64: 1, 512>}, {pipeline_mode = #tpu.pipeline_mode<synchronous>, transform_indices = @transform_11, window_bounds = array<i64: 512, 128>}, {pipeline_mode = #tpu.pipeline_mode<synchronous>, transform_indices = @transform_12, window_bounds = array<i64: 1, 128>}, {transform_indices = @transform_13, window_bounds = array<i64: 1, 64, 128>}]} {
    %c0 = arith.constant 0 : index
    %c0_0 = arith.constant 0 : index
    %c0_1 = arith.constant 0 : index
    %0 = vector.load %arg1[%c0, %c0_0, %c0_1] : memref<1x64x128xf32, #tpu.memory_space<vmem>>, vector<1x64x128xf32>
    %1 = vector.shape_cast %0 : vector<1x64x128xf32> to vector<64x128xf32>
    %c0_2 = arith.constant 0 : index
    %c0_3 = arith.constant 0 : index
    %2 = vector.load %arg2[%c0_2, %c0_3] : memref<1x128xf32, #tpu.memory_space<vmem>>, vector<1x128xf32>
    %c0_4 = arith.constant 0 : index
    %c0_5 = arith.constant 0 : index
    %3 = vector.load %arg3[%c0_4, %c0_5] : memref<1x128xf32, #tpu.memory_space<vmem>>, vector<1x128xf32>
    %cst = arith.constant dense<0.000000e+00> : vector<64xf32>
    %4 = vector.multi_reduction <add>, %1, %cst [1] : vector<64x128xf32> to vector<64xf32>
    %5 = vector.shape_cast %4 : vector<64xf32> to vector<64x1xf32>
    %cst_6 = arith.constant 1.280000e+02 : f32
    %6 = vector.broadcast %cst_6 : f32 to vector<64x1xf32>
    %7 = arith.divf %5, %6 : vector<64x1xf32>
    %8 = vector.broadcast %7 : vector<64x1xf32> to vector<64x128xf32>
    %9 = arith.subf %1, %8 : vector<64x128xf32>
    %10 = arith.mulf %9, %9 : vector<64x128xf32>
    %cst_7 = arith.constant dense<0.000000e+00> : vector<64xf32>
    %11 = vector.multi_reduction <add>, %10, %cst_7 [1] : vector<64x128xf32> to vector<64xf32>
    %12 = vector.shape_cast %11 : vector<64xf32> to vector<64x1xf32>
    %cst_8 = arith.constant 1.280000e+02 : f32
    %13 = vector.broadcast %cst_8 : f32 to vector<64x1xf32>
    %14 = arith.divf %12, %13 : vector<64x1xf32>
    %15 = vector.broadcast %7 : vector<64x1xf32> to vector<64x128xf32>
    %16 = arith.subf %1, %15 : vector<64x128xf32>
    %cst_9 = arith.constant 9.99999974E-6 : f32
    %17 = vector.broadcast %cst_9 : f32 to vector<64x1xf32>
    %18 = arith.addf %14, %17 : vector<64x1xf32>
    %19 = math.rsqrt %18 : vector<64x1xf32>
    %20 = vector.broadcast %19 : vector<64x1xf32> to vector<64x128xf32>
    %21 = arith.mulf %16, %20 : vector<64x128xf32>
    %22 = vector.broadcast %2 : vector<1x128xf32> to vector<64x128xf32>
    %23 = arith.mulf %21, %22 : vector<64x128xf32>
    %24 = vector.broadcast %3 : vector<1x128xf32> to vector<64x128xf32>
    %25 = arith.addf %23, %24 : vector<64x128xf32>
    %26 = arith.truncf %25 : vector<64x128xf32> to vector<64x128xbf16>
    %c0_10 = arith.constant 0 : index
    %c0_11 = arith.constant 0 : index
    %27 = vector.load %arg4[%c0_10, %c0_11] : memref<128x384xbf16, #tpu.memory_space<vmem>>, vector<128x128xbf16>
    %cst_12 = arith.constant dense<0.000000e+00> : vector<64x128xf32>
    %28 = tpu.matmul %26, %27, %cst_12 {dimension_numbers = #tpu.dot_dimension_numbers<[1], [0], [0], [1], [0, 0, 1, 1], [], []>} : vector<64x128xbf16>, vector<128x128xbf16>, vector<64x128xf32> -> vector<64x128xf32>
    %c0_13 = arith.constant 0 : index
    %c0_14 = arith.constant 0 : index
    %29 = vector.load %arg5[%c0_13, %c0_14] : memref<1x384xf32, #tpu.memory_space<vmem>>, vector<1x128xf32>
    %30 = vector.broadcast %29 : vector<1x128xf32> to vector<64x128xf32>
    %31 = arith.addf %28, %30 : vector<64x128xf32>
    %32 = arith.truncf %31 : vector<64x128xf32> to vector<64x128xbf16>
    %c0_15 = arith.constant 0 : index
    %c0_16 = arith.constant 0 : index
    %33 = vector.load %arg15[%c0_15, %c0_16] : memref<64x384xbf16, #tpu.memory_space<vmem>>, vector<64x128xbf16>
    tpu.vector_store %arg15[%c0_15, %c0_16], %32 {strides = array<i32>} : memref<64x384xbf16, #tpu.memory_space<vmem>>, vector<64x128xbf16>,
    %c0_17 = arith.constant 0 : index
    %c128 = arith.constant 128 : index
    %34 = vector.load %arg4[%c0_17, %c128] : memref<128x384xbf16, #tpu.memory_space<vmem>>, vector<128x128xbf16>
    %cst_18 = arith.constant dense<0.000000e+00> : vector<64x128xf32>
    %35 = tpu.matmul %26, %34, %cst_18 {dimension_numbers = #tpu.dot_dimension_numbers<[1], [0], [0], [1], [0, 0, 1, 1], [], []>} : vector<64x128xbf16>, vector<128x128xbf16>, vector<64x128xf32> -> vector<64x128xf32>
    %c0_19 = arith.constant 0 : index
    %c128_20 = arith.constant 128 : index
    %36 = vector.load %arg5[%c0_19, %c128_20] : memref<1x384xf32, #tpu.memory_space<vmem>>, vector<1x128xf32>
    %37 = vector.broadcast %36 : vector<1x128xf32> to vector<64x128xf32>
    %38 = arith.addf %35, %37 : vector<64x128xf32>
    %39 = arith.truncf %38 : vector<64x128xf32> to vector<64x128xbf16>
    %c0_21 = arith.constant 0 : index
    %c128_22 = arith.constant 128 : index
    %40 = vector.load %arg15[%c0_21, %c128_22] : memref<64x384xbf16, #tpu.memory_space<vmem>>, vector<64x128xbf16>
    tpu.vector_store %arg15[%c0_21, %c128_22], %39 {strides = array<i32>} : memref<64x384xbf16, #tpu.memory_space<vmem>>, vector<64x128xbf16>,
    %c0_23 = arith.constant 0 : index
    %c256 = arith.constant 256 : index
    %41 = vector.load %arg4[%c0_23, %c256] : memref<128x384xbf16, #tpu.memory_space<vmem>>, vector<128x128xbf16>
    %cst_24 = arith.constant dense<0.000000e+00> : vector<64x128xf32>
    %42 = tpu.matmul %26, %41, %cst_24 {dimension_numbers = #tpu.dot_dimension_numbers<[1], [0], [0], [1], [0, 0, 1, 1], [], []>} : vector<64x128xbf16>, vector<128x128xbf16>, vector<64x128xf32> -> vector<64x128xf32>
    %c0_25 = arith.constant 0 : index
    %c256_26 = arith.constant 256 : index
    %43 = vector.load %arg5[%c0_25, %c256_26] : memref<1x384xf32, #tpu.memory_space<vmem>>, vector<1x128xf32>
    %44 = vector.broadcast %43 : vector<1x128xf32> to vector<64x128xf32>
    %45 = arith.addf %42, %44 : vector<64x128xf32>
    %46 = arith.truncf %45 : vector<64x128xf32> to vector<64x128xbf16>
    %c0_27 = arith.constant 0 : index
    %c256_28 = arith.constant 256 : index
    %47 = vector.load %arg15[%c0_27, %c256_28] : memref<64x384xbf16, #tpu.memory_space<vmem>>, vector<64x128xbf16>
    tpu.vector_store %arg15[%c0_27, %c256_28], %46 {strides = array<i32>} : memref<64x384xbf16, #tpu.memory_space<vmem>>, vector<64x128xbf16>,
    %48 = tpu.iota {dimensions = array<i32: 0>} : vector<32x16xi32>
    %c0_i32 = arith.constant 0 : i32
    %c2_i32 = arith.constant 2 : i32
    %49 = arith.addi %c0_i32, %c2_i32 : i32
    %c1_i32 = arith.constant 1 : i32
    scf.for %arg17 = %c0_i32 to %49 step %c1_i32  : i32 {
      %c1_i32_34 = arith.constant 1 : i32
      %51 = arith.muli %arg17, %c1_i32_34 : i32
      %c0_i32_35 = arith.constant 0 : i32
      %52 = arith.addi %c0_i32_35, %51 : i32
      %c32_i32 = arith.constant 32 : i32
      %53 = arith.muli %52, %c32_i32 : i32
      %54 = tpu.assume_multiple %53, 32 : i32
      %55 = arith.index_cast %54 : i32 to index
      %c0_36 = arith.constant 0 : index
      %56 = vector.load %arg15[%55, %c0_36] : memref<64x384xbf16, #tpu.memory_space<vmem>>, vector<32x32xbf16>
      %cst_37 = arith.constant -1.000000e+30 : f32
      %57 = vector.broadcast %cst_37 : f32 to vector<32x1xf32>
      %cst_38 = arith.constant 0.000000e+00 : f32
      %58 = vector.broadcast %cst_38 : f32 to vector<32x1xf32>
      %cst_39 = arith.constant 0.000000e+00 : f32
      %59 = vector.broadcast %cst_39 : f32 to vector<32x32xf32>
      %c0_i32_40 = arith.constant 0 : i32
      %c2_i32_41 = arith.constant 2 : i32
      %60 = arith.addi %c0_i32_40, %c2_i32_41 : i32
      %c1_i32_42 = arith.constant 1 : i32
      %61:3 = scf.for %arg18 = %c0_i32_40 to %60 step %c1_i32_42 iter_args(%arg19 = %57, %arg20 = %58, %arg21 = %59) -> (vector<32x1xf32>, vector<32x1xf32>, vector<32x32xf32>)  : i32 {
        %c16_i32 = arith.constant 16 : i32
        %107 = arith.muli %arg18, %c16_i32 : i32
        %108 = tpu.assume_multiple %107, 16 : i32
        %109 = arith.addi %54, %108 : i32
        %110 = arith.index_cast %109 : i32 to index
        %c128_69 = arith.constant 128 : index
        %111 = vector.load %arg15[%110, %c128_69] : memref<64x384xbf16, #tpu.memory_space<vmem>>, vector<16x32xbf16>
        %112 = arith.addi %54, %108 : i32
        %113 = arith.index_cast %112 : i32 to index
        %c256_70 = arith.constant 256 : index
        %114 = vector.load %arg15[%113, %c256_70] : memref<64x384xbf16, #tpu.memory_space<vmem>>, vector<16x32xbf16>
        %cst_71 = arith.constant dense<0.000000e+00> : vector<32x16xf32>
        %115 = tpu.matmul %56, %111, %cst_71 {dimension_numbers = #tpu.dot_dimension_numbers<[1], [1], [0], [0], [0, 0, 1, 0], [], []>} : vector<32x32xbf16>, vector<16x32xbf16>, vector<32x16xf32> -> vector<32x16xf32>
        %116 = tpu.iota {dimensions = array<i32: 1>} : vector<32x16xi32>
        %117 = vector.broadcast %108 : i32 to vector<32x16xi32>
        %118 = arith.addi %117, %116 : vector<32x16xi32>
        %119 = arith.cmpi sle, %118, %48 : vector<32x16xi32>
        %cst_72 = arith.constant -1.000000e+30 : f32
        %120 = vector.broadcast %cst_72 : f32 to vector<32x16xf32>
        %121 = arith.select %119, %115, %120 : vector<32x16xi1>, vector<32x16xf32>
        %cst_73 = arith.constant dense<0xFF800000> : vector<32xf32>
        %122 = vector.multi_reduction <maximumf>, %121, %cst_73 [1] : vector<32x16xf32> to vector<32xf32>
        %123 = vector.shape_cast %122 : vector<32xf32> to vector<32x1xf32>
        %124 = arith.maximumf %arg19, %123 : vector<32x1xf32>
        %125 = arith.subf %arg19, %124 : vector<32x1xf32>
        %126 = math.exp %125 : vector<32x1xf32>
        %127 = vector.broadcast %124 : vector<32x1xf32> to vector<32x16xf32>
        %128 = arith.subf %121, %127 : vector<32x16xf32>
        %129 = math.exp %128 : vector<32x16xf32>
        %130 = arith.mulf %126, %arg20 : vector<32x1xf32>
        %cst_74 = arith.constant dense<0.000000e+00> : vector<32xf32>
        %131 = vector.multi_reduction <add>, %129, %cst_74 [1] : vector<32x16xf32> to vector<32xf32>
        %132 = vector.shape_cast %131 : vector<32xf32> to vector<32x1xf32>
        %133 = arith.addf %130, %132 : vector<32x1xf32>
        %134 = vector.broadcast %126 : vector<32x1xf32> to vector<32x32xf32>
        %135 = arith.mulf %134, %arg21 : vector<32x32xf32>
        %136 = arith.truncf %129 : vector<32x16xf32> to vector<32x16xbf16>
        %cst_75 = arith.constant dense<0.000000e+00> : vector<32x32xf32>
        %137 = tpu.matmul %136, %114, %cst_75 {dimension_numbers = #tpu.dot_dimension_numbers<[1], [0], [0], [1], [0, 0, 1, 1], [], []>} : vector<32x16xbf16>, vector<16x32xbf16>, vector<32x32xf32> -> vector<32x32xf32>
        %138 = arith.addf %135, %137 : vector<32x32xf32>
        scf.yield %124, %133, %138 : vector<32x1xf32>, vector<32x1xf32>, vector<32x32xf32>
      }
      %c2_i32_43 = arith.constant 2 : i32
      %62 = tpu.reciprocal %61#1 {approx = true} : vector<32x1xf32> -> vector<32x1xf32>
      %63 = vector.broadcast %62 : vector<32x1xf32> to vector<32x32xf32>
      %64 = arith.mulf %61#2, %63 : vector<32x32xf32>
      %65 = arith.truncf %64 : vector<32x32xf32> to vector<32x32xbf16>
      %66 = arith.index_cast %54 : i32 to index
      %c0_44 = arith.constant 0 : index
      %67 = vector.load %arg16[%66, %c0_44] : memref<64x128xbf16, #tpu.memory_space<vmem>>, vector<32x32xbf16>
      tpu.vector_store %arg16[%66, %c0_44], %65 {strides = array<i32>} : memref<64x128xbf16, #tpu.memory_space<vmem>>, vector<32x32xbf16>,
      %68 = arith.index_cast %54 : i32 to index
      %c32 = arith.constant 32 : index
      %69 = vector.load %arg15[%68, %c32] : memref<64x384xbf16, #tpu.memory_space<vmem>>, vector<32x32xbf16>
      %cst_45 = arith.constant -1.000000e+30 : f32
      %70 = vector.broadcast %cst_45 : f32 to vector<32x1xf32>
      %cst_46 = arith.constant 0.000000e+00 : f32
      %71 = vector.broadcast %cst_46 : f32 to vector<32x1xf32>
      %cst_47 = arith.constant 0.000000e+00 : f32
      %72 = vector.broadcast %cst_47 : f32 to vector<32x32xf32>
      %c0_i32_48 = arith.constant 0 : i32
      %c2_i32_49 = arith.constant 2 : i32
      %73 = arith.addi %c0_i32_48, %c2_i32_49 : i32
      %c1_i32_50 = arith.constant 1 : i32
      %74:3 = scf.for %arg18 = %c0_i32_48 to %73 step %c1_i32_50 iter_args(%arg19 = %70, %arg20 = %71, %arg21 = %72) -> (vector<32x1xf32>, vector<32x1xf32>, vector<32x32xf32>)  : i32 {
        %c16_i32 = arith.constant 16 : i32
        %107 = arith.muli %arg18, %c16_i32 : i32
        %108 = tpu.assume_multiple %107, 16 : i32
        %109 = arith.addi %54, %108 : i32
        %110 = arith.index_cast %109 : i32 to index
        %c160 = arith.constant 160 : index
        %111 = vector.load %arg15[%110, %c160] : memref<64x384xbf16, #tpu.memory_space<vmem>>, vector<16x32xbf16>
        %112 = arith.addi %54, %108 : i32
        %113 = arith.index_cast %112 : i32 to index
        %c288 = arith.constant 288 : index
        %114 = vector.load %arg15[%113, %c288] : memref<64x384xbf16, #tpu.memory_space<vmem>>, vector<16x32xbf16>
        %cst_69 = arith.constant dense<0.000000e+00> : vector<32x16xf32>
        %115 = tpu.matmul %69, %111, %cst_69 {dimension_numbers = #tpu.dot_dimension_numbers<[1], [1], [0], [0], [0, 0, 1, 0], [], []>} : vector<32x32xbf16>, vector<16x32xbf16>, vector<32x16xf32> -> vector<32x16xf32>
        %116 = tpu.iota {dimensions = array<i32: 1>} : vector<32x16xi32>
        %117 = vector.broadcast %108 : i32 to vector<32x16xi32>
        %118 = arith.addi %117, %116 : vector<32x16xi32>
        %119 = arith.cmpi sle, %118, %48 : vector<32x16xi32>
        %cst_70 = arith.constant -1.000000e+30 : f32
        %120 = vector.broadcast %cst_70 : f32 to vector<32x16xf32>
        %121 = arith.select %119, %115, %120 : vector<32x16xi1>, vector<32x16xf32>
        %cst_71 = arith.constant dense<0xFF800000> : vector<32xf32>
        %122 = vector.multi_reduction <maximumf>, %121, %cst_71 [1] : vector<32x16xf32> to vector<32xf32>
        %123 = vector.shape_cast %122 : vector<32xf32> to vector<32x1xf32>
        %124 = arith.maximumf %arg19, %123 : vector<32x1xf32>
        %125 = arith.subf %arg19, %124 : vector<32x1xf32>
        %126 = math.exp %125 : vector<32x1xf32>
        %127 = vector.broadcast %124 : vector<32x1xf32> to vector<32x16xf32>
        %128 = arith.subf %121, %127 : vector<32x16xf32>
        %129 = math.exp %128 : vector<32x16xf32>
        %130 = arith.mulf %126, %arg20 : vector<32x1xf32>
        %cst_72 = arith.constant dense<0.000000e+00> : vector<32xf32>
        %131 = vector.multi_reduction <add>, %129, %cst_72 [1] : vector<32x16xf32> to vector<32xf32>
        %132 = vector.shape_cast %131 : vector<32xf32> to vector<32x1xf32>
        %133 = arith.addf %130, %132 : vector<32x1xf32>
        %134 = vector.broadcast %126 : vector<32x1xf32> to vector<32x32xf32>
        %135 = arith.mulf %134, %arg21 : vector<32x32xf32>
        %136 = arith.truncf %129 : vector<32x16xf32> to vector<32x16xbf16>
        %cst_73 = arith.constant dense<0.000000e+00> : vector<32x32xf32>
        %137 = tpu.matmul %136, %114, %cst_73 {dimension_numbers = #tpu.dot_dimension_numbers<[1], [0], [0], [1], [0, 0, 1, 1], [], []>} : vector<32x16xbf16>, vector<16x32xbf16>, vector<32x32xf32> -> vector<32x32xf32>
        %138 = arith.addf %135, %137 : vector<32x32xf32>
        scf.yield %124, %133, %138 : vector<32x1xf32>, vector<32x1xf32>, vector<32x32xf32>
      }
      %c2_i32_51 = arith.constant 2 : i32
      %75 = tpu.reciprocal %74#1 {approx = true} : vector<32x1xf32> -> vector<32x1xf32>
      %76 = vector.broadcast %75 : vector<32x1xf32> to vector<32x32xf32>
      %77 = arith.mulf %74#2, %76 : vector<32x32xf32>
      %78 = arith.truncf %77 : vector<32x32xf32> to vector<32x32xbf16>
      %79 = arith.index_cast %54 : i32 to index
      %c32_52 = arith.constant 32 : index
      %80 = vector.load %arg16[%79, %c32_52] : memref<64x128xbf16, #tpu.memory_space<vmem>>, vector<32x32xbf16>
      tpu.vector_store %arg16[%79, %c32_52], %78 {strides = array<i32>} : memref<64x128xbf16, #tpu.memory_space<vmem>>, vector<32x32xbf16>,
      %81 = arith.index_cast %54 : i32 to index
      %c64 = arith.constant 64 : index
      %82 = vector.load %arg15[%81, %c64] : memref<64x384xbf16, #tpu.memory_space<vmem>>, vector<32x32xbf16>
      %cst_53 = arith.constant -1.000000e+30 : f32
      %83 = vector.broadcast %cst_53 : f32 to vector<32x1xf32>
      %cst_54 = arith.constant 0.000000e+00 : f32
      %84 = vector.broadcast %cst_54 : f32 to vector<32x1xf32>
      %cst_55 = arith.constant 0.000000e+00 : f32
      %85 = vector.broadcast %cst_55 : f32 to vector<32x32xf32>
      %c0_i32_56 = arith.constant 0 : i32
      %c2_i32_57 = arith.constant 2 : i32
      %86 = arith.addi %c0_i32_56, %c2_i32_57 : i32
      %c1_i32_58 = arith.constant 1 : i32
      %87:3 = scf.for %arg18 = %c0_i32_56 to %86 step %c1_i32_58 iter_args(%arg19 = %83, %arg20 = %84, %arg21 = %85) -> (vector<32x1xf32>, vector<32x1xf32>, vector<32x32xf32>)  : i32 {
        %c16_i32 = arith.constant 16 : i32
        %107 = arith.muli %arg18, %c16_i32 : i32
        %108 = tpu.assume_multiple %107, 16 : i32
        %109 = arith.addi %54, %108 : i32
        %110 = arith.index_cast %109 : i32 to index
        %c192 = arith.constant 192 : index
        %111 = vector.load %arg15[%110, %c192] : memref<64x384xbf16, #tpu.memory_space<vmem>>, vector<16x32xbf16>
        %112 = arith.addi %54, %108 : i32
        %113 = arith.index_cast %112 : i32 to index
        %c320 = arith.constant 320 : index
        %114 = vector.load %arg15[%113, %c320] : memref<64x384xbf16, #tpu.memory_space<vmem>>, vector<16x32xbf16>
        %cst_69 = arith.constant dense<0.000000e+00> : vector<32x16xf32>
        %115 = tpu.matmul %82, %111, %cst_69 {dimension_numbers = #tpu.dot_dimension_numbers<[1], [1], [0], [0], [0, 0, 1, 0], [], []>} : vector<32x32xbf16>, vector<16x32xbf16>, vector<32x16xf32> -> vector<32x16xf32>
        %116 = tpu.iota {dimensions = array<i32: 1>} : vector<32x16xi32>
        %117 = vector.broadcast %108 : i32 to vector<32x16xi32>
        %118 = arith.addi %117, %116 : vector<32x16xi32>
        %119 = arith.cmpi sle, %118, %48 : vector<32x16xi32>
        %cst_70 = arith.constant -1.000000e+30 : f32
        %120 = vector.broadcast %cst_70 : f32 to vector<32x16xf32>
        %121 = arith.select %119, %115, %120 : vector<32x16xi1>, vector<32x16xf32>
        %cst_71 = arith.constant dense<0xFF800000> : vector<32xf32>
        %122 = vector.multi_reduction <maximumf>, %121, %cst_71 [1] : vector<32x16xf32> to vector<32xf32>
        %123 = vector.shape_cast %122 : vector<32xf32> to vector<32x1xf32>
        %124 = arith.maximumf %arg19, %123 : vector<32x1xf32>
        %125 = arith.subf %arg19, %124 : vector<32x1xf32>
        %126 = math.exp %125 : vector<32x1xf32>
        %127 = vector.broadcast %124 : vector<32x1xf32> to vector<32x16xf32>
        %128 = arith.subf %121, %127 : vector<32x16xf32>
        %129 = math.exp %128 : vector<32x16xf32>
        %130 = arith.mulf %126, %arg20 : vector<32x1xf32>
        %cst_72 = arith.constant dense<0.000000e+00> : vector<32xf32>
        %131 = vector.multi_reduction <add>, %129, %cst_72 [1] : vector<32x16xf32> to vector<32xf32>
        %132 = vector.shape_cast %131 : vector<32xf32> to vector<32x1xf32>
        %133 = arith.addf %130, %132 : vector<32x1xf32>
        %134 = vector.broadcast %126 : vector<32x1xf32> to vector<32x32xf32>
        %135 = arith.mulf %134, %arg21 : vector<32x32xf32>
        %136 = arith.truncf %129 : vector<32x16xf32> to vector<32x16xbf16>
        %cst_73 = arith.constant dense<0.000000e+00> : vector<32x32xf32>
        %137 = tpu.matmul %136, %114, %cst_73 {dimension_numbers = #tpu.dot_dimension_numbers<[1], [0], [0], [1], [0, 0, 1, 1], [], []>} : vector<32x16xbf16>, vector<16x32xbf16>, vector<32x32xf32> -> vector<32x32xf32>
        %138 = arith.addf %135, %137 : vector<32x32xf32>
        scf.yield %124, %133, %138 : vector<32x1xf32>, vector<32x1xf32>, vector<32x32xf32>
      }
      %c2_i32_59 = arith.constant 2 : i32
      %88 = tpu.reciprocal %87#1 {approx = true} : vector<32x1xf32> -> vector<32x1xf32>
      %89 = vector.broadcast %88 : vector<32x1xf32> to vector<32x32xf32>
      %90 = arith.mulf %87#2, %89 : vector<32x32xf32>
      %91 = arith.truncf %90 : vector<32x32xf32> to vector<32x32xbf16>
      %92 = arith.index_cast %54 : i32 to index
      %c64_60 = arith.constant 64 : index
      %93 = vector.load %arg16[%92, %c64_60] : memref<64x128xbf16, #tpu.memory_space<vmem>>, vector<32x32xbf16>
      tpu.vector_store %arg16[%92, %c64_60], %91 {strides = array<i32>} : memref<64x128xbf16, #tpu.memory_space<vmem>>, vector<32x32xbf16>,
      %94 = arith.index_cast %54 : i32 to index
      %c96 = arith.constant 96 : index
      %95 = vector.load %arg15[%94, %c96] : memref<64x384xbf16, #tpu.memory_space<vmem>>, vector<32x32xbf16>
      %cst_61 = arith.constant -1.000000e+30 : f32
      %96 = vector.broadcast %cst_61 : f32 to vector<32x1xf32>
      %cst_62 = arith.constant 0.000000e+00 : f32
      %97 = vector.broadcast %cst_62 : f32 to vector<32x1xf32>
      %cst_63 = arith.constant 0.000000e+00 : f32
      %98 = vector.broadcast %cst_63 : f32 to vector<32x32xf32>
      %c0_i32_64 = arith.constant 0 : i32
      %c2_i32_65 = arith.constant 2 : i32
      %99 = arith.addi %c0_i32_64, %c2_i32_65 : i32
      %c1_i32_66 = arith.constant 1 : i32
      %100:3 = scf.for %arg18 = %c0_i32_64 to %99 step %c1_i32_66 iter_args(%arg19 = %96, %arg20 = %97, %arg21 = %98) -> (vector<32x1xf32>, vector<32x1xf32>, vector<32x32xf32>)  : i32 {
        %c16_i32 = arith.constant 16 : i32
        %107 = arith.muli %arg18, %c16_i32 : i32
        %108 = tpu.assume_multiple %107, 16 : i32
        %109 = arith.addi %54, %108 : i32
        %110 = arith.index_cast %109 : i32 to index
        %c224 = arith.constant 224 : index
        %111 = vector.load %arg15[%110, %c224] : memref<64x384xbf16, #tpu.memory_space<vmem>>, vector<16x32xbf16>
        %112 = arith.addi %54, %108 : i32
        %113 = arith.index_cast %112 : i32 to index
        %c352 = arith.constant 352 : index
        %114 = vector.load %arg15[%113, %c352] : memref<64x384xbf16, #tpu.memory_space<vmem>>, vector<16x32xbf16>
        %cst_69 = arith.constant dense<0.000000e+00> : vector<32x16xf32>
        %115 = tpu.matmul %95, %111, %cst_69 {dimension_numbers = #tpu.dot_dimension_numbers<[1], [1], [0], [0], [0, 0, 1, 0], [], []>} : vector<32x32xbf16>, vector<16x32xbf16>, vector<32x16xf32> -> vector<32x16xf32>
        %116 = tpu.iota {dimensions = array<i32: 1>} : vector<32x16xi32>
        %117 = vector.broadcast %108 : i32 to vector<32x16xi32>
        %118 = arith.addi %117, %116 : vector<32x16xi32>
        %119 = arith.cmpi sle, %118, %48 : vector<32x16xi32>
        %cst_70 = arith.constant -1.000000e+30 : f32
        %120 = vector.broadcast %cst_70 : f32 to vector<32x16xf32>
        %121 = arith.select %119, %115, %120 : vector<32x16xi1>, vector<32x16xf32>
        %cst_71 = arith.constant dense<0xFF800000> : vector<32xf32>
        %122 = vector.multi_reduction <maximumf>, %121, %cst_71 [1] : vector<32x16xf32> to vector<32xf32>
        %123 = vector.shape_cast %122 : vector<32xf32> to vector<32x1xf32>
        %124 = arith.maximumf %arg19, %123 : vector<32x1xf32>
        %125 = arith.subf %arg19, %124 : vector<32x1xf32>
        %126 = math.exp %125 : vector<32x1xf32>
        %127 = vector.broadcast %124 : vector<32x1xf32> to vector<32x16xf32>
        %128 = arith.subf %121, %127 : vector<32x16xf32>
        %129 = math.exp %128 : vector<32x16xf32>
        %130 = arith.mulf %126, %arg20 : vector<32x1xf32>
        %cst_72 = arith.constant dense<0.000000e+00> : vector<32xf32>
        %131 = vector.multi_reduction <add>, %129, %cst_72 [1] : vector<32x16xf32> to vector<32xf32>
        %132 = vector.shape_cast %131 : vector<32xf32> to vector<32x1xf32>
        %133 = arith.addf %130, %132 : vector<32x1xf32>
        %134 = vector.broadcast %126 : vector<32x1xf32> to vector<32x32xf32>
        %135 = arith.mulf %134, %arg21 : vector<32x32xf32>
        %136 = arith.truncf %129 : vector<32x16xf32> to vector<32x16xbf16>
        %cst_73 = arith.constant dense<0.000000e+00> : vector<32x32xf32>
        %137 = tpu.matmul %136, %114, %cst_73 {dimension_numbers = #tpu.dot_dimension_numbers<[1], [0], [0], [1], [0, 0, 1, 1], [], []>} : vector<32x16xbf16>, vector<16x32xbf16>, vector<32x32xf32> -> vector<32x32xf32>
        %138 = arith.addf %135, %137 : vector<32x32xf32>
        scf.yield %124, %133, %138 : vector<32x1xf32>, vector<32x1xf32>, vector<32x32xf32>
      }
      %c2_i32_67 = arith.constant 2 : i32
      %101 = tpu.reciprocal %100#1 {approx = true} : vector<32x1xf32> -> vector<32x1xf32>
      %102 = vector.broadcast %101 : vector<32x1xf32> to vector<32x32xf32>
      %103 = arith.mulf %100#2, %102 : vector<32x32xf32>
      %104 = arith.truncf %103 : vector<32x32xf32> to vector<32x32xbf16>
      %105 = arith.index_cast %54 : i32 to index
      %c96_68 = arith.constant 96 : index
      %106 = vector.load %arg16[%105, %c96_68] : memref<64x128xbf16, #tpu.memory_space<vmem>>, vector<32x32xbf16>
      tpu.vector_store %arg16[%105, %c96_68], %104 {strides = array<i32>} : memref<64x128xbf16, #tpu.memory_space<vmem>>, vector<32x32xbf16>,
    }
    %c2_i32_29 = arith.constant 2 : i32
    %c0_i32_30 = arith.constant 0 : i32
    %c2_i32_31 = arith.constant 2 : i32
    %50 = arith.addi %c0_i32_30, %c2_i32_31 : i32
    %c1_i32_32 = arith.constant 1 : i32
    scf.for %arg17 = %c0_i32_30 to %50 step %c1_i32_32  : i32 {
      %c1_i32_34 = arith.constant 1 : i32
      %51 = arith.muli %arg17, %c1_i32_34 : i32
      %c0_i32_35 = arith.constant 0 : i32
      %52 = arith.addi %c0_i32_35, %51 : i32
      %c32_i32 = arith.constant 32 : i32
      %53 = arith.muli %52, %c32_i32 : i32
      %54 = tpu.assume_multiple %53, 32 : i32
      %c0_36 = arith.constant 0 : index
      %55 = arith.index_cast %54 : i32 to index
      %c0_37 = arith.constant 0 : index
      %56 = vector.load %arg1[%c0_36, %55, %c0_37] : memref<1x64x128xf32, #tpu.memory_space<vmem>>, vector<1x32x128xf32>
      %57 = vector.shape_cast %56 : vector<1x32x128xf32> to vector<32x128xf32>
      %58 = arith.index_cast %54 : i32 to index
      %c0_38 = arith.constant 0 : index
      %59 = vector.load %arg16[%58, %c0_38] : memref<64x128xbf16, #tpu.memory_space<vmem>>, vector<32x128xbf16>
      %c0_39 = arith.constant 0 : index
      %c0_40 = arith.constant 0 : index
      %60 = vector.load %arg6[%c0_39, %c0_40] : memref<128x128xbf16, #tpu.memory_space<vmem>>, vector<128x128xbf16>
      %cst_41 = arith.constant dense<0.000000e+00> : vector<32x128xf32>
      %61 = tpu.matmul %59, %60, %cst_41 {dimension_numbers = #tpu.dot_dimension_numbers<[1], [0], [0], [1], [0, 0, 1, 1], [], []>} : vector<32x128xbf16>, vector<128x128xbf16>, vector<32x128xf32> -> vector<32x128xf32>
      %62 = arith.addf %57, %61 : vector<32x128xf32>
      %c0_42 = arith.constant 0 : index
      %c0_43 = arith.constant 0 : index
      %63 = vector.load %arg7[%c0_42, %c0_43] : memref<1x128xf32, #tpu.memory_space<vmem>>, vector<1x128xf32>
      %64 = vector.broadcast %63 : vector<1x128xf32> to vector<32x128xf32>
      %65 = arith.addf %62, %64 : vector<32x128xf32>
      %c0_44 = arith.constant 0 : index
      %c0_45 = arith.constant 0 : index
      %66 = vector.load %arg8[%c0_44, %c0_45] : memref<1x128xf32, #tpu.memory_space<vmem>>, vector<1x128xf32>
      %c0_46 = arith.constant 0 : index
      %c0_47 = arith.constant 0 : index
      %67 = vector.load %arg9[%c0_46, %c0_47] : memref<1x128xf32, #tpu.memory_space<vmem>>, vector<1x128xf32>
      %cst_48 = arith.constant dense<0.000000e+00> : vector<32xf32>
      %68 = vector.multi_reduction <add>, %65, %cst_48 [1] : vector<32x128xf32> to vector<32xf32>
      %69 = vector.shape_cast %68 : vector<32xf32> to vector<32x1xf32>
      %cst_49 = arith.constant 1.280000e+02 : f32
      %70 = vector.broadcast %cst_49 : f32 to vector<32x1xf32>
      %71 = arith.divf %69, %70 : vector<32x1xf32>
      %72 = vector.broadcast %71 : vector<32x1xf32> to vector<32x128xf32>
      %73 = arith.subf %65, %72 : vector<32x128xf32>
      %74 = arith.mulf %73, %73 : vector<32x128xf32>
      %cst_50 = arith.constant dense<0.000000e+00> : vector<32xf32>
      %75 = vector.multi_reduction <add>, %74, %cst_50 [1] : vector<32x128xf32> to vector<32xf32>
      %76 = vector.shape_cast %75 : vector<32xf32> to vector<32x1xf32>
      %cst_51 = arith.constant 1.280000e+02 : f32
      %77 = vector.broadcast %cst_51 : f32 to vector<32x1xf32>
      %78 = arith.divf %76, %77 : vector<32x1xf32>
      %79 = vector.broadcast %71 : vector<32x1xf32> to vector<32x128xf32>
      %80 = arith.subf %65, %79 : vector<32x128xf32>
      %cst_52 = arith.constant 9.99999974E-6 : f32
      %81 = vector.broadcast %cst_52 : f32 to vector<32x1xf32>
      %82 = arith.addf %78, %81 : vector<32x1xf32>
      %83 = math.rsqrt %82 : vector<32x1xf32>
      %84 = vector.broadcast %83 : vector<32x1xf32> to vector<32x128xf32>
      %85 = arith.mulf %80, %84 : vector<32x128xf32>
      %86 = vector.broadcast %66 : vector<1x128xf32> to vector<32x128xf32>
      %87 = arith.mulf %85, %86 : vector<32x128xf32>
      %88 = vector.broadcast %67 : vector<1x128xf32> to vector<32x128xf32>
      %89 = arith.addf %87, %88 : vector<32x128xf32>
      %90 = arith.truncf %89 : vector<32x128xf32> to vector<32x128xbf16>
      %c0_53 = arith.constant 0 : index
      %c0_54 = arith.constant 0 : index
      %91 = vector.load %arg10[%c0_53, %c0_54] : memref<128x512xbf16, #tpu.memory_space<vmem>>, vector<128x512xbf16>
      %cst_55 = arith.constant dense<0.000000e+00> : vector<32x512xf32>
      %92 = tpu.matmul %90, %91, %cst_55 {dimension_numbers = #tpu.dot_dimension_numbers<[1], [0], [0], [1], [0, 0, 1, 1], [], []>} : vector<32x128xbf16>, vector<128x512xbf16>, vector<32x512xf32> -> vector<32x512xf32>
      %c0_56 = arith.constant 0 : index
      %c0_57 = arith.constant 0 : index
      %93 = vector.load %arg11[%c0_56, %c0_57] : memref<1x512xf32, #tpu.memory_space<vmem>>, vector<1x512xf32>
      %94 = vector.broadcast %93 : vector<1x512xf32> to vector<32x512xf32>
      %95 = arith.addf %92, %94 : vector<32x512xf32>
      %cst_58 = arith.constant 5.000000e-01 : f32
      %96 = vector.broadcast %cst_58 : f32 to vector<32x512xf32>
      %97 = arith.mulf %96, %95 : vector<32x512xf32>
      %cst_59 = arith.constant 4.471500e-02 : f32
      %98 = vector.broadcast %cst_59 : f32 to vector<32x512xf32>
      %99 = arith.mulf %98, %95 : vector<32x512xf32>
      %100 = arith.mulf %99, %95 : vector<32x512xf32>
      %101 = arith.mulf %100, %95 : vector<32x512xf32>
      %102 = arith.addf %95, %101 : vector<32x512xf32>
      %cst_60 = arith.constant 0.797884583 : f32
      %103 = vector.broadcast %cst_60 : f32 to vector<32x512xf32>
      %104 = arith.mulf %103, %102 : vector<32x512xf32>
      %105 = math.tanh %104 : vector<32x512xf32>
      %cst_61 = arith.constant 1.000000e+00 : f32
      %106 = vector.broadcast %cst_61 : f32 to vector<32x512xf32>
      %107 = arith.addf %106, %105 : vector<32x512xf32>
      %108 = arith.mulf %97, %107 : vector<32x512xf32>
      %109 = arith.truncf %108 : vector<32x512xf32> to vector<32x512xbf16>
      %c0_62 = arith.constant 0 : index
      %c0_63 = arith.constant 0 : index
      %110 = vector.load %arg12[%c0_62, %c0_63] : memref<512x128xbf16, #tpu.memory_space<vmem>>, vector<512x128xbf16>
      %cst_64 = arith.constant dense<0.000000e+00> : vector<32x128xf32>
      %111 = tpu.matmul %109, %110, %cst_64 {dimension_numbers = #tpu.dot_dimension_numbers<[1], [0], [0], [1], [0, 0, 1, 1], [], []>} : vector<32x512xbf16>, vector<512x128xbf16>, vector<32x128xf32> -> vector<32x128xf32>
      %c0_65 = arith.constant 0 : index
      %c0_66 = arith.constant 0 : index
      %112 = vector.load %arg13[%c0_65, %c0_66] : memref<1x128xf32, #tpu.memory_space<vmem>>, vector<1x128xf32>
      %113 = vector.broadcast %112 : vector<1x128xf32> to vector<32x128xf32>
      %114 = arith.addf %111, %113 : vector<32x128xf32>
      %115 = arith.addf %65, %114 : vector<32x128xf32>
      %c0_67 = arith.constant 0 : index
      %116 = arith.index_cast %54 : i32 to index
      %c0_68 = arith.constant 0 : index
      %117 = vector.load %arg14[%c0_67, %116, %c0_68] : memref<1x64x128xf32, #tpu.memory_space<vmem>>, vector<1x32x128xf32>
      %118 = vector.shape_cast %117 : vector<1x32x128xf32> to vector<32x128xf32>
      %119 = vector.shape_cast %115 : vector<32x128xf32> to vector<1x32x128xf32>
      tpu.vector_store %arg14[%c0_67, %116, %c0_68], %119 {strides = array<i32>} : memref<1x64x128xf32, #tpu.memory_space<vmem>>, vector<1x32x128xf32>,
    }
    %c2_i32_33 = arith.constant 2 : i32
    return
  }
  func.func @transform_0(%arg0: i32) -> (i32, i32, i32) {
    %c0_i32 = arith.constant 0 : i32
    %c0_i32_0 = arith.constant 0 : i32
    %c0_i32_1 = arith.constant 0 : i32
    return %arg0, %c0_i32, %c0_i32_0 : i32, i32, i32
  }
  func.func @transform_1(%arg0: i32) -> (i32, i32) {
    %c0_i32 = arith.constant 0 : i32
    %c0_i32_0 = arith.constant 0 : i32
    %c0_i32_1 = arith.constant 0 : i32
    return %c0_i32, %c0_i32_0 : i32, i32
  }
  func.func @transform_2(%arg0: i32) -> (i32, i32) {
    %c0_i32 = arith.constant 0 : i32
    %c0_i32_0 = arith.constant 0 : i32
    %c0_i32_1 = arith.constant 0 : i32
    return %c0_i32, %c0_i32_0 : i32, i32
  }
  func.func @transform_3(%arg0: i32) -> (i32, i32) {
    %c0_i32 = arith.constant 0 : i32
    %c0_i32_0 = arith.constant 0 : i32
    %c0_i32_1 = arith.constant 0 : i32
    return %c0_i32, %c0_i32_0 : i32, i32
  }
  func.func @transform_4(%arg0: i32) -> (i32, i32) {
    %c0_i32 = arith.constant 0 : i32
    %c0_i32_0 = arith.constant 0 : i32
    %c0_i32_1 = arith.constant 0 : i32
    return %c0_i32, %c0_i32_0 : i32, i32
  }
  func.func @transform_5(%arg0: i32) -> (i32, i32) {
    %c0_i32 = arith.constant 0 : i32
    %c0_i32_0 = arith.constant 0 : i32
    %c0_i32_1 = arith.constant 0 : i32
    return %c0_i32, %c0_i32_0 : i32, i32
  }
  func.func @transform_6(%arg0: i32) -> (i32, i32) {
    %c0_i32 = arith.constant 0 : i32
    %c0_i32_0 = arith.constant 0 : i32
    %c0_i32_1 = arith.constant 0 : i32
    return %c0_i32, %c0_i32_0 : i32, i32
  }
  func.func @transform_7(%arg0: i32) -> (i32, i32) {
    %c0_i32 = arith.constant 0 : i32
    %c0_i32_0 = arith.constant 0 : i32
    %c0_i32_1 = arith.constant 0 : i32
    return %c0_i32, %c0_i32_0 : i32, i32
  }
  func.func @transform_8(%arg0: i32) -> (i32, i32) {
    %c0_i32 = arith.constant 0 : i32
    %c0_i32_0 = arith.constant 0 : i32
    %c0_i32_1 = arith.constant 0 : i32
    return %c0_i32, %c0_i32_0 : i32, i32
  }
  func.func @transform_9(%arg0: i32) -> (i32, i32) {
    %c0_i32 = arith.constant 0 : i32
    %c0_i32_0 = arith.constant 0 : i32
    %c0_i32_1 = arith.constant 0 : i32
    return %c0_i32, %c0_i32_0 : i32, i32
  }
  func.func @transform_10(%arg0: i32) -> (i32, i32) {
    %c0_i32 = arith.constant 0 : i32
    %c0_i32_0 = arith.constant 0 : i32
    %c0_i32_1 = arith.constant 0 : i32
    return %c0_i32, %c0_i32_0 : i32, i32
  }
  func.func @transform_11(%arg0: i32) -> (i32, i32) {
    %c0_i32 = arith.constant 0 : i32
    %c0_i32_0 = arith.constant 0 : i32
    %c0_i32_1 = arith.constant 0 : i32
    return %c0_i32, %c0_i32_0 : i32, i32
  }
  func.func @transform_12(%arg0: i32) -> (i32, i32) {
    %c0_i32 = arith.constant 0 : i32
    %c0_i32_0 = arith.constant 0 : i32
    %c0_i32_1 = arith.constant 0 : i32
    return %c0_i32, %c0_i32_0 : i32, i32
  }
  func.func @transform_13(%arg0: i32) -> (i32, i32, i32) {
    %c0_i32 = arith.constant 0 : i32
    %c0_i32_0 = arith.constant 0 : i32
    %c0_i32_1 = arith.constant 0 : i32
    return %arg0, %c0_i32, %c0_i32_0 : i32, i32, i32
  }
}

module attributes {stable_mosaic.version = 11 : i64} {
  func.func @block_kernel(%arg0: i32, %arg1: memref<1x64x128xf32, #tpu.memory_space<vmem>>, %arg2: memref<1x128xf32, #tpu.memory_space<vmem>>, %arg3: memref<1x128xf32, #tpu.memory_space<vmem>>, %arg4: memref<128x384xbf16, #tpu.memory_space<vmem>>, %arg5: memref<1x384xf32, #tpu.memory_space<vmem>>, %arg6: memref<128x128xbf16, #tpu.memory_space<vmem>>, %arg7: memref<1x128xf32, #tpu.memory_space<vmem>>, %arg8: memref<1x128xf32, #tpu.memory_space<vmem>>, %arg9: memref<1x128xf32, #tpu.memory_space<vmem>>, %arg10: memref<128x512xbf16, #tpu.memory_space<vmem>>, %arg11: memref<1x512xf32, #tpu.memory_space<vmem>>, %arg12: memref<512x128xbf16, #tpu.memory_space<vmem>>, %arg13: memref<1x128xf32, #tpu.memory_space<vmem>>, %arg14: memref<1x64x128xf32, #tpu.memory_space<vmem>>, %arg15: memref<64x384xbf16, #tpu.memory_space<vmem>>, %arg16: memref<64x128xbf16, #tpu.memory_space<vmem>>) attributes {dimension_semantics = [#tpu.dimension_semantics<parallel>], iteration_bounds = array<i64: 2>, scalar_prefetch = 0 : i64, scratch_operands = 2 : i64, tpu.core_type = #tpu.core_type<tc>, window_params = [{transform_indices = @transform_0, window_bounds = array<i64: 1, 64, 128>}, {pipeline_mode = #tpu.pipeline_mode<synchronous>, transform_indices = @transform_1, window_bounds = array<i64: 1, 128>}, {pipeline_mode = #tpu.pipeline_mode<synchronous>, transform_indices = @transform_2, window_bounds = array<i64: 1, 128>}, {pipeline_mode = #tpu.pipeline_mode<synchronous>, transform_indices = @transform_3, window_bounds = array<i64: 128, 384>}, {pipeline_mode = #tpu.pipeline_mode<synchronous>, transform_indices = @transform_4, window_bounds = array<i64: 1, 384>}, {pipeline_mode = #tpu.pipeline_mode<synchronous>, transform_indices = @transform_5, window_bounds = array<i64: 128, 128>}, {pipeline_mode = #tpu.pipeline_mode<synchronous>, transform_indices = @transform_6, window_bounds = array<i64: 1, 128>}, {pipeline_mode = #tpu.pipeline_mode<synchronous>, transform_indices = @transform_7, window_bounds = array<i64: 1, 128>}, {pipeline_mode = #tpu.pipeline_mode<synchronous>, transform_indices = @transform_8, window_bounds = array<i64: 1, 128>}, {pipeline_mode = #tpu.pipeline_mode<synchronous>, transform_indices = @transform_9, window_bounds = array<i64: 128, 512>}, {pipeline_mode = #tpu.pipeline_mode<synchronous>, transform_indices = @transform_10, window_bounds = array<i64: 1, 512>}, {pipeline_mode = #tpu.pipeline_mode<synchronous>, transform_indices = @transform_11, window_bounds = array<i64: 512, 128>}, {pipeline_mode = #tpu.pipeline_mode<synchronous>, transform_indices = @transform_12, window_bounds = array<i64: 1, 128>}, {transform_indices = @transform_13, window_bounds = array<i64: 1, 64, 128>}]} {
    %c0 = arith.constant 0 : index
    %c0_0 = arith.constant 0 : index
    %c0_1 = arith.constant 0 : index
    %0 = vector.load %arg1[%c0, %c0_0, %c0_1] : memref<1x64x128xf32, #tpu.memory_space<vmem>>, vector<1x64x128xf32>
    %1 = vector.shape_cast %0 : vector<1x64x128xf32> to vector<64x128xf32>
    %c0_2 = arith.constant 0 : index
    %c0_3 = arith.constant 0 : index
    %2 = vector.load %arg2[%c0_2, %c0_3] : memref<1x128xf32, #tpu.memory_space<vmem>>, vector<1x128xf32>
    %c0_4 = arith.constant 0 : index
    %c0_5 = arith.constant 0 : index
    %3 = vector.load %arg3[%c0_4, %c0_5] : memref<1x128xf32, #tpu.memory_space<vmem>>, vector<1x128xf32>
    %cst = arith.constant dense<0.000000e+00> : vector<64xf32>
    %4 = vector.multi_reduction <add>, %1, %cst [1] : vector<64x128xf32> to vector<64xf32>
    %5 = vector.shape_cast %4 : vector<64xf32> to vector<64x1xf32>
    %cst_6 = arith.constant 1.280000e+02 : f32
    %6 = vector.broadcast %cst_6 : f32 to vector<64x1xf32>
    %7 = arith.divf %5, %6 : vector<64x1xf32>
    %8 = vector.broadcast %7 : vector<64x1xf32> to vector<64x128xf32>
    %9 = arith.subf %1, %8 : vector<64x128xf32>
    %10 = arith.mulf %9, %9 : vector<64x128xf32>
    %cst_7 = arith.constant dense<0.000000e+00> : vector<64xf32>
    %11 = vector.multi_reduction <add>, %10, %cst_7 [1] : vector<64x128xf32> to vector<64xf32>
    %12 = vector.shape_cast %11 : vector<64xf32> to vector<64x1xf32>
    %cst_8 = arith.constant 1.280000e+02 : f32
    %13 = vector.broadcast %cst_8 : f32 to vector<64x1xf32>
    %14 = arith.divf %12, %13 : vector<64x1xf32>
    %15 = vector.broadcast %7 : vector<64x1xf32> to vector<64x128xf32>
    %16 = arith.subf %1, %15 : vector<64x128xf32>
    %cst_9 = arith.constant 9.99999974E-6 : f32
    %17 = vector.broadcast %cst_9 : f32 to vector<64x1xf32>
    %18 = arith.addf %14, %17 : vector<64x1xf32>
    %19 = math.rsqrt %18 : vector<64x1xf32>
    %20 = vector.broadcast %19 : vector<64x1xf32> to vector<64x128xf32>
    %21 = arith.mulf %16, %20 : vector<64x128xf32>
    %22 = vector.broadcast %2 : vector<1x128xf32> to vector<64x128xf32>
    %23 = arith.mulf %21, %22 : vector<64x128xf32>
    %24 = vector.broadcast %3 : vector<1x128xf32> to vector<64x128xf32>
    %25 = arith.addf %23, %24 : vector<64x128xf32>
    %26 = arith.truncf %25 : vector<64x128xf32> to vector<64x128xbf16>
    %c0_10 = arith.constant 0 : index
    %c0_11 = arith.constant 0 : index
    %27 = vector.load %arg4[%c0_10, %c0_11] : memref<128x384xbf16, #tpu.memory_space<vmem>>, vector<128x128xbf16>
    %cst_12 = arith.constant dense<0.000000e+00> : vector<64x128xf32>
    %28 = tpu.matmul %26, %27, %cst_12 {dimension_numbers = #tpu.dot_dimension_numbers<[1], [0], [0], [1], [0, 0, 1, 1], [], []>} : vector<64x128xbf16>, vector<128x128xbf16>, vector<64x128xf32> -> vector<64x128xf32>
    %c0_13 = arith.constant 0 : index
    %c0_14 = arith.constant 0 : index
    %29 = vector.load %arg5[%c0_13, %c0_14] : memref<1x384xf32, #tpu.memory_space<vmem>>, vector<1x128xf32>
    %30 = vector.broadcast %29 : vector<1x128xf32> to vector<64x128xf32>
    %31 = arith.addf %28, %30 : vector<64x128xf32>
    %32 = arith.truncf %31 : vector<64x128xf32> to vector<64x128xbf16>
    %c0_15 = arith.constant 0 : index
    %c0_16 = arith.constant 0 : index
    %33 = vector.load %arg15[%c0_15, %c0_16] : memref<64x384xbf16, #tpu.memory_space<vmem>>, vector<64x128xbf16>
    tpu.vector_store %arg15[%c0_15, %c0_16], %32 {strides = array<i32>} : memref<64x384xbf16, #tpu.memory_space<vmem>>, vector<64x128xbf16>,
    %c0_17 = arith.constant 0 : index
    %c128 = arith.constant 128 : index
    %34 = vector.load %arg4[%c0_17, %c128] : memref<128x384xbf16, #tpu.memory_space<vmem>>, vector<128x128xbf16>
    %cst_18 = arith.constant dense<0.000000e+00> : vector<64x128xf32>
    %35 = tpu.matmul %26, %34, %cst_18 {dimension_numbers = #tpu.dot_dimension_numbers<[1], [0], [0], [1], [0, 0, 1, 1], [], []>} : vector<64x128xbf16>, vector<128x128xbf16>, vector<64x128xf32> -> vector<64x128xf32>
    %c0_19 = arith.constant 0 : index
    %c128_20 = arith.constant 128 : index
    %36 = vector.load %arg5[%c0_19, %c128_20] : memref<1x384xf32, #tpu.memory_space<vmem>>, vector<1x128xf32>
    %37 = vector.broadcast %36 : vector<1x128xf32> to vector<64x128xf32>
    %38 = arith.addf %35, %37 : vector<64x128xf32>
    %39 = arith.truncf %38 : vector<64x128xf32> to vector<64x128xbf16>
    %c0_21 = arith.constant 0 : index
    %c128_22 = arith.constant 128 : index
    %40 = vector.load %arg15[%c0_21, %c128_22] : memref<64x384xbf16, #tpu.memory_space<vmem>>, vector<64x128xbf16>
    tpu.vector_store %arg15[%c0_21, %c128_22], %39 {strides = array<i32>} : memref<64x384xbf16, #tpu.memory_space<vmem>>, vector<64x128xbf16>,
    %c0_23 = arith.constant 0 : index
    %c256 = arith.constant 256 : index
    %41 = vector.load %arg4[%c0_23, %c256] : memref<128x384xbf16, #tpu.memory_space<vmem>>, vector<128x128xbf16>
    %cst_24 = arith.constant dense<0.000000e+00> : vector<64x128xf32>
    %42 = tpu.matmul %26, %41, %cst_24 {dimension_numbers = #tpu.dot_dimension_numbers<[1], [0], [0], [1], [0, 0, 1, 1], [], []>} : vector<64x128xbf16>, vector<128x128xbf16>, vector<64x128xf32> -> vector<64x128xf32>
    %c0_25 = arith.constant 0 : index
    %c256_26 = arith.constant 256 : index
    %43 = vector.load %arg5[%c0_25, %c256_26] : memref<1x384xf32, #tpu.memory_space<vmem>>, vector<1x128xf32>
    %44 = vector.broadcast %43 : vector<1x128xf32> to vector<64x128xf32>
    %45 = arith.addf %42, %44 : vector<64x128xf32>
    %46 = arith.truncf %45 : vector<64x128xf32> to vector<64x128xbf16>
    %c0_27 = arith.constant 0 : index
    %c256_28 = arith.constant 256 : index
    %47 = vector.load %arg15[%c0_27, %c256_28] : memref<64x384xbf16, #tpu.memory_space<vmem>>, vector<64x128xbf16>
    tpu.vector_store %arg15[%c0_27, %c256_28], %46 {strides = array<i32>} : memref<64x384xbf16, #tpu.memory_space<vmem>>, vector<64x128xbf16>,
    %48 = tpu.iota {dimensions = array<i32: 0>} : vector<32x16xi32>
    %c0_i32 = arith.constant 0 : i32
    %c2_i32 = arith.constant 2 : i32
    %49 = arith.addi %c0_i32, %c2_i32 : i32
    %c1_i32 = arith.constant 1 : i32
    scf.for %arg17 = %c0_i32 to %49 step %c1_i32  : i32 {
      %c1_i32_34 = arith.constant 1 : i32
      %51 = arith.muli %arg17, %c1_i32_34 : i32
      %c0_i32_35 = arith.constant 0 : i32
      %52 = arith.addi %c0_i32_35, %51 : i32
      %c32_i32 = arith.constant 32 : i32
      %53 = arith.muli %52, %c32_i32 : i32
      %54 = tpu.assume_multiple %53, 32 : i32
      %55 = arith.index_cast %54 : i32 to index
      %c0_36 = arith.constant 0 : index
      %56 = vector.load %arg15[%55, %c0_36] : memref<64x384xbf16, #tpu.memory_space<vmem>>, vector<32x32xbf16>
      %cst_37 = arith.constant -1.000000e+30 : f32
      %57 = vector.broadcast %cst_37 : f32 to vector<32x1xf32>
      %cst_38 = arith.constant 0.000000e+00 : f32
      %58 = vector.broadcast %cst_38 : f32 to vector<32x1xf32>
      %cst_39 = arith.constant 0.000000e+00 : f32
      %59 = vector.broadcast %cst_39 : f32 to vector<32x32xf32>
      %c0_i32_40 = arith.constant 0 : i32
      %c2_i32_41 = arith.constant 2 : i32
      %60 = arith.addi %c0_i32_40, %c2_i32_41 : i32
      %c1_i32_42 = arith.constant 1 : i32
      %61:3 = scf.for %arg18 = %c0_i32_40 to %60 step %c1_i32_42 iter_args(%arg19 = %57, %arg20 = %58, %arg21 = %59) -> (vector<32x1xf32>, vector<32x1xf32>, vector<32x32xf32>)  : i32 {
        %c16_i32 = arith.constant 16 : i32
        %107 = arith.muli %arg18, %c16_i32 : i32
        %108 = tpu.assume_multiple %107, 16 : i32
        %109 = arith.addi %54, %108 : i32
        %110 = arith.index_cast %109 : i32 to index
        %c128_69 = arith.constant 128 : index
        %111 = vector.load %arg15[%110, %c128_69] : memref<64x384xbf16, #tpu.memory_space<vmem>>, vector<16x32xbf16>
        %112 = arith.addi %54, %108 : i32
        %113 = arith.index_cast %112 : i32 to index
        %c256_70 = arith.constant 256 : index
        %114 = vector.load %arg15[%113, %c256_70] : memref<64x384xbf16, #tpu.memory_space<vmem>>, vector<16x32xbf16>
        %cst_71 = arith.constant dense<0.000000e+00> : vector<32x16xf32>
        %115 = tpu.matmul %56, %111, %cst_71 {dimension_numbers = #tpu.dot_dimension_numbers<[1], [1], [0], [0], [0, 0, 1, 0], [], []>} : vector<32x32xbf16>, vector<16x32xbf16>, vector<32x16xf32> -> vector<32x16xf32>
        %116 = tpu.iota {dimensions = array<i32: 1>} : vector<32x16xi32>
        %117 = vector.broadcast %108 : i32 to vector<32x16xi32>
        %118 = arith.addi %117, %116 : vector<32x16xi32>
        %119 = arith.cmpi sle, %118, %48 : vector<32x16xi32>
        %cst_72 = arith.constant -1.000000e+30 : f32
        %120 = vector.broadcast %cst_72 : f32 to vector<32x16xf32>
        %121 = arith.select %119, %115, %120 : vector<32x16xi1>, vector<32x16xf32>
        %cst_73 = arith.constant dense<0xFF800000> : vector<32xf32>
        %122 = vector.multi_reduction <maximumf>, %121, %cst_73 [1] : vector<32x16xf32> to vector<32xf32>
        %123 = vector.shape_cast %122 : vector<32xf32> to vector<32x1xf32>
        %124 = arith.maximumf %arg19, %123 : vector<32x1xf32>
        %125 = arith.subf %arg19, %124 : vector<32x1xf32>
        %126 = math.exp %125 : vector<32x1xf32>
        %127 = vector.broadcast %124 : vector<32x1xf32> to vector<32x16xf32>
        %128 = arith.subf %121, %127 : vector<32x16xf32>
        %129 = math.exp %128 : vector<32x16xf32>
        %130 = arith.mulf %126, %arg20 : vector<32x1xf32>
        %cst_74 = arith.constant dense<0.000000e+00> : vector<32xf32>
        %131 = vector.multi_reduction <add>, %129, %cst_74 [1] : vector<32x16xf32> to vector<32xf32>
        %132 = vector.shape_cast %131 : vector<32xf32> to vector<32x1xf32>
        %133 = arith.addf %130, %132 : vector<32x1xf32>
        %134 = vector.broadcast %126 : vector<32x1xf32> to vector<32x32xf32>
        %135 = arith.mulf %134, %arg21 : vector<32x32xf32>
        %136 = arith.truncf %129 : vector<32x16xf32> to vector<32x16xbf16>
        %cst_75 = arith.constant dense<0.000000e+00> : vector<32x32xf32>
        %137 = tpu.matmul %136, %114, %cst_75 {dimension_numbers = #tpu.dot_dimension_numbers<[1], [0], [0], [1], [0, 0, 1, 1], [], []>} : vector<32x16xbf16>, vector<16x32xbf16>, vector<32x32xf32> -> vector<32x32xf32>
        %138 = arith.addf %135, %137 : vector<32x32xf32>
        scf.yield %124, %133, %138 : vector<32x1xf32>, vector<32x1xf32>, vector<32x32xf32>
      }
      %c2_i32_43 = arith.constant 2 : i32
      %62 = tpu.reciprocal %61#1 {approx = true} : vector<32x1xf32> -> vector<32x1xf32>
      %63 = vector.broadcast %62 : vector<32x1xf32> to vector<32x32xf32>
      %64 = arith.mulf %61#2, %63 : vector<32x32xf32>
      %65 = arith.truncf %64 : vector<32x32xf32> to vector<32x32xbf16>
      %66 = arith.index_cast %54 : i32 to index
      %c0_44 = arith.constant 0 : index
      %67 = vector.load %arg16[%66, %c0_44] : memref<64x128xbf16, #tpu.memory_space<vmem>>, vector<32x32xbf16>
      tpu.vector_store %arg16[%66, %c0_44], %65 {strides = array<i32>} : memref<64x128xbf16, #tpu.memory_space<vmem>>, vector<32x32xbf16>,
      %68 = arith.index_cast %54 : i32 to index
      %c32 = arith.constant 32 : index
      %69 = vector.load %arg15[%68, %c32] : memref<64x384xbf16, #tpu.memory_space<vmem>>, vector<32x32xbf16>
      %cst_45 = arith.constant -1.000000e+30 : f32
      %70 = vector.broadcast %cst_45 : f32 to vector<32x1xf32>
      %cst_46 = arith.constant 0.000000e+00 : f32
      %71 = vector.broadcast %cst_46 : f32 to vector<32x1xf32>
      %cst_47 = arith.constant 0.000000e+00 : f32
      %72 = vector.broadcast %cst_47 : f32 to vector<32x32xf32>
      %c0_i32_48 = arith.constant 0 : i32
      %c2_i32_49 = arith.constant 2 : i32
      %73 = arith.addi %c0_i32_48, %c2_i32_49 : i32
      %c1_i32_50 = arith.constant 1 : i32
      %74:3 = scf.for %arg18 = %c0_i32_48 to %73 step %c1_i32_50 iter_args(%arg19 = %70, %arg20 = %71, %arg21 = %72) -> (vector<32x1xf32>, vector<32x1xf32>, vector<32x32xf32>)  : i32 {
        %c16_i32 = arith.constant 16 : i32
        %107 = arith.muli %arg18, %c16_i32 : i32
        %108 = tpu.assume_multiple %107, 16 : i32
        %109 = arith.addi %54, %108 : i32
        %110 = arith.index_cast %109 : i32 to index
        %c160 = arith.constant 160 : index
        %111 = vector.load %arg15[%110, %c160] : memref<64x384xbf16, #tpu.memory_space<vmem>>, vector<16x32xbf16>
        %112 = arith.addi %54, %108 : i32
        %113 = arith.index_cast %112 : i32 to index
        %c288 = arith.constant 288 : index
        %114 = vector.load %arg15[%113, %c288] : memref<64x384xbf16, #tpu.memory_space<vmem>>, vector<16x32xbf16>
        %cst_69 = arith.constant dense<0.000000e+00> : vector<32x16xf32>
        %115 = tpu.matmul %69, %111, %cst_69 {dimension_numbers = #tpu.dot_dimension_numbers<[1], [1], [0], [0], [0, 0, 1, 0], [], []>} : vector<32x32xbf16>, vector<16x32xbf16>, vector<32x16xf32> -> vector<32x16xf32>
        %116 = tpu.iota {dimensions = array<i32: 1>} : vector<32x16xi32>
        %117 = vector.broadcast %108 : i32 to vector<32x16xi32>
        %118 = arith.addi %117, %116 : vector<32x16xi32>
        %119 = arith.cmpi sle, %118, %48 : vector<32x16xi32>
        %cst_70 = arith.constant -1.000000e+30 : f32
        %120 = vector.broadcast %cst_70 : f32 to vector<32x16xf32>
        %121 = arith.select %119, %115, %120 : vector<32x16xi1>, vector<32x16xf32>
        %cst_71 = arith.constant dense<0xFF800000> : vector<32xf32>
        %122 = vector.multi_reduction <maximumf>, %121, %cst_71 [1] : vector<32x16xf32> to vector<32xf32>
        %123 = vector.shape_cast %122 : vector<32xf32> to vector<32x1xf32>
        %124 = arith.maximumf %arg19, %123 : vector<32x1xf32>
        %125 = arith.subf %arg19, %124 : vector<32x1xf32>
        %126 = math.exp %125 : vector<32x1xf32>
        %127 = vector.broadcast %124 : vector<32x1xf32> to vector<32x16xf32>
        %128 = arith.subf %121, %127 : vector<32x16xf32>
        %129 = math.exp %128 : vector<32x16xf32>
        %130 = arith.mulf %126, %arg20 : vector<32x1xf32>
        %cst_72 = arith.constant dense<0.000000e+00> : vector<32xf32>
        %131 = vector.multi_reduction <add>, %129, %cst_72 [1] : vector<32x16xf32> to vector<32xf32>
        %132 = vector.shape_cast %131 : vector<32xf32> to vector<32x1xf32>
        %133 = arith.addf %130, %132 : vector<32x1xf32>
        %134 = vector.broadcast %126 : vector<32x1xf32> to vector<32x32xf32>
        %135 = arith.mulf %134, %arg21 : vector<32x32xf32>
        %136 = arith.truncf %129 : vector<32x16xf32> to vector<32x16xbf16>
        %cst_73 = arith.constant dense<0.000000e+00> : vector<32x32xf32>
        %137 = tpu.matmul %136, %114, %cst_73 {dimension_numbers = #tpu.dot_dimension_numbers<[1], [0], [0], [1], [0, 0, 1, 1], [], []>} : vector<32x16xbf16>, vector<16x32xbf16>, vector<32x32xf32> -> vector<32x32xf32>
        %138 = arith.addf %135, %137 : vector<32x32xf32>
        scf.yield %124, %133, %138 : vector<32x1xf32>, vector<32x1xf32>, vector<32x32xf32>
      }
      %c2_i32_51 = arith.constant 2 : i32
      %75 = tpu.reciprocal %74#1 {approx = true} : vector<32x1xf32> -> vector<32x1xf32>
      %76 = vector.broadcast %75 : vector<32x1xf32> to vector<32x32xf32>
      %77 = arith.mulf %74#2, %76 : vector<32x32xf32>
      %78 = arith.truncf %77 : vector<32x32xf32> to vector<32x32xbf16>
      %79 = arith.index_cast %54 : i32 to index
      %c32_52 = arith.constant 32 : index
      %80 = vector.load %arg16[%79, %c32_52] : memref<64x128xbf16, #tpu.memory_space<vmem>>, vector<32x32xbf16>
      tpu.vector_store %arg16[%79, %c32_52], %78 {strides = array<i32>} : memref<64x128xbf16, #tpu.memory_space<vmem>>, vector<32x32xbf16>,
      %81 = arith.index_cast %54 : i32 to index
      %c64 = arith.constant 64 : index
      %82 = vector.load %arg15[%81, %c64] : memref<64x384xbf16, #tpu.memory_space<vmem>>, vector<32x32xbf16>
      %cst_53 = arith.constant -1.000000e+30 : f32
      %83 = vector.broadcast %cst_53 : f32 to vector<32x1xf32>
      %cst_54 = arith.constant 0.000000e+00 : f32
      %84 = vector.broadcast %cst_54 : f32 to vector<32x1xf32>
      %cst_55 = arith.constant 0.000000e+00 : f32
      %85 = vector.broadcast %cst_55 : f32 to vector<32x32xf32>
      %c0_i32_56 = arith.constant 0 : i32
      %c2_i32_57 = arith.constant 2 : i32
      %86 = arith.addi %c0_i32_56, %c2_i32_57 : i32
      %c1_i32_58 = arith.constant 1 : i32
      %87:3 = scf.for %arg18 = %c0_i32_56 to %86 step %c1_i32_58 iter_args(%arg19 = %83, %arg20 = %84, %arg21 = %85) -> (vector<32x1xf32>, vector<32x1xf32>, vector<32x32xf32>)  : i32 {
        %c16_i32 = arith.constant 16 : i32
        %107 = arith.muli %arg18, %c16_i32 : i32
        %108 = tpu.assume_multiple %107, 16 : i32
        %109 = arith.addi %54, %108 : i32
        %110 = arith.index_cast %109 : i32 to index
        %c192 = arith.constant 192 : index
        %111 = vector.load %arg15[%110, %c192] : memref<64x384xbf16, #tpu.memory_space<vmem>>, vector<16x32xbf16>
        %112 = arith.addi %54, %108 : i32
        %113 = arith.index_cast %112 : i32 to index
        %c320 = arith.constant 320 : index
        %114 = vector.load %arg15[%113, %c320] : memref<64x384xbf16, #tpu.memory_space<vmem>>, vector<16x32xbf16>
        %cst_69 = arith.constant dense<0.000000e+00> : vector<32x16xf32>
        %115 = tpu.matmul %82, %111, %cst_69 {dimension_numbers = #tpu.dot_dimension_numbers<[1], [1], [0], [0], [0, 0, 1, 0], [], []>} : vector<32x32xbf16>, vector<16x32xbf16>, vector<32x16xf32> -> vector<32x16xf32>
        %116 = tpu.iota {dimensions = array<i32: 1>} : vector<32x16xi32>
        %117 = vector.broadcast %108 : i32 to vector<32x16xi32>
        %118 = arith.addi %117, %116 : vector<32x16xi32>
        %119 = arith.cmpi sle, %118, %48 : vector<32x16xi32>
        %cst_70 = arith.constant -1.000000e+30 : f32
        %120 = vector.broadcast %cst_70 : f32 to vector<32x16xf32>
        %121 = arith.select %119, %115, %120 : vector<32x16xi1>, vector<32x16xf32>
        %cst_71 = arith.constant dense<0xFF800000> : vector<32xf32>
        %122 = vector.multi_reduction <maximumf>, %121, %cst_71 [1] : vector<32x16xf32> to vector<32xf32>
        %123 = vector.shape_cast %122 : vector<32xf32> to vector<32x1xf32>
        %124 = arith.maximumf %arg19, %123 : vector<32x1xf32>
        %125 = arith.subf %arg19, %124 : vector<32x1xf32>
        %126 = math.exp %125 : vector<32x1xf32>
        %127 = vector.broadcast %124 : vector<32x1xf32> to vector<32x16xf32>
        %128 = arith.subf %121, %127 : vector<32x16xf32>
        %129 = math.exp %128 : vector<32x16xf32>
        %130 = arith.mulf %126, %arg20 : vector<32x1xf32>
        %cst_72 = arith.constant dense<0.000000e+00> : vector<32xf32>
        %131 = vector.multi_reduction <add>, %129, %cst_72 [1] : vector<32x16xf32> to vector<32xf32>
        %132 = vector.shape_cast %131 : vector<32xf32> to vector<32x1xf32>
        %133 = arith.addf %130, %132 : vector<32x1xf32>
        %134 = vector.broadcast %126 : vector<32x1xf32> to vector<32x32xf32>
        %135 = arith.mulf %134, %arg21 : vector<32x32xf32>
        %136 = arith.truncf %129 : vector<32x16xf32> to vector<32x16xbf16>
        %cst_73 = arith.constant dense<0.000000e+00> : vector<32x32xf32>
        %137 = tpu.matmul %136, %114, %cst_73 {dimension_numbers = #tpu.dot_dimension_numbers<[1], [0], [0], [1], [0, 0, 1, 1], [], []>} : vector<32x16xbf16>, vector<16x32xbf16>, vector<32x32xf32> -> vector<32x32xf32>
        %138 = arith.addf %135, %137 : vector<32x32xf32>
        scf.yield %124, %133, %138 : vector<32x1xf32>, vector<32x1xf32>, vector<32x32xf32>
      }
      %c2_i32_59 = arith.constant 2 : i32
      %88 = tpu.reciprocal %87#1 {approx = true} : vector<32x1xf32> -> vector<32x1xf32>
      %89 = vector.broadcast %88 : vector<32x1xf32> to vector<32x32xf32>
      %90 = arith.mulf %87#2, %89 : vector<32x32xf32>
      %91 = arith.truncf %90 : vector<32x32xf32> to vector<32x32xbf16>
      %92 = arith.index_cast %54 : i32 to index
      %c64_60 = arith.constant 64 : index
      %93 = vector.load %arg16[%92, %c64_60] : memref<64x128xbf16, #tpu.memory_space<vmem>>, vector<32x32xbf16>
      tpu.vector_store %arg16[%92, %c64_60], %91 {strides = array<i32>} : memref<64x128xbf16, #tpu.memory_space<vmem>>, vector<32x32xbf16>,
      %94 = arith.index_cast %54 : i32 to index
      %c96 = arith.constant 96 : index
      %95 = vector.load %arg15[%94, %c96] : memref<64x384xbf16, #tpu.memory_space<vmem>>, vector<32x32xbf16>
      %cst_61 = arith.constant -1.000000e+30 : f32
      %96 = vector.broadcast %cst_61 : f32 to vector<32x1xf32>
      %cst_62 = arith.constant 0.000000e+00 : f32
      %97 = vector.broadcast %cst_62 : f32 to vector<32x1xf32>
      %cst_63 = arith.constant 0.000000e+00 : f32
      %98 = vector.broadcast %cst_63 : f32 to vector<32x32xf32>
      %c0_i32_64 = arith.constant 0 : i32
      %c2_i32_65 = arith.constant 2 : i32
      %99 = arith.addi %c0_i32_64, %c2_i32_65 : i32
      %c1_i32_66 = arith.constant 1 : i32
      %100:3 = scf.for %arg18 = %c0_i32_64 to %99 step %c1_i32_66 iter_args(%arg19 = %96, %arg20 = %97, %arg21 = %98) -> (vector<32x1xf32>, vector<32x1xf32>, vector<32x32xf32>)  : i32 {
        %c16_i32 = arith.constant 16 : i32
        %107 = arith.muli %arg18, %c16_i32 : i32
        %108 = tpu.assume_multiple %107, 16 : i32
        %109 = arith.addi %54, %108 : i32
        %110 = arith.index_cast %109 : i32 to index
        %c224 = arith.constant 224 : index
        %111 = vector.load %arg15[%110, %c224] : memref<64x384xbf16, #tpu.memory_space<vmem>>, vector<16x32xbf16>
        %112 = arith.addi %54, %108 : i32
        %113 = arith.index_cast %112 : i32 to index
        %c352 = arith.constant 352 : index
        %114 = vector.load %arg15[%113, %c352] : memref<64x384xbf16, #tpu.memory_space<vmem>>, vector<16x32xbf16>
        %cst_69 = arith.constant dense<0.000000e+00> : vector<32x16xf32>
        %115 = tpu.matmul %95, %111, %cst_69 {dimension_numbers = #tpu.dot_dimension_numbers<[1], [1], [0], [0], [0, 0, 1, 0], [], []>} : vector<32x32xbf16>, vector<16x32xbf16>, vector<32x16xf32> -> vector<32x16xf32>
        %116 = tpu.iota {dimensions = array<i32: 1>} : vector<32x16xi32>
        %117 = vector.broadcast %108 : i32 to vector<32x16xi32>
        %118 = arith.addi %117, %116 : vector<32x16xi32>
        %119 = arith.cmpi sle, %118, %48 : vector<32x16xi32>
        %cst_70 = arith.constant -1.000000e+30 : f32
        %120 = vector.broadcast %cst_70 : f32 to vector<32x16xf32>
        %121 = arith.select %119, %115, %120 : vector<32x16xi1>, vector<32x16xf32>
        %cst_71 = arith.constant dense<0xFF800000> : vector<32xf32>
        %122 = vector.multi_reduction <maximumf>, %121, %cst_71 [1] : vector<32x16xf32> to vector<32xf32>
        %123 = vector.shape_cast %122 : vector<32xf32> to vector<32x1xf32>
        %124 = arith.maximumf %arg19, %123 : vector<32x1xf32>
        %125 = arith.subf %arg19, %124 : vector<32x1xf32>
        %126 = math.exp %125 : vector<32x1xf32>
        %127 = vector.broadcast %124 : vector<32x1xf32> to vector<32x16xf32>
        %128 = arith.subf %121, %127 : vector<32x16xf32>
        %129 = math.exp %128 : vector<32x16xf32>
        %130 = arith.mulf %126, %arg20 : vector<32x1xf32>
        %cst_72 = arith.constant dense<0.000000e+00> : vector<32xf32>
        %131 = vector.multi_reduction <add>, %129, %cst_72 [1] : vector<32x16xf32> to vector<32xf32>
        %132 = vector.shape_cast %131 : vector<32xf32> to vector<32x1xf32>
        %133 = arith.addf %130, %132 : vector<32x1xf32>
        %134 = vector.broadcast %126 : vector<32x1xf32> to vector<32x32xf32>
        %135 = arith.mulf %134, %arg21 : vector<32x32xf32>
        %136 = arith.truncf %129 : vector<32x16xf32> to vector<32x16xbf16>
        %cst_73 = arith.constant dense<0.000000e+00> : vector<32x32xf32>
        %137 = tpu.matmul %136, %114, %cst_73 {dimension_numbers = #tpu.dot_dimension_numbers<[1], [0], [0], [1], [0, 0, 1, 1], [], []>} : vector<32x16xbf16>, vector<16x32xbf16>, vector<32x32xf32> -> vector<32x32xf32>
        %138 = arith.addf %135, %137 : vector<32x32xf32>
        scf.yield %124, %133, %138 : vector<32x1xf32>, vector<32x1xf32>, vector<32x32xf32>
      }
      %c2_i32_67 = arith.constant 2 : i32
      %101 = tpu.reciprocal %100#1 {approx = true} : vector<32x1xf32> -> vector<32x1xf32>
      %102 = vector.broadcast %101 : vector<32x1xf32> to vector<32x32xf32>
      %103 = arith.mulf %100#2, %102 : vector<32x32xf32>
      %104 = arith.truncf %103 : vector<32x32xf32> to vector<32x32xbf16>
      %105 = arith.index_cast %54 : i32 to index
      %c96_68 = arith.constant 96 : index
      %106 = vector.load %arg16[%105, %c96_68] : memref<64x128xbf16, #tpu.memory_space<vmem>>, vector<32x32xbf16>
      tpu.vector_store %arg16[%105, %c96_68], %104 {strides = array<i32>} : memref<64x128xbf16, #tpu.memory_space<vmem>>, vector<32x32xbf16>,
    }
    %c2_i32_29 = arith.constant 2 : i32
    %c0_i32_30 = arith.constant 0 : i32
    %c2_i32_31 = arith.constant 2 : i32
    %50 = arith.addi %c0_i32_30, %c2_i32_31 : i32
    %c1_i32_32 = arith.constant 1 : i32
    scf.for %arg17 = %c0_i32_30 to %50 step %c1_i32_32  : i32 {
      %c1_i32_34 = arith.constant 1 : i32
      %51 = arith.muli %arg17, %c1_i32_34 : i32
      %c0_i32_35 = arith.constant 0 : i32
      %52 = arith.addi %c0_i32_35, %51 : i32
      %c32_i32 = arith.constant 32 : i32
      %53 = arith.muli %52, %c32_i32 : i32
      %54 = tpu.assume_multiple %53, 32 : i32
      %c0_36 = arith.constant 0 : index
      %55 = arith.index_cast %54 : i32 to index
      %c0_37 = arith.constant 0 : index
      %56 = vector.load %arg1[%c0_36, %55, %c0_37] : memref<1x64x128xf32, #tpu.memory_space<vmem>>, vector<1x32x128xf32>
      %57 = vector.shape_cast %56 : vector<1x32x128xf32> to vector<32x128xf32>
      %58 = arith.index_cast %54 : i32 to index
      %c0_38 = arith.constant 0 : index
      %59 = vector.load %arg16[%58, %c0_38] : memref<64x128xbf16, #tpu.memory_space<vmem>>, vector<32x128xbf16>
      %c0_39 = arith.constant 0 : index
      %c0_40 = arith.constant 0 : index
      %60 = vector.load %arg6[%c0_39, %c0_40] : memref<128x128xbf16, #tpu.memory_space<vmem>>, vector<128x128xbf16>
      %cst_41 = arith.constant dense<0.000000e+00> : vector<32x128xf32>
      %61 = tpu.matmul %59, %60, %cst_41 {dimension_numbers = #tpu.dot_dimension_numbers<[1], [0], [0], [1], [0, 0, 1, 1], [], []>} : vector<32x128xbf16>, vector<128x128xbf16>, vector<32x128xf32> -> vector<32x128xf32>
      %62 = arith.addf %57, %61 : vector<32x128xf32>
      %c0_42 = arith.constant 0 : index
      %c0_43 = arith.constant 0 : index
      %63 = vector.load %arg7[%c0_42, %c0_43] : memref<1x128xf32, #tpu.memory_space<vmem>>, vector<1x128xf32>
      %64 = vector.broadcast %63 : vector<1x128xf32> to vector<32x128xf32>
      %65 = arith.addf %62, %64 : vector<32x128xf32>
      %c0_44 = arith.constant 0 : index
      %c0_45 = arith.constant 0 : index
      %66 = vector.load %arg8[%c0_44, %c0_45] : memref<1x128xf32, #tpu.memory_space<vmem>>, vector<1x128xf32>
      %c0_46 = arith.constant 0 : index
      %c0_47 = arith.constant 0 : index
      %67 = vector.load %arg9[%c0_46, %c0_47] : memref<1x128xf32, #tpu.memory_space<vmem>>, vector<1x128xf32>
      %cst_48 = arith.constant dense<0.000000e+00> : vector<32xf32>
      %68 = vector.multi_reduction <add>, %65, %cst_48 [1] : vector<32x128xf32> to vector<32xf32>
      %69 = vector.shape_cast %68 : vector<32xf32> to vector<32x1xf32>
      %cst_49 = arith.constant 1.280000e+02 : f32
      %70 = vector.broadcast %cst_49 : f32 to vector<32x1xf32>
      %71 = arith.divf %69, %70 : vector<32x1xf32>
      %72 = vector.broadcast %71 : vector<32x1xf32> to vector<32x128xf32>
      %73 = arith.subf %65, %72 : vector<32x128xf32>
      %74 = arith.mulf %73, %73 : vector<32x128xf32>
      %cst_50 = arith.constant dense<0.000000e+00> : vector<32xf32>
      %75 = vector.multi_reduction <add>, %74, %cst_50 [1] : vector<32x128xf32> to vector<32xf32>
      %76 = vector.shape_cast %75 : vector<32xf32> to vector<32x1xf32>
      %cst_51 = arith.constant 1.280000e+02 : f32
      %77 = vector.broadcast %cst_51 : f32 to vector<32x1xf32>
      %78 = arith.divf %76, %77 : vector<32x1xf32>
      %79 = vector.broadcast %71 : vector<32x1xf32> to vector<32x128xf32>
      %80 = arith.subf %65, %79 : vector<32x128xf32>
      %cst_52 = arith.constant 9.99999974E-6 : f32
      %81 = vector.broadcast %cst_52 : f32 to vector<32x1xf32>
      %82 = arith.addf %78, %81 : vector<32x1xf32>
      %83 = math.rsqrt %82 : vector<32x1xf32>
      %84 = vector.broadcast %83 : vector<32x1xf32> to vector<32x128xf32>
      %85 = arith.mulf %80, %84 : vector<32x128xf32>
      %86 = vector.broadcast %66 : vector<1x128xf32> to vector<32x128xf32>
      %87 = arith.mulf %85, %86 : vector<32x128xf32>
      %88 = vector.broadcast %67 : vector<1x128xf32> to vector<32x128xf32>
      %89 = arith.addf %87, %88 : vector<32x128xf32>
      %90 = arith.truncf %89 : vector<32x128xf32> to vector<32x128xbf16>
      %c0_53 = arith.constant 0 : index
      %c0_54 = arith.constant 0 : index
      %91 = vector.load %arg10[%c0_53, %c0_54] : memref<128x512xbf16, #tpu.memory_space<vmem>>, vector<128x512xbf16>
      %cst_55 = arith.constant dense<0.000000e+00> : vector<32x512xf32>
      %92 = tpu.matmul %90, %91, %cst_55 {dimension_numbers = #tpu.dot_dimension_numbers<[1], [0], [0], [1], [0, 0, 1, 1], [], []>} : vector<32x128xbf16>, vector<128x512xbf16>, vector<32x512xf32> -> vector<32x512xf32>
      %c0_56 = arith.constant 0 : index
      %c0_57 = arith.constant 0 : index
      %93 = vector.load %arg11[%c0_56, %c0_57] : memref<1x512xf32, #tpu.memory_space<vmem>>, vector<1x512xf32>
      %94 = vector.broadcast %93 : vector<1x512xf32> to vector<32x512xf32>
      %95 = arith.addf %92, %94 : vector<32x512xf32>
      %cst_58 = arith.constant 5.000000e-01 : f32
      %96 = vector.broadcast %cst_58 : f32 to vector<32x512xf32>
      %97 = arith.mulf %96, %95 : vector<32x512xf32>
      %cst_59 = arith.constant 4.471500e-02 : f32
      %98 = vector.broadcast %cst_59 : f32 to vector<32x512xf32>
      %99 = arith.mulf %98, %95 : vector<32x512xf32>
      %100 = arith.mulf %99, %95 : vector<32x512xf32>
      %101 = arith.mulf %100, %95 : vector<32x512xf32>
      %102 = arith.addf %95, %101 : vector<32x512xf32>
      %cst_60 = arith.constant 0.797884583 : f32
      %103 = vector.broadcast %cst_60 : f32 to vector<32x512xf32>
      %104 = arith.mulf %103, %102 : vector<32x512xf32>
      %105 = math.tanh %104 : vector<32x512xf32>
      %cst_61 = arith.constant 1.000000e+00 : f32
      %106 = vector.broadcast %cst_61 : f32 to vector<32x512xf32>
      %107 = arith.addf %106, %105 : vector<32x512xf32>
      %108 = arith.mulf %97, %107 : vector<32x512xf32>
      %109 = arith.truncf %108 : vector<32x512xf32> to vector<32x512xbf16>
      %c0_62 = arith.constant 0 : index
      %c0_63 = arith.constant 0 : index
      %110 = vector.load %arg12[%c0_62, %c0_63] : memref<512x128xbf16, #tpu.memory_space<vmem>>, vector<512x128xbf16>
      %cst_64 = arith.constant dense<0.000000e+00> : vector<32x128xf32>
      %111 = tpu.matmul %109, %110, %cst_64 {dimension_numbers = #tpu.dot_dimension_numbers<[1], [0], [0], [1], [0, 0, 1, 1], [], []>} : vector<32x512xbf16>, vector<512x128xbf16>, vector<32x128xf32> -> vector<32x128xf32>
      %c0_65 = arith.constant 0 : index
      %c0_66 = arith.constant 0 : index
      %112 = vector.load %arg13[%c0_65, %c0_66] : memref<1x128xf32, #tpu.memory_space<vmem>>, vector<1x128xf32>
      %113 = vector.broadcast %112 : vector<1x128xf32> to vector<32x128xf32>
      %114 = arith.addf %111, %113 : vector<32x128xf32>
      %115 = arith.addf %65, %114 : vector<32x128xf32>
      %c0_67 = arith.constant 0 : index
      %116 = arith.index_cast %54 : i32 to index
      %c0_68 = arith.constant 0 : index
      %117 = vector.load %arg14[%c0_67, %116, %c0_68] : memref<1x64x128xf32, #tpu.memory_space<vmem>>, vector<1x32x128xf32>
      %118 = vector.shape_cast %117 : vector<1x32x128xf32> to vector<32x128xf32>
      %119 = vector.shape_cast %115 : vector<32x128xf32> to vector<1x32x128xf32>
      tpu.vector_store %arg14[%c0_67, %116, %c0_68], %119 {strides = array<i32>} : memref<1x64x128xf32, #tpu.memory_space<vmem>>, vector<1x32x128xf32>,
    }
    %c2_i32_33 = arith.constant 2 : i32
    return
  }
  func.func @transform_0(%arg0: i32) -> (i32, i32, i32) {
    %c0_i32 = arith.constant 0 : i32
    %c0_i32_0 = arith.constant 0 : i32
    %c0_i32_1 = arith.constant 0 : i32
    return %arg0, %c0_i32, %c0_i32_0 : i32, i32, i32
  }
  func.func @transform_1(%arg0: i32) -> (i32, i32) {
    %c0_i32 = arith.constant 0 : i32
    %c0_i32_0 = arith.constant 0 : i32
    %c0_i32_1 = arith.constant 0 : i32
    return %c0_i32, %c0_i32_0 : i32, i32
  }
  func.func @transform_2(%arg0: i32) -> (i32, i32) {
    %c0_i32 = arith.constant 0 : i32
    %c0_i32_0 = arith.constant 0 : i32
    %c0_i32_1 = arith.constant 0 : i32
    return %c0_i32, %c0_i32_0 : i32, i32
  }
  func.func @transform_3(%arg0: i32) -> (i32, i32) {
    %c0_i32 = arith.constant 0 : i32
    %c0_i32_0 = arith.constant 0 : i32
    %c0_i32_1 = arith.constant 0 : i32
    return %c0_i32, %c0_i32_0 : i32, i32
  }
  func.func @transform_4(%arg0: i32) -> (i32, i32) {
    %c0_i32 = arith.constant 0 : i32
    %c0_i32_0 = arith.constant 0 : i32
    %c0_i32_1 = arith.constant 0 : i32
    return %c0_i32, %c0_i32_0 : i32, i32
  }
  func.func @transform_5(%arg0: i32) -> (i32, i32) {
    %c0_i32 = arith.constant 0 : i32
    %c0_i32_0 = arith.constant 0 : i32
    %c0_i32_1 = arith.constant 0 : i32
    return %c0_i32, %c0_i32_0 : i32, i32
  }
  func.func @transform_6(%arg0: i32) -> (i32, i32) {
    %c0_i32 = arith.constant 0 : i32
    %c0_i32_0 = arith.constant 0 : i32
    %c0_i32_1 = arith.constant 0 : i32
    return %c0_i32, %c0_i32_0 : i32, i32
  }
  func.func @transform_7(%arg0: i32) -> (i32, i32) {
    %c0_i32 = arith.constant 0 : i32
    %c0_i32_0 = arith.constant 0 : i32
    %c0_i32_1 = arith.constant 0 : i32
    return %c0_i32, %c0_i32_0 : i32, i32
  }
  func.func @transform_8(%arg0: i32) -> (i32, i32) {
    %c0_i32 = arith.constant 0 : i32
    %c0_i32_0 = arith.constant 0 : i32
    %c0_i32_1 = arith.constant 0 : i32
    return %c0_i32, %c0_i32_0 : i32, i32
  }
  func.func @transform_9(%arg0: i32) -> (i32, i32) {
    %c0_i32 = arith.constant 0 : i32
    %c0_i32_0 = arith.constant 0 : i32
    %c0_i32_1 = arith.constant 0 : i32
    return %c0_i32, %c0_i32_0 : i32, i32
  }
  func.func @transform_10(%arg0: i32) -> (i32, i32) {
    %c0_i32 = arith.constant 0 : i32
    %c0_i32_0 = arith.constant 0 : i32
    %c0_i32_1 = arith.constant 0 : i32
    return %c0_i32, %c0_i32_0 : i32, i32
  }
  func.func @transform_11(%arg0: i32) -> (i32, i32) {
    %c0_i32 = arith.constant 0 : i32
    %c0_i32_0 = arith.constant 0 : i32
    %c0_i32_1 = arith.constant 0 : i32
    return %c0_i32, %c0_i32_0 : i32, i32
  }
  func.func @transform_12(%arg0: i32) -> (i32, i32) {
    %c0_i32 = arith.constant 0 : i32
    %c0_i32_0 = arith.constant 0 : i32
    %c0_i32_1 = arith.constant 0 : i32
    return %c0_i32, %c0_i32_0 : i32, i32
  }
  func.func @transform_13(%arg0: i32) -> (i32, i32, i32) {
    %c0_i32 = arith.constant 0 : i32
    %c0_i32_0 = arith.constant 0 : i32
    %c0_i32_1 = arith.constant 0 : i32
    return %arg0, %c0_i32, %c0_i32_0 : i32, i32, i32
  }
}

</mosaic_0001>

<llo_original>
// kernel: tpu_custom_call.1
$region0: #{tpu_custom_call.1}
  #allocation0 [shape = 'u32[]', space=smem, size = 0x4, offset = 0x4, fixed_abs, tag = 'smem constant byte address 0x4 - core index']
  #allocation1 [shape = 'u32[144,128]{1,0:T(1,128)}', space=vmem, size = 0x12000, scoped, tag = 'internal scratch']
  #allocation2 [shape = 'bf16[64,384]{1,0:T(16,128)(2,1)}', space=vmem, size = 0xc000, scoped, tag = 'scratch operand']
  #allocation3 [shape = 'bf16[64,128]{1,0:T(16,128)(2,1)}', space=vmem, size = 0x4000, scoped, tag = 'scratch operand']
  %s0 = inlined_call_operand.hbm [shape: f32[2,64,128], index: 0, kind: input, shape index: {}]
  %s1 = inlined_call_operand.hbm [shape: f32[1,128], index: 1, kind: input, shape index: {}]
  %s2 = inlined_call_operand.hbm [shape: f32[1,128], index: 2, kind: input, shape index: {}]
  %s3 = inlined_call_operand.hbm [shape: bf16[128,384], index: 3, kind: input, shape index: {}]
  %s4 = inlined_call_operand.hbm [shape: f32[1,384], index: 4, kind: input, shape index: {}]
  %s5 = inlined_call_operand.hbm [shape: bf16[128,128], index: 5, kind: input, shape index: {}]
  %s6 = inlined_call_operand.hbm [shape: f32[1,128], index: 6, kind: input, shape index: {}]
  %s7 = inlined_call_operand.hbm [shape: f32[1,128], index: 7, kind: input, shape index: {}]
  %s8 = inlined_call_operand.hbm [shape: f32[1,128], index: 8, kind: input, shape index: {}]
  %s9 = inlined_call_operand.hbm [shape: bf16[128,512], index: 9, kind: input, shape index: {}]
  %s10 = inlined_call_operand.hbm [shape: f32[1,512], index: 10, kind: input, shape index: {}]
  %s11 = inlined_call_operand.hbm [shape: bf16[512,128], index: 11, kind: input, shape index: {}]
  %s12 = inlined_call_operand.hbm [shape: f32[1,128], index: 12, kind: input, shape index: {}]
  %s13 = inlined_call_operand.hbm [shape: f32[2,64,128], index: 13, kind: output, shape index: {}]
  %s14 = sld [smem:[#allocation0]]
  $region179: #{tpu_custom_call.1} parent=0
    _
  %s16 = ssub.s32 1, %s14
  %s17 = scalar_select 0, %s16, %s14
  $region1: #{tpu_custom_call.1} parent=0
    #allocation4 [shape = 'u8[65536]{0}', space=vmem, size = 0x10000, scoped, tag = 'input window, operand 0']
    #allocation5 [shape = 's32[2]{0}', space=sflag, size = 0x8, scoped, tag = 'scoped memory for tpu_custom_call.1']
    #allocation6 [shape = 's32[2]{0}', space=sflag, size = 0x8, scoped, tag = 'scoped memory for tpu_custom_call.1']
    #allocation7 [shape = 'u8[512]{0}', space=vmem, size = 0x400, scoped, tag = 'input window, operand 1, single buffered']
    #allocation8 [shape = 's32[1]{0}', space=sflag, size = 0x4, scoped, tag = 'scoped memory for tpu_custom_call.1']
    #allocation9 [shape = 'u8[512]{0}', space=vmem, size = 0x400, scoped, tag = 'input window, operand 2, single buffered']
    #allocation10 [shape = 'u8[98304]{0}', space=vmem, size = 0x18000, scoped, tag = 'input window, operand 3, single buffered']
    #allocation11 [shape = 's32[1]{0}', space=sflag, size = 0x4, scoped, tag = 'scoped memory for tpu_custom_call.1']
    #allocation12 [shape = 'u8[1536]{0}', space=vmem, size = 0x800, scoped, tag = 'input window, operand 4, single buffered']
    #allocation13 [shape = 'u8[32768]{0}', space=vmem, size = 0x8000, scoped, tag = 'input window, operand 5, single buffered']
    #allocation14 [shape = 's32[1]{0}', space=sflag, size = 0x4, scoped, tag = 'scoped memory for tpu_custom_call.1']
    #allocation15 [shape = 'u8[512]{0}', space=vmem, size = 0x400, scoped, tag = 'input window, operand 6, single buffered']
    #allocation16 [shape = 'u8[512]{0}', space=vmem, size = 0x400, scoped, tag = 'input window, operand 7, single buffered']
    #allocation17 [shape = 's32[1]{0}', space=sflag, size = 0x4, scoped, tag = 'scoped memory for tpu_custom_call.1']
    #allocation18 [shape = 'u8[512]{0}', space=vmem, size = 0x400, scoped, tag = 'input window, operand 8, single buffered']
    #allocation19 [shape = 'u8[131072]{0}', space=vmem, size = 0x20000, scoped, tag = 'input window, operand 9, single buffered']
    #allocation20 [shape = 's32[1]{0}', space=sflag, size = 0x4, scoped, tag = 'scoped memory for tpu_custom_call.1']
    #allocation21 [shape = 'u8[2048]{0}', space=vmem, size = 0x800, scoped, tag = 'input window, operand 10, single buffered']
    #allocation22 [shape = 'u8[131072]{0}', space=vmem, size = 0x20000, scoped, tag = 'input window, operand 11, single buffered']
    #allocation23 [shape = 's32[1]{0}', space=sflag, size = 0x4, scoped, tag = 'scoped memory for tpu_custom_call.1']
    #allocation24 [shape = 'u8[512]{0}', space=vmem, size = 0x400, scoped, tag = 'input window, operand 12, single buffered']
    #allocation25 [shape = 'u8[65536]{0}', space=vmem, size = 0x10000, scoped, tag = 'output window, operand 0']
    %18 = vsyncpa [#allocation5], 0
    %s19 = scalar_lea.sflag [#allocation5], 1
    %20 = vsyncpa %s19, 0
    %21 = vsyncpa [#allocation8], 0
    %22 = vsyncpa [#allocation11], 0
    %23 = vsyncpa [#allocation14], 0
    %24 = vsyncpa [#allocation17], 0
    %25 = vsyncpa [#allocation20], 0
    %26 = vsyncpa [#allocation23], 0
    %27 = vsyncpa [#allocation6], 0
    %s28 = scalar_lea.sflag [#allocation6], 1
    %29 = vsyncpa %s28, 0
    loop: start=0, step=1, limit=4
    $region2: #{tpu_custom_call.1} parent=1 // loop_pre_header
      _
    $region3: #{tpu_custom_call.1} parent=1 // loop_header
      %s31 = sphi 0, %s35
      %p32 = scmp.ge.s32.totalorder %s31, 4
      %s41 = sphi 0, %s43
      %s44 = sphi 0, %s41
      %s45 = sphi 0, %s44
      %s61 = sphi 0, %s45
      %s65 = sphi 0, %s65
      %s67 = sphi 0, %s65
      %s68 = sphi 0, %s67
      %s82 = sphi 0, %s68
      %s86 = sphi 0, %s86
      %s88 = sphi 0, %s86
      %s89 = sphi 0, %s88
      %s103 = sphi 0, %s89
      %s107 = sphi 0, %s107
      %s109 = sphi 0, %s107
      %s110 = sphi 0, %s109
      %s124 = sphi 0, %s110
      %s128 = sphi 0, %s128
      %s130 = sphi 0, %s128
      %s131 = sphi 0, %s130
      %s145 = sphi 0, %s131
      %s149 = sphi 0, %s149
      %s151 = sphi 0, %s149
      %s152 = sphi 0, %s151
      %s166 = sphi 0, %s152
      %s170 = sphi 0, %s170
      %s172 = sphi 0, %s170
      %s173 = sphi 0, %s172
      %s187 = sphi 0, %s173
      %s191 = sphi 0, %s191
      %s193 = sphi 0, %s191
      %s194 = sphi 0, %s193
      %s208 = sphi 0, %s194
      %s212 = sphi 0, %s212
      %s214 = sphi 0, %s212
      %s215 = sphi 0, %s214
      %s229 = sphi 0, %s215
      %s233 = sphi 0, %s233
      %s235 = sphi 0, %s233
      %s236 = sphi 0, %s235
      %s250 = sphi 0, %s236
      %s254 = sphi 0, %s254
      %s256 = sphi 0, %s254
      %s257 = sphi 0, %s256
      %s271 = sphi 0, %s257
      %s275 = sphi 0, %s275
      %s277 = sphi 0, %s275
      %s278 = sphi 0, %s277
      %s292 = sphi 0, %s278
      %s296 = sphi 0, %s296
      %s298 = sphi 0, %s296
      %s299 = sphi 0, %s298
      %s313 = sphi 0, %s299
      %s319 = sphi 0, %s321
      %s322 = sphi 0, %s319
      %s323 = sphi 0, %s322
      %s339 = sphi 0, %s323
    $region4: #{tpu_custom_call.1} parent=1 // loop_header_branch
      %34 = sbr.rel (%p32) target = $region8
    $region5: #{tpu_custom_call.1} parent=1 // loop_body
      %s36 = ssub.s32 %s31, 1
      %s37 = ssub.s32 %s31, 2
      %s38 = sadd.s32 %s31, 1
      %s39 = ssub.s32 %s31, %s38
      %p40 = scmp.eq.s32.totalorder %s39, 0
      %s42 = sadd.s32 %s41, 1
      %s43 = scalar_select %p40, %s41, %s42
      %p46 = pneg %p40
      %p47 = scmp.eq.s32.totalorder %s31, 1
      %p48 = por %p46, %p47
      %p49 = scmp.ne.s32.totalorder %s41, %s44
      %p50 = scmp.eq.s32.totalorder %s31, 0
      %p51 = por %p49, %p50
      %p52 = scmp.ne.s32.totalorder %s41, %s44
      %p53 = scmp.eq.s32.totalorder %s36, 1
      %p54 = por %p52, %p53
      %p55 = scmp.ne.s32.totalorder %s44, %s45
      %p56 = scmp.eq.s32.totalorder %s36, 0
      %p57 = por %p55, %p56
      %p58 = scmp.ne.s32.totalorder %s44, %s45
      %p59 = scmp.eq.s32.totalorder %s37, 1
      %p60 = por %p58, %p59
      %p62 = scmp.ne.s32.totalorder %s45, %s61
      %p63 = scmp.eq.s32.totalorder %s37, 0
      %p64 = por %p62, %p63
      %s66 = sadd.s32 %s65, 1
      %p69 = scmp.eq.s32.totalorder %s31, 1
      %p70 = scmp.ne.s32.totalorder %s65, %s67
      %p71 = scmp.eq.s32.totalorder %s31, 0
      %p72 = por %p70, %p71
      %p73 = scmp.ne.s32.totalorder %s65, %s67
      %p74 = scmp.eq.s32.totalorder %s36, 1
      %p75 = por %p73, %p74
      %p76 = scmp.ne.s32.totalorder %s67, %s68
      %p77 = scmp.eq.s32.totalorder %s36, 0
      %p78 = por %p76, %p77
      %p79 = scmp.ne.s32.totalorder %s67, %s68
      %p80 = scmp.eq.s32.totalorder %s37, 1
      %p81 = por %p79, %p80
      %p83 = scmp.ne.s32.totalorder %s68, %s82
      %p84 = scmp.eq.s32.totalorder %s37, 0
      %p85 = por %p83, %p84
      %s87 = sadd.s32 %s86, 1
      %p90 = scmp.eq.s32.totalorder %s31, 1
      %p91 = scmp.ne.s32.totalorder %s86, %s88
      %p92 = scmp.eq.s32.totalorder %s31, 0
      %p93 = por %p91, %p92
      %p94 = scmp.ne.s32.totalorder %s86, %s88
      %p95 = scmp.eq.s32.totalorder %s36, 1
      %p96 = por %p94, %p95
      %p97 = scmp.ne.s32.totalorder %s88, %s89
      %p98 = scmp.eq.s32.totalorder %s36, 0
      %p99 = por %p97, %p98
      %p100 = scmp.ne.s32.totalorder %s88, %s89
      %p101 = scmp.eq.s32.totalorder %s37, 1
      %p102 = por %p100, %p101
      %p104 = scmp.ne.s32.totalorder %s89, %s103
      %p105 = scmp.eq.s32.totalorder %s37, 0
      %p106 = por %p104, %p105
      %s108 = sadd.s32 %s107, 1
      %p111 = scmp.eq.s32.totalorder %s31, 1
      %p112 = scmp.ne.s32.totalorder %s107, %s109
      %p113 = scmp.eq.s32.totalorder %s31, 0
      %p114 = por %p112, %p113
      %p115 = scmp.ne.s32.totalorder %s107, %s109
      %p116 = scmp.eq.s32.totalorder %s36, 1
      %p117 = por %p115, %p116
      %p118 = scmp.ne.s32.totalorder %s109, %s110
      %p119 = scmp.eq.s32.totalorder %s36, 0
      %p120 = por %p118, %p119
      %p121 = scmp.ne.s32.totalorder %s109, %s110
      %p122 = scmp.eq.s32.totalorder %s37, 1
      %p123 = por %p121, %p122
      %p125 = scmp.ne.s32.totalorder %s110, %s124
      %p126 = scmp.eq.s32.totalorder %s37, 0
      %p127 = por %p125, %p126
      %s129 = sadd.s32 %s128, 1
      %p132 = scmp.eq.s32.totalorder %s31, 1
      %p133 = scmp.ne.s32.totalorder %s128, %s130
      %p134 = scmp.eq.s32.totalorder %s31, 0
      %p135 = por %p133, %p134
      %p136 = scmp.ne.s32.totalorder %s128, %s130
      %p137 = scmp.eq.s32.totalorder %s36, 1
      %p138 = por %p136, %p137
      %p139 = scmp.ne.s32.totalorder %s130, %s131
      %p140 = scmp.eq.s32.totalorder %s36, 0
      %p141 = por %p139, %p140
      %p142 = scmp.ne.s32.totalorder %s130, %s131
      %p143 = scmp.eq.s32.totalorder %s37, 1
      %p144 = por %p142, %p143
      %p146 = scmp.ne.s32.totalorder %s131, %s145
      %p147 = scmp.eq.s32.totalorder %s37, 0
      %p148 = por %p146, %p147
      %s150 = sadd.s32 %s149, 1
      %p153 = scmp.eq.s32.totalorder %s31, 1
      %p154 = scmp.ne.s32.totalorder %s149, %s151
      %p155 = scmp.eq.s32.totalorder %s31, 0
      %p156 = por %p154, %p155
      %p157 = scmp.ne.s32.totalorder %s149, %s151
      %p158 = scmp.eq.s32.totalorder %s36, 1
      %p159 = por %p157, %p158
      %p160 = scmp.ne.s32.totalorder %s151, %s152
      %p161 = scmp.eq.s32.totalorder %s36, 0
      %p162 = por %p160, %p161
      %p163 = scmp.ne.s32.totalorder %s151, %s152
      %p164 = scmp.eq.s32.totalorder %s37, 1
      %p165 = por %p163, %p164
      %p167 = scmp.ne.s32.totalorder %s152, %s166
      %p168 = scmp.eq.s32.totalorder %s37, 0
      %p169 = por %p167, %p168
      %s171 = sadd.s32 %s170, 1
      %p174 = scmp.eq.s32.totalorder %s31, 1
      %p175 = scmp.ne.s32.totalorder %s170, %s172
      %p176 = scmp.eq.s32.totalorder %s31, 0
      %p177 = por %p175, %p176
      %p178 = scmp.ne.s32.totalorder %s170, %s172
      %p179 = scmp.eq.s32.totalorder %s36, 1
      %p180 = por %p178, %p179
      %p181 = scmp.ne.s32.totalorder %s172, %s173
      %p182 = scmp.eq.s32.totalorder %s36, 0
      %p183 = por %p181, %p182
      %p184 = scmp.ne.s32.totalorder %s172, %s173
      %p185 = scmp.eq.s32.totalorder %s37, 1
      %p186 = por %p184, %p185
      %p188 = scmp.ne.s32.totalorder %s173, %s187
      %p189 = scmp.eq.s32.totalorder %s37, 0
      %p190 = por %p188, %p189
      %s192 = sadd.s32 %s191, 1
      %p195 = scmp.eq.s32.totalorder %s31, 1
      %p196 = scmp.ne.s32.totalorder %s191, %s193
      %p197 = scmp.eq.s32.totalorder %s31, 0
      %p198 = por %p196, %p197
      %p199 = scmp.ne.s32.totalorder %s191, %s193
      %p200 = scmp.eq.s32.totalorder %s36, 1
      %p201 = por %p199, %p200
      %p202 = scmp.ne.s32.totalorder %s193, %s194
      %p203 = scmp.eq.s32.totalorder %s36, 0
      %p204 = por %p202, %p203
      %p205 = scmp.ne.s32.totalorder %s193, %s194
      %p206 = scmp.eq.s32.totalorder %s37, 1
      %p207 = por %p205, %p206
      %p209 = scmp.ne.s32.totalorder %s194, %s208
      %p210 = scmp.eq.s32.totalorder %s37, 0
      %p211 = por %p209, %p210
      %s213 = sadd.s32 %s212, 1
      %p216 = scmp.eq.s32.totalorder %s31, 1
      %p217 = scmp.ne.s32.totalorder %s212, %s214
      %p218 = scmp.eq.s32.totalorder %s31, 0
      %p219 = por %p217, %p218
      %p220 = scmp.ne.s32.totalorder %s212, %s214
      %p221 = scmp.eq.s32.totalorder %s36, 1
      %p222 = por %p220, %p221
      %p223 = scmp.ne.s32.totalorder %s214, %s215
      %p224 = scmp.eq.s32.totalorder %s36, 0
      %p225 = por %p223, %p224
      %p226 = scmp.ne.s32.totalorder %s214, %s215
      %p227 = scmp.eq.s32.totalorder %s37, 1
      %p228 = por %p226, %p227
      %p230 = scmp.ne.s32.totalorder %s215, %s229
      %p231 = scmp.eq.s32.totalorder %s37, 0
      %p232 = por %p230, %p231
      %s234 = sadd.s32 %s233, 1
      %p237 = scmp.eq.s32.totalorder %s31, 1
      %p238 = scmp.ne.s32.totalorder %s233, %s235
      %p239 = scmp.eq.s32.totalorder %s31, 0
      %p240 = por %p238, %p239
      %p241 = scmp.ne.s32.totalorder %s233, %s235
      %p242 = scmp.eq.s32.totalorder %s36, 1
      %p243 = por %p241, %p242
      %p244 = scmp.ne.s32.totalorder %s235, %s236
      %p245 = scmp.eq.s32.totalorder %s36, 0
      %p246 = por %p244, %p245
      %p247 = scmp.ne.s32.totalorder %s235, %s236
      %p248 = scmp.eq.s32.totalorder %s37, 1
      %p249 = por %p247, %p248
      %p251 = scmp.ne.s32.totalorder %s236, %s250
      %p252 = scmp.eq.s32.totalorder %s37, 0
      %p253 = por %p251, %p252
      %s255 = sadd.s32 %s254, 1
      %p258 = scmp.eq.s32.totalorder %s31, 1
      %p259 = scmp.ne.s32.totalorder %s254, %s256
      %p260 = scmp.eq.s32.totalorder %s31, 0
      %p261 = por %p259, %p260
      %p262 = scmp.ne.s32.totalorder %s254, %s256
      %p263 = scmp.eq.s32.totalorder %s36, 1
      %p264 = por %p262, %p263
      %p265 = scmp.ne.s32.totalorder %s256, %s257
      %p266 = scmp.eq.s32.totalorder %s36, 0
      %p267 = por %p265, %p266
      %p268 = scmp.ne.s32.totalorder %s256, %s257
      %p269 = scmp.eq.s32.totalorder %s37, 1
      %p270 = por %p268, %p269
      %p272 = scmp.ne.s32.totalorder %s257, %s271
      %p273 = scmp.eq.s32.totalorder %s37, 0
      %p274 = por %p272, %p273
      %s276 = sadd.s32 %s275, 1
      %p279 = scmp.eq.s32.totalorder %s31, 1
      %p280 = scmp.ne.s32.totalorder %s275, %s277
      %p281 = scmp.eq.s32.totalorder %s31, 0
      %p282 = por %p280, %p281
      %p283 = scmp.ne.s32.totalorder %s275, %s277
      %p284 = scmp.eq.s32.totalorder %s36, 1
      %p285 = por %p283, %p284
      %p286 = scmp.ne.s32.totalorder %s277, %s278
      %p287 = scmp.eq.s32.totalorder %s36, 0
      %p288 = por %p286, %p287
      %p289 = scmp.ne.s32.totalorder %s277, %s278
      %p290 = scmp.eq.s32.totalorder %s37, 1
      %p291 = por %p289, %p290
      %p293 = scmp.ne.s32.totalorder %s278, %s292
      %p294 = scmp.eq.s32.totalorder %s37, 0
      %p295 = por %p293, %p294
      %s297 = sadd.s32 %s296, 1
      %p300 = scmp.eq.s32.totalorder %s31, 1
      %p301 = scmp.ne.s32.totalorder %s296, %s298
      %p302 = scmp.eq.s32.totalorder %s31, 0
      %p303 = por %p301, %p302
      %p304 = scmp.ne.s32.totalorder %s296, %s298
      %p305 = scmp.eq.s32.totalorder %s36, 1
      %p306 = por %p304, %p305
      %p307 = scmp.ne.s32.totalorder %s298, %s299
      %p308 = scmp.eq.s32.totalorder %s36, 0
      %p309 = por %p307, %p308
      %p310 = scmp.ne.s32.totalorder %s298, %s299
      %p311 = scmp.eq.s32.totalorder %s37, 1
      %p312 = por %p310, %p311
      %p314 = scmp.ne.s32.totalorder %s299, %s313
      %p315 = scmp.eq.s32.totalorder %s37, 0
      %p316 = por %p314, %p315
      %s317 = ssub.s32 %s31, %s38
      %p318 = scmp.eq.s32.totalorder %s317, 0
      %s320 = sadd.s32 %s319, 1
      %s321 = scalar_select %p318, %s319, %s320
      %p324 = pneg %p318
      %p325 = scmp.eq.s32.totalorder %s31, 1
      %p326 = por %p324, %p325
      %p327 = scmp.ne.s32.totalorder %s319, %s322
      %p328 = scmp.eq.s32.totalorder %s31, 0
      %p329 = por %p327, %p328
      %p330 = scmp.ne.s32.totalorder %s319, %s322
      %p331 = scmp.eq.s32.totalorder %s36, 1
      %p332 = por %p330, %p331
      %p333 = scmp.ne.s32.totalorder %s322, %s323
      %p334 = scmp.eq.s32.totalorder %s36, 0
      %p335 = por %p333, %p334
      %p336 = scmp.ne.s32.totalorder %s322, %s323
      %p337 = scmp.eq.s32.totalorder %s37, 1
      %p338 = por %p336, %p337
      %p340 = scmp.ne.s32.totalorder %s323, %s339
      %p341 = scmp.eq.s32.totalorder %s37, 0
      %p342 = por %p340, %p341
      %p343 = scmp.le.s32.totalorder 1, %s31
      %p344 = scmp.lt.s32.totalorder %s31, 3
      %p345 = pnand %p343, %p344
      %p346 = pneg %p345
      // Predicated region
      $region9: #{tpu_custom_call.1} parent=5 // pred_check
        _
      $region10: #{tpu_custom_call.1} parent=5 // pred_check_branch
        %348 = sbr.rel (%p345) target = $region12
      $region11: #{tpu_custom_call.1} parent=5 // pred_region
        %s349 = ssub.s32 %s31, 1
        // Predicated region
        $region13: #{tpu_custom_call.1} parent=11 // pred_check
          %p350 = pneg %p78
        $region14: #{tpu_custom_call.1} parent=11 // pred_check_branch
          %352 = sbr.rel (%p350) target = $region16
        $region15: #{tpu_custom_call.1} parent=11 // pred_region
          %s354 = ssub.s32 16, 16
          %355 = vsyncadd [#allocation8], %s354
          %s357 = sshll.u32 [#allocation7], 4
          %s358 = int_to_ptr.vmem [resolvable:$true] %s357
          %360 = dma.hbm_to_vmem [thread:$0]  %s1, 16, %s358, [#allocation8]
        $region16: #{tpu_custom_call.1} parent=11 // pred_fallthru
          _
        // Predicated region
        $region17: #{tpu_custom_call.1} parent=11 // pred_check
          %p361 = pneg %p99
        $region18: #{tpu_custom_call.1} parent=11 // pred_check_branch
          %363 = sbr.rel (%p361) target = $region20
        $region19: #{tpu_custom_call.1} parent=11 // pred_region
          %s365 = ssub.s32 16, 16
          %366 = vsyncadd [#allocation8], %s365
          %s368 = sshll.u32 [#allocation9], 4
          %s369 = int_to_ptr.vmem [resolvable:$true] %s368
          %371 = dma.hbm_to_vmem [thread:$0]  %s2, 16, %s369, [#allocation8]
        $region20: #{tpu_custom_call.1} parent=11 // pred_fallthru
          _
        // Predicated region
        $region21: #{tpu_custom_call.1} parent=11 // pred_check
          %p372 = pneg %p120
        $region22: #{tpu_custom_call.1} parent=11 // pred_check_branch
          %374 = sbr.rel (%p372) target = $region24
        $region23: #{tpu_custom_call.1} parent=11 // pred_region
          %s376 = ssub.s32 3072, 3072
          %377 = vsyncadd [#allocation11], %s376
          %s378 = sshll.u32 [#allocation10], 4
          %s379 = int_to_ptr.vmem [resolvable:$true] %s378
          %384 = dma.hbm_to_vmem [thread:$0]  %s3, 3072, %s379, [#allocation11], 192, 192, 12
        $region24: #{tpu_custom_call.1} parent=11 // pred_fallthru
          _
        // Predicated region
        $region25: #{tpu_custom_call.1} parent=11 // pred_check
          %p385 = pneg %p141
        $region26: #{tpu_custom_call.1} parent=11 // pred_check_branch
          %387 = sbr.rel (%p385) target = $region28
        $region27: #{tpu_custom_call.1} parent=11 // pred_region
          %s389 = ssub.s32 48, 48
          %390 = vsyncadd [#allocation11], %s389
          %s392 = sshll.u32 [#allocation12], 4
          %s393 = int_to_ptr.vmem [resolvable:$true] %s392
          %395 = dma.hbm_to_vmem [thread:$0]  %s4, 48, %s393, [#allocation11]
        $region28: #{tpu_custom_call.1} parent=11 // pred_fallthru
          _
        // Predicated region
        $region29: #{tpu_custom_call.1} parent=11 // pred_check
          %p396 = pneg %p162
        $region30: #{tpu_custom_call.1} parent=11 // pred_check_branch
          %398 = sbr.rel (%p396) target = $region32
        $region31: #{tpu_custom_call.1} parent=11 // pred_region
          %s400 = ssub.s32 1024, 1024
          %401 = vsyncadd [#allocation14], %s400
          %s402 = sshll.u32 [#allocation13], 4
          %s403 = int_to_ptr.vmem [resolvable:$true] %s402
          %408 = dma.hbm_to_vmem [thread:$0]  %s5, 1024, %s403, [#allocation14], 64, 64, 4
        $region32: #{tpu_custom_call.1} parent=11 // pred_fallthru
          _
        // Predicated region
        $region33: #{tpu_custom_call.1} parent=11 // pred_check
          %p409 = pneg %p183
        $region34: #{tpu_custom_call.1} parent=11 // pred_check_branch
          %411 = sbr.rel (%p409) target = $region36
        $region35: #{tpu_custom_call.1} parent=11 // pred_region
          %s413 = ssub.s32 16, 16
          %414 = vsyncadd [#allocation14], %s413
          %s416 = sshll.u32 [#allocation15], 4
          %s417 = int_to_ptr.vmem [resolvable:$true] %s416
          %419 = dma.hbm_to_vmem [thread:$0]  %s6, 16, %s417, [#allocation14]
        $region36: #{tpu_custom_call.1} parent=11 // pred_fallthru
          _
        // Predicated region
        $region37: #{tpu_custom_call.1} parent=11 // pred_check
          %p420 = pneg %p204
        $region38: #{tpu_custom_call.1} parent=11 // pred_check_branch
          %422 = sbr.rel (%p420) target = $region40
        $region39: #{tpu_custom_call.1} parent=11 // pred_region
          %s424 = ssub.s32 16, 16
          %425 = vsyncadd [#allocation17], %s424
          %s427 = sshll.u32 [#allocation16], 4
          %s428 = int_to_ptr.vmem [resolvable:$true] %s427
          %430 = dma.hbm_to_vmem [thread:$0]  %s7, 16, %s428, [#allocation17]
        $region40: #{tpu_custom_call.1} parent=11 // pred_fallthru
          _
        // Predicated region
        $region41: #{tpu_custom_call.1} parent=11 // pred_check
          %p431 = pneg %p225
        $region42: #{tpu_custom_call.1} parent=11 // pred_check_branch
          %433 = sbr.rel (%p431) target = $region44
        $region43: #{tpu_custom_call.1} parent=11 // pred_region
          %s435 = ssub.s32 16, 16
          %436 = vsyncadd [#allocation17], %s435
          %s438 = sshll.u32 [#allocation18], 4
          %s439 = int_to_ptr.vmem [resolvable:$true] %s438
          %441 = dma.hbm_to_vmem [thread:$0]  %s8, 16, %s439, [#allocation17]
        $region44: #{tpu_custom_call.1} parent=11 // pred_fallthru
          _
        // Predicated region
        $region45: #{tpu_custom_call.1} parent=11 // pred_check
          %p442 = pneg %p246
        $region46: #{tpu_custom_call.1} parent=11 // pred_check_branch
          %444 = sbr.rel (%p442) target = $region48
        $region47: #{tpu_custom_call.1} parent=11 // pred_region
          %s446 = ssub.s32 4096, 4096
          %447 = vsyncadd [#allocation20], %s446
          %s448 = sshll.u32 [#allocation19], 4
          %s449 = int_to_ptr.vmem [resolvable:$true] %s448
          %454 = dma.hbm_to_vmem [thread:$0]  %s9, 4096, %s449, [#allocation20], 256, 256, 16
        $region48: #{tpu_custom_call.1} parent=11 // pred_fallthru
          _
        // Predicated region
        $region49: #{tpu_custom_call.1} parent=11 // pred_check
          %p455 = pneg %p267
        $region50: #{tpu_custom_call.1} parent=11 // pred_check_branch
          %457 = sbr.rel (%p455) target = $region52
        $region51: #{tpu_custom_call.1} parent=11 // pred_region
          %s459 = ssub.s32 64, 64
          %460 = vsyncadd [#allocation20], %s459
          %s462 = sshll.u32 [#allocation21], 4
          %s463 = int_to_ptr.vmem [resolvable:$true] %s462
          %465 = dma.hbm_to_vmem [thread:$0]  %s10, 64, %s463, [#allocation20]
        $region52: #{tpu_custom_call.1} parent=11 // pred_fallthru
          _
        // Predicated region
        $region53: #{tpu_custom_call.1} parent=11 // pred_check
          %p466 = pneg %p288
        $region54: #{tpu_custom_call.1} parent=11 // pred_check_branch
          %468 = sbr.rel (%p466) target = $region56
        $region55: #{tpu_custom_call.1} parent=11 // pred_region
          %s470 = ssub.s32 4096, 4096
          %471 = vsyncadd [#allocation23], %s470
          %s472 = sshll.u32 [#allocation22], 4
          %s473 = int_to_ptr.vmem [resolvable:$true] %s472
          %478 = dma.hbm_to_vmem [thread:$0]  %s11, 4096, %s473, [#allocation23], 64, 64, 4
        $region56: #{tpu_custom_call.1} parent=11 // pred_fallthru
          _
        // Predicated region
        $region57: #{tpu_custom_call.1} parent=11 // pred_check
          %p479 = pneg %p309
        $region58: #{tpu_custom_call.1} parent=11 // pred_check_branch
          %481 = sbr.rel (%p479) target = $region60
        $region59: #{tpu_custom_call.1} parent=11 // pred_region
          %s483 = ssub.s32 16, 16
          %484 = vsyncadd [#allocation23], %s483
          %s486 = sshll.u32 [#allocation24], 4
          %s487 = int_to_ptr.vmem [resolvable:$true] %s486
          %489 = dma.hbm_to_vmem [thread:$0]  %s12, 16, %s487, [#allocation23]
        $region60: #{tpu_custom_call.1} parent=11 // pred_fallthru
          _
      $region12: #{tpu_custom_call.1} parent=5 // pred_fallthru
        _
      %p490 = scmp.lt.s32.totalorder %s31, 2
      // Predicated region
      $region61: #{tpu_custom_call.1} parent=5 // pred_check
        %p491 = pneg %p490
      $region62: #{tpu_custom_call.1} parent=5 // pred_check_branch
        %493 = sbr.rel (%p491) target = $region64
      $region63: #{tpu_custom_call.1} parent=5 // pred_region
        // Predicated region
        $region65: #{tpu_custom_call.1} parent=63 // pred_check
          %p494 = pneg %p51
        $region66: #{tpu_custom_call.1} parent=63 // pred_check_branch
          %496 = sbr.rel (%p494) target = $region68
        $region67: #{tpu_custom_call.1} parent=63 // pred_region
          %s497 = sand.u32 %s41, 1
          %s498 = scalar_lea.sflag [#allocation5], %s497
          %s499 = sand.u32 %s41, 1
          %s500 = smul.addr %s499, 64
          %s501 = scalar_lea.vmem [#allocation4], %s500
          %s503 = ssub.s32 1024, 1024
          %504 = vsyncadd %s498, %s503
          %s505 = smul.addr %s31, 8
          %s506 = smul.addr %s505, 128
          %s507 = scalar_lea.hbm %s0, %s506
          %s508 = sshll.u32 %s501, 4
          %s509 = int_to_ptr.vmem [resolvable:$true] %s508
          %514 = dma.hbm_to_vmem [thread:$0]  %s507, 1024, %s509, %s498, 128, 128, 8
        $region68: #{tpu_custom_call.1} parent=63 // pred_fallthru
          _
      $region64: #{tpu_custom_call.1} parent=5 // pred_fallthru
        _
      %p515 = scmp.le.s32.totalorder 1, %s31
      %p516 = scmp.lt.s32.totalorder %s31, 3
      %p517 = pnand %p515, %p516
      %p518 = pneg %p517
      // Predicated region
      $region69: #{tpu_custom_call.1} parent=5 // pred_check
        _
      $region70: #{tpu_custom_call.1} parent=5 // pred_check_branch
        %520 = sbr.rel (%p517) target = $region72
      $region71: #{tpu_custom_call.1} parent=5 // pred_region
        %s521 = ssub.s32 %s31, 1
        %s522 = sand.u32 %s44, 1
        %s523 = scalar_lea.sflag [#allocation5], %s522
        %s524 = sand.u32 %s44, 1
        %s525 = smul.addr %s524, 64
        %s526 = scalar_lea.vmem [#allocation4], %s525
        // Predicated region
        $region73: #{tpu_custom_call.1} parent=71 // pred_check
          %p527 = pneg %p57
        $region74: #{tpu_custom_call.1} parent=71 // pred_check_branch
          %529 = sbr.rel (%p527) target = $region76
        $region75: #{tpu_custom_call.1} parent=71 // pred_region
          %530 = dma.done %s523, 1024
        $region76: #{tpu_custom_call.1} parent=71 // pred_fallthru
          _
        // Predicated region
        $region77: #{tpu_custom_call.1} parent=71 // pred_check
          %p531 = pneg %p78
        $region78: #{tpu_custom_call.1} parent=71 // pred_check_branch
          %533 = sbr.rel (%p531) target = $region80
        $region79: #{tpu_custom_call.1} parent=71 // pred_region
          %534 = dma.done [#allocation8], 16
        $region80: #{tpu_custom_call.1} parent=71 // pred_fallthru
          _
        // Predicated region
        $region81: #{tpu_custom_call.1} parent=71 // pred_check
          %p535 = pneg %p99
        $region82: #{tpu_custom_call.1} parent=71 // pred_check_branch
          %537 = sbr.rel (%p535) target = $region84
        $region83: #{tpu_custom_call.1} parent=71 // pred_region
          %538 = dma.done [#allocation8], 16
        $region84: #{tpu_custom_call.1} parent=71 // pred_fallthru
          _
        // Predicated region
        $region85: #{tpu_custom_call.1} parent=71 // pred_check
          %p539 = pneg %p120
        $region86: #{tpu_custom_call.1} parent=71 // pred_check_branch
          %541 = sbr.rel (%p539) target = $region88
        $region87: #{tpu_custom_call.1} parent=71 // pred_region
          %542 = dma.done [#allocation11], 3072
        $region88: #{tpu_custom_call.1} parent=71 // pred_fallthru
          _
        // Predicated region
        $region89: #{tpu_custom_call.1} parent=71 // pred_check
          %p543 = pneg %p141
        $region90: #{tpu_custom_call.1} parent=71 // pred_check_branch
          %545 = sbr.rel (%p543) target = $region92
        $region91: #{tpu_custom_call.1} parent=71 // pred_region
          %546 = dma.done [#allocation11], 48
        $region92: #{tpu_custom_call.1} parent=71 // pred_fallthru
          _
        // Predicated region
        $region93: #{tpu_custom_call.1} parent=71 // pred_check
          %p547 = pneg %p162
        $region94: #{tpu_custom_call.1} parent=71 // pred_check_branch
          %549 = sbr.rel (%p547) target = $region96
        $region95: #{tpu_custom_call.1} parent=71 // pred_region
          %550 = dma.done [#allocation14], 1024
        $region96: #{tpu_custom_call.1} parent=71 // pred_fallthru
          _
        // Predicated region
        $region97: #{tpu_custom_call.1} parent=71 // pred_check
          %p551 = pneg %p183
        $region98: #{tpu_custom_call.1} parent=71 // pred_check_branch
          %553 = sbr.rel (%p551) target = $region100
        $region99: #{tpu_custom_call.1} parent=71 // pred_region
          %554 = dma.done [#allocation14], 16
        $region100: #{tpu_custom_call.1} parent=71 // pred_fallthru
          _
        // Predicated region
        $region101: #{tpu_custom_call.1} parent=71 // pred_check
          %p555 = pneg %p204
        $region102: #{tpu_custom_call.1} parent=71 // pred_check_branch
          %557 = sbr.rel (%p555) target = $region104
        $region103: #{tpu_custom_call.1} parent=71 // pred_region
          %558 = dma.done [#allocation17], 16
        $region104: #{tpu_custom_call.1} parent=71 // pred_fallthru
          _
        // Predicated region
        $region105: #{tpu_custom_call.1} parent=71 // pred_check
          %p559 = pneg %p225
        $region106: #{tpu_custom_call.1} parent=71 // pred_check_branch
          %561 = sbr.rel (%p559) target = $region108
        $region107: #{tpu_custom_call.1} parent=71 // pred_region
          %562 = dma.done [#allocation17], 16
        $region108: #{tpu_custom_call.1} parent=71 // pred_fallthru
          _
        // Predicated region
        $region109: #{tpu_custom_call.1} parent=71 // pred_check
          %p563 = pneg %p246
        $region110: #{tpu_custom_call.1} parent=71 // pred_check_branch
          %565 = sbr.rel (%p563) target = $region112
        $region111: #{tpu_custom_call.1} parent=71 // pred_region
          %566 = dma.done [#allocation20], 4096
        $region112: #{tpu_custom_call.1} parent=71 // pred_fallthru
          _
        // Predicated region
        $region113: #{tpu_custom_call.1} parent=71 // pred_check
          %p567 = pneg %p267
        $region114: #{tpu_custom_call.1} parent=71 // pred_check_branch
          %569 = sbr.rel (%p567) target = $region116
        $region115: #{tpu_custom_call.1} parent=71 // pred_region
          %570 = dma.done [#allocation20], 64
        $region116: #{tpu_custom_call.1} parent=71 // pred_fallthru
          _
        // Predicated region
        $region117: #{tpu_custom_call.1} parent=71 // pred_check
          %p571 = pneg %p288
        $region118: #{tpu_custom_call.1} parent=71 // pred_check_branch
          %573 = sbr.rel (%p571) target = $region120
        $region119: #{tpu_custom_call.1} parent=71 // pred_region
          %574 = dma.done [#allocation23], 4096
        $region120: #{tpu_custom_call.1} parent=71 // pred_fallthru
          _
        // Predicated region
        $region121: #{tpu_custom_call.1} parent=71 // pred_check
          %p575 = pneg %p309
        $region122: #{tpu_custom_call.1} parent=71 // pred_check_branch
          %577 = sbr.rel (%p575) target = $region124
        $region123: #{tpu_custom_call.1} parent=71 // pred_region
          %578 = dma.done [#allocation23], 16
        $region124: #{tpu_custom_call.1} parent=71 // pred_fallthru
          _
        %s579 = sand.u32 %s44, 1
        %s580 = scalar_lea.sflag [#allocation5], %s579
        %s581 = sand.u32 %s44, 1
        %s582 = smul.addr %s581, 64
        %s583 = scalar_lea.vmem [#allocation4], %s582
        %p584 = pneg %p57
        %p585 = pneg %p54
        %p586 = pneg %p78
        %p587 = pneg %p75
        %p588 = pneg %p99
        %p589 = pneg %p96
        %p590 = pneg %p120
        %p591 = pneg %p117
        %p592 = pneg %p141
        %p593 = pneg %p138
        %p594 = pneg %p162
        %p595 = pneg %p159
        %p596 = pneg %p183
        %p597 = pneg %p180
        %p598 = pneg %p204
        %p599 = pneg %p201
        %p600 = pneg %p225
        %p601 = pneg %p222
        %p602 = pneg %p246
        %p603 = pneg %p243
        %p604 = pneg %p267
        %p605 = pneg %p264
        %p606 = pneg %p288
        %p607 = pneg %p285
        %p608 = pneg %p309
        %p609 = pneg %p306
        %p610 = pneg %p335
        %p611 = pneg %p332
        %s612 = sand.u32 %s322, 1
        %s613 = scalar_lea.sflag [#allocation6], %s612
        %s614 = sand.u32 %s322, 1
        %s615 = smul.addr %s614, 64
        %s616 = scalar_lea.vmem [#allocation25], %s615
        %v618 = vld [vmem:[%s526] sm:$0xff]
        %v619 = vld [vmem:[%s526 + $0x8] sm:$0xff]
        %v620 = vld [vmem:[%s526 + $0x10] sm:$0xff]
        %v621 = vld [vmem:[%s526 + $0x18] sm:$0xff]
        %v622 = vld [vmem:[%s526 + $0x20] sm:$0xff]
        %v623 = vld [vmem:[%s526 + $0x28] sm:$0xff]
        %v624 = vld [vmem:[%s526 + $0x30] sm:$0xff]
        %v625 = vld [vmem:[%s526 + $0x38] sm:$0xff]
        %v626 = vld [vmem:[#allocation7] sm:$0x1]
        %v627 = vld [vmem:[#allocation9] sm:$0x1]
        %628 = vadd.xlane.f32.xlu0 %v618
        %v629 = vpop.xlane.xlu0 %628
        %630 = vadd.xlane.f32.xlu0 %v619
        %v631 = vpop.xlane.xlu0 %630
        %632 = vadd.xlane.f32.xlu0 %v620
        %v633 = vpop.xlane.xlu0 %632
        %634 = vadd.xlane.f32.xlu0 %v621
        %v635 = vpop.xlane.xlu0 %634
        %636 = vadd.xlane.f32.xlu0 %v622
        %v637 = vpop.xlane.xlu0 %636
        %638 = vadd.xlane.f32.xlu0 %v623
        %v639 = vpop.xlane.xlu0 %638
        %640 = vadd.xlane.f32.xlu0 %v624
        %v641 = vpop.xlane.xlu0 %640
        %642 = vadd.xlane.f32.xlu0 %v625
        %v643 = vpop.xlane.xlu0 %642
        %v644 = vrcp.pop 128.0
        %v645 = vmul.f32 %v629, %v644
        %v646 = vmul.f32 %v631, %v644
        %v647 = vmul.f32 %v633, %v644
        %v648 = vmul.f32 %v635, %v644
        %v649 = vmul.f32 %v637, %v644
        %v650 = vmul.f32 %v639, %v644
        %v651 = vmul.f32 %v641, %v644
        %v652 = vmul.f32 %v643, %v644
        %v653 = vsub.f32 %v618, %v645
        %v654 = vsub.f32 %v619, %v646
        %v655 = vsub.f32 %v620, %v647
        %v656 = vsub.f32 %v621, %v648
        %v657 = vsub.f32 %v622, %v649
        %v658 = vsub.f32 %v623, %v650
        %v659 = vsub.f32 %v624, %v651
        %v660 = vsub.f32 %v625, %v652
        %v661 = vmul.f32 %v653, %v653
        %v662 = vmul.f32 %v654, %v654
        %v663 = vmul.f32 %v655, %v655
        %v664 = vmul.f32 %v656, %v656
        %v665 = vmul.f32 %v657, %v657
        %v666 = vmul.f32 %v658, %v658
        %v667 = vmul.f32 %v659, %v659
        %v668 = vmul.f32 %v660, %v660
        %669 = vadd.xlane.f32.xlu0 %v661
        %v670 = vpop.xlane.xlu0 %669
        %671 = vadd.xlane.f32.xlu0 %v662
        %v672 = vpop.xlane.xlu0 %671
        %673 = vadd.xlane.f32.xlu0 %v663
        %v674 = vpop.xlane.xlu0 %673
        %675 = vadd.xlane.f32.xlu0 %v664
        %v676 = vpop.xlane.xlu0 %675
        %677 = vadd.xlane.f32.xlu0 %v665
        %v678 = vpop.xlane.xlu0 %677
        %679 = vadd.xlane.f32.xlu0 %v666
        %v680 = vpop.xlane.xlu0 %679
        %681 = vadd.xlane.f32.xlu0 %v667
        %v682 = vpop.xlane.xlu0 %681
        %683 = vadd.xlane.f32.xlu0 %v668
        %v684 = vpop.xlane.xlu0 %683
        %v685 = vmul.f32 %v670, %v644
        %v686 = vmul.f32 %v672, %v644
        %v687 = vmul.f32 %v674, %v644
        %v688 = vmul.f32 %v676, %v644
        %v689 = vmul.f32 %v678, %v644
        %v690 = vmul.f32 %v680, %v644
        %v691 = vmul.f32 %v682, %v644
        %v692 = vmul.f32 %v684, %v644
        %v693 = vadd.f32 %v685, 1e-05
        %v694 = vadd.f32 %v686, 1e-05
        %v695 = vadd.f32 %v687, 1e-05
        %v696 = vadd.f32 %v688, 1e-05
        %v697 = vadd.f32 %v689, 1e-05
        %v698 = vadd.f32 %v690, 1e-05
        %v699 = vadd.f32 %v691, 1e-05
        %v700 = vadd.f32 %v692, 1e-05
        %v701 = vrsqrt.pop %v693
        %v702 = vrsqrt.pop %v694
        %v703 = vrsqrt.pop %v695
        %v704 = vrsqrt.pop %v696
        %v705 = vrsqrt.pop %v697
        %v706 = vrsqrt.pop %v698
        %v707 = vrsqrt.pop %v699
        %v708 = vrsqrt.pop %v700
        %v709 = vmul.f32 %v653, %v701
        %v710 = vmul.f32 %v654, %v702
        %v711 = vmul.f32 %v655, %v703
        %v712 = vmul.f32 %v656, %v704
        %v713 = vmul.f32 %v657, %v705
        %v714 = vmul.f32 %v658, %v706
        %v715 = vmul.f32 %v659, %v707
        %v716 = vmul.f32 %v660, %v708
        %v718 = vlaneseq
        %v719 = vshrl.u32 %v718, 7
        %v720 = vsub.s32 0, %v719
        %v721 = vrot.slane %v626, %v720
        %v723 = vmul.f32 %v709, %v721
        %v724 = vmul.f32 %v710, %v721
        %v725 = vmul.f32 %v711, %v721
        %v726 = vmul.f32 %v712, %v721
        %v727 = vmul.f32 %v713, %v721
        %v728 = vmul.f32 %v714, %v721
        %v729 = vmul.f32 %v715, %v721
        %v730 = vmul.f32 %v716, %v721
        %v732 = vlaneseq
        %v733 = vshrl.u32 %v732, 7
        %v734 = vsub.s32 0, %v733
        %v735 = vrot.slane %v627, %v734
        %v737 = vadd.f32 %v723, %v735
        %v738 = vadd.f32 %v724, %v735
        %v739 = vadd.f32 %v725, %v735
        %v740 = vadd.f32 %v726, %v735
        %v741 = vadd.f32 %v727, %v735
        %v742 = vadd.f32 %v728, %v735
        %v743 = vadd.f32 %v729, %v735
        %v744 = vadd.f32 %v730, %v735
        %v745 = vpack.c.bf16 %v738, %v737
        %v746 = vpack.c.bf16 %v740, %v739
        %v747 = vpack.c.bf16 %v742, %v741
        %v748 = vpack.c.bf16 %v744, %v743
        %v749 = vld [vmem:[#allocation10] sm:$0xf]
        %v750 = vld [vmem:[#allocation10 + $0xc] sm:$0xf]
        %v751 = vld [vmem:[#allocation10 + $0x18] sm:$0xf]
        %v752 = vld [vmem:[#allocation10 + $0x24] sm:$0xf]
        %v753 = vld [vmem:[#allocation10 + $0x30] sm:$0xf]
        %v754 = vld [vmem:[#allocation10 + $0x3c] sm:$0xf]
        %v755 = vld [vmem:[#allocation10 + $0x48] sm:$0xf]
        %v756 = vld [vmem:[#allocation10 + $0x54] sm:$0xf]
        %v757 = vld [vmem:[#allocation10 + $0x60] sm:$0xf]
        %v758 = vld [vmem:[#allocation10 + $0x6c] sm:$0xf]
        %v759 = vld [vmem:[#allocation10 + $0x78] sm:$0xf]
        %v760 = vld [vmem:[#allocation10 + $0x84] sm:$0xf]
        %v761 = vld [vmem:[#allocation10 + $0x90] sm:$0xf]
        %v762 = vld [vmem:[#allocation10 + $0x9c] sm:$0xf]
        %v763 = vld [vmem:[#allocation10 + $0xa8] sm:$0xf]
        %v764 = vld [vmem:[#allocation10 + $0xb4] sm:$0xf]
        %v765 = vld [vmem:[#allocation12] sm:$0x1]
        %v767 = vlaneseq
        %v768 = vshrl.u32 %v767, 7
        %v769 = vsub.s32 0, %v768
        %v770 = vrot.slane %v765, %v769
        %v788 = vunpack.c.l.b16 %v749
        %v789 = vunpack.c.l.b16 %v750
        %v790 = vunpack.c.l.b16 %v751
        %v791 = vunpack.c.l.b16 %v752
        %v792 = vunpack.c.l.b16 %v753
        %v793 = vunpack.c.l.b16 %v754
        %v794 = vunpack.c.l.b16 %v755
        %v795 = vunpack.c.l.b16 %v756
        %v796 = vunpack.c.l.b16 %v757
        %v797 = vunpack.c.l.b16 %v758
        %v798 = vunpack.c.l.b16 %v759
        %v799 = vunpack.c.l.b16 %v760
        %v800 = vunpack.c.l.b16 %v761
        %v801 = vunpack.c.l.b16 %v762
        %v802 = vunpack.c.l.b16 %v763
        %v803 = vunpack.c.l.b16 %v764
        %v804 = vpack.c.b16 %v789, %v788
        %v805 = vpack.c.b16 %v791, %v790
        %v806 = vpack.c.b16 %v793, %v792
        %v807 = vpack.c.b16 %v795, %v794
        %v808 = vpack.c.b16 %v797, %v796
        %v809 = vpack.c.b16 %v799, %v798
        %v810 = vpack.c.b16 %v801, %v800
        %v811 = vpack.c.b16 %v803, %v802
        %820 = vmatprep.subr.bf16.mxu0 0
        %821 = vmatpush1.bf16.msra.mxu0 %v804
        %822 = vmatprep.subr.bf16.mxu0 0
        %823 = vmatpush1.bf16.msra.mxu0 %v805
        %824 = vmatprep.subr.bf16.mxu0 0
        %825 = vmatpush1.bf16.msra.mxu0 %v806
        %826 = vmatprep.subr.bf16.mxu0 0
        %827 = vmatpush1.bf16.msra.mxu0 %v807
        %828 = vmatprep.subr.bf16.mxu0 0
        %829 = vmatpush1.bf16.msra.mxu0 %v808
        %830 = vmatprep.subr.bf16.mxu0 0
        %831 = vmatpush1.bf16.msra.mxu0 %v809
        %832 = vmatprep.subr.bf16.mxu0 0
        %833 = vmatpush1.bf16.msra.mxu0 %v810
        %834 = vmatprep.subr.bf16.mxu0 0
        %835 = vmatpush1.bf16.msra.mxu0 %v811
        %836 = vmatprep.subr.bf16.mxu0 0
        %837 = vmatpush1.bf16.msra.mxu0 0
        %838 = vmatprep.subr.bf16.mxu0 0
        %839 = vmatpush1.bf16.msra.mxu0 0
        %840 = vmatprep.subr.bf16.mxu0 0
        %841 = vmatpush1.bf16.msra.mxu0 0
        %842 = vmatprep.subr.bf16.mxu0 0
        %843 = vmatpush1.bf16.msra.mxu0 0
        %844 = vmatprep.subr.bf16.mxu0 0
        %845 = vmatpush1.bf16.msra.mxu0 0
        %846 = vmatprep.subr.bf16.mxu0 0
        %847 = vmatpush1.bf16.msra.mxu0 0
        %848 = vmatprep.subr.bf16.mxu0 0
        %849 = vmatpush1.bf16.msra.mxu0 0
        %850 = vmatprep.subr.bf16.mxu0 0
        %851 = vmatpush1.bf16.msra.mxu0 0
        %852 = vmatprep.mubr.bf16.mxu0 0
        %853 = vmatmul.mubr.bf16.gmra.mrb[0].mxu0 %v745
        %v854 = vpop.f32.mrb[0].mxu0
        %v855 = vadd.f32 %v770, %v854
        %v856 = vpop.f32.mrb[0].mxu0
        %v857 = vpop.f32.mrb[0].mxu0
        %v858 = vadd.f32 %v770, %v857
        %v859 = vpop.f32.mrb[0].mxu0
        %860 = vmatprep.mubr.bf16.mxu0 0
        %861 = vmatmul.mubr.bf16.gmra.mrb[0].mxu0 %v746
        %v862 = vpop.f32.mrb[0].mxu0
        %v863 = vadd.f32 %v770, %v862
        %v864 = vpop.f32.mrb[0].mxu0
        %v865 = vpop.f32.mrb[0].mxu0
        %v866 = vadd.f32 %v770, %v865
        %v867 = vpop.f32.mrb[0].mxu0
        %868 = vmatprep.mubr.bf16.mxu0 0
        %869 = vmatmul.mubr.bf16.gmra.mrb[0].mxu0 %v747
        %v870 = vpop.f32.mrb[0].mxu0
        %v871 = vadd.f32 %v770, %v870
        %v872 = vpop.f32.mrb[0].mxu0
        %v873 = vpop.f32.mrb[0].mxu0
        %v874 = vadd.f32 %v770, %v873
        %v875 = vpop.f32.mrb[0].mxu0
        %876 = vmatprep.mubr.bf16.mxu0 0
        %877 = vmatmul.mubr.bf16.gmra.mrb[0].mxu0 %v748
        %v878 = vpop.f32.mrb[0].mxu0
        %v879 = vadd.f32 %v770, %v878
        %v880 = vpop.f32.mrb[0].mxu0
        %v881 = vpop.f32.mrb[0].mxu0
        %v882 = vadd.f32 %v770, %v881
        %v883 = vpop.f32.mrb[0].mxu0
        %884 = vdwg.mxu0
        %v885 = vpack.c.bf16 %v858, %v855
        %v886 = vpack.c.bf16 %v866, %v863
        %v887 = vpack.c.bf16 %v874, %v871
        %v888 = vpack.c.bf16 %v882, %v879
        %889 = vst [vmem:[#allocation2] sm:$0xff] %v885
        %890 = vst [vmem:[#allocation2 + $0x18] sm:$0xff] %v886
        %891 = vst [vmem:[#allocation2 + $0x30] sm:$0xff] %v887
        %892 = vst [vmem:[#allocation2 + $0x48] sm:$0xff] %v888
        %v893 = vld [vmem:[#allocation10 + $0x4] sm:$0xf]
        %v894 = vld [vmem:[#allocation10 + $0x10] sm:$0xf]
        %v895 = vld [vmem:[#allocation10 + $0x1c] sm:$0xf]
        %v896 = vld [vmem:[#allocation10 + $0x28] sm:$0xf]
        %v897 = vld [vmem:[#allocation10 + $0x34] sm:$0xf]
        %v898 = vld [vmem:[#allocation10 + $0x40] sm:$0xf]
        %v899 = vld [vmem:[#allocation10 + $0x4c] sm:$0xf]
        %v900 = vld [vmem:[#allocation10 + $0x58] sm:$0xf]
        %v901 = vld [vmem:[#allocation10 + $0x64] sm:$0xf]
        %v902 = vld [vmem:[#allocation10 + $0x70] sm:$0xf]
        %v903 = vld [vmem:[#allocation10 + $0x7c] sm:$0xf]
        %v904 = vld [vmem:[#allocation10 + $0x88] sm:$0xf]
        %v905 = vld [vmem:[#allocation10 + $0x94] sm:$0xf]
        %v906 = vld [vmem:[#allocation10 + $0xa0] sm:$0xf]
        %v907 = vld [vmem:[#allocation10 + $0xac] sm:$0xf]
        %v908 = vld [vmem:[#allocation10 + $0xb8] sm:$0xf]
        %v909 = vld [vmem:[#allocation12 + $0x1] sm:$0x1]
        %v911 = vlaneseq
        %v912 = vshrl.u32 %v911, 7
        %v913 = vsub.s32 0, %v912
        %v914 = vrot.slane %v909, %v913
        %v932 = vunpack.c.l.b16 %v893
        %v933 = vunpack.c.l.b16 %v894
        %v934 = vunpack.c.l.b16 %v895
        %v935 = vunpack.c.l.b16 %v896
        %v936 = vunpack.c.l.b16 %v897
        %v937 = vunpack.c.l.b16 %v898
        %v938 = vunpack.c.l.b16 %v899
        %v939 = vunpack.c.l.b16 %v900
        %v940 = vunpack.c.l.b16 %v901
        %v941 = vunpack.c.l.b16 %v902
        %v942 = vunpack.c.l.b16 %v903
        %v943 = vunpack.c.l.b16 %v904
        %v944 = vunpack.c.l.b16 %v905
        %v945 = vunpack.c.l.b16 %v906
        %v946 = vunpack.c.l.b16 %v907
        %v947 = vunpack.c.l.b16 %v908
        %v948 = vpack.c.b16 %v933, %v932
        %v949 = vpack.c.b16 %v935, %v934
        %v950 = vpack.c.b16 %v937, %v936
        %v951 = vpack.c.b16 %v939, %v938
        %v952 = vpack.c.b16 %v941, %v940
        %v953 = vpack.c.b16 %v943, %v942
        %v954 = vpack.c.b16 %v945, %v944
        %v955 = vpack.c.b16 %v947, %v946
        %964 = vmatprep.subr.bf16.mxu0 0
        %965 = vmatpush1.bf16.msra.mxu0 %v948
        %966 = vmatprep.subr.bf16.mxu0 0
        %967 = vmatpush1.bf16.msra.mxu0 %v949
        %968 = vmatprep.subr.bf16.mxu0 0
        %969 = vmatpush1.bf16.msra.mxu0 %v950
        %970 = vmatprep.subr.bf16.mxu0 0
        %971 = vmatpush1.bf16.msra.mxu0 %v951
        %972 = vmatprep.subr.bf16.mxu0 0
        %973 = vmatpush1.bf16.msra.mxu0 %v952
        %974 = vmatprep.subr.bf16.mxu0 0
        %975 = vmatpush1.bf16.msra.mxu0 %v953
        %976 = vmatprep.subr.bf16.mxu0 0
        %977 = vmatpush1.bf16.msra.mxu0 %v954
        %978 = vmatprep.subr.bf16.mxu0 0
        %979 = vmatpush1.bf16.msra.mxu0 %v955
        %980 = vmatprep.subr.bf16.mxu0 0
        %981 = vmatpush1.bf16.msra.mxu0 0
        %982 = vmatprep.subr.bf16.mxu0 0
        %983 = vmatpush1.bf16.msra.mxu0 0
        %984 = vmatprep.subr.bf16.mxu0 0
        %985 = vmatpush1.bf16.msra.mxu0 0
        %986 = vmatprep.subr.bf16.mxu0 0
        %987 = vmatpush1.bf16.msra.mxu0 0
        %988 = vmatprep.subr.bf16.mxu0 0
        %989 = vmatpush1.bf16.msra.mxu0 0
        %990 = vmatprep.subr.bf16.mxu0 0
        %991 = vmatpush1.bf16.msra.mxu0 0
        %992 = vmatprep.subr.bf16.mxu0 0
        %993 = vmatpush1.bf16.msra.mxu0 0
        %994 = vmatprep.subr.bf16.mxu0 0
        %995 = vmatpush1.bf16.msra.mxu0 0
        %996 = vmatprep.mubr.bf16.mxu0 0
        %997 = vmatmul.mubr.bf16.gmra.mrb[0].mxu0 %v745
        %v998 = vpop.f32.mrb[0].mxu0
        %v999 = vadd.f32 %v914, %v998
        %v1000 = vpop.f32.mrb[0].mxu0
        %v1001 = vpop.f32.mrb[0].mxu0
        %v1002 = vadd.f32 %v914, %v1001
        %v1003 = vpop.f32.mrb[0].mxu0
        %1004 = vmatprep.mubr.bf16.mxu0 0
        %1005 = vmatmul.mubr.bf16.gmra.mrb[0].mxu0 %v746
        %v1006 = vpop.f32.mrb[0].mxu0
        %v1007 = vadd.f32 %v914, %v1006
        %v1008 = vpop.f32.mrb[0].mxu0
        %v1009 = vpop.f32.mrb[0].mxu0
        %v1010 = vadd.f32 %v914, %v1009
        %v1011 = vpop.f32.mrb[0].mxu0
        %1012 = vmatprep.mubr.bf16.mxu0 0
        %1013 = vmatmul.mubr.bf16.gmra.mrb[0].mxu0 %v747
        %v1014 = vpop.f32.mrb[0].mxu0
        %v1015 = vadd.f32 %v914, %v1014
        %v1016 = vpop.f32.mrb[0].mxu0
        %v1017 = vpop.f32.mrb[0].mxu0
        %v1018 = vadd.f32 %v914, %v1017
        %v1019 = vpop.f32.mrb[0].mxu0
        %1020 = vmatprep.mubr.bf16.mxu0 0
        %1021 = vmatmul.mubr.bf16.gmra.mrb[0].mxu0 %v748
        %v1022 = vpop.f32.mrb[0].mxu0
        %v1023 = vadd.f32 %v914, %v1022
        %v1024 = vpop.f32.mrb[0].mxu0
        %v1025 = vpop.f32.mrb[0].mxu0
        %v1026 = vadd.f32 %v914, %v1025
        %v1027 = vpop.f32.mrb[0].mxu0
        %1028 = vdwg.mxu0
        %v1029 = vpack.c.bf16 %v1002, %v999
        %v1030 = vpack.c.bf16 %v1010, %v1007
        %v1031 = vpack.c.bf16 %v1018, %v1015
        %v1032 = vpack.c.bf16 %v1026, %v1023
        %1033 = vst [vmem:[#allocation2 + $0x8] sm:$0xff] %v1029
        %1034 = vst [vmem:[#allocation2 + $0x20] sm:$0xff] %v1030
        %1035 = vst [vmem:[#allocation2 + $0x38] sm:$0xff] %v1031
        %1036 = vst [vmem:[#allocation2 + $0x50] sm:$0xff] %v1032
        %v1037 = vld [vmem:[#allocation10 + $0x8] sm:$0xf]
        %v1038 = vld [vmem:[#allocation10 + $0x14] sm:$0xf]
        %v1039 = vld [vmem:[#allocation10 + $0x20] sm:$0xf]
        %v1040 = vld [vmem:[#allocation10 + $0x2c] sm:$0xf]
        %v1041 = vld [vmem:[#allocation10 + $0x38] sm:$0xf]
        %v1042 = vld [vmem:[#allocation10 + $0x44] sm:$0xf]
        %v1043 = vld [vmem:[#allocation10 + $0x50] sm:$0xf]
        %v1044 = vld [vmem:[#allocation10 + $0x5c] sm:$0xf]
        %v1045 = vld [vmem:[#allocation10 + $0x68] sm:$0xf]
        %v1046 = vld [vmem:[#allocation10 + $0x74] sm:$0xf]
        %v1047 = vld [vmem:[#allocation10 + $0x80] sm:$0xf]
        %v1048 = vld [vmem:[#allocation10 + $0x8c] sm:$0xf]
        %v1049 = vld [vmem:[#allocation10 + $0x98] sm:$0xf]
        %v1050 = vld [vmem:[#allocation10 + $0xa4] sm:$0xf]
        %v1051 = vld [vmem:[#allocation10 + $0xb0] sm:$0xf]
        %v1052 = vld [vmem:[#allocation10 + $0xbc] sm:$0xf]
        %v1053 = vld [vmem:[#allocation12 + $0x2] sm:$0x1]
        %v1055 = vlaneseq
        %v1056 = vshrl.u32 %v1055, 7
        %v1057 = vsub.s32 0, %v1056
        %v1058 = vrot.slane %v1053, %v1057
        %v1076 = vunpack.c.l.b16 %v1037
        %v1077 = vunpack.c.l.b16 %v1038
        %v1078 = vunpack.c.l.b16 %v1039
        %v1079 = vunpack.c.l.b16 %v1040
        %v1080 = vunpack.c.l.b16 %v1041
        %v1081 = vunpack.c.l.b16 %v1042
        %v1082 = vunpack.c.l.b16 %v1043
        %v1083 = vunpack.c.l.b16 %v1044
        %v1084 = vunpack.c.l.b16 %v1045
        %v1085 = vunpack.c.l.b16 %v1046
        %v1086 = vunpack.c.l.b16 %v1047
        %v1087 = vunpack.c.l.b16 %v1048
        %v1088 = vunpack.c.l.b16 %v1049
        %v1089 = vunpack.c.l.b16 %v1050
        %v1090 = vunpack.c.l.b16 %v1051
        %v1091 = vunpack.c.l.b16 %v1052
        %v1092 = vpack.c.b16 %v1077, %v1076
        %v1093 = vpack.c.b16 %v1079, %v1078
        %v1094 = vpack.c.b16 %v1081, %v1080
        %v1095 = vpack.c.b16 %v1083, %v1082
        %v1096 = vpack.c.b16 %v1085, %v1084
        %v1097 = vpack.c.b16 %v1087, %v1086
        %v1098 = vpack.c.b16 %v1089, %v1088
        %v1099 = vpack.c.b16 %v1091, %v1090
        %1108 = vmatprep.subr.bf16.mxu0 0
        %1109 = vmatpush1.bf16.msra.mxu0 %v1092
        %1110 = vmatprep.subr.bf16.mxu0 0
        %1111 = vmatpush1.bf16.msra.mxu0 %v1093
        %1112 = vmatprep.subr.bf16.mxu0 0
        %1113 = vmatpush1.bf16.msra.mxu0 %v1094
        %1114 = vmatprep.subr.bf16.mxu0 0
        %1115 = vmatpush1.bf16.msra.mxu0 %v1095
        %1116 = vmatprep.subr.bf16.mxu0 0
        %1117 = vmatpush1.bf16.msra.mxu0 %v1096
        %1118 = vmatprep.subr.bf16.mxu0 0
        %1119 = vmatpush1.bf16.msra.mxu0 %v1097
        %1120 = vmatprep.subr.bf16.mxu0 0
        %1121 = vmatpush1.bf16.msra.mxu0 %v1098
        %1122 = vmatprep.subr.bf16.mxu0 0
        %1123 = vmatpush1.bf16.msra.mxu0 %v1099
        %1124 = vmatprep.subr.bf16.mxu0 0
        %1125 = vmatpush1.bf16.msra.mxu0 0
        %1126 = vmatprep.subr.bf16.mxu0 0
        %1127 = vmatpush1.bf16.msra.mxu0 0
        %1128 = vmatprep.subr.bf16.mxu0 0
        %1129 = vmatpush1.bf16.msra.mxu0 0
        %1130 = vmatprep.subr.bf16.mxu0 0
        %1131 = vmatpush1.bf16.msra.mxu0 0
        %1132 = vmatprep.subr.bf16.mxu0 0
        %1133 = vmatpush1.bf16.msra.mxu0 0
        %1134 = vmatprep.subr.bf16.mxu0 0
        %1135 = vmatpush1.bf16.msra.mxu0 0
        %1136 = vmatprep.subr.bf16.mxu0 0
        %1137 = vmatpush1.bf16.msra.mxu0 0
        %1138 = vmatprep.subr.bf16.mxu0 0
        %1139 = vmatpush1.bf16.msra.mxu0 0
        %1140 = vmatprep.mubr.bf16.mxu0 0
        %1141 = vmatmul.mubr.bf16.gmra.mrb[0].mxu0 %v745
        %v1142 = vpop.f32.mrb[0].mxu0
        %v1143 = vadd.f32 %v1058, %v1142
        %v1144 = vpop.f32.mrb[0].mxu0
        %v1145 = vpop.f32.mrb[0].mxu0
        %v1146 = vadd.f32 %v1058, %v1145
        %v1147 = vpop.f32.mrb[0].mxu0
        %1148 = vmatprep.mubr.bf16.mxu0 0
        %1149 = vmatmul.mubr.bf16.gmra.mrb[0].mxu0 %v746
        %v1150 = vpop.f32.mrb[0].mxu0
        %v1151 = vadd.f32 %v1058, %v1150
        %v1152 = vpop.f32.mrb[0].mxu0
        %v1153 = vpop.f32.mrb[0].mxu0
        %v1154 = vadd.f32 %v1058, %v1153
        %v1155 = vpop.f32.mrb[0].mxu0
        %1156 = vmatprep.mubr.bf16.mxu0 0
        %1157 = vmatmul.mubr.bf16.gmra.mrb[0].mxu0 %v747
        %v1158 = vpop.f32.mrb[0].mxu0
        %v1159 = vadd.f32 %v1058, %v1158
        %v1160 = vpop.f32.mrb[0].mxu0
        %v1161 = vpop.f32.mrb[0].mxu0
        %v1162 = vadd.f32 %v1058, %v1161
        %v1163 = vpop.f32.mrb[0].mxu0
        %1164 = vmatprep.mubr.bf16.mxu0 0
        %1165 = vmatmul.mubr.bf16.gmra.mrb[0].mxu0 %v748
        %v1166 = vpop.f32.mrb[0].mxu0
        %v1167 = vadd.f32 %v1058, %v1166
        %v1168 = vpop.f32.mrb[0].mxu0
        %v1169 = vpop.f32.mrb[0].mxu0
        %v1170 = vadd.f32 %v1058, %v1169
        %v1171 = vpop.f32.mrb[0].mxu0
        %1172 = vdwg.mxu0
        %v1173 = vpack.c.bf16 %v1146, %v1143
        %v1174 = vpack.c.bf16 %v1154, %v1151
        %v1175 = vpack.c.bf16 %v1162, %v1159
        %v1176 = vpack.c.bf16 %v1170, %v1167
        %1177 = vst [vmem:[#allocation2 + $0x10] sm:$0xff] %v1173
        %1178 = vst [vmem:[#allocation2 + $0x28] sm:$0xff] %v1174
        %1179 = vst [vmem:[#allocation2 + $0x40] sm:$0xff] %v1175
        %1180 = vst [vmem:[#allocation2 + $0x58] sm:$0xff] %v1176
        %v1181 = vlaneseq
        %v1182 = vshrl.u32 %v1181, 7
        %v1183 = vadd.s32 %v1182, 8
        %v1184 = vadd.s32 %v1182, 16
        %v1185 = vadd.s32 %v1182, 24
        loop: start=0, step=1, limit=2
        $region125: #{tpu_custom_call.1} parent=71 // loop_pre_header
          _
        $region126: #{tpu_custom_call.1} parent=71 // loop_header
          %s1187 = sphi 0, %s1191
          %p1188 = scmp.ge.s32.totalorder %s1187, 2
        $region127: #{tpu_custom_call.1} parent=71 // loop_header_branch
          %1190 = sbr.rel (%p1188) target = $region131
        $region128: #{tpu_custom_call.1} parent=71 // loop_body
          %s1192 = smul.u32 %s1187, 32
          %s1193 = sshra.s32 %s1192, 4
          %s1194 = sand.u32 %s1192, 15
          %s1195 = smul.u32 %s1193, 3
          %s1196 = smul.addr %s1195, 8
          %s1197 = scalar_lea.vmem [#allocation2], %s1196
          %v1198 = vld [vmem:[%s1197] sm:$0xff]
          %v1199 = vld [vmem:[%s1197 + $0x18] sm:$0xff]
          loop: start=0, step=1, limit=2
          $region132: #{tpu_custom_call.1} parent=128 // loop_pre_header
            _
          $region133: #{tpu_custom_call.1} parent=128 // loop_header
            %s1201 = sphi 0, %s1205
            %p1202 = scmp.ge.s32.totalorder %s1201, 2
            %v1206 = vphi -1e+30, %v1311
            %v1207 = vphi -1e+30, %v1312
            %v1208 = vphi -1e+30, %v1313
            %v1209 = vphi -1e+30, %v1314
            %v1210 = vphi 0.0, %v1355
            %v1211 = vphi 0.0, %v1356
            %v1212 = vphi 0.0, %v1357
            %v1213 = vphi 0.0, %v1358
            %v1214 = vphi 0.0, %v1420
            %v1215 = vphi 0.0, %v1421
            %v1216 = vphi 0.0, %v1422
            %v1217 = vphi 0.0, %v1423
          $region134: #{tpu_custom_call.1} parent=128 // loop_header_branch
            %1204 = sbr.rel (%p1202) target = $region138
          $region135: #{tpu_custom_call.1} parent=128 // loop_body
            %s1218 = smul.u32 %s1201, 16
            %s1219 = sadd.s32 %s1192, %s1218
            %s1220 = sshra.s32 %s1219, 4
            %s1221 = sand.u32 %s1219, 15
            %s1222 = smul.u32 %s1220, 3
            %s1223 = smul.addr %s1222, 8
            %s1224 = scalar_lea.vmem [#allocation2], %s1223
            %v1225 = vld [vmem:[%s1224 + $0x8] sm:$0xff]
            %v1226 = vld [vmem:[%s1224 + $0x10] sm:$0xff]
            %vm1227 = vcmask 261120
            %v1229 = vsel %vm1227, %v1198, 0
            %v1232 = vsel %vm1227, %v1199, 0
            %v1235 = vsel %vm1227, %v1225, 0
            %1237 = vmatprep.subr.bf16.mxu0 0
            %1238 = vmatpush1.bf16.xpose.msra.mxu0 %v1235
            %1239 = vmatprep.subr.bf16.mxu0 0
            %1240 = vmatpush1.bf16.xpose.msra.mxu0 0
            %1241 = vmatprep.subr.bf16.mxu0 0
            %1242 = vmatpush1.bf16.xpose.msra.mxu0 0
            %1243 = vmatprep.subr.bf16.mxu0 0
            %1244 = vmatpush1.bf16.xpose.msra.mxu0 0
            %1245 = vmatprep.subr.bf16.mxu0 0
            %1246 = vmatpush1.bf16.xpose.msra.mxu0 0
            %1247 = vmatprep.subr.bf16.mxu0 0
            %1248 = vmatpush1.bf16.xpose.msra.mxu0 0
            %1249 = vmatprep.subr.bf16.mxu0 0
            %1250 = vmatpush1.bf16.xpose.msra.mxu0 0
            %1251 = vmatprep.subr.bf16.mxu0 0
            %1252 = vmatpush1.bf16.xpose.msra.mxu0 0
            %1253 = vmatprep.subr.bf16.mxu0 0
            %1254 = vmatpush1.bf16.xpose.msra.mxu0 0
            %1255 = vmatprep.subr.bf16.mxu0 0
            %1256 = vmatpush1.bf16.xpose.msra.mxu0 0
            %1257 = vmatprep.subr.bf16.mxu0 0
            %1258 = vmatpush1.bf16.xpose.msra.mxu0 0
            %1259 = vmatprep.subr.bf16.mxu0 0
            %1260 = vmatpush1.bf16.xpose.msra.mxu0 0
            %1261 = vmatprep.subr.bf16.mxu0 0
            %1262 = vmatpush1.bf16.xpose.msra.mxu0 0
            %1263 = vmatprep.subr.bf16.mxu0 0
            %1264 = vmatpush1.bf16.xpose.msra.mxu0 0
            %1265 = vmatprep.subr.bf16.mxu0 0
            %1266 = vmatpush1.bf16.xpose.msra.mxu0 0
            %1267 = vmatprep.subr.bf16.mxu0 0
            %1268 = vmatpush1.bf16.xpose.msra.mxu0 0
            %1269 = vmatprep.mubr.bf16.mxu0 0
            %1270 = vmatmul.mubr.bf16.gmra.mrb[0].mxu0 %v1229
            %v1271 = vpop.f32.mrb[0].mxu0
            %v1272 = vadd.f32 0.0, %v1271
            %v1273 = vpop.f32.mrb[0].mxu0
            %v1274 = vpop.f32.mrb[0].mxu0
            %v1275 = vadd.f32 0.0, %v1274
            %v1276 = vpop.f32.mrb[0].mxu0
            %1277 = vmatprep.mubr.bf16.mxu0 0
            %1278 = vmatmul.mubr.bf16.gmra.mrb[0].mxu0 %v1232
            %v1279 = vpop.f32.mrb[0].mxu0
            %v1280 = vadd.f32 0.0, %v1279
            %v1281 = vpop.f32.mrb[0].mxu0
            %v1282 = vpop.f32.mrb[0].mxu0
            %v1283 = vadd.f32 0.0, %v1282
            %v1284 = vpop.f32.mrb[0].mxu0
            %1285 = vdwg.mxu0
            %v1286 = vlaneseq
            %v1287 = vand.u32 %v1286, 127
            %v1288 = vstv %s1218
            %v1289 = vadd.s32 %v1288, %v1287
            %vm1290 = vcmp.le.s32.totalorder %v1289, %v1182
            %vm1291 = vcmp.le.s32.totalorder %v1289, %v1183
            %vm1292 = vcmp.le.s32.totalorder %v1289, %v1184
            %vm1293 = vcmp.le.s32.totalorder %v1289, %v1185
            %v1294 = vsel %vm1290, %v1272, -1e+30
            %v1295 = vsel %vm1291, %v1275, -1e+30
            %v1296 = vsel %vm1292, %v1280, -1e+30
            %v1297 = vsel %vm1293, %v1283, -1e+30
            %vm1298 = vcmask 130048
            %v1299 = vsel %vm1298, %v1294, -inf
            %1300 = vmax.xlane.f32.xlu0 %v1299
            %v1301 = vpop.xlane.xlu0 %1300
            %v1302 = vsel %vm1298, %v1295, -inf
            %1303 = vmax.xlane.f32.xlu0 %v1302
            %v1304 = vpop.xlane.xlu0 %1303
            %v1305 = vsel %vm1298, %v1296, -inf
            %1306 = vmax.xlane.f32.xlu0 %v1305
            %v1307 = vpop.xlane.xlu0 %1306
            %v1308 = vsel %vm1298, %v1297, -inf
            %1309 = vmax.xlane.f32.xlu0 %v1308
            %v1310 = vpop.xlane.xlu0 %1309
            %v1311 = vmax.f32 %v1206, %v1301
            %v1312 = vmax.f32 %v1207, %v1304
            %v1313 = vmax.f32 %v1208, %v1307
            %v1314 = vmax.f32 %v1209, %v1310
            %v1315 = vsub.f32 %v1206, %v1311
            %v1316 = vsub.f32 %v1207, %v1312
            %v1317 = vsub.f32 %v1208, %v1313
            %v1318 = vsub.f32 %v1209, %v1314
            %v1319 = vmul.f32 %v1315, 1.442695
            %v1320 = vpow.pop %v1319
            %v1321 = vmul.f32 %v1316, 1.442695
            %v1322 = vpow.pop %v1321
            %v1323 = vmul.f32 %v1317, 1.442695
            %v1324 = vpow.pop %v1323
            %v1325 = vmul.f32 %v1318, 1.442695
            %v1326 = vpow.pop %v1325
            %v1327 = vsub.f32 %v1294, %v1311
            %v1328 = vsub.f32 %v1295, %v1312
            %v1329 = vsub.f32 %v1296, %v1313
            %v1330 = vsub.f32 %v1297, %v1314
            %v1331 = vmul.f32 %v1327, 1.442695
            %v1332 = vpow.pop %v1331
            %v1333 = vmul.f32 %v1328, 1.442695
            %v1334 = vpow.pop %v1333
            %v1335 = vmul.f32 %v1329, 1.442695
            %v1336 = vpow.pop %v1335
            %v1337 = vmul.f32 %v1330, 1.442695
            %v1338 = vpow.pop %v1337
            %v1339 = vmul.f32 %v1320, %v1210
            %v1340 = vmul.f32 %v1322, %v1211
            %v1341 = vmul.f32 %v1324, %v1212
            %v1342 = vmul.f32 %v1326, %v1213
            %v1343 = vsel %vm1298, %v1332, 0.0
            %1344 = vadd.xlane.f32.xlu0 %v1343
            %v1345 = vpop.xlane.xlu0 %1344
            %v1346 = vsel %vm1298, %v1334, 0.0
            %1347 = vadd.xlane.f32.xlu0 %v1346
            %v1348 = vpop.xlane.xlu0 %1347
            %v1349 = vsel %vm1298, %v1336, 0.0
            %1350 = vadd.xlane.f32.xlu0 %v1349
            %v1351 = vpop.xlane.xlu0 %1350
            %v1352 = vsel %vm1298, %v1338, 0.0
            %1353 = vadd.xlane.f32.xlu0 %v1352
            %v1354 = vpop.xlane.xlu0 %1353
            %v1355 = vadd.f32 %v1339, %v1345
            %v1356 = vadd.f32 %v1340, %v1348
            %v1357 = vadd.f32 %v1341, %v1351
            %v1358 = vadd.f32 %v1342, %v1354
            %v1359 = vmul.f32 %v1320, %v1214
            %v1360 = vmul.f32 %v1322, %v1215
            %v1361 = vmul.f32 %v1324, %v1216
            %v1362 = vmul.f32 %v1326, %v1217
            %v1363 = vpack.c.bf16 %v1334, %v1332
            %v1364 = vpack.c.bf16 %v1338, %v1336
            %v1366 = vsel %vm1298, %v1363, 0
            %v1369 = vsel %vm1298, %v1364, 0
            %1371 = vmatprep.subr.bf16.mxu0 0
            %1372 = vmatpush1.bf16.msra.mxu0 %v1226
            %1373 = vmatprep.subr.bf16.mxu0 0
            %1374 = vmatpush1.bf16.msra.mxu0 0
            %1375 = vmatprep.subr.bf16.mxu0 0
            %1376 = vmatpush1.bf16.msra.mxu0 0
            %1377 = vmatprep.subr.bf16.mxu0 0
            %1378 = vmatpush1.bf16.msra.mxu0 0
            %1379 = vmatprep.subr.bf16.mxu0 0
            %1380 = vmatpush1.bf16.msra.mxu0 0
            %1381 = vmatprep.subr.bf16.mxu0 0
            %1382 = vmatpush1.bf16.msra.mxu0 0
            %1383 = vmatprep.subr.bf16.mxu0 0
            %1384 = vmatpush1.bf16.msra.mxu0 0
            %1385 = vmatprep.subr.bf16.mxu0 0
            %1386 = vmatpush1.bf16.msra.mxu0 0
            %1387 = vmatprep.subr.bf16.mxu0 0
            %1388 = vmatpush1.bf16.msra.mxu0 0
            %1389 = vmatprep.subr.bf16.mxu0 0
            %1390 = vmatpush1.bf16.msra.mxu0 0
            %1391 = vmatprep.subr.bf16.mxu0 0
            %1392 = vmatpush1.bf16.msra.mxu0 0
            %1393 = vmatprep.subr.bf16.mxu0 0
            %1394 = vmatpush1.bf16.msra.mxu0 0
            %1395 = vmatprep.subr.bf16.mxu0 0
            %1396 = vmatpush1.bf16.msra.mxu0 0
            %1397 = vmatprep.subr.bf16.mxu0 0
            %1398 = vmatpush1.bf16.msra.mxu0 0
            %1399 = vmatprep.subr.bf16.mxu0 0
            %1400 = vmatpush1.bf16.msra.mxu0 0
            %1401 = vmatprep.subr.bf16.mxu0 0
            %1402 = vmatpush1.bf16.msra.mxu0 0
            %1403 = vmatprep.mubr.bf16.mxu0 0
            %1404 = vmatmul.mubr.bf16.gmra.mrb[0].mxu0 %v1366
            %v1405 = vpop.f32.mrb[0].mxu0
            %v1406 = vadd.f32 0.0, %v1405
            %v1407 = vpop.f32.mrb[0].mxu0
            %v1408 = vpop.f32.mrb[0].mxu0
            %v1409 = vadd.f32 0.0, %v1408
            %v1410 = vpop.f32.mrb[0].mxu0
            %1411 = vmatprep.mubr.bf16.mxu0 0
            %1412 = vmatmul.mubr.bf16.gmra.mrb[0].mxu0 %v1369
            %v1413 = vpop.f32.mrb[0].mxu0
            %v1414 = vadd.f32 0.0, %v1413
            %v1415 = vpop.f32.mrb[0].mxu0
            %v1416 = vpop.f32.mrb[0].mxu0
            %v1417 = vadd.f32 0.0, %v1416
            %v1418 = vpop.f32.mrb[0].mxu0
            %1419 = vdwg.mxu0
            %v1420 = vadd.f32 %v1359, %v1406
            %v1421 = vadd.f32 %v1360, %v1409
            %v1422 = vadd.f32 %v1361, %v1414
            %v1423 = vadd.f32 %v1362, %v1417
          $region136: #{tpu_custom_call.1} parent=128 // loop_footer
            %s1205 = sadd.s32 1, %s1201
          $region137: #{tpu_custom_call.1} parent=128 // loop_footer_branch
            %1200 = sbr.rel target = $region133
          $region138: #{tpu_custom_call.1} parent=128 // loop_exit
            _
          %v1424 = vrcp.pop %v1210
          %v1425 = vrcp.pop %v1211
          %v1426 = vrcp.pop %v1212
          %v1427 = vrcp.pop %v1213
          %v1428 = vmul.f32 %v1214, %v1424
          %v1429 = vmul.f32 %v1215, %v1425
          %v1430 = vmul.f32 %v1216, %v1426
          %v1431 = vmul.f32 %v1217, %v1427
          %v1432 = vpack.c.bf16 %v1429, %v1428
          %v1433 = vpack.c.bf16 %v1431, %v1430
          %s1434 = smul.addr %s1193, 8
          %s1435 = scalar_lea.vmem [#allocation3], %s1434
          %vm1436 = vcmask 261120
          %1437 = vst.msk [vmem:[%s1435] sm:$0xff] %vm1436, %v1432
          %1438 = vst.msk [vmem:[%s1435 + $0x8] sm:$0xff] %vm1436, %v1433
          %v1439 = vld [vmem:[%s1197] sm:$0xff]
          %v1440 = vld [vmem:[%s1197 + $0x18] sm:$0xff]
          loop: start=0, step=1, limit=2
          $region139: #{tpu_custom_call.1} parent=128 // loop_pre_header
            _
          $region140: #{tpu_custom_call.1} parent=128 // loop_header
            %s1442 = sphi 0, %s1446
            %p1443 = scmp.ge.s32.totalorder %s1442, 2
            %v1447 = vphi -1e+30, %v1560
            %v1448 = vphi -1e+30, %v1561
            %v1449 = vphi -1e+30, %v1562
            %v1450 = vphi -1e+30, %v1563
            %v1451 = vphi 0.0, %v1604
            %v1452 = vphi 0.0, %v1605
            %v1453 = vphi 0.0, %v1606
            %v1454 = vphi 0.0, %v1607
            %v1455 = vphi 0.0, %v1673
            %v1456 = vphi 0.0, %v1674
            %v1457 = vphi 0.0, %v1675
            %v1458 = vphi 0.0, %v1676
          $region141: #{tpu_custom_call.1} parent=128 // loop_header_branch
            %1445 = sbr.rel (%p1443) target = $region145
          $region142: #{tpu_custom_call.1} parent=128 // loop_body
            %s1459 = smul.u32 %s1442, 16
            %s1460 = sadd.s32 %s1192, %s1459
            %s1461 = sshra.s32 %s1460, 4
            %s1462 = sand.u32 %s1460, 15
            %s1463 = smul.u32 %s1461, 3
            %s1464 = smul.addr %s1463, 8
            %s1465 = scalar_lea.vmem [#allocation2], %s1464
            %v1466 = vld [vmem:[%s1465 + $0x8] sm:$0xff]
            %v1467 = vld [vmem:[%s1465 + $0x10] sm:$0xff]
            %1470 = vrot.lane.b32.xlu0 %v1439, 96
            %v1471 = vpop.permute.xlu0 %1470
            %1472 = vrot.lane.b32.xlu0 %v1440, 96
            %v1473 = vpop.permute.xlu0 %1472
            %1475 = vrot.lane.b32.xlu0 %v1466, 96
            %v1476 = vpop.permute.xlu0 %1475
            %v1478 = vsel %vm1436, %v1471, 0
            %v1481 = vsel %vm1436, %v1473, 0
            %v1484 = vsel %vm1436, %v1476, 0
            %1486 = vmatprep.subr.bf16.mxu0 0
            %1487 = vmatpush1.bf16.xpose.msra.mxu0 %v1484
            %1488 = vmatprep.subr.bf16.mxu0 0
            %1489 = vmatpush1.bf16.xpose.msra.mxu0 0
            %1490 = vmatprep.subr.bf16.mxu0 0
            %1491 = vmatpush1.bf16.xpose.msra.mxu0 0
            %1492 = vmatprep.subr.bf16.mxu0 0
            %1493 = vmatpush1.bf16.xpose.msra.mxu0 0
            %1494 = vmatprep.subr.bf16.mxu0 0
            %1495 = vmatpush1.bf16.xpose.msra.mxu0 0
            %1496 = vmatprep.subr.bf16.mxu0 0
            %1497 = vmatpush1.bf16.xpose.msra.mxu0 0
            %1498 = vmatprep.subr.bf16.mxu0 0
            %1499 = vmatpush1.bf16.xpose.msra.mxu0 0
            %1500 = vmatprep.subr.bf16.mxu0 0
            %1501 = vmatpush1.bf16.xpose.msra.mxu0 0
            %1502 = vmatprep.subr.bf16.mxu0 0
            %1503 = vmatpush1.bf16.xpose.msra.mxu0 0
            %1504 = vmatprep.subr.bf16.mxu0 0
            %1505 = vmatpush1.bf16.xpose.msra.mxu0 0
            %1506 = vmatprep.subr.bf16.mxu0 0
            %1507 = vmatpush1.bf16.xpose.msra.mxu0 0
            %1508 = vmatprep.subr.bf16.mxu0 0
            %1509 = vmatpush1.bf16.xpose.msra.mxu0 0
            %1510 = vmatprep.subr.bf16.mxu0 0
            %1511 = vmatpush1.bf16.xpose.msra.mxu0 0
            %1512 = vmatprep.subr.bf16.mxu0 0
            %1513 = vmatpush1.bf16.xpose.msra.mxu0 0
            %1514 = vmatprep.subr.bf16.mxu0 0
            %1515 = vmatpush1.bf16.xpose.msra.mxu0 0
            %1516 = vmatprep.subr.bf16.mxu0 0
            %1517 = vmatpush1.bf16.xpose.msra.mxu0 0
            %1518 = vmatprep.mubr.bf16.mxu0 0
            %1519 = vmatmul.mubr.bf16.gmra.mrb[0].mxu0 %v1478
            %v1520 = vpop.f32.mrb[0].mxu0
            %v1521 = vadd.f32 0.0, %v1520
            %v1522 = vpop.f32.mrb[0].mxu0
            %v1523 = vpop.f32.mrb[0].mxu0
            %v1524 = vadd.f32 0.0, %v1523
            %v1525 = vpop.f32.mrb[0].mxu0
            %1526 = vmatprep.mubr.bf16.mxu0 0
            %1527 = vmatmul.mubr.bf16.gmra.mrb[0].mxu0 %v1481
            %v1528 = vpop.f32.mrb[0].mxu0
            %v1529 = vadd.f32 0.0, %v1528
            %v1530 = vpop.f32.mrb[0].mxu0
            %v1531 = vpop.f32.mrb[0].mxu0
            %v1532 = vadd.f32 0.0, %v1531
            %v1533 = vpop.f32.mrb[0].mxu0
            %1534 = vdwg.mxu0
            %v1535 = vlaneseq
            %v1536 = vand.u32 %v1535, 127
            %v1537 = vstv %s1459
            %v1538 = vadd.s32 %v1537, %v1536
            %vm1539 = vcmp.le.s32.totalorder %v1538, %v1182
            %vm1540 = vcmp.le.s32.totalorder %v1538, %v1183
            %vm1541 = vcmp.le.s32.totalorder %v1538, %v1184
            %vm1542 = vcmp.le.s32.totalorder %v1538, %v1185
            %v1543 = vsel %vm1539, %v1521, -1e+30
            %v1544 = vsel %vm1540, %v1524, -1e+30
            %v1545 = vsel %vm1541, %v1529, -1e+30
            %v1546 = vsel %vm1542, %v1532, -1e+30
            %vm1547 = vcmask 130048
            %v1548 = vsel %vm1547, %v1543, -inf
            %1549 = vmax.xlane.f32.xlu0 %v1548
            %v1550 = vpop.xlane.xlu0 %1549
            %v1551 = vsel %vm1547, %v1544, -inf
            %1552 = vmax.xlane.f32.xlu0 %v1551
            %v1553 = vpop.xlane.xlu0 %1552
            %v1554 = vsel %vm1547, %v1545, -inf
            %1555 = vmax.xlane.f32.xlu0 %v1554
            %v1556 = vpop.xlane.xlu0 %1555
            %v1557 = vsel %vm1547, %v1546, -inf
            %1558 = vmax.xlane.f32.xlu0 %v1557
            %v1559 = vpop.xlane.xlu0 %1558
            %v1560 = vmax.f32 %v1447, %v1550
            %v1561 = vmax.f32 %v1448, %v1553
            %v1562 = vmax.f32 %v1449, %v1556
            %v1563 = vmax.f32 %v1450, %v1559
            %v1564 = vsub.f32 %v1447, %v1560
            %v1565 = vsub.f32 %v1448, %v1561
            %v1566 = vsub.f32 %v1449, %v1562
            %v1567 = vsub.f32 %v1450, %v1563
            %v1568 = vmul.f32 %v1564, 1.442695
            %v1569 = vpow.pop %v1568
            %v1570 = vmul.f32 %v1565, 1.442695
            %v1571 = vpow.pop %v1570
            %v1572 = vmul.f32 %v1566, 1.442695
            %v1573 = vpow.pop %v1572
            %v1574 = vmul.f32 %v1567, 1.442695
            %v1575 = vpow.pop %v1574
            %v1576 = vsub.f32 %v1543, %v1560
            %v1577 = vsub.f32 %v1544, %v1561
            %v1578 = vsub.f32 %v1545, %v1562
            %v1579 = vsub.f32 %v1546, %v1563
            %v1580 = vmul.f32 %v1576, 1.442695
            %v1581 = vpow.pop %v1580
            %v1582 = vmul.f32 %v1577, 1.442695
            %v1583 = vpow.pop %v1582
            %v1584 = vmul.f32 %v1578, 1.442695
            %v1585 = vpow.pop %v1584
            %v1586 = vmul.f32 %v1579, 1.442695
            %v1587 = vpow.pop %v1586
            %v1588 = vmul.f32 %v1569, %v1451
            %v1589 = vmul.f32 %v1571, %v1452
            %v1590 = vmul.f32 %v1573, %v1453
            %v1591 = vmul.f32 %v1575, %v1454
            %v1592 = vsel %vm1547, %v1581, 0.0
            %1593 = vadd.xlane.f32.xlu0 %v1592
            %v1594 = vpop.xlane.xlu0 %1593
            %v1595 = vsel %vm1547, %v1583, 0.0
            %1596 = vadd.xlane.f32.xlu0 %v1595
            %v1597 = vpop.xlane.xlu0 %1596
            %v1598 = vsel %vm1547, %v1585, 0.0
            %1599 = vadd.xlane.f32.xlu0 %v1598
            %v1600 = vpop.xlane.xlu0 %1599
            %v1601 = vsel %vm1547, %v1587, 0.0
            %1602 = vadd.xlane.f32.xlu0 %v1601
            %v1603 = vpop.xlane.xlu0 %1602
            %v1604 = vadd.f32 %v1588, %v1594
            %v1605 = vadd.f32 %v1589, %v1597
            %v1606 = vadd.f32 %v1590, %v1600
            %v1607 = vadd.f32 %v1591, %v1603
            %v1608 = vmul.f32 %v1569, %v1455
            %v1609 = vmul.f32 %v1571, %v1456
            %v1610 = vmul.f32 %v1573, %v1457
            %v1611 = vmul.f32 %v1575, %v1458
            %v1612 = vpack.c.bf16 %v1583, %v1581
            %v1613 = vpack.c.bf16 %v1587, %v1585
            %1615 = vrot.lane.b32.xlu0 %v1467, 96
            %v1616 = vpop.permute.xlu0 %1615
            %v1619 = vsel %vm1547, %v1612, 0
            %v1622 = vsel %vm1547, %v1613, 0
            %1624 = vmatprep.subr.bf16.mxu0 0
            %1625 = vmatpush1.bf16.msra.mxu0 %v1616
            %1626 = vmatprep.subr.bf16.mxu0 0
            %1627 = vmatpush1.bf16.msra.mxu0 0
            %1628 = vmatprep.subr.bf16.mxu0 0
            %1629 = vmatpush1.bf16.msra.mxu0 0
            %1630 = vmatprep.subr.bf16.mxu0 0
            %1631 = vmatpush1.bf16.msra.mxu0 0
            %1632 = vmatprep.subr.bf16.mxu0 0
            %1633 = vmatpush1.bf16.msra.mxu0 0
            %1634 = vmatprep.subr.bf16.mxu0 0
            %1635 = vmatpush1.bf16.msra.mxu0 0
            %1636 = vmatprep.subr.bf16.mxu0 0
            %1637 = vmatpush1.bf16.msra.mxu0 0
            %1638 = vmatprep.subr.bf16.mxu0 0
            %1639 = vmatpush1.bf16.msra.mxu0 0
            %1640 = vmatprep.subr.bf16.mxu0 0
            %1641 = vmatpush1.bf16.msra.mxu0 0
            %1642 = vmatprep.subr.bf16.mxu0 0
            %1643 = vmatpush1.bf16.msra.mxu0 0
            %1644 = vmatprep.subr.bf16.mxu0 0
            %1645 = vmatpush1.bf16.msra.mxu0 0
            %1646 = vmatprep.subr.bf16.mxu0 0
            %1647 = vmatpush1.bf16.msra.mxu0 0
            %1648 = vmatprep.subr.bf16.mxu0 0
            %1649 = vmatpush1.bf16.msra.mxu0 0
            %1650 = vmatprep.subr.bf16.mxu0 0
            %1651 = vmatpush1.bf16.msra.mxu0 0
            %1652 = vmatprep.subr.bf16.mxu0 0
            %1653 = vmatpush1.bf16.msra.mxu0 0
            %1654 = vmatprep.subr.bf16.mxu0 0
            %1655 = vmatpush1.bf16.msra.mxu0 0
            %1656 = vmatprep.mubr.bf16.mxu0 0
            %1657 = vmatmul.mubr.bf16.gmra.mrb[0].mxu0 %v1619
            %v1658 = vpop.f32.mrb[0].mxu0
            %v1659 = vadd.f32 0.0, %v1658
            %v1660 = vpop.f32.mrb[0].mxu0
            %v1661 = vpop.f32.mrb[0].mxu0
            %v1662 = vadd.f32 0.0, %v1661
            %v1663 = vpop.f32.mrb[0].mxu0
            %1664 = vmatprep.mubr.bf16.mxu0 0
            %1665 = vmatmul.mubr.bf16.gmra.mrb[0].mxu0 %v1622
            %v1666 = vpop.f32.mrb[0].mxu0
            %v1667 = vadd.f32 0.0, %v1666
            %v1668 = vpop.f32.mrb[0].mxu0
            %v1669 = vpop.f32.mrb[0].mxu0
            %v1670 = vadd.f32 0.0, %v1669
            %v1671 = vpop.f32.mrb[0].mxu0
            %1672 = vdwg.mxu0
            %v1673 = vadd.f32 %v1608, %v1659
            %v1674 = vadd.f32 %v1609, %v1662
            %v1675 = vadd.f32 %v1610, %v1667
            %v1676 = vadd.f32 %v1611, %v1670
          $region143: #{tpu_custom_call.1} parent=128 // loop_footer
            %s1446 = sadd.s32 1, %s1442
          $region144: #{tpu_custom_call.1} parent=128 // loop_footer_branch
            %1441 = sbr.rel target = $region140
          $region145: #{tpu_custom_call.1} parent=128 // loop_exit
            _
          %v1677 = vrcp.pop %v1451
          %v1678 = vrcp.pop %v1452
          %v1679 = vrcp.pop %v1453
          %v1680 = vrcp.pop %v1454
          %v1681 = vmul.f32 %v1455, %v1677
          %v1682 = vmul.f32 %v1456, %v1678
          %v1683 = vmul.f32 %v1457, %v1679
          %v1684 = vmul.f32 %v1458, %v1680
          %v1685 = vpack.c.bf16 %v1682, %v1681
          %v1686 = vpack.c.bf16 %v1684, %v1683
          %1689 = vrot.lane.b32.xlu0 %v1685, 32
          %v1690 = vpop.permute.xlu0 %1689
          %1691 = vrot.lane.b32.xlu0 %v1686, 32
          %v1692 = vpop.permute.xlu0 %1691
          %vm1695 = vcmask 523520
          %1696 = vst.msk [vmem:[%s1435] sm:$0xff] %vm1695, %v1690
          %1697 = vst.msk [vmem:[%s1435 + $0x8] sm:$0xff] %vm1695, %v1692
          %v1698 = vld [vmem:[%s1197] sm:$0xff]
          %v1699 = vld [vmem:[%s1197 + $0x18] sm:$0xff]
          loop: start=0, step=1, limit=2
          $region146: #{tpu_custom_call.1} parent=128 // loop_pre_header
            _
          $region147: #{tpu_custom_call.1} parent=128 // loop_header
            %s1701 = sphi 0, %s1705
            %p1702 = scmp.ge.s32.totalorder %s1701, 2
            %v1706 = vphi -1e+30, %v1819
            %v1707 = vphi -1e+30, %v1820
            %v1708 = vphi -1e+30, %v1821
            %v1709 = vphi -1e+30, %v1822
            %v1710 = vphi 0.0, %v1863
            %v1711 = vphi 0.0, %v1864
            %v1712 = vphi 0.0, %v1865
            %v1713 = vphi 0.0, %v1866
            %v1714 = vphi 0.0, %v1932
            %v1715 = vphi 0.0, %v1933
            %v1716 = vphi 0.0, %v1934
            %v1717 = vphi 0.0, %v1935
          $region148: #{tpu_custom_call.1} parent=128 // loop_header_branch
            %1704 = sbr.rel (%p1702) target = $region152
          $region149: #{tpu_custom_call.1} parent=128 // loop_body
            %s1718 = smul.u32 %s1701, 16
            %s1719 = sadd.s32 %s1192, %s1718
            %s1720 = sshra.s32 %s1719, 4
            %s1721 = sand.u32 %s1719, 15
            %s1722 = smul.u32 %s1720, 3
            %s1723 = smul.addr %s1722, 8
            %s1724 = scalar_lea.vmem [#allocation2], %s1723
            %v1725 = vld [vmem:[%s1724 + $0x8] sm:$0xff]
            %v1726 = vld [vmem:[%s1724 + $0x10] sm:$0xff]
            %1729 = vrot.lane.b32.xlu0 %v1698, 64
            %v1730 = vpop.permute.xlu0 %1729
            %1731 = vrot.lane.b32.xlu0 %v1699, 64
            %v1732 = vpop.permute.xlu0 %1731
            %1734 = vrot.lane.b32.xlu0 %v1725, 64
            %v1735 = vpop.permute.xlu0 %1734
            %v1737 = vsel %vm1436, %v1730, 0
            %v1740 = vsel %vm1436, %v1732, 0
            %v1743 = vsel %vm1436, %v1735, 0
            %1745 = vmatprep.subr.bf16.mxu0 0
            %1746 = vmatpush1.bf16.xpose.msra.mxu0 %v1743
            %1747 = vmatprep.subr.bf16.mxu0 0
            %1748 = vmatpush1.bf16.xpose.msra.mxu0 0
            %1749 = vmatprep.subr.bf16.mxu0 0
            %1750 = vmatpush1.bf16.xpose.msra.mxu0 0
            %1751 = vmatprep.subr.bf16.mxu0 0
            %1752 = vmatpush1.bf16.xpose.msra.mxu0 0
            %1753 = vmatprep.subr.bf16.mxu0 0
            %1754 = vmatpush1.bf16.xpose.msra.mxu0 0
            %1755 = vmatprep.subr.bf16.mxu0 0
            %1756 = vmatpush1.bf16.xpose.msra.mxu0 0
            %1757 = vmatprep.subr.bf16.mxu0 0
            %1758 = vmatpush1.bf16.xpose.msra.mxu0 0
            %1759 = vmatprep.subr.bf16.mxu0 0
            %1760 = vmatpush1.bf16.xpose.msra.mxu0 0
            %1761 = vmatprep.subr.bf16.mxu0 0
            %1762 = vmatpush1.bf16.xpose.msra.mxu0 0
            %1763 = vmatprep.subr.bf16.mxu0 0
            %1764 = vmatpush1.bf16.xpose.msra.mxu0 0
            %1765 = vmatprep.subr.bf16.mxu0 0
            %1766 = vmatpush1.bf16.xpose.msra.mxu0 0
            %1767 = vmatprep.subr.bf16.mxu0 0
            %1768 = vmatpush1.bf16.xpose.msra.mxu0 0
            %1769 = vmatprep.subr.bf16.mxu0 0
            %1770 = vmatpush1.bf16.xpose.msra.mxu0 0
            %1771 = vmatprep.subr.bf16.mxu0 0
            %1772 = vmatpush1.bf16.xpose.msra.mxu0 0
            %1773 = vmatprep.subr.bf16.mxu0 0
            %1774 = vmatpush1.bf16.xpose.msra.mxu0 0
            %1775 = vmatprep.subr.bf16.mxu0 0
            %1776 = vmatpush1.bf16.xpose.msra.mxu0 0
            %1777 = vmatprep.mubr.bf16.mxu0 0
            %1778 = vmatmul.mubr.bf16.gmra.mrb[0].mxu0 %v1737
            %v1779 = vpop.f32.mrb[0].mxu0
            %v1780 = vadd.f32 0.0, %v1779
            %v1781 = vpop.f32.mrb[0].mxu0
            %v1782 = vpop.f32.mrb[0].mxu0
            %v1783 = vadd.f32 0.0, %v1782
            %v1784 = vpop.f32.mrb[0].mxu0
            %1785 = vmatprep.mubr.bf16.mxu0 0
            %1786 = vmatmul.mubr.bf16.gmra.mrb[0].mxu0 %v1740
            %v1787 = vpop.f32.mrb[0].mxu0
            %v1788 = vadd.f32 0.0, %v1787
            %v1789 = vpop.f32.mrb[0].mxu0
            %v1790 = vpop.f32.mrb[0].mxu0
            %v1791 = vadd.f32 0.0, %v1790
            %v1792 = vpop.f32.mrb[0].mxu0
            %1793 = vdwg.mxu0
            %v1794 = vlaneseq
            %v1795 = vand.u32 %v1794, 127
            %v1796 = vstv %s1718
            %v1797 = vadd.s32 %v1796, %v1795
            %vm1798 = vcmp.le.s32.totalorder %v1797, %v1182
            %vm1799 = vcmp.le.s32.totalorder %v1797, %v1183
            %vm1800 = vcmp.le.s32.totalorder %v1797, %v1184
            %vm1801 = vcmp.le.s32.totalorder %v1797, %v1185
            %v1802 = vsel %vm1798, %v1780, -1e+30
            %v1803 = vsel %vm1799, %v1783, -1e+30
            %v1804 = vsel %vm1800, %v1788, -1e+30
            %v1805 = vsel %vm1801, %v1791, -1e+30
            %vm1806 = vcmask 130048
            %v1807 = vsel %vm1806, %v1802, -inf
            %1808 = vmax.xlane.f32.xlu0 %v1807
            %v1809 = vpop.xlane.xlu0 %1808
            %v1810 = vsel %vm1806, %v1803, -inf
            %1811 = vmax.xlane.f32.xlu0 %v1810
            %v1812 = vpop.xlane.xlu0 %1811
            %v1813 = vsel %vm1806, %v1804, -inf
            %1814 = vmax.xlane.f32.xlu0 %v1813
            %v1815 = vpop.xlane.xlu0 %1814
            %v1816 = vsel %vm1806, %v1805, -inf
            %1817 = vmax.xlane.f32.xlu0 %v1816
            %v1818 = vpop.xlane.xlu0 %1817
            %v1819 = vmax.f32 %v1706, %v1809
            %v1820 = vmax.f32 %v1707, %v1812
            %v1821 = vmax.f32 %v1708, %v1815
            %v1822 = vmax.f32 %v1709, %v1818
            %v1823 = vsub.f32 %v1706, %v1819
            %v1824 = vsub.f32 %v1707, %v1820
            %v1825 = vsub.f32 %v1708, %v1821
            %v1826 = vsub.f32 %v1709, %v1822
            %v1827 = vmul.f32 %v1823, 1.442695
            %v1828 = vpow.pop %v1827
            %v1829 = vmul.f32 %v1824, 1.442695
            %v1830 = vpow.pop %v1829
            %v1831 = vmul.f32 %v1825, 1.442695
            %v1832 = vpow.pop %v1831
            %v1833 = vmul.f32 %v1826, 1.442695
            %v1834 = vpow.pop %v1833
            %v1835 = vsub.f32 %v1802, %v1819
            %v1836 = vsub.f32 %v1803, %v1820
            %v1837 = vsub.f32 %v1804, %v1821
            %v1838 = vsub.f32 %v1805, %v1822
            %v1839 = vmul.f32 %v1835, 1.442695
            %v1840 = vpow.pop %v1839
            %v1841 = vmul.f32 %v1836, 1.442695
            %v1842 = vpow.pop %v1841
            %v1843 = vmul.f32 %v1837, 1.442695
            %v1844 = vpow.pop %v1843
            %v1845 = vmul.f32 %v1838, 1.442695
            %v1846 = vpow.pop %v1845
            %v1847 = vmul.f32 %v1828, %v1710
            %v1848 = vmul.f32 %v1830, %v1711
            %v1849 = vmul.f32 %v1832, %v1712
            %v1850 = vmul.f32 %v1834, %v1713
            %v1851 = vsel %vm1806, %v1840, 0.0
            %1852 = vadd.xlane.f32.xlu0 %v1851
            %v1853 = vpop.xlane.xlu0 %1852
            %v1854 = vsel %vm1806, %v1842, 0.0
            %1855 = vadd.xlane.f32.xlu0 %v1854
            %v1856 = vpop.xlane.xlu0 %1855
            %v1857 = vsel %vm1806, %v1844, 0.0
            %1858 = vadd.xlane.f32.xlu0 %v1857
            %v1859 = vpop.xlane.xlu0 %1858
            %v1860 = vsel %vm1806, %v1846, 0.0
            %1861 = vadd.xlane.f32.xlu0 %v1860
            %v1862 = vpop.xlane.xlu0 %1861
            %v1863 = vadd.f32 %v1847, %v1853
            %v1864 = vadd.f32 %v1848, %v1856
            %v1865 = vadd.f32 %v1849, %v1859
            %v1866 = vadd.f32 %v1850, %v1862
            %v1867 = vmul.f32 %v1828, %v1714
            %v1868 = vmul.f32 %v1830, %v1715
            %v1869 = vmul.f32 %v1832, %v1716
            %v1870 = vmul.f32 %v1834, %v1717
            %v1871 = vpack.c.bf16 %v1842, %v1840
            %v1872 = vpack.c.bf16 %v1846, %v1844
            %1874 = vrot.lane.b32.xlu0 %v1726, 64
            %v1875 = vpop.permute.xlu0 %1874
            %v1878 = vsel %vm1806, %v1871, 0
            %v1881 = vsel %vm1806, %v1872, 0
            %1883 = vmatprep.subr.bf16.mxu0 0
            %1884 = vmatpush1.bf16.msra.mxu0 %v1875
            %1885 = vmatprep.subr.bf16.mxu0 0
            %1886 = vmatpush1.bf16.msra.mxu0 0
            %1887 = vmatprep.subr.bf16.mxu0 0
            %1888 = vmatpush1.bf16.msra.mxu0 0
            %1889 = vmatprep.subr.bf16.mxu0 0
            %1890 = vmatpush1.bf16.msra.mxu0 0
            %1891 = vmatprep.subr.bf16.mxu0 0
            %1892 = vmatpush1.bf16.msra.mxu0 0
            %1893 = vmatprep.subr.bf16.mxu0 0
            %1894 = vmatpush1.bf16.msra.mxu0 0
            %1895 = vmatprep.subr.bf16.mxu0 0
            %1896 = vmatpush1.bf16.msra.mxu0 0
            %1897 = vmatprep.subr.bf16.mxu0 0
            %1898 = vmatpush1.bf16.msra.mxu0 0
            %1899 = vmatprep.subr.bf16.mxu0 0
            %1900 = vmatpush1.bf16.msra.mxu0 0
            %1901 = vmatprep.subr.bf16.mxu0 0
            %1902 = vmatpush1.bf16.msra.mxu0 0
            %1903 = vmatprep.subr.bf16.mxu0 0
            %1904 = vmatpush1.bf16.msra.mxu0 0
            %1905 = vmatprep.subr.bf16.mxu0 0
            %1906 = vmatpush1.bf16.msra.mxu0 0
            %1907 = vmatprep.subr.bf16.mxu0 0
            %1908 = vmatpush1.bf16.msra.mxu0 0
            %1909 = vmatprep.subr.bf16.mxu0 0
            %1910 = vmatpush1.bf16.msra.mxu0 0
            %1911 = vmatprep.subr.bf16.mxu0 0
            %1912 = vmatpush1.bf16.msra.mxu0 0
            %1913 = vmatprep.subr.bf16.mxu0 0
            %1914 = vmatpush1.bf16.msra.mxu0 0
            %1915 = vmatprep.mubr.bf16.mxu0 0
            %1916 = vmatmul.mubr.bf16.gmra.mrb[0].mxu0 %v1878
            %v1917 = vpop.f32.mrb[0].mxu0
            %v1918 = vadd.f32 0.0, %v1917
            %v1919 = vpop.f32.mrb[0].mxu0
            %v1920 = vpop.f32.mrb[0].mxu0
            %v1921 = vadd.f32 0.0, %v1920
            %v1922 = vpop.f32.mrb[0].mxu0
            %1923 = vmatprep.mubr.bf16.mxu0 0
            %1924 = vmatmul.mubr.bf16.gmra.mrb[0].mxu0 %v1881
            %v1925 = vpop.f32.mrb[0].mxu0
            %v1926 = vadd.f32 0.0, %v1925
            %v1927 = vpop.f32.mrb[0].mxu0
            %v1928 = vpop.f32.mrb[0].mxu0
            %v1929 = vadd.f32 0.0, %v1928
            %v1930 = vpop.f32.mrb[0].mxu0
            %1931 = vdwg.mxu0
            %v1932 = vadd.f32 %v1867, %v1918
            %v1933 = vadd.f32 %v1868, %v1921
            %v1934 = vadd.f32 %v1869, %v1926
            %v1935 = vadd.f32 %v1870, %v1929
          $region150: #{tpu_custom_call.1} parent=128 // loop_footer
            %s1705 = sadd.s32 1, %s1701
          $region151: #{tpu_custom_call.1} parent=128 // loop_footer_branch
            %1700 = sbr.rel target = $region147
          $region152: #{tpu_custom_call.1} parent=128 // loop_exit
            _
          %v1936 = vrcp.pop %v1710
          %v1937 = vrcp.pop %v1711
          %v1938 = vrcp.pop %v1712
          %v1939 = vrcp.pop %v1713
          %v1940 = vmul.f32 %v1714, %v1936
          %v1941 = vmul.f32 %v1715, %v1937
          %v1942 = vmul.f32 %v1716, %v1938
          %v1943 = vmul.f32 %v1717, %v1939
          %v1944 = vpack.c.bf16 %v1941, %v1940
          %v1945 = vpack.c.bf16 %v1943, %v1942
          %1948 = vrot.lane.b32.xlu0 %v1944, 64
          %v1949 = vpop.permute.xlu0 %1948
          %1950 = vrot.lane.b32.xlu0 %v1945, 64
          %v1951 = vpop.permute.xlu0 %1950
          %vm1954 = vcmask 785920
          %1955 = vst.msk [vmem:[%s1435] sm:$0xff] %vm1954, %v1949
          %1956 = vst.msk [vmem:[%s1435 + $0x8] sm:$0xff] %vm1954, %v1951
          %v1957 = vld [vmem:[%s1197] sm:$0xff]
          %v1958 = vld [vmem:[%s1197 + $0x18] sm:$0xff]
          loop: start=0, step=1, limit=2
          $region153: #{tpu_custom_call.1} parent=128 // loop_pre_header
            _
          $region154: #{tpu_custom_call.1} parent=128 // loop_header
            %s1960 = sphi 0, %s1964
            %p1961 = scmp.ge.s32.totalorder %s1960, 2
            %v1965 = vphi -1e+30, %v2078
            %v1966 = vphi -1e+30, %v2079
            %v1967 = vphi -1e+30, %v2080
            %v1968 = vphi -1e+30, %v2081
            %v1969 = vphi 0.0, %v2122
            %v1970 = vphi 0.0, %v2123
            %v1971 = vphi 0.0, %v2124
            %v1972 = vphi 0.0, %v2125
            %v1973 = vphi 0.0, %v2191
            %v1974 = vphi 0.0, %v2192
            %v1975 = vphi 0.0, %v2193
            %v1976 = vphi 0.0, %v2194
          $region155: #{tpu_custom_call.1} parent=128 // loop_header_branch
            %1963 = sbr.rel (%p1961) target = $region159
          $region156: #{tpu_custom_call.1} parent=128 // loop_body
            %s1977 = smul.u32 %s1960, 16
            %s1978 = sadd.s32 %s1192, %s1977
            %s1979 = sshra.s32 %s1978, 4
            %s1980 = sand.u32 %s1978, 15
            %s1981 = smul.u32 %s1979, 3
            %s1982 = smul.addr %s1981, 8
            %s1983 = scalar_lea.vmem [#allocation2], %s1982
            %v1984 = vld [vmem:[%s1983 + $0x8] sm:$0xff]
            %v1985 = vld [vmem:[%s1983 + $0x10] sm:$0xff]
            %1988 = vrot.lane.b32.xlu0 %v1957, 32
            %v1989 = vpop.permute.xlu0 %1988
            %1990 = vrot.lane.b32.xlu0 %v1958, 32
            %v1991 = vpop.permute.xlu0 %1990
            %1993 = vrot.lane.b32.xlu0 %v1984, 32
            %v1994 = vpop.permute.xlu0 %1993
            %v1996 = vsel %vm1436, %v1989, 0
            %v1999 = vsel %vm1436, %v1991, 0
            %v2002 = vsel %vm1436, %v1994, 0
            %2004 = vmatprep.subr.bf16.mxu0 0
            %2005 = vmatpush1.bf16.xpose.msra.mxu0 %v2002
            %2006 = vmatprep.subr.bf16.mxu0 0
            %2007 = vmatpush1.bf16.xpose.msra.mxu0 0
            %2008 = vmatprep.subr.bf16.mxu0 0
            %2009 = vmatpush1.bf16.xpose.msra.mxu0 0
            %2010 = vmatprep.subr.bf16.mxu0 0
            %2011 = vmatpush1.bf16.xpose.msra.mxu0 0
            %2012 = vmatprep.subr.bf16.mxu0 0
            %2013 = vmatpush1.bf16.xpose.msra.mxu0 0
            %2014 = vmatprep.subr.bf16.mxu0 0
            %2015 = vmatpush1.bf16.xpose.msra.mxu0 0
            %2016 = vmatprep.subr.bf16.mxu0 0
            %2017 = vmatpush1.bf16.xpose.msra.mxu0 0
            %2018 = vmatprep.subr.bf16.mxu0 0
            %2019 = vmatpush1.bf16.xpose.msra.mxu0 0
            %2020 = vmatprep.subr.bf16.mxu0 0
            %2021 = vmatpush1.bf16.xpose.msra.mxu0 0
            %2022 = vmatprep.subr.bf16.mxu0 0
            %2023 = vmatpush1.bf16.xpose.msra.mxu0 0
            %2024 = vmatprep.subr.bf16.mxu0 0
            %2025 = vmatpush1.bf16.xpose.msra.mxu0 0
            %2026 = vmatprep.subr.bf16.mxu0 0
            %2027 = vmatpush1.bf16.xpose.msra.mxu0 0
            %2028 = vmatprep.subr.bf16.mxu0 0
            %2029 = vmatpush1.bf16.xpose.msra.mxu0 0
            %2030 = vmatprep.subr.bf16.mxu0 0
            %2031 = vmatpush1.bf16.xpose.msra.mxu0 0
            %2032 = vmatprep.subr.bf16.mxu0 0
            %2033 = vmatpush1.bf16.xpose.msra.mxu0 0
            %2034 = vmatprep.subr.bf16.mxu0 0
            %2035 = vmatpush1.bf16.xpose.msra.mxu0 0
            %2036 = vmatprep.mubr.bf16.mxu0 0
            %2037 = vmatmul.mubr.bf16.gmra.mrb[0].mxu0 %v1996
            %v2038 = vpop.f32.mrb[0].mxu0
            %v2039 = vadd.f32 0.0, %v2038
            %v2040 = vpop.f32.mrb[0].mxu0
            %v2041 = vpop.f32.mrb[0].mxu0
            %v2042 = vadd.f32 0.0, %v2041
            %v2043 = vpop.f32.mrb[0].mxu0
            %2044 = vmatprep.mubr.bf16.mxu0 0
            %2045 = vmatmul.mubr.bf16.gmra.mrb[0].mxu0 %v1999
            %v2046 = vpop.f32.mrb[0].mxu0
            %v2047 = vadd.f32 0.0, %v2046
            %v2048 = vpop.f32.mrb[0].mxu0
            %v2049 = vpop.f32.mrb[0].mxu0
            %v2050 = vadd.f32 0.0, %v2049
            %v2051 = vpop.f32.mrb[0].mxu0
            %2052 = vdwg.mxu0
            %v2053 = vlaneseq
            %v2054 = vand.u32 %v2053, 127
            %v2055 = vstv %s1977
            %v2056 = vadd.s32 %v2055, %v2054
            %vm2057 = vcmp.le.s32.totalorder %v2056, %v1182
            %vm2058 = vcmp.le.s32.totalorder %v2056, %v1183
            %vm2059 = vcmp.le.s32.totalorder %v2056, %v1184
            %vm2060 = vcmp.le.s32.totalorder %v2056, %v1185
            %v2061 = vsel %vm2057, %v2039, -1e+30
            %v2062 = vsel %vm2058, %v2042, -1e+30
            %v2063 = vsel %vm2059, %v2047, -1e+30
            %v2064 = vsel %vm2060, %v2050, -1e+30
            %vm2065 = vcmask 130048
            %v2066 = vsel %vm2065, %v2061, -inf
            %2067 = vmax.xlane.f32.xlu0 %v2066
            %v2068 = vpop.xlane.xlu0 %2067
            %v2069 = vsel %vm2065, %v2062, -inf
            %2070 = vmax.xlane.f32.xlu0 %v2069
            %v2071 = vpop.xlane.xlu0 %2070
            %v2072 = vsel %vm2065, %v2063, -inf
            %2073 = vmax.xlane.f32.xlu0 %v2072
            %v2074 = vpop.xlane.xlu0 %2073
            %v2075 = vsel %vm2065, %v2064, -inf
            %2076 = vmax.xlane.f32.xlu0 %v2075
            %v2077 = vpop.xlane.xlu0 %2076
            %v2078 = vmax.f32 %v1965, %v2068
            %v2079 = vmax.f32 %v1966, %v2071
            %v2080 = vmax.f32 %v1967, %v2074
            %v2081 = vmax.f32 %v1968, %v2077
            %v2082 = vsub.f32 %v1965, %v2078
            %v2083 = vsub.f32 %v1966, %v2079
            %v2084 = vsub.f32 %v1967, %v2080
            %v2085 = vsub.f32 %v1968, %v2081
            %v2086 = vmul.f32 %v2082, 1.442695
            %v2087 = vpow.pop %v2086
            %v2088 = vmul.f32 %v2083, 1.442695
            %v2089 = vpow.pop %v2088
            %v2090 = vmul.f32 %v2084, 1.442695
            %v2091 = vpow.pop %v2090
            %v2092 = vmul.f32 %v2085, 1.442695
            %v2093 = vpow.pop %v2092
            %v2094 = vsub.f32 %v2061, %v2078
            %v2095 = vsub.f32 %v2062, %v2079
            %v2096 = vsub.f32 %v2063, %v2080
            %v2097 = vsub.f32 %v2064, %v2081
            %v2098 = vmul.f32 %v2094, 1.442695
            %v2099 = vpow.pop %v2098
            %v2100 = vmul.f32 %v2095, 1.442695
            %v2101 = vpow.pop %v2100
            %v2102 = vmul.f32 %v2096, 1.442695
            %v2103 = vpow.pop %v2102
            %v2104 = vmul.f32 %v2097, 1.442695
            %v2105 = vpow.pop %v2104
            %v2106 = vmul.f32 %v2087, %v1969
            %v2107 = vmul.f32 %v2089, %v1970
            %v2108 = vmul.f32 %v2091, %v1971
            %v2109 = vmul.f32 %v2093, %v1972
            %v2110 = vsel %vm2065, %v2099, 0.0
            %2111 = vadd.xlane.f32.xlu0 %v2110
            %v2112 = vpop.xlane.xlu0 %2111
            %v2113 = vsel %vm2065, %v2101, 0.0
            %2114 = vadd.xlane.f32.xlu0 %v2113
            %v2115 = vpop.xlane.xlu0 %2114
            %v2116 = vsel %vm2065, %v2103, 0.0
            %2117 = vadd.xlane.f32.xlu0 %v2116
            %v2118 = vpop.xlane.xlu0 %2117
            %v2119 = vsel %vm2065, %v2105, 0.0
            %2120 = vadd.xlane.f32.xlu0 %v2119
            %v2121 = vpop.xlane.xlu0 %2120
            %v2122 = vadd.f32 %v2106, %v2112
            %v2123 = vadd.f32 %v2107, %v2115
            %v2124 = vadd.f32 %v2108, %v2118
            %v2125 = vadd.f32 %v2109, %v2121
            %v2126 = vmul.f32 %v2087, %v1973
            %v2127 = vmul.f32 %v2089, %v1974
            %v2128 = vmul.f32 %v2091, %v1975
            %v2129 = vmul.f32 %v2093, %v1976
            %v2130 = vpack.c.bf16 %v2101, %v2099
            %v2131 = vpack.c.bf16 %v2105, %v2103
            %2133 = vrot.lane.b32.xlu0 %v1985, 32
            %v2134 = vpop.permute.xlu0 %2133
            %v2137 = vsel %vm2065, %v2130, 0
            %v2140 = vsel %vm2065, %v2131, 0
            %2142 = vmatprep.subr.bf16.mxu0 0
            %2143 = vmatpush1.bf16.msra.mxu0 %v2134
            %2144 = vmatprep.subr.bf16.mxu0 0
            %2145 = vmatpush1.bf16.msra.mxu0 0
            %2146 = vmatprep.subr.bf16.mxu0 0
            %2147 = vmatpush1.bf16.msra.mxu0 0
            %2148 = vmatprep.subr.bf16.mxu0 0
            %2149 = vmatpush1.bf16.msra.mxu0 0
            %2150 = vmatprep.subr.bf16.mxu0 0
            %2151 = vmatpush1.bf16.msra.mxu0 0
            %2152 = vmatprep.subr.bf16.mxu0 0
            %2153 = vmatpush1.bf16.msra.mxu0 0
            %2154 = vmatprep.subr.bf16.mxu0 0
            %2155 = vmatpush1.bf16.msra.mxu0 0
            %2156 = vmatprep.subr.bf16.mxu0 0
            %2157 = vmatpush1.bf16.msra.mxu0 0
            %2158 = vmatprep.subr.bf16.mxu0 0
            %2159 = vmatpush1.bf16.msra.mxu0 0
            %2160 = vmatprep.subr.bf16.mxu0 0
            %2161 = vmatpush1.bf16.msra.mxu0 0
            %2162 = vmatprep.subr.bf16.mxu0 0
            %2163 = vmatpush1.bf16.msra.mxu0 0
            %2164 = vmatprep.subr.bf16.mxu0 0
            %2165 = vmatpush1.bf16.msra.mxu0 0
            %2166 = vmatprep.subr.bf16.mxu0 0
            %2167 = vmatpush1.bf16.msra.mxu0 0
            %2168 = vmatprep.subr.bf16.mxu0 0
            %2169 = vmatpush1.bf16.msra.mxu0 0
            %2170 = vmatprep.subr.bf16.mxu0 0
            %2171 = vmatpush1.bf16.msra.mxu0 0
            %2172 = vmatprep.subr.bf16.mxu0 0
            %2173 = vmatpush1.bf16.msra.mxu0 0
            %2174 = vmatprep.mubr.bf16.mxu0 0
            %2175 = vmatmul.mubr.bf16.gmra.mrb[0].mxu0 %v2137
            %v2176 = vpop.f32.mrb[0].mxu0
            %v2177 = vadd.f32 0.0, %v2176
            %v2178 = vpop.f32.mrb[0].mxu0
            %v2179 = vpop.f32.mrb[0].mxu0
            %v2180 = vadd.f32 0.0, %v2179
            %v2181 = vpop.f32.mrb[0].mxu0
            %2182 = vmatprep.mubr.bf16.mxu0 0
            %2183 = vmatmul.mubr.bf16.gmra.mrb[0].mxu0 %v2140
            %v2184 = vpop.f32.mrb[0].mxu0
            %v2185 = vadd.f32 0.0, %v2184
            %v2186 = vpop.f32.mrb[0].mxu0
            %v2187 = vpop.f32.mrb[0].mxu0
            %v2188 = vadd.f32 0.0, %v2187
            %v2189 = vpop.f32.mrb[0].mxu0
            %2190 = vdwg.mxu0
            %v2191 = vadd.f32 %v2126, %v2177
            %v2192 = vadd.f32 %v2127, %v2180
            %v2193 = vadd.f32 %v2128, %v2185
            %v2194 = vadd.f32 %v2129, %v2188
          $region157: #{tpu_custom_call.1} parent=128 // loop_footer
            %s1964 = sadd.s32 1, %s1960
          $region158: #{tpu_custom_call.1} parent=128 // loop_footer_branch
            %1959 = sbr.rel target = $region154
          $region159: #{tpu_custom_call.1} parent=128 // loop_exit
            _
          %v2195 = vrcp.pop %v1969
          %v2196 = vrcp.pop %v1970
          %v2197 = vrcp.pop %v1971
          %v2198 = vrcp.pop %v1972
          %v2199 = vmul.f32 %v1973, %v2195
          %v2200 = vmul.f32 %v1974, %v2196
          %v2201 = vmul.f32 %v1975, %v2197
          %v2202 = vmul.f32 %v1976, %v2198
          %v2203 = vpack.c.bf16 %v2200, %v2199
          %v2204 = vpack.c.bf16 %v2202, %v2201
          %2207 = vrot.lane.b32.xlu0 %v2203, 96
          %v2208 = vpop.permute.xlu0 %2207
          %2209 = vrot.lane.b32.xlu0 %v2204, 96
          %v2210 = vpop.permute.xlu0 %2209
          %vm2213 = vcmask 1048320
          %2214 = vst.msk [vmem:[%s1435] sm:$0xff] %vm2213, %v2208
          %2215 = vst.msk [vmem:[%s1435 + $0x8] sm:$0xff] %vm2213, %v2210
        $region129: #{tpu_custom_call.1} parent=71 // loop_footer
          %s1191 = sadd.s32 1, %s1187
        $region130: #{tpu_custom_call.1} parent=71 // loop_footer_branch
          %1186 = sbr.rel target = $region126
        $region131: #{tpu_custom_call.1} parent=71 // loop_exit
          _
        loop: start=0, step=1, limit=2
        $region160: #{tpu_custom_call.1} parent=71 // loop_pre_header
          _
        $region161: #{tpu_custom_call.1} parent=71 // loop_header
          %s2217 = sphi 0, %s2221
          %p2218 = scmp.ge.s32.totalorder %s2217, 2
        $region162: #{tpu_custom_call.1} parent=71 // loop_header_branch
          %2220 = sbr.rel (%p2218) target = $region166
        $region163: #{tpu_custom_call.1} parent=71 // loop_body
          %s2222 = smul.u32 %s2217, 32
          %s2223 = scalar_lea.vmem %s526, %s2222 [#allocation4]
          %v2224 = vld [vmem:[%s2223] sm:$0xff]
          %v2225 = vld [vmem:[%s2223 + $0x8] sm:$0xff]
          %v2226 = vld [vmem:[%s2223 + $0x10] sm:$0xff]
          %v2227 = vld [vmem:[%s2223 + $0x18] sm:$0xff]
          %s2228 = sshra.s32 %s2222, 4
          %s2229 = sand.u32 %s2222, 15
          %s2230 = smul.addr %s2228, 8
          %s2231 = scalar_lea.vmem [#allocation3], %s2230
          %v2232 = vld [vmem:[%s2231] sm:$0xff]
          %v2233 = vld [vmem:[%s2231 + $0x8] sm:$0xff]
          %v2234 = vld [vmem:[#allocation13] sm:$0xf]
          %v2235 = vld [vmem:[#allocation13 + $0x4] sm:$0xf]
          %v2236 = vld [vmem:[#allocation13 + $0x8] sm:$0xf]
          %v2237 = vld [vmem:[#allocation13 + $0xc] sm:$0xf]
          %v2238 = vld [vmem:[#allocation13 + $0x10] sm:$0xf]
          %v2239 = vld [vmem:[#allocation13 + $0x14] sm:$0xf]
          %v2240 = vld [vmem:[#allocation13 + $0x18] sm:$0xf]
          %v2241 = vld [vmem:[#allocation13 + $0x1c] sm:$0xf]
          %v2242 = vld [vmem:[#allocation13 + $0x20] sm:$0xf]
          %v2243 = vld [vmem:[#allocation13 + $0x24] sm:$0xf]
          %v2244 = vld [vmem:[#allocation13 + $0x28] sm:$0xf]
          %v2245 = vld [vmem:[#allocation13 + $0x2c] sm:$0xf]
          %v2246 = vld [vmem:[#allocation13 + $0x30] sm:$0xf]
          %v2247 = vld [vmem:[#allocation13 + $0x34] sm:$0xf]
          %v2248 = vld [vmem:[#allocation13 + $0x38] sm:$0xf]
          %v2249 = vld [vmem:[#allocation13 + $0x3c] sm:$0xf]
          %v2266 = vunpack.c.l.b16 %v2234
          %v2267 = vunpack.c.l.b16 %v2235
          %v2268 = vunpack.c.l.b16 %v2236
          %v2269 = vunpack.c.l.b16 %v2237
          %v2270 = vunpack.c.l.b16 %v2238
          %v2271 = vunpack.c.l.b16 %v2239
          %v2272 = vunpack.c.l.b16 %v2240
          %v2273 = vunpack.c.l.b16 %v2241
          %v2274 = vunpack.c.l.b16 %v2242
          %v2275 = vunpack.c.l.b16 %v2243
          %v2276 = vunpack.c.l.b16 %v2244
          %v2277 = vunpack.c.l.b16 %v2245
          %v2278 = vunpack.c.l.b16 %v2246
          %v2279 = vunpack.c.l.b16 %v2247
          %v2280 = vunpack.c.l.b16 %v2248
          %v2281 = vunpack.c.l.b16 %v2249
          %v2282 = vpack.c.b16 %v2267, %v2266
          %v2283 = vpack.c.b16 %v2269, %v2268
          %v2284 = vpack.c.b16 %v2271, %v2270
          %v2285 = vpack.c.b16 %v2273, %v2272
          %v2286 = vpack.c.b16 %v2275, %v2274
          %v2287 = vpack.c.b16 %v2277, %v2276
          %v2288 = vpack.c.b16 %v2279, %v2278
          %v2289 = vpack.c.b16 %v2281, %v2280
          %2298 = vmatprep.subr.bf16.mxu0 0
          %2299 = vmatpush1.bf16.msra.mxu0 %v2282
          %2300 = vmatprep.subr.bf16.mxu0 0
          %2301 = vmatpush1.bf16.msra.mxu0 %v2283
          %2302 = vmatprep.subr.bf16.mxu0 0
          %2303 = vmatpush1.bf16.msra.mxu0 %v2284
          %2304 = vmatprep.subr.bf16.mxu0 0
          %2305 = vmatpush1.bf16.msra.mxu0 %v2285
          %2306 = vmatprep.subr.bf16.mxu0 0
          %2307 = vmatpush1.bf16.msra.mxu0 %v2286
          %2308 = vmatprep.subr.bf16.mxu0 0
          %2309 = vmatpush1.bf16.msra.mxu0 %v2287
          %2310 = vmatprep.subr.bf16.mxu0 0
          %2311 = vmatpush1.bf16.msra.mxu0 %v2288
          %2312 = vmatprep.subr.bf16.mxu0 0
          %2313 = vmatpush1.bf16.msra.mxu0 %v2289
          %2314 = vmatprep.subr.bf16.mxu0 0
          %2315 = vmatpush1.bf16.msra.mxu0 0
          %2316 = vmatprep.subr.bf16.mxu0 0
          %2317 = vmatpush1.bf16.msra.mxu0 0
          %2318 = vmatprep.subr.bf16.mxu0 0
          %2319 = vmatpush1.bf16.msra.mxu0 0
          %2320 = vmatprep.subr.bf16.mxu0 0
          %2321 = vmatpush1.bf16.msra.mxu0 0
          %2322 = vmatprep.subr.bf16.mxu0 0
          %2323 = vmatpush1.bf16.msra.mxu0 0
          %2324 = vmatprep.subr.bf16.mxu0 0
          %2325 = vmatpush1.bf16.msra.mxu0 0
          %2326 = vmatprep.subr.bf16.mxu0 0
          %2327 = vmatpush1.bf16.msra.mxu0 0
          %2328 = vmatprep.subr.bf16.mxu0 0
          %2329 = vmatpush1.bf16.msra.mxu0 0
          %2330 = vmatprep.mubr.bf16.mxu0 0
          %2331 = vmatmul.mubr.bf16.gmra.mrb[0].mxu0 %v2232
          %v2332 = vpop.f32.mrb[0].mxu0
          %v2333 = vadd.f32 0.0, %v2332
          %v2334 = vpop.f32.mrb[0].mxu0
          %v2335 = vpop.f32.mrb[0].mxu0
          %v2336 = vadd.f32 0.0, %v2335
          %v2337 = vpop.f32.mrb[0].mxu0
          %2338 = vmatprep.mubr.bf16.mxu0 0
          %2339 = vmatmul.mubr.bf16.gmra.mrb[0].mxu0 %v2233
          %v2340 = vpop.f32.mrb[0].mxu0
          %v2341 = vadd.f32 0.0, %v2340
          %v2342 = vpop.f32.mrb[0].mxu0
          %v2343 = vpop.f32.mrb[0].mxu0
          %v2344 = vadd.f32 0.0, %v2343
          %v2345 = vpop.f32.mrb[0].mxu0
          %2346 = vdwg.mxu0
          %v2347 = vadd.f32 %v2224, %v2333
          %v2348 = vadd.f32 %v2225, %v2336
          %v2349 = vadd.f32 %v2226, %v2341
          %v2350 = vadd.f32 %v2227, %v2344
          %v2351 = vld [vmem:[#allocation15] sm:$0x1]
          %v2353 = vlaneseq
          %v2354 = vshrl.u32 %v2353, 7
          %v2355 = vsub.s32 0, %v2354
          %v2356 = vrot.slane %v2351, %v2355
          %v2358 = vadd.f32 %v2347, %v2356
          %v2359 = vadd.f32 %v2348, %v2356
          %v2360 = vadd.f32 %v2349, %v2356
          %v2361 = vadd.f32 %v2350, %v2356
          %v2362 = vld [vmem:[#allocation16] sm:$0x1]
          %v2363 = vld [vmem:[#allocation18] sm:$0x1]
          %2364 = vadd.xlane.f32.xlu0 %v2358
          %v2365 = vpop.xlane.xlu0 %2364
          %2366 = vadd.xlane.f32.xlu0 %v2359
          %v2367 = vpop.xlane.xlu0 %2366
          %2368 = vadd.xlane.f32.xlu0 %v2360
          %v2369 = vpop.xlane.xlu0 %2368
          %2370 = vadd.xlane.f32.xlu0 %v2361
          %v2371 = vpop.xlane.xlu0 %2370
          %v2372 = vmul.f32 %v2365, %v644
          %v2373 = vmul.f32 %v2367, %v644
          %v2374 = vmul.f32 %v2369, %v644
          %v2375 = vmul.f32 %v2371, %v644
          %v2376 = vsub.f32 %v2358, %v2372
          %v2377 = vsub.f32 %v2359, %v2373
          %v2378 = vsub.f32 %v2360, %v2374
          %v2379 = vsub.f32 %v2361, %v2375
          %v2380 = vmul.f32 %v2376, %v2376
          %v2381 = vmul.f32 %v2377, %v2377
          %v2382 = vmul.f32 %v2378, %v2378
          %v2383 = vmul.f32 %v2379, %v2379
          %2384 = vadd.xlane.f32.xlu0 %v2380
          %v2385 = vpop.xlane.xlu0 %2384
          %2386 = vadd.xlane.f32.xlu0 %v2381
          %v2387 = vpop.xlane.xlu0 %2386
          %2388 = vadd.xlane.f32.xlu0 %v2382
          %v2389 = vpop.xlane.xlu0 %2388
          %2390 = vadd.xlane.f32.xlu0 %v2383
          %v2391 = vpop.xlane.xlu0 %2390
          %v2392 = vmul.f32 %v2385, %v644
          %v2393 = vmul.f32 %v2387, %v644
          %v2394 = vmul.f32 %v2389, %v644
          %v2395 = vmul.f32 %v2391, %v644
          %v2396 = vadd.f32 %v2392, 1e-05
          %v2397 = vadd.f32 %v2393, 1e-05
          %v2398 = vadd.f32 %v2394, 1e-05
          %v2399 = vadd.f32 %v2395, 1e-05
          %v2400 = vrsqrt.pop %v2396
          %v2401 = vrsqrt.pop %v2397
          %v2402 = vrsqrt.pop %v2398
          %v2403 = vrsqrt.pop %v2399
          %v2404 = vmul.f32 %v2376, %v2400
          %v2405 = vmul.f32 %v2377, %v2401
          %v2406 = vmul.f32 %v2378, %v2402
          %v2407 = vmul.f32 %v2379, %v2403
          %v2409 = vlaneseq
          %v2410 = vshrl.u32 %v2409, 7
          %v2411 = vsub.s32 0, %v2410
          %v2412 = vrot.slane %v2362, %v2411
          %v2414 = vmul.f32 %v2404, %v2412
          %v2415 = vmul.f32 %v2405, %v2412
          %v2416 = vmul.f32 %v2406, %v2412
          %v2417 = vmul.f32 %v2407, %v2412
          %v2419 = vlaneseq
          %v2420 = vshrl.u32 %v2419, 7
          %v2421 = vsub.s32 0, %v2420
          %v2422 = vrot.slane %v2363, %v2421
          %v2424 = vadd.f32 %v2414, %v2422
          %v2425 = vadd.f32 %v2415, %v2422
          %v2426 = vadd.f32 %v2416, %v2422
          %v2427 = vadd.f32 %v2417, %v2422
          %v2428 = vpack.c.bf16 %v2425, %v2424
          %v2429 = vpack.c.bf16 %v2427, %v2426
          %v2430 = vld [vmem:[#allocation19] sm:$0xff]
          %v2431 = vld [vmem:[#allocation19 + $0x8] sm:$0xff]
          %v2432 = vld [vmem:[#allocation19 + $0x10] sm:$0xff]
          %v2433 = vld [vmem:[#allocation19 + $0x18] sm:$0xff]
          %v2434 = vld [vmem:[#allocation19 + $0x20] sm:$0xff]
          %v2435 = vld [vmem:[#allocation19 + $0x28] sm:$0xff]
          %v2436 = vld [vmem:[#allocation19 + $0x30] sm:$0xff]
          %v2437 = vld [vmem:[#allocation19 + $0x38] sm:$0xff]
          %v2438 = vld [vmem:[#allocation19 + $0x40] sm:$0xff]
          %v2439 = vld [vmem:[#allocation19 + $0x48] sm:$0xff]
          %v2440 = vld [vmem:[#allocation19 + $0x50] sm:$0xff]
          %v2441 = vld [vmem:[#allocation19 + $0x58] sm:$0xff]
          %v2442 = vld [vmem:[#allocation19 + $0x60] sm:$0xff]
          %v2443 = vld [vmem:[#allocation19 + $0x68] sm:$0xff]
          %v2444 = vld [vmem:[#allocation19 + $0x70] sm:$0xff]
          %v2445 = vld [vmem:[#allocation19 + $0x78] sm:$0xff]
          %v2446 = vld [vmem:[#allocation19 + $0x80] sm:$0xff]
          %v2447 = vld [vmem:[#allocation19 + $0x88] sm:$0xff]
          %v2448 = vld [vmem:[#allocation19 + $0x90] sm:$0xff]
          %v2449 = vld [vmem:[#allocation19 + $0x98] sm:$0xff]
          %v2450 = vld [vmem:[#allocation19 + $0xa0] sm:$0xff]
          %v2451 = vld [vmem:[#allocation19 + $0xa8] sm:$0xff]
          %v2452 = vld [vmem:[#allocation19 + $0xb0] sm:$0xff]
          %v2453 = vld [vmem:[#allocation19 + $0xb8] sm:$0xff]
          %v2454 = vld [vmem:[#allocation19 + $0xc0] sm:$0xff]
          %v2455 = vld [vmem:[#allocation19 + $0xc8] sm:$0xff]
          %v2456 = vld [vmem:[#allocation19 + $0xd0] sm:$0xff]
          %v2457 = vld [vmem:[#allocation19 + $0xd8] sm:$0xff]
          %v2458 = vld [vmem:[#allocation19 + $0xe0] sm:$0xff]
          %v2459 = vld [vmem:[#allocation19 + $0xe8] sm:$0xff]
          %v2460 = vld [vmem:[#allocation19 + $0xf0] sm:$0xff]
          %v2461 = vld [vmem:[#allocation19 + $0xf8] sm:$0xff]
          %v2462 = vld [vmem:[#allocation21] sm:$0xf]
          %v2464 = vlaneseq
          %v2465 = vshrl.u32 %v2464, 7
          %v2466 = vsub.s32 0, %v2465
          %v2467 = vrot.slane %v2462, %v2466
          %v2468 = vlaneseq
          %v2469 = vshrl.u32 %v2468, 7
          %v2470 = vsub.s32 1, %v2469
          %v2471 = vrot.slane %v2462, %v2470
          %v2472 = vlaneseq
          %v2473 = vshrl.u32 %v2472, 7
          %v2474 = vsub.s32 2, %v2473
          %v2475 = vrot.slane %v2462, %v2474
          %v2476 = vlaneseq
          %v2477 = vshrl.u32 %v2476, 7
          %v2478 = vsub.s32 3, %v2477
          %v2479 = vrot.slane %v2462, %v2478
          %v2516 = vunpack.c.l.b16 %v2430
          %v2517 = vunpack.c.h.b16 %v2430
          %v2518 = vunpack.c.l.b16 %v2431
          %v2519 = vunpack.c.h.b16 %v2431
          %v2520 = vunpack.c.l.b16 %v2432
          %v2521 = vunpack.c.h.b16 %v2432
          %v2522 = vunpack.c.l.b16 %v2433
          %v2523 = vunpack.c.h.b16 %v2433
          %v2524 = vunpack.c.l.b16 %v2434
          %v2525 = vunpack.c.h.b16 %v2434
          %v2526 = vunpack.c.l.b16 %v2435
          %v2527 = vunpack.c.h.b16 %v2435
          %v2528 = vunpack.c.l.b16 %v2436
          %v2529 = vunpack.c.h.b16 %v2436
          %v2530 = vunpack.c.l.b16 %v2437
          %v2531 = vunpack.c.h.b16 %v2437
          %v2532 = vunpack.c.l.b16 %v2438
          %v2533 = vunpack.c.h.b16 %v2438
          %v2534 = vunpack.c.l.b16 %v2439
          %v2535 = vunpack.c.h.b16 %v2439
          %v2536 = vunpack.c.l.b16 %v2440
          %v2537 = vunpack.c.h.b16 %v2440
          %v2538 = vunpack.c.l.b16 %v2441
          %v2539 = vunpack.c.h.b16 %v2441
          %v2540 = vunpack.c.l.b16 %v2442
          %v2541 = vunpack.c.h.b16 %v2442
          %v2542 = vunpack.c.l.b16 %v2443
          %v2543 = vunpack.c.h.b16 %v2443
          %v2544 = vunpack.c.l.b16 %v2444
          %v2545 = vunpack.c.h.b16 %v2444
          %v2546 = vunpack.c.l.b16 %v2445
          %v2547 = vunpack.c.h.b16 %v2445
          %v2548 = vunpack.c.l.b16 %v2446
          %v2549 = vunpack.c.h.b16 %v2446
          %v2550 = vunpack.c.l.b16 %v2447
          %v2551 = vunpack.c.h.b16 %v2447
          %v2552 = vunpack.c.l.b16 %v2448
          %v2553 = vunpack.c.h.b16 %v2448
          %v2554 = vunpack.c.l.b16 %v2449
          %v2555 = vunpack.c.h.b16 %v2449
          %v2556 = vunpack.c.l.b16 %v2450
          %v2557 = vunpack.c.h.b16 %v2450
          %v2558 = vunpack.c.l.b16 %v2451
          %v2559 = vunpack.c.h.b16 %v2451
          %v2560 = vunpack.c.l.b16 %v2452
          %v2561 = vunpack.c.h.b16 %v2452
          %v2562 = vunpack.c.l.b16 %v2453
          %v2563 = vunpack.c.h.b16 %v2453
          %v2564 = vunpack.c.l.b16 %v2454
          %v2565 = vunpack.c.h.b16 %v2454
          %v2566 = vunpack.c.l.b16 %v2455
          %v2567 = vunpack.c.h.b16 %v2455
          %v2568 = vunpack.c.l.b16 %v2456
          %v2569 = vunpack.c.h.b16 %v2456
          %v2570 = vunpack.c.l.b16 %v2457
          %v2571 = vunpack.c.h.b16 %v2457
          %v2572 = vunpack.c.l.b16 %v2458
          %v2573 = vunpack.c.h.b16 %v2458
          %v2574 = vunpack.c.l.b16 %v2459
          %v2575 = vunpack.c.h.b16 %v2459
          %v2576 = vunpack.c.l.b16 %v2460
          %v2577 = vunpack.c.h.b16 %v2460
          %v2578 = vunpack.c.l.b16 %v2461
          %v2579 = vunpack.c.h.b16 %v2461
          %v2580 = vpack.c.b16 %v2520, %v2516
          %v2581 = vpack.c.b16 %v2521, %v2517
          %v2582 = vpack.c.b16 %v2522, %v2518
          %v2583 = vpack.c.b16 %v2523, %v2519
          %v2584 = vpack.c.b16 %v2528, %v2524
          %v2585 = vpack.c.b16 %v2529, %v2525
          %v2586 = vpack.c.b16 %v2530, %v2526
          %v2587 = vpack.c.b16 %v2531, %v2527
          %v2588 = vpack.c.b16 %v2536, %v2532
          %v2589 = vpack.c.b16 %v2537, %v2533
          %v2590 = vpack.c.b16 %v2538, %v2534
          %v2591 = vpack.c.b16 %v2539, %v2535
          %v2592 = vpack.c.b16 %v2544, %v2540
          %v2593 = vpack.c.b16 %v2545, %v2541
          %v2594 = vpack.c.b16 %v2546, %v2542
          %v2595 = vpack.c.b16 %v2547, %v2543
          %v2596 = vpack.c.b16 %v2552, %v2548
          %v2597 = vpack.c.b16 %v2553, %v2549
          %v2598 = vpack.c.b16 %v2554, %v2550
          %v2599 = vpack.c.b16 %v2555, %v2551
          %v2600 = vpack.c.b16 %v2560, %v2556
          %v2601 = vpack.c.b16 %v2561, %v2557
          %v2602 = vpack.c.b16 %v2562, %v2558
          %v2603 = vpack.c.b16 %v2563, %v2559
          %v2604 = vpack.c.b16 %v2568, %v2564
          %v2605 = vpack.c.b16 %v2569, %v2565
          %v2606 = vpack.c.b16 %v2570, %v2566
          %v2607 = vpack.c.b16 %v2571, %v2567
          %v2608 = vpack.c.b16 %v2576, %v2572
          %v2609 = vpack.c.b16 %v2577, %v2573
          %v2610 = vpack.c.b16 %v2578, %v2574
          %v2611 = vpack.c.b16 %v2579, %v2575
          %2644 = vmatprep.subr.bf16.mxu0 %v2581
          %2645 = vmatpush1.bf16.msra.mxu0 %v2580
          %2646 = vmatprep.subr.bf16.mxu0 %v2585
          %2647 = vmatpush1.bf16.msra.mxu0 %v2584
          %2648 = vmatprep.subr.bf16.mxu0 %v2589
          %2649 = vmatpush1.bf16.msra.mxu0 %v2588
          %2650 = vmatprep.subr.bf16.mxu0 %v2593
          %2651 = vmatpush1.bf16.msra.mxu0 %v2592
          %2652 = vmatprep.subr.bf16.mxu0 %v2597
          %2653 = vmatpush1.bf16.msra.mxu0 %v2596
          %2654 = vmatprep.subr.bf16.mxu0 %v2601
          %2655 = vmatpush1.bf16.msra.mxu0 %v2600
          %2656 = vmatprep.subr.bf16.mxu0 %v2605
          %2657 = vmatpush1.bf16.msra.mxu0 %v2604
          %2658 = vmatprep.subr.bf16.mxu0 %v2609
          %2659 = vmatpush1.bf16.msra.mxu0 %v2608
          %2660 = vmatprep.subr.bf16.mxu0 0
          %2661 = vmatpush1.bf16.msra.mxu0 0
          %2662 = vmatprep.subr.bf16.mxu0 0
          %2663 = vmatpush1.bf16.msra.mxu0 0
          %2664 = vmatprep.subr.bf16.mxu0 0
          %2665 = vmatpush1.bf16.msra.mxu0 0
          %2666 = vmatprep.subr.bf16.mxu0 0
          %2667 = vmatpush1.bf16.msra.mxu0 0
          %2668 = vmatprep.subr.bf16.mxu0 0
          %2669 = vmatpush1.bf16.msra.mxu0 0
          %2670 = vmatprep.subr.bf16.mxu0 0
          %2671 = vmatpush1.bf16.msra.mxu0 0
          %2672 = vmatprep.subr.bf16.mxu0 0
          %2673 = vmatpush1.bf16.msra.mxu0 0
          %2674 = vmatprep.subr.bf16.mxu0 0
          %2675 = vmatpush1.bf16.msra.mxu0 0
          %2676 = vmatprep.mubr.bf16.mxu0 0
          %2677 = vmatmul.mubr.bf16.gmra.mrb[0].mxu0 %v2428
          %v2678 = vpop.f32.mrb[0].mxu0
          %v2679 = vadd.f32 %v2467, %v2678
          %v2680 = vpop.f32.mrb[0].mxu0
          %v2681 = vadd.f32 %v2471, %v2680
          %v2682 = vpop.f32.mrb[0].mxu0
          %v2683 = vadd.f32 %v2467, %v2682
          %v2684 = vpop.f32.mrb[0].mxu0
          %v2685 = vadd.f32 %v2471, %v2684
          %2686 = vmatprep.mubr.bf16.mxu0 0
          %2687 = vmatmul.mubr.bf16.gmra.mrb[0].mxu0 %v2429
          %v2688 = vpop.f32.mrb[0].mxu0
          %v2689 = vadd.f32 %v2467, %v2688
          %v2690 = vpop.f32.mrb[0].mxu0
          %v2691 = vadd.f32 %v2471, %v2690
          %v2692 = vpop.f32.mrb[0].mxu0
          %v2693 = vadd.f32 %v2467, %v2692
          %v2694 = vpop.f32.mrb[0].mxu0
          %v2695 = vadd.f32 %v2471, %v2694
          %2696 = vdwg.mxu0
          %2697 = vmatprep.subr.bf16.mxu0 %v2583
          %2698 = vmatpush1.bf16.msra.mxu0 %v2582
          %2699 = vmatprep.subr.bf16.mxu0 %v2587
          %2700 = vmatpush1.bf16.msra.mxu0 %v2586
          %2701 = vmatprep.subr.bf16.mxu0 %v2591
          %2702 = vmatpush1.bf16.msra.mxu0 %v2590
          %2703 = vmatprep.subr.bf16.mxu0 %v2595
          %2704 = vmatpush1.bf16.msra.mxu0 %v2594
          %2705 = vmatprep.subr.bf16.mxu0 %v2599
          %2706 = vmatpush1.bf16.msra.mxu0 %v2598
          %2707 = vmatprep.subr.bf16.mxu0 %v2603
          %2708 = vmatpush1.bf16.msra.mxu0 %v2602
          %2709 = vmatprep.subr.bf16.mxu0 %v2607
          %2710 = vmatpush1.bf16.msra.mxu0 %v2606
          %2711 = vmatprep.subr.bf16.mxu0 %v2611
          %2712 = vmatpush1.bf16.msra.mxu0 %v2610
          %2713 = vmatprep.subr.bf16.mxu0 0
          %2714 = vmatpush1.bf16.msra.mxu0 0
          %2715 = vmatprep.subr.bf16.mxu0 0
          %2716 = vmatpush1.bf16.msra.mxu0 0
          %2717 = vmatprep.subr.bf16.mxu0 0
          %2718 = vmatpush1.bf16.msra.mxu0 0
          %2719 = vmatprep.subr.bf16.mxu0 0
          %2720 = vmatpush1.bf16.msra.mxu0 0
          %2721 = vmatprep.subr.bf16.mxu0 0
          %2722 = vmatpush1.bf16.msra.mxu0 0
          %2723 = vmatprep.subr.bf16.mxu0 0
          %2724 = vmatpush1.bf16.msra.mxu0 0
          %2725 = vmatprep.subr.bf16.mxu0 0
          %2726 = vmatpush1.bf16.msra.mxu0 0
          %2727 = vmatprep.subr.bf16.mxu0 0
          %2728 = vmatpush1.bf16.msra.mxu0 0
          %2729 = vmatprep.mubr.bf16.mxu0 0
          %2730 = vmatmul.mubr.bf16.gmra.mrb[0].mxu0 %v2428
          %v2731 = vpop.f32.mrb[0].mxu0
          %v2732 = vadd.f32 %v2475, %v2731
          %v2733 = vpop.f32.mrb[0].mxu0
          %v2734 = vadd.f32 %v2479, %v2733
          %v2735 = vpop.f32.mrb[0].mxu0
          %v2736 = vadd.f32 %v2475, %v2735
          %v2737 = vpop.f32.mrb[0].mxu0
          %v2738 = vadd.f32 %v2479, %v2737
          %2739 = vmatprep.mubr.bf16.mxu0 0
          %2740 = vmatmul.mubr.bf16.gmra.mrb[0].mxu0 %v2429
          %v2741 = vpop.f32.mrb[0].mxu0
          %v2742 = vadd.f32 %v2475, %v2741
          %v2743 = vpop.f32.mrb[0].mxu0
          %v2744 = vadd.f32 %v2479, %v2743
          %v2745 = vpop.f32.mrb[0].mxu0
          %v2746 = vadd.f32 %v2475, %v2745
          %v2747 = vpop.f32.mrb[0].mxu0
          %v2748 = vadd.f32 %v2479, %v2747
          %2749 = vdwg.mxu0
          %v2750 = vmul.f32 %v2679, 0.5
          %v2751 = vmul.f32 %v2681, 0.5
          %v2752 = vmul.f32 %v2732, 0.5
          %v2753 = vmul.f32 %v2734, 0.5
          %v2754 = vmul.f32 %v2683, 0.5
          %v2755 = vmul.f32 %v2685, 0.5
          %v2756 = vmul.f32 %v2736, 0.5
          %v2757 = vmul.f32 %v2738, 0.5
          %v2758 = vmul.f32 %v2689, 0.5
          %v2759 = vmul.f32 %v2691, 0.5
          %v2760 = vmul.f32 %v2742, 0.5
          %v2761 = vmul.f32 %v2744, 0.5
          %v2762 = vmul.f32 %v2693, 0.5
          %v2763 = vmul.f32 %v2695, 0.5
          %v2764 = vmul.f32 %v2746, 0.5
          %v2765 = vmul.f32 %v2748, 0.5
          %v2766 = vmul.f32 %v2679, 0.044715
          %v2767 = vmul.f32 %v2681, 0.044715
          %v2768 = vmul.f32 %v2732, 0.044715
          %v2769 = vmul.f32 %v2734, 0.044715
          %v2770 = vmul.f32 %v2683, 0.044715
          %v2771 = vmul.f32 %v2685, 0.044715
          %v2772 = vmul.f32 %v2736, 0.044715
          %v2773 = vmul.f32 %v2738, 0.044715
          %v2774 = vmul.f32 %v2689, 0.044715
          %v2775 = vmul.f32 %v2691, 0.044715
          %v2776 = vmul.f32 %v2742, 0.044715
          %v2777 = vmul.f32 %v2744, 0.044715
          %v2778 = vmul.f32 %v2693, 0.044715
          %v2779 = vmul.f32 %v2695, 0.044715
          %v2780 = vmul.f32 %v2746, 0.044715
          %v2781 = vmul.f32 %v2748, 0.044715
          %v2782 = vmul.f32 %v2766, %v2679
          %v2783 = vmul.f32 %v2767, %v2681
          %v2784 = vmul.f32 %v2768, %v2732
          %v2785 = vmul.f32 %v2769, %v2734
          %v2786 = vmul.f32 %v2770, %v2683
          %v2787 = vmul.f32 %v2771, %v2685
          %v2788 = vmul.f32 %v2772, %v2736
          %v2789 = vmul.f32 %v2773, %v2738
          %v2790 = vmul.f32 %v2774, %v2689
          %v2791 = vmul.f32 %v2775, %v2691
          %v2792 = vmul.f32 %v2776, %v2742
          %v2793 = vmul.f32 %v2777, %v2744
          %v2794 = vmul.f32 %v2778, %v2693
          %v2795 = vmul.f32 %v2779, %v2695
          %v2796 = vmul.f32 %v2780, %v2746
          %v2797 = vmul.f32 %v2781, %v2748
          %v2798 = vmul.f32 %v2782, %v2679
          %v2799 = vmul.f32 %v2783, %v2681
          %v2800 = vmul.f32 %v2784, %v2732
          %v2801 = vmul.f32 %v2785, %v2734
          %v2802 = vmul.f32 %v2786, %v2683
          %v2803 = vmul.f32 %v2787, %v2685
          %v2804 = vmul.f32 %v2788, %v2736
          %v2805 = vmul.f32 %v2789, %v2738
          %v2806 = vmul.f32 %v2790, %v2689
          %v2807 = vmul.f32 %v2791, %v2691
          %v2808 = vmul.f32 %v2792, %v2742
          %v2809 = vmul.f32 %v2793, %v2744
          %v2810 = vmul.f32 %v2794, %v2693
          %v2811 = vmul.f32 %v2795, %v2695
          %v2812 = vmul.f32 %v2796, %v2746
          %v2813 = vmul.f32 %v2797, %v2748
          %v2814 = vadd.f32 %v2679, %v2798
          %v2815 = vadd.f32 %v2681, %v2799
          %v2816 = vadd.f32 %v2732, %v2800
          %v2817 = vadd.f32 %v2734, %v2801
          %v2818 = vadd.f32 %v2683, %v2802
          %v2819 = vadd.f32 %v2685, %v2803
          %v2820 = vadd.f32 %v2736, %v2804
          %v2821 = vadd.f32 %v2738, %v2805
          %v2822 = vadd.f32 %v2689, %v2806
          %v2823 = vadd.f32 %v2691, %v2807
          %v2824 = vadd.f32 %v2742, %v2808
          %v2825 = vadd.f32 %v2744, %v2809
          %v2826 = vadd.f32 %v2693, %v2810
          %v2827 = vadd.f32 %v2695, %v2811
          %v2828 = vadd.f32 %v2746, %v2812
          %v2829 = vadd.f32 %v2748, %v2813
          %v2830 = vmul.f32 %v2814, 0.7978846
          %v2831 = vmul.f32 %v2815, 0.7978846
          %v2832 = vmul.f32 %v2816, 0.7978846
          %v2833 = vmul.f32 %v2817, 0.7978846
          %v2834 = vmul.f32 %v2818, 0.7978846
          %v2835 = vmul.f32 %v2819, 0.7978846
          %v2836 = vmul.f32 %v2820, 0.7978846
          %v2837 = vmul.f32 %v2821, 0.7978846
          %v2838 = vmul.f32 %v2822, 0.7978846
          %v2839 = vmul.f32 %v2823, 0.7978846
          %v2840 = vmul.f32 %v2824, 0.7978846
          %v2841 = vmul.f32 %v2825, 0.7978846
          %v2842 = vmul.f32 %v2826, 0.7978846
          %v2843 = vmul.f32 %v2827, 0.7978846
          %v2844 = vmul.f32 %v2828, 0.7978846
          %v2845 = vmul.f32 %v2829, 0.7978846
          %v2846 = vtanh.pop %v2830
          %v2847 = vtanh.pop %v2831
          %v2848 = vtanh.pop %v2832
          %v2849 = vtanh.pop %v2833
          %v2850 = vtanh.pop %v2834
          %v2851 = vtanh.pop %v2835
          %v2852 = vtanh.pop %v2836
          %v2853 = vtanh.pop %v2837
          %v2854 = vtanh.pop %v2838
          %v2855 = vtanh.pop %v2839
          %v2856 = vtanh.pop %v2840
          %v2857 = vtanh.pop %v2841
          %v2858 = vtanh.pop %v2842
          %v2859 = vtanh.pop %v2843
          %v2860 = vtanh.pop %v2844
          %v2861 = vtanh.pop %v2845
          %v2862 = vadd.f32 %v2846, 1.0
          %v2863 = vadd.f32 %v2847, 1.0
          %v2864 = vadd.f32 %v2848, 1.0
          %v2865 = vadd.f32 %v2849, 1.0
          %v2866 = vadd.f32 %v2850, 1.0
          %v2867 = vadd.f32 %v2851, 1.0
          %v2868 = vadd.f32 %v2852, 1.0
          %v2869 = vadd.f32 %v2853, 1.0
          %v2870 = vadd.f32 %v2854, 1.0
          %v2871 = vadd.f32 %v2855, 1.0
          %v2872 = vadd.f32 %v2856, 1.0
          %v2873 = vadd.f32 %v2857, 1.0
          %v2874 = vadd.f32 %v2858, 1.0
          %v2875 = vadd.f32 %v2859, 1.0
          %v2876 = vadd.f32 %v2860, 1.0
          %v2877 = vadd.f32 %v2861, 1.0
          %v2878 = vmul.f32 %v2750, %v2862
          %v2879 = vmul.f32 %v2751, %v2863
          %v2880 = vmul.f32 %v2752, %v2864
          %v2881 = vmul.f32 %v2753, %v2865
          %v2882 = vmul.f32 %v2754, %v2866
          %v2883 = vmul.f32 %v2755, %v2867
          %v2884 = vmul.f32 %v2756, %v2868
          %v2885 = vmul.f32 %v2757, %v2869
          %v2886 = vmul.f32 %v2758, %v2870
          %v2887 = vmul.f32 %v2759, %v2871
          %v2888 = vmul.f32 %v2760, %v2872
          %v2889 = vmul.f32 %v2761, %v2873
          %v2890 = vmul.f32 %v2762, %v2874
          %v2891 = vmul.f32 %v2763, %v2875
          %v2892 = vmul.f32 %v2764, %v2876
          %v2893 = vmul.f32 %v2765, %v2877
          %v2894 = vpack.c.bf16 %v2882, %v2878
          %v2895 = vpack.c.bf16 %v2883, %v2879
          %v2896 = vpack.c.bf16 %v2884, %v2880
          %v2897 = vpack.c.bf16 %v2885, %v2881
          %v2898 = vpack.c.bf16 %v2890, %v2886
          %v2899 = vpack.c.bf16 %v2891, %v2887
          %v2900 = vpack.c.bf16 %v2892, %v2888
          %v2901 = vpack.c.bf16 %v2893, %v2889
          %v2902 = vld [vmem:[#allocation22] sm:$0xf]
          %v2903 = vld [vmem:[#allocation22 + $0x4] sm:$0xf]
          %v2904 = vld [vmem:[#allocation22 + $0x8] sm:$0xf]
          %v2905 = vld [vmem:[#allocation22 + $0xc] sm:$0xf]
          %v2906 = vld [vmem:[#allocation22 + $0x10] sm:$0xf]
          %v2907 = vld [vmem:[#allocation22 + $0x14] sm:$0xf]
          %v2908 = vld [vmem:[#allocation22 + $0x18] sm:$0xf]
          %v2909 = vld [vmem:[#allocation22 + $0x1c] sm:$0xf]
          %v2910 = vld [vmem:[#allocation22 + $0x20] sm:$0xf]
          %v2911 = vld [vmem:[#allocation22 + $0x24] sm:$0xf]
          %v2912 = vld [vmem:[#allocation22 + $0x28] sm:$0xf]
          %v2913 = vld [vmem:[#allocation22 + $0x2c] sm:$0xf]
          %v2914 = vld [vmem:[#allocation22 + $0x30] sm:$0xf]
          %v2915 = vld [vmem:[#allocation22 + $0x34] sm:$0xf]
          %v2916 = vld [vmem:[#allocation22 + $0x38] sm:$0xf]
          %v2917 = vld [vmem:[#allocation22 + $0x3c] sm:$0xf]
          %v2918 = vld [vmem:[#allocation22 + $0x40] sm:$0xf]
          %v2919 = vld [vmem:[#allocation22 + $0x44] sm:$0xf]
          %v2920 = vld [vmem:[#allocation22 + $0x48] sm:$0xf]
          %v2921 = vld [vmem:[#allocation22 + $0x4c] sm:$0xf]
          %v2922 = vld [vmem:[#allocation22 + $0x50] sm:$0xf]
          %v2923 = vld [vmem:[#allocation22 + $0x54] sm:$0xf]
          %v2924 = vld [vmem:[#allocation22 + $0x58] sm:$0xf]
          %v2925 = vld [vmem:[#allocation22 + $0x5c] sm:$0xf]
          %v2926 = vld [vmem:[#allocation22 + $0x60] sm:$0xf]
          %v2927 = vld [vmem:[#allocation22 + $0x64] sm:$0xf]
          %v2928 = vld [vmem:[#allocation22 + $0x68] sm:$0xf]
          %v2929 = vld [vmem:[#allocation22 + $0x6c] sm:$0xf]
          %v2930 = vld [vmem:[#allocation22 + $0x70] sm:$0xf]
          %v2931 = vld [vmem:[#allocation22 + $0x74] sm:$0xf]
          %v2932 = vld [vmem:[#allocation22 + $0x78] sm:$0xf]
          %v2933 = vld [vmem:[#allocation22 + $0x7c] sm:$0xf]
          %v2934 = vld [vmem:[#allocation22 + $0x80] sm:$0xf]
          %v2935 = vld [vmem:[#allocation22 + $0x84] sm:$0xf]
          %v2936 = vld [vmem:[#allocation22 + $0x88] sm:$0xf]
          %v2937 = vld [vmem:[#allocation22 + $0x8c] sm:$0xf]
          %v2938 = vld [vmem:[#allocation22 + $0x90] sm:$0xf]
          %v2939 = vld [vmem:[#allocation22 + $0x94] sm:$0xf]
          %v2940 = vld [vmem:[#allocation22 + $0x98] sm:$0xf]
          %v2941 = vld [vmem:[#allocation22 + $0x9c] sm:$0xf]
          %v2942 = vld [vmem:[#allocation22 + $0xa0] sm:$0xf]
          %v2943 = vld [vmem:[#allocation22 + $0xa4] sm:$0xf]
          %v2944 = vld [vmem:[#allocation22 + $0xa8] sm:$0xf]
          %v2945 = vld [vmem:[#allocation22 + $0xac] sm:$0xf]
          %v2946 = vld [vmem:[#allocation22 + $0xb0] sm:$0xf]
          %v2947 = vld [vmem:[#allocation22 + $0xb4] sm:$0xf]
          %v2948 = vld [vmem:[#allocation22 + $0xb8] sm:$0xf]
          %v2949 = vld [vmem:[#allocation22 + $0xbc] sm:$0xf]
          %v2950 = vld [vmem:[#allocation22 + $0xc0] sm:$0xf]
          %v2951 = vld [vmem:[#allocation22 + $0xc4] sm:$0xf]
          %v2952 = vld [vmem:[#allocation22 + $0xc8] sm:$0xf]
          %v2953 = vld [vmem:[#allocation22 + $0xcc] sm:$0xf]
          %v2954 = vld [vmem:[#allocation22 + $0xd0] sm:$0xf]
          %v2955 = vld [vmem:[#allocation22 + $0xd4] sm:$0xf]
          %v2956 = vld [vmem:[#allocation22 + $0xd8] sm:$0xf]
          %v2957 = vld [vmem:[#allocation22 + $0xdc] sm:$0xf]
          %v2958 = vld [vmem:[#allocation22 + $0xe0] sm:$0xf]
          %v2959 = vld [vmem:[#allocation22 + $0xe4] sm:$0xf]
          %v2960 = vld [vmem:[#allocation22 + $0xe8] sm:$0xf]
          %v2961 = vld [vmem:[#allocation22 + $0xec] sm:$0xf]
          %v2962 = vld [vmem:[#allocation22 + $0xf0] sm:$0xf]
          %v2963 = vld [vmem:[#allocation22 + $0xf4] sm:$0xf]
          %v2964 = vld [vmem:[#allocation22 + $0xf8] sm:$0xf]
          %v2965 = vld [vmem:[#allocation22 + $0xfc] sm:$0xf]
          %v2966 = vld [vmem:[#allocation24] sm:$0x1]
          %v2968 = vlaneseq
          %v2969 = vshrl.u32 %v2968, 7
          %v2970 = vsub.s32 0, %v2969
          %v2971 = vrot.slane %v2966, %v2970
          %v3037 = vunpack.c.l.b16 %v2902
          %v3038 = vunpack.c.l.b16 %v2903
          %v3039 = vunpack.c.l.b16 %v2904
          %v3040 = vunpack.c.l.b16 %v2905
          %v3041 = vunpack.c.l.b16 %v2906
          %v3042 = vunpack.c.l.b16 %v2907
          %v3043 = vunpack.c.l.b16 %v2908
          %v3044 = vunpack.c.l.b16 %v2909
          %v3045 = vunpack.c.l.b16 %v2910
          %v3046 = vunpack.c.l.b16 %v2911
          %v3047 = vunpack.c.l.b16 %v2912
          %v3048 = vunpack.c.l.b16 %v2913
          %v3049 = vunpack.c.l.b16 %v2914
          %v3050 = vunpack.c.l.b16 %v2915
          %v3051 = vunpack.c.l.b16 %v2916
          %v3052 = vunpack.c.l.b16 %v2917
          %v3053 = vunpack.c.l.b16 %v2918
          %v3054 = vunpack.c.l.b16 %v2919
          %v3055 = vunpack.c.l.b16 %v2920
          %v3056 = vunpack.c.l.b16 %v2921
          %v3057 = vunpack.c.l.b16 %v2922
          %v3058 = vunpack.c.l.b16 %v2923
          %v3059 = vunpack.c.l.b16 %v2924
          %v3060 = vunpack.c.l.b16 %v2925
          %v3061 = vunpack.c.l.b16 %v2926
          %v3062 = vunpack.c.l.b16 %v2927
          %v3063 = vunpack.c.l.b16 %v2928
          %v3064 = vunpack.c.l.b16 %v2929
          %v3065 = vunpack.c.l.b16 %v2930
          %v3066 = vunpack.c.l.b16 %v2931
          %v3067 = vunpack.c.l.b16 %v2932
          %v3068 = vunpack.c.l.b16 %v2933
          %v3069 = vunpack.c.l.b16 %v2934
          %v3070 = vunpack.c.l.b16 %v2935
          %v3071 = vunpack.c.l.b16 %v2936
          %v3072 = vunpack.c.l.b16 %v2937
          %v3073 = vunpack.c.l.b16 %v2938
          %v3074 = vunpack.c.l.b16 %v2939
          %v3075 = vunpack.c.l.b16 %v2940
          %v3076 = vunpack.c.l.b16 %v2941
          %v3077 = vunpack.c.l.b16 %v2942
          %v3078 = vunpack.c.l.b16 %v2943
          %v3079 = vunpack.c.l.b16 %v2944
          %v3080 = vunpack.c.l.b16 %v2945
          %v3081 = vunpack.c.l.b16 %v2946
          %v3082 = vunpack.c.l.b16 %v2947
          %v3083 = vunpack.c.l.b16 %v2948
          %v3084 = vunpack.c.l.b16 %v2949
          %v3085 = vunpack.c.l.b16 %v2950
          %v3086 = vunpack.c.l.b16 %v2951
          %v3087 = vunpack.c.l.b16 %v2952
          %v3088 = vunpack.c.l.b16 %v2953
          %v3089 = vunpack.c.l.b16 %v2954
          %v3090 = vunpack.c.l.b16 %v2955
          %v3091 = vunpack.c.l.b16 %v2956
          %v3092 = vunpack.c.l.b16 %v2957
          %v3093 = vunpack.c.l.b16 %v2958
          %v3094 = vunpack.c.l.b16 %v2959
          %v3095 = vunpack.c.l.b16 %v2960
          %v3096 = vunpack.c.l.b16 %v2961
          %v3097 = vunpack.c.l.b16 %v2962
          %v3098 = vunpack.c.l.b16 %v2963
          %v3099 = vunpack.c.l.b16 %v2964
          %v3100 = vunpack.c.l.b16 %v2965
          %v3101 = vpack.c.b16 %v3038, %v3037
          %v3102 = vpack.c.b16 %v3040, %v3039
          %v3103 = vpack.c.b16 %v3042, %v3041
          %v3104 = vpack.c.b16 %v3044, %v3043
          %v3105 = vpack.c.b16 %v3046, %v3045
          %v3106 = vpack.c.b16 %v3048, %v3047
          %v3107 = vpack.c.b16 %v3050, %v3049
          %v3108 = vpack.c.b16 %v3052, %v3051
          %v3109 = vpack.c.b16 %v3054, %v3053
          %v3110 = vpack.c.b16 %v3056, %v3055
          %v3111 = vpack.c.b16 %v3058, %v3057
          %v3112 = vpack.c.b16 %v3060, %v3059
          %v3113 = vpack.c.b16 %v3062, %v3061
          %v3114 = vpack.c.b16 %v3064, %v3063
          %v3115 = vpack.c.b16 %v3066, %v3065
          %v3116 = vpack.c.b16 %v3068, %v3067
          %v3117 = vpack.c.b16 %v3070, %v3069
          %v3118 = vpack.c.b16 %v3072, %v3071
          %v3119 = vpack.c.b16 %v3074, %v3073
          %v3120 = vpack.c.b16 %v3076, %v3075
          %v3121 = vpack.c.b16 %v3078, %v3077
          %v3122 = vpack.c.b16 %v3080, %v3079
          %v3123 = vpack.c.b16 %v3082, %v3081
          %v3124 = vpack.c.b16 %v3084, %v3083
          %v3125 = vpack.c.b16 %v3086, %v3085
          %v3126 = vpack.c.b16 %v3088, %v3087
          %v3127 = vpack.c.b16 %v3090, %v3089
          %v3128 = vpack.c.b16 %v3092, %v3091
          %v3129 = vpack.c.b16 %v3094, %v3093
          %v3130 = vpack.c.b16 %v3096, %v3095
          %v3131 = vpack.c.b16 %v3098, %v3097
          %v3132 = vpack.c.b16 %v3100, %v3099
          %3165 = vmatprep.subr.bf16.mxu0 0
          %3166 = vmatpush1.bf16.msra.mxu0 %v3101
          %3167 = vmatprep.subr.bf16.mxu0 0
          %3168 = vmatpush1.bf16.msra.mxu0 %v3102
          %3169 = vmatprep.subr.bf16.mxu0 0
          %3170 = vmatpush1.bf16.msra.mxu0 %v3103
          %3171 = vmatprep.subr.bf16.mxu0 0
          %3172 = vmatpush1.bf16.msra.mxu0 %v3104
          %3173 = vmatprep.subr.bf16.mxu0 0
          %3174 = vmatpush1.bf16.msra.mxu0 %v3105
          %3175 = vmatprep.subr.bf16.mxu0 0
          %3176 = vmatpush1.bf16.msra.mxu0 %v3106
          %3177 = vmatprep.subr.bf16.mxu0 0
          %3178 = vmatpush1.bf16.msra.mxu0 %v3107
          %3179 = vmatprep.subr.bf16.mxu0 0
          %3180 = vmatpush1.bf16.msra.mxu0 %v3108
          %3181 = vmatprep.subr.bf16.mxu0 0
          %3182 = vmatpush1.bf16.msra.mxu0 %v3109
          %3183 = vmatprep.subr.bf16.mxu0 0
          %3184 = vmatpush1.bf16.msra.mxu0 %v3110
          %3185 = vmatprep.subr.bf16.mxu0 0
          %3186 = vmatpush1.bf16.msra.mxu0 %v3111
          %3187 = vmatprep.subr.bf16.mxu0 0
          %3188 = vmatpush1.bf16.msra.mxu0 %v3112
          %3189 = vmatprep.subr.bf16.mxu0 0
          %3190 = vmatpush1.bf16.msra.mxu0 %v3113
          %3191 = vmatprep.subr.bf16.mxu0 0
          %3192 = vmatpush1.bf16.msra.mxu0 %v3114
          %3193 = vmatprep.subr.bf16.mxu0 0
          %3194 = vmatpush1.bf16.msra.mxu0 %v3115
          %3195 = vmatprep.subr.bf16.mxu0 0
          %3196 = vmatpush1.bf16.msra.mxu0 %v3116
          %3197 = vmatprep.mubr.bf16.mxu0 %v2895
          %3198 = vmatmul.mubr.bf16.gmra.mrb[0].mxu0 %v2894
          %v3199 = vpop.f32.mrb[0].mxu0
          %v3200 = vadd.f32 %v2971, %v3199
          %v3201 = vpop.f32.mrb[0].mxu0
          %v3202 = vpop.f32.mrb[0].mxu0
          %v3203 = vadd.f32 %v2971, %v3202
          %v3204 = vpop.f32.mrb[0].mxu0
          %3205 = vmatprep.mubr.bf16.mxu0 %v2899
          %3206 = vmatmul.mubr.bf16.gmra.mrb[0].mxu0 %v2898
          %v3207 = vpop.f32.mrb[0].mxu0
          %v3208 = vadd.f32 %v2971, %v3207
          %v3209 = vpop.f32.mrb[0].mxu0
          %v3210 = vpop.f32.mrb[0].mxu0
          %v3211 = vadd.f32 %v2971, %v3210
          %v3212 = vpop.f32.mrb[0].mxu0
          %3213 = vdwg.mxu0
          %3214 = vmatprep.subr.bf16.mxu0 0
          %3215 = vmatpush1.bf16.msra.mxu0 %v3117
          %3216 = vmatprep.subr.bf16.mxu0 0
          %3217 = vmatpush1.bf16.msra.mxu0 %v3118
          %3218 = vmatprep.subr.bf16.mxu0 0
          %3219 = vmatpush1.bf16.msra.mxu0 %v3119
          %3220 = vmatprep.subr.bf16.mxu0 0
          %3221 = vmatpush1.bf16.msra.mxu0 %v3120
          %3222 = vmatprep.subr.bf16.mxu0 0
          %3223 = vmatpush1.bf16.msra.mxu0 %v3121
          %3224 = vmatprep.subr.bf16.mxu0 0
          %3225 = vmatpush1.bf16.msra.mxu0 %v3122
          %3226 = vmatprep.subr.bf16.mxu0 0
          %3227 = vmatpush1.bf16.msra.mxu0 %v3123
          %3228 = vmatprep.subr.bf16.mxu0 0
          %3229 = vmatpush1.bf16.msra.mxu0 %v3124
          %3230 = vmatprep.subr.bf16.mxu0 0
          %3231 = vmatpush1.bf16.msra.mxu0 %v3125
          %3232 = vmatprep.subr.bf16.mxu0 0
          %3233 = vmatpush1.bf16.msra.mxu0 %v3126
          %3234 = vmatprep.subr.bf16.mxu0 0
          %3235 = vmatpush1.bf16.msra.mxu0 %v3127
          %3236 = vmatprep.subr.bf16.mxu0 0
          %3237 = vmatpush1.bf16.msra.mxu0 %v3128
          %3238 = vmatprep.subr.bf16.mxu0 0
          %3239 = vmatpush1.bf16.msra.mxu0 %v3129
          %3240 = vmatprep.subr.bf16.mxu0 0
          %3241 = vmatpush1.bf16.msra.mxu0 %v3130
          %3242 = vmatprep.subr.bf16.mxu0 0
          %3243 = vmatpush1.bf16.msra.mxu0 %v3131
          %3244 = vmatprep.subr.bf16.mxu0 0
          %3245 = vmatpush1.bf16.msra.mxu0 %v3132
          %3246 = vmatprep.mubr.bf16.mxu0 %v2897
          %3247 = vmatmul.mubr.bf16.gmra.mrb[0].mxu0 %v2896
          %v3248 = vpop.f32.mrb[0].mxu0
          %v3249 = vadd.f32 %v3200, %v3248
          %v3250 = vpop.f32.mrb[0].mxu0
          %v3251 = vpop.f32.mrb[0].mxu0
          %v3252 = vadd.f32 %v3203, %v3251
          %v3253 = vpop.f32.mrb[0].mxu0
          %3254 = vmatprep.mubr.bf16.mxu0 %v2901
          %3255 = vmatmul.mubr.bf16.gmra.mrb[0].mxu0 %v2900
          %v3256 = vpop.f32.mrb[0].mxu0
          %v3257 = vadd.f32 %v3208, %v3256
          %v3258 = vpop.f32.mrb[0].mxu0
          %v3259 = vpop.f32.mrb[0].mxu0
          %v3260 = vadd.f32 %v3211, %v3259
          %v3261 = vpop.f32.mrb[0].mxu0
          %3262 = vdwg.mxu0
          %v3263 = vadd.f32 %v2358, %v3249
          %v3264 = vadd.f32 %v2359, %v3252
          %v3265 = vadd.f32 %v2360, %v3257
          %v3266 = vadd.f32 %v2361, %v3260
          %s3267 = scalar_lea.vmem %s616, %s2222 [#allocation25]
          %3268 = vst [vmem:[%s3267] sm:$0xff] %v3263
          %3269 = vst [vmem:[%s3267 + $0x8] sm:$0xff] %v3264
          %3270 = vst [vmem:[%s3267 + $0x10] sm:$0xff] %v3265
          %3271 = vst [vmem:[%s3267 + $0x18] sm:$0xff] %v3266
        $region164: #{tpu_custom_call.1} parent=71 // loop_footer
          %s2221 = sadd.s32 1, %s2217
        $region165: #{tpu_custom_call.1} parent=71 // loop_footer_branch
          %2216 = sbr.rel target = $region161
        $region166: #{tpu_custom_call.1} parent=71 // loop_exit
          _
        %s3272 = sand.u32 %s322, 1
        %s3273 = scalar_lea.sflag [#allocation6], %s3272
        %s3274 = sand.u32 %s322, 1
        %s3275 = smul.addr %s3274, 64
        %s3276 = scalar_lea.vmem [#allocation25], %s3275
        // Predicated region
        $region167: #{tpu_custom_call.1} parent=71 // pred_check
          %p3277 = pneg %p332
        $region168: #{tpu_custom_call.1} parent=71 // pred_check_branch
          %3279 = sbr.rel (%p3277) target = $region170
        $region169: #{tpu_custom_call.1} parent=71 // pred_region
          %s3281 = ssub.s32 1024, 1024
          %3282 = vsyncadd %s3273, %s3281
          %s3283 = smul.addr %s36, 8
          %s3284 = smul.addr %s3283, 128
          %s3285 = scalar_lea.hbm %s13, %s3284
          %s3286 = sshll.u32 %s3276, 4
          %s3287 = int_to_ptr.vmem [resolvable:$true] %s3286
          %3292 = dma.vmem_to_hbm [thread:$0]  %s3287, 1024, %s3285, %s3273, 128, 128, 8
        $region170: #{tpu_custom_call.1} parent=71 // pred_fallthru
          _
      $region72: #{tpu_custom_call.1} parent=5 // pred_fallthru
        _
      %p3293 = scmp.le.s32.totalorder 2, %s31
      // Predicated region
      $region171: #{tpu_custom_call.1} parent=5 // pred_check
        %p3294 = pneg %p3293
      $region172: #{tpu_custom_call.1} parent=5 // pred_check_branch
        %3296 = sbr.rel (%p3294) target = $region174
      $region173: #{tpu_custom_call.1} parent=5 // pred_region
        %s3297 = ssub.s32 %s31, 2
        // Predicated region
        $region175: #{tpu_custom_call.1} parent=173 // pred_check
          %p3298 = pneg %p338
        $region176: #{tpu_custom_call.1} parent=173 // pred_check_branch
          %3300 = sbr.rel (%p3298) target = $region178
        $region177: #{tpu_custom_call.1} parent=173 // pred_region
          %s3301 = sand.u32 %s323, 1
          %s3302 = scalar_lea.sflag [#allocation6], %s3301
          %s3303 = sand.u32 %s323, 1
          %s3304 = smul.addr %s3303, 64
          %s3305 = scalar_lea.vmem [#allocation25], %s3304
          %3306 = dma.done %s3302, 1024
        $region178: #{tpu_custom_call.1} parent=173 // pred_fallthru
          _
      $region174: #{tpu_custom_call.1} parent=5 // pred_fallthru
        _
    $region6: #{tpu_custom_call.1} parent=1 // loop_footer
      %s35 = sadd.s32 1, %s31
    $region7: #{tpu_custom_call.1} parent=1 // loop_footer_branch
      %30 = sbr.rel target = $region3
    $region8: #{tpu_custom_call.1} parent=1 // loop_exit
      _
    %3307 = vsyncpa [#allocation5], 1
    %s3308 = scalar_lea.sflag [#allocation5], 1
    %3309 = vsyncpa %s3308, 1
    %3310 = vsyncpa [#allocation8], 1
    %3311 = vsyncpa [#allocation11], 1
    %3312 = vsyncpa [#allocation14], 1
    %3313 = vsyncpa [#allocation17], 1
    %3314 = vsyncpa [#allocation20], 1
    %3315 = vsyncpa [#allocation23], 1
    %3316 = vsyncpa [#allocation6], 1
    %s3317 = scalar_lea.sflag [#allocation6], 1
    %3318 = vsyncpa %s3317, 1

// kernel: tpu_custom_call.1
$region0: #{tpu_custom_call.1}
  #allocation0 [shape = 'u32[]', space=smem, size = 0x4, offset = 0x4, fixed_abs, tag = 'smem constant byte address 0x4 - core index']
  #allocation1 [shape = 'u32[144,128]{1,0:T(1,128)}', space=vmem, size = 0x12000, scoped, tag = 'internal scratch']
  #allocation2 [shape = 'bf16[64,384]{1,0:T(16,128)(2,1)}', space=vmem, size = 0xc000, scoped, tag = 'scratch operand']
  #allocation3 [shape = 'bf16[64,128]{1,0:T(16,128)(2,1)}', space=vmem, size = 0x4000, scoped, tag = 'scratch operand']
  %s0 = inlined_call_operand.hbm [shape: f32[2,64,128], index: 0, kind: input, shape index: {}]
  %s1 = inlined_call_operand.hbm [shape: f32[1,128], index: 1, kind: input, shape index: {}]
  %s2 = inlined_call_operand.hbm [shape: f32[1,128], index: 2, kind: input, shape index: {}]
  %s3 = inlined_call_operand.hbm [shape: bf16[128,384], index: 3, kind: input, shape index: {}]
  %s4 = inlined_call_operand.hbm [shape: f32[1,384], index: 4, kind: input, shape index: {}]
  %s5 = inlined_call_operand.hbm [shape: bf16[128,128], index: 5, kind: input, shape index: {}]
  %s6 = inlined_call_operand.hbm [shape: f32[1,128], index: 6, kind: input, shape index: {}]
  %s7 = inlined_call_operand.hbm [shape: f32[1,128], index: 7, kind: input, shape index: {}]
  %s8 = inlined_call_operand.hbm [shape: f32[1,128], index: 8, kind: input, shape index: {}]
  %s9 = inlined_call_operand.hbm [shape: bf16[128,512], index: 9, kind: input, shape index: {}]
  %s10 = inlined_call_operand.hbm [shape: f32[1,512], index: 10, kind: input, shape index: {}]
  %s11 = inlined_call_operand.hbm [shape: bf16[512,128], index: 11, kind: input, shape index: {}]
  %s12 = inlined_call_operand.hbm [shape: f32[1,128], index: 12, kind: input, shape index: {}]
  %s13 = inlined_call_operand.hbm [shape: f32[2,64,128], index: 13, kind: output, shape index: {}]
  %s14 = sld [smem:[#allocation0]]
  $region179: #{tpu_custom_call.1} parent=0
    _
  %s16 = ssub.s32 1, %s14
  %s17 = scalar_select 0, %s16, %s14
  $region1: #{tpu_custom_call.1} parent=0
    #allocation4 [shape = 'u8[65536]{0}', space=vmem, size = 0x10000, scoped, tag = 'input window, operand 0']
    #allocation5 [shape = 's32[2]{0}', space=sflag, size = 0x8, scoped, tag = 'scoped memory for tpu_custom_call.1']
    #allocation6 [shape = 's32[2]{0}', space=sflag, size = 0x8, scoped, tag = 'scoped memory for tpu_custom_call.1']
    #allocation7 [shape = 'u8[512]{0}', space=vmem, size = 0x400, scoped, tag = 'input window, operand 1, single buffered']
    #allocation8 [shape = 's32[1]{0}', space=sflag, size = 0x4, scoped, tag = 'scoped memory for tpu_custom_call.1']
    #allocation9 [shape = 'u8[512]{0}', space=vmem, size = 0x400, scoped, tag = 'input window, operand 2, single buffered']
    #allocation10 [shape = 'u8[98304]{0}', space=vmem, size = 0x18000, scoped, tag = 'input window, operand 3, single buffered']
    #allocation11 [shape = 's32[1]{0}', space=sflag, size = 0x4, scoped, tag = 'scoped memory for tpu_custom_call.1']
    #allocation12 [shape = 'u8[1536]{0}', space=vmem, size = 0x800, scoped, tag = 'input window, operand 4, single buffered']
    #allocation13 [shape = 'u8[32768]{0}', space=vmem, size = 0x8000, scoped, tag = 'input window, operand 5, single buffered']
    #allocation14 [shape = 's32[1]{0}', space=sflag, size = 0x4, scoped, tag = 'scoped memory for tpu_custom_call.1']
    #allocation15 [shape = 'u8[512]{0}', space=vmem, size = 0x400, scoped, tag = 'input window, operand 6, single buffered']
    #allocation16 [shape = 'u8[512]{0}', space=vmem, size = 0x400, scoped, tag = 'input window, operand 7, single buffered']
    #allocation17 [shape = 's32[1]{0}', space=sflag, size = 0x4, scoped, tag = 'scoped memory for tpu_custom_call.1']
    #allocation18 [shape = 'u8[512]{0}', space=vmem, size = 0x400, scoped, tag = 'input window, operand 8, single buffered']
    #allocation19 [shape = 'u8[131072]{0}', space=vmem, size = 0x20000, scoped, tag = 'input window, operand 9, single buffered']
    #allocation20 [shape = 's32[1]{0}', space=sflag, size = 0x4, scoped, tag = 'scoped memory for tpu_custom_call.1']
    #allocation21 [shape = 'u8[2048]{0}', space=vmem, size = 0x800, scoped, tag = 'input window, operand 10, single buffered']
    #allocation22 [shape = 'u8[131072]{0}', space=vmem, size = 0x20000, scoped, tag = 'input window, operand 11, single buffered']
    #allocation23 [shape = 's32[1]{0}', space=sflag, size = 0x4, scoped, tag = 'scoped memory for tpu_custom_call.1']
    #allocation24 [shape = 'u8[512]{0}', space=vmem, size = 0x400, scoped, tag = 'input window, operand 12, single buffered']
    #allocation25 [shape = 'u8[65536]{0}', space=vmem, size = 0x10000, scoped, tag = 'output window, operand 0']
    %18 = vsyncpa [#allocation5], 0
    %s19 = scalar_lea.sflag [#allocation5], 1
    %20 = vsyncpa %s19, 0
    %21 = vsyncpa [#allocation8], 0
    %22 = vsyncpa [#allocation11], 0
    %23 = vsyncpa [#allocation14], 0
    %24 = vsyncpa [#allocation17], 0
    %25 = vsyncpa [#allocation20], 0
    %26 = vsyncpa [#allocation23], 0
    %27 = vsyncpa [#allocation6], 0
    %s28 = scalar_lea.sflag [#allocation6], 1
    %29 = vsyncpa %s28, 0
    loop: start=0, step=1, limit=4
    $region2: #{tpu_custom_call.1} parent=1 // loop_pre_header
      _
    $region3: #{tpu_custom_call.1} parent=1 // loop_header
      %s31 = sphi 0, %s35
      %p32 = scmp.ge.s32.totalorder %s31, 4
      %s41 = sphi 0, %s43
      %s44 = sphi 0, %s41
      %s45 = sphi 0, %s44
      %s61 = sphi 0, %s45
      %s65 = sphi 0, %s65
      %s67 = sphi 0, %s65
      %s68 = sphi 0, %s67
      %s82 = sphi 0, %s68
      %s86 = sphi 0, %s86
      %s88 = sphi 0, %s86
      %s89 = sphi 0, %s88
      %s103 = sphi 0, %s89
      %s107 = sphi 0, %s107
      %s109 = sphi 0, %s107
      %s110 = sphi 0, %s109
      %s124 = sphi 0, %s110
      %s128 = sphi 0, %s128
      %s130 = sphi 0, %s128
      %s131 = sphi 0, %s130
      %s145 = sphi 0, %s131
      %s149 = sphi 0, %s149
      %s151 = sphi 0, %s149
      %s152 = sphi 0, %s151
      %s166 = sphi 0, %s152
      %s170 = sphi 0, %s170
      %s172 = sphi 0, %s170
      %s173 = sphi 0, %s172
      %s187 = sphi 0, %s173
      %s191 = sphi 0, %s191
      %s193 = sphi 0, %s191
      %s194 = sphi 0, %s193
      %s208 = sphi 0, %s194
      %s212 = sphi 0, %s212
      %s214 = sphi 0, %s212
      %s215 = sphi 0, %s214
      %s229 = sphi 0, %s215
      %s233 = sphi 0, %s233
      %s235 = sphi 0, %s233
      %s236 = sphi 0, %s235
      %s250 = sphi 0, %s236
      %s254 = sphi 0, %s254
      %s256 = sphi 0, %s254
      %s257 = sphi 0, %s256
      %s271 = sphi 0, %s257
      %s275 = sphi 0, %s275
      %s277 = sphi 0, %s275
      %s278 = sphi 0, %s277
      %s292 = sphi 0, %s278
      %s296 = sphi 0, %s296
      %s298 = sphi 0, %s296
      %s299 = sphi 0, %s298
      %s313 = sphi 0, %s299
      %s319 = sphi 0, %s321
      %s322 = sphi 0, %s319
      %s323 = sphi 0, %s322
      %s339 = sphi 0, %s323
    $region4: #{tpu_custom_call.1} parent=1 // loop_header_branch
      %34 = sbr.rel (%p32) target = $region8
    $region5: #{tpu_custom_call.1} parent=1 // loop_body
      %s36 = ssub.s32 %s31, 1
      %s37 = ssub.s32 %s31, 2
      %s38 = sadd.s32 %s31, 1
      %s39 = ssub.s32 %s31, %s38
      %p40 = scmp.eq.s32.totalorder %s39, 0
      %s42 = sadd.s32 %s41, 1
      %s43 = scalar_select %p40, %s41, %s42
      %p46 = pneg %p40
      %p47 = scmp.eq.s32.totalorder %s31, 1
      %p48 = por %p46, %p47
      %p49 = scmp.ne.s32.totalorder %s41, %s44
      %p50 = scmp.eq.s32.totalorder %s31, 0
      %p51 = por %p49, %p50
      %p52 = scmp.ne.s32.totalorder %s41, %s44
      %p53 = scmp.eq.s32.totalorder %s36, 1
      %p54 = por %p52, %p53
      %p55 = scmp.ne.s32.totalorder %s44, %s45
      %p56 = scmp.eq.s32.totalorder %s36, 0
      %p57 = por %p55, %p56
      %p58 = scmp.ne.s32.totalorder %s44, %s45
      %p59 = scmp.eq.s32.totalorder %s37, 1
      %p60 = por %p58, %p59
      %p62 = scmp.ne.s32.totalorder %s45, %s61
      %p63 = scmp.eq.s32.totalorder %s37, 0
      %p64 = por %p62, %p63
      %s66 = sadd.s32 %s65, 1
      %p69 = scmp.eq.s32.totalorder %s31, 1
      %p70 = scmp.ne.s32.totalorder %s65, %s67
      %p71 = scmp.eq.s32.totalorder %s31, 0
      %p72 = por %p70, %p71
      %p73 = scmp.ne.s32.totalorder %s65, %s67
      %p74 = scmp.eq.s32.totalorder %s36, 1
      %p75 = por %p73, %p74
      %p76 = scmp.ne.s32.totalorder %s67, %s68
      %p77 = scmp.eq.s32.totalorder %s36, 0
      %p78 = por %p76, %p77
      %p79 = scmp.ne.s32.totalorder %s67, %s68
      %p80 = scmp.eq.s32.totalorder %s37, 1
      %p81 = por %p79, %p80
      %p83 = scmp.ne.s32.totalorder %s68, %s82
      %p84 = scmp.eq.s32.totalorder %s37, 0
      %p85 = por %p83, %p84
      %s87 = sadd.s32 %s86, 1
      %p90 = scmp.eq.s32.totalorder %s31, 1
      %p91 = scmp.ne.s32.totalorder %s86, %s88
      %p92 = scmp.eq.s32.totalorder %s31, 0
      %p93 = por %p91, %p92
      %p94 = scmp.ne.s32.totalorder %s86, %s88
      %p95 = scmp.eq.s32.totalorder %s36, 1
      %p96 = por %p94, %p95
      %p97 = scmp.ne.s32.totalorder %s88, %s89
      %p98 = scmp.eq.s32.totalorder %s36, 0
      %p99 = por %p97, %p98
      %p100 = scmp.ne.s32.totalorder %s88, %s89
      %p101 = scmp.eq.s32.totalorder %s37, 1
      %p102 = por %p100, %p101
      %p104 = scmp.ne.s32.totalorder %s89, %s103
      %p105 = scmp.eq.s32.totalorder %s37, 0
      %p106 = por %p104, %p105
      %s108 = sadd.s32 %s107, 1
      %p111 = scmp.eq.s32.totalorder %s31, 1
      %p112 = scmp.ne.s32.totalorder %s107, %s109
      %p113 = scmp.eq.s32.totalorder %s31, 0
      %p114 = por %p112, %p113
      %p115 = scmp.ne.s32.totalorder %s107, %s109
      %p116 = scmp.eq.s32.totalorder %s36, 1
      %p117 = por %p115, %p116
      %p118 = scmp.ne.s32.totalorder %s109, %s110
      %p119 = scmp.eq.s32.totalorder %s36, 0
      %p120 = por %p118, %p119
      %p121 = scmp.ne.s32.totalorder %s109, %s110
      %p122 = scmp.eq.s32.totalorder %s37, 1
      %p123 = por %p121, %p122
      %p125 = scmp.ne.s32.totalorder %s110, %s124
      %p126 = scmp.eq.s32.totalorder %s37, 0
      %p127 = por %p125, %p126
      %s129 = sadd.s32 %s128, 1
      %p132 = scmp.eq.s32.totalorder %s31, 1
      %p133 = scmp.ne.s32.totalorder %s128, %s130
      %p134 = scmp.eq.s32.totalorder %s31, 0
      %p135 = por %p133, %p134
      %p136 = scmp.ne.s32.totalorder %s128, %s130
      %p137 = scmp.eq.s32.totalorder %s36, 1
      %p138 = por %p136, %p137
      %p139 = scmp.ne.s32.totalorder %s130, %s131
      %p140 = scmp.eq.s32.totalorder %s36, 0
      %p141 = por %p139, %p140
      %p142 = scmp.ne.s32.totalorder %s130, %s131
      %p143 = scmp.eq.s32.totalorder %s37, 1
      %p144 = por %p142, %p143
      %p146 = scmp.ne.s32.totalorder %s131, %s145
      %p147 = scmp.eq.s32.totalorder %s37, 0
      %p148 = por %p146, %p147
      %s150 = sadd.s32 %s149, 1
      %p153 = scmp.eq.s32.totalorder %s31, 1
      %p154 = scmp.ne.s32.totalorder %s149, %s151
      %p155 = scmp.eq.s32.totalorder %s31, 0
      %p156 = por %p154, %p155
      %p157 = scmp.ne.s32.totalorder %s149, %s151
      %p158 = scmp.eq.s32.totalorder %s36, 1
      %p159 = por %p157, %p158
      %p160 = scmp.ne.s32.totalorder %s151, %s152
      %p161 = scmp.eq.s32.totalorder %s36, 0
      %p162 = por %p160, %p161
      %p163 = scmp.ne.s32.totalorder %s151, %s152
      %p164 = scmp.eq.s32.totalorder %s37, 1
      %p165 = por %p163, %p164
      %p167 = scmp.ne.s32.totalorder %s152, %s166
      %p168 = scmp.eq.s32.totalorder %s37, 0
      %p169 = por %p167, %p168
      %s171 = sadd.s32 %s170, 1
      %p174 = scmp.eq.s32.totalorder %s31, 1
      %p175 = scmp.ne.s32.totalorder %s170, %s172
      %p176 = scmp.eq.s32.totalorder %s31, 0
      %p177 = por %p175, %p176
      %p178 = scmp.ne.s32.totalorder %s170, %s172
      %p179 = scmp.eq.s32.totalorder %s36, 1
      %p180 = por %p178, %p179
      %p181 = scmp.ne.s32.totalorder %s172, %s173
      %p182 = scmp.eq.s32.totalorder %s36, 0
      %p183 = por %p181, %p182
      %p184 = scmp.ne.s32.totalorder %s172, %s173
      %p185 = scmp.eq.s32.totalorder %s37, 1
      %p186 = por %p184, %p185
      %p188 = scmp.ne.s32.totalorder %s173, %s187
      %p189 = scmp.eq.s32.totalorder %s37, 0
      %p190 = por %p188, %p189
      %s192 = sadd.s32 %s191, 1
      %p195 = scmp.eq.s32.totalorder %s31, 1
      %p196 = scmp.ne.s32.totalorder %s191, %s193
      %p197 = scmp.eq.s32.totalorder %s31, 0
      %p198 = por %p196, %p197
      %p199 = scmp.ne.s32.totalorder %s191, %s193
      %p200 = scmp.eq.s32.totalorder %s36, 1
      %p201 = por %p199, %p200
      %p202 = scmp.ne.s32.totalorder %s193, %s194
      %p203 = scmp.eq.s32.totalorder %s36, 0
      %p204 = por %p202, %p203
      %p205 = scmp.ne.s32.totalorder %s193, %s194
      %p206 = scmp.eq.s32.totalorder %s37, 1
      %p207 = por %p205, %p206
      %p209 = scmp.ne.s32.totalorder %s194, %s208
      %p210 = scmp.eq.s32.totalorder %s37, 0
      %p211 = por %p209, %p210
      %s213 = sadd.s32 %s212, 1
      %p216 = scmp.eq.s32.totalorder %s31, 1
      %p217 = scmp.ne.s32.totalorder %s212, %s214
      %p218 = scmp.eq.s32.totalorder %s31, 0
      %p219 = por %p217, %p218
      %p220 = scmp.ne.s32.totalorder %s212, %s214
      %p221 = scmp.eq.s32.totalorder %s36, 1
      %p222 = por %p220, %p221
      %p223 = scmp.ne.s32.totalorder %s214, %s215
      %p224 = scmp.eq.s32.totalorder %s36, 0
      %p225 = por %p223, %p224
      %p226 = scmp.ne.s32.totalorder %s214, %s215
      %p227 = scmp.eq.s32.totalorder %s37, 1
      %p228 = por %p226, %p227
      %p230 = scmp.ne.s32.totalorder %s215, %s229
      %p231 = scmp.eq.s32.totalorder %s37, 0
      %p232 = por %p230, %p231
      %s234 = sadd.s32 %s233, 1
      %p237 = scmp.eq.s32.totalorder %s31, 1
      %p238 = scmp.ne.s32.totalorder %s233, %s235
      %p239 = scmp.eq.s32.totalorder %s31, 0
      %p240 = por %p238, %p239
      %p241 = scmp.ne.s32.totalorder %s233, %s235
      %p242 = scmp.eq.s32.totalorder %s36, 1
      %p243 = por %p241, %p242
      %p244 = scmp.ne.s32.totalorder %s235, %s236
      %p245 = scmp.eq.s32.totalorder %s36, 0
      %p246 = por %p244, %p245
      %p247 = scmp.ne.s32.totalorder %s235, %s236
      %p248 = scmp.eq.s32.totalorder %s37, 1
      %p249 = por %p247, %p248
      %p251 = scmp.ne.s32.totalorder %s236, %s250
      %p252 = scmp.eq.s32.totalorder %s37, 0
      %p253 = por %p251, %p252
      %s255 = sadd.s32 %s254, 1
      %p258 = scmp.eq.s32.totalorder %s31, 1
      %p259 = scmp.ne.s32.totalorder %s254, %s256
      %p260 = scmp.eq.s32.totalorder %s31, 0
      %p261 = por %p259, %p260
      %p262 = scmp.ne.s32.totalorder %s254, %s256
      %p263 = scmp.eq.s32.totalorder %s36, 1
      %p264 = por %p262, %p263
      %p265 = scmp.ne.s32.totalorder %s256, %s257
      %p266 = scmp.eq.s32.totalorder %s36, 0
      %p267 = por %p265, %p266
      %p268 = scmp.ne.s32.totalorder %s256, %s257
      %p269 = scmp.eq.s32.totalorder %s37, 1
      %p270 = por %p268, %p269
      %p272 = scmp.ne.s32.totalorder %s257, %s271
      %p273 = scmp.eq.s32.totalorder %s37, 0
      %p274 = por %p272, %p273
      %s276 = sadd.s32 %s275, 1
      %p279 = scmp.eq.s32.totalorder %s31, 1
      %p280 = scmp.ne.s32.totalorder %s275, %s277
      %p281 = scmp.eq.s32.totalorder %s31, 0
      %p282 = por %p280, %p281
      %p283 = scmp.ne.s32.totalorder %s275, %s277
      %p284 = scmp.eq.s32.totalorder %s36, 1
      %p285 = por %p283, %p284
      %p286 = scmp.ne.s32.totalorder %s277, %s278
      %p287 = scmp.eq.s32.totalorder %s36, 0
      %p288 = por %p286, %p287
      %p289 = scmp.ne.s32.totalorder %s277, %s278
      %p290 = scmp.eq.s32.totalorder %s37, 1
      %p291 = por %p289, %p290
      %p293 = scmp.ne.s32.totalorder %s278, %s292
      %p294 = scmp.eq.s32.totalorder %s37, 0
      %p295 = por %p293, %p294
      %s297 = sadd.s32 %s296, 1
      %p300 = scmp.eq.s32.totalorder %s31, 1
      %p301 = scmp.ne.s32.totalorder %s296, %s298
      %p302 = scmp.eq.s32.totalorder %s31, 0
      %p303 = por %p301, %p302
      %p304 = scmp.ne.s32.totalorder %s296, %s298
      %p305 = scmp.eq.s32.totalorder %s36, 1
      %p306 = por %p304, %p305
      %p307 = scmp.ne.s32.totalorder %s298, %s299
      %p308 = scmp.eq.s32.totalorder %s36, 0
      %p309 = por %p307, %p308
      %p310 = scmp.ne.s32.totalorder %s298, %s299
      %p311 = scmp.eq.s32.totalorder %s37, 1
      %p312 = por %p310, %p311
      %p314 = scmp.ne.s32.totalorder %s299, %s313
      %p315 = scmp.eq.s32.totalorder %s37, 0
      %p316 = por %p314, %p315
      %s317 = ssub.s32 %s31, %s38
      %p318 = scmp.eq.s32.totalorder %s317, 0
      %s320 = sadd.s32 %s319, 1
      %s321 = scalar_select %p318, %s319, %s320
      %p324 = pneg %p318
      %p325 = scmp.eq.s32.totalorder %s31, 1
      %p326 = por %p324, %p325
      %p327 = scmp.ne.s32.totalorder %s319, %s322
      %p328 = scmp.eq.s32.totalorder %s31, 0
      %p329 = por %p327, %p328
      %p330 = scmp.ne.s32.totalorder %s319, %s322
      %p331 = scmp.eq.s32.totalorder %s36, 1
      %p332 = por %p330, %p331
      %p333 = scmp.ne.s32.totalorder %s322, %s323
      %p334 = scmp.eq.s32.totalorder %s36, 0
      %p335 = por %p333, %p334
      %p336 = scmp.ne.s32.totalorder %s322, %s323
      %p337 = scmp.eq.s32.totalorder %s37, 1
      %p338 = por %p336, %p337
      %p340 = scmp.ne.s32.totalorder %s323, %s339
      %p341 = scmp.eq.s32.totalorder %s37, 0
      %p342 = por %p340, %p341
      %p343 = scmp.le.s32.totalorder 1, %s31
      %p344 = scmp.lt.s32.totalorder %s31, 3
      %p345 = pnand %p343, %p344
      %p346 = pneg %p345
      // Predicated region
      $region9: #{tpu_custom_call.1} parent=5 // pred_check
        _
      $region10: #{tpu_custom_call.1} parent=5 // pred_check_branch
        %348 = sbr.rel (%p345) target = $region12
      $region11: #{tpu_custom_call.1} parent=5 // pred_region
        %s349 = ssub.s32 %s31, 1
        // Predicated region
        $region13: #{tpu_custom_call.1} parent=11 // pred_check
          %p350 = pneg %p78
        $region14: #{tpu_custom_call.1} parent=11 // pred_check_branch
          %352 = sbr.rel (%p350) target = $region16
        $region15: #{tpu_custom_call.1} parent=11 // pred_region
          %s354 = ssub.s32 16, 16
          %355 = vsyncadd [#allocation8], %s354
          %s357 = sshll.u32 [#allocation7], 4
          %s358 = int_to_ptr.vmem [resolvable:$true] %s357
          %360 = dma.hbm_to_vmem [thread:$0]  %s1, 16, %s358, [#allocation8]
        $region16: #{tpu_custom_call.1} parent=11 // pred_fallthru
          _
        // Predicated region
        $region17: #{tpu_custom_call.1} parent=11 // pred_check
          %p361 = pneg %p99
        $region18: #{tpu_custom_call.1} parent=11 // pred_check_branch
          %363 = sbr.rel (%p361) target = $region20
        $region19: #{tpu_custom_call.1} parent=11 // pred_region
          %s365 = ssub.s32 16, 16
          %366 = vsyncadd [#allocation8], %s365
          %s368 = sshll.u32 [#allocation9], 4
          %s369 = int_to_ptr.vmem [resolvable:$true] %s368
          %371 = dma.hbm_to_vmem [thread:$0]  %s2, 16, %s369, [#allocation8]
        $region20: #{tpu_custom_call.1} parent=11 // pred_fallthru
          _
        // Predicated region
        $region21: #{tpu_custom_call.1} parent=11 // pred_check
          %p372 = pneg %p120
        $region22: #{tpu_custom_call.1} parent=11 // pred_check_branch
          %374 = sbr.rel (%p372) target = $region24
        $region23: #{tpu_custom_call.1} parent=11 // pred_region
          %s376 = ssub.s32 3072, 3072
          %377 = vsyncadd [#allocation11], %s376
          %s378 = sshll.u32 [#allocation10], 4
          %s379 = int_to_ptr.vmem [resolvable:$true] %s378
          %384 = dma.hbm_to_vmem [thread:$0]  %s3, 3072, %s379, [#allocation11], 192, 192, 12
        $region24: #{tpu_custom_call.1} parent=11 // pred_fallthru
          _
        // Predicated region
        $region25: #{tpu_custom_call.1} parent=11 // pred_check
          %p385 = pneg %p141
        $region26: #{tpu_custom_call.1} parent=11 // pred_check_branch
          %387 = sbr.rel (%p385) target = $region28
        $region27: #{tpu_custom_call.1} parent=11 // pred_region
          %s389 = ssub.s32 48, 48
          %390 = vsyncadd [#allocation11], %s389
          %s392 = sshll.u32 [#allocation12], 4
          %s393 = int_to_ptr.vmem [resolvable:$true] %s392
          %395 = dma.hbm_to_vmem [thread:$0]  %s4, 48, %s393, [#allocation11]
        $region28: #{tpu_custom_call.1} parent=11 // pred_fallthru
          _
        // Predicated region
        $region29: #{tpu_custom_call.1} parent=11 // pred_check
          %p396 = pneg %p162
        $region30: #{tpu_custom_call.1} parent=11 // pred_check_branch
          %398 = sbr.rel (%p396) target = $region32
        $region31: #{tpu_custom_call.1} parent=11 // pred_region
          %s400 = ssub.s32 1024, 1024
          %401 = vsyncadd [#allocation14], %s400
          %s402 = sshll.u32 [#allocation13], 4
          %s403 = int_to_ptr.vmem [resolvable:$true] %s402
          %408 = dma.hbm_to_vmem [thread:$0]  %s5, 1024, %s403, [#allocation14], 64, 64, 4
        $region32: #{tpu_custom_call.1} parent=11 // pred_fallthru
          _
        // Predicated region
        $region33: #{tpu_custom_call.1} parent=11 // pred_check
          %p409 = pneg %p183
        $region34: #{tpu_custom_call.1} parent=11 // pred_check_branch
          %411 = sbr.rel (%p409) target = $region36
        $region35: #{tpu_custom_call.1} parent=11 // pred_region
          %s413 = ssub.s32 16, 16
          %414 = vsyncadd [#allocation14], %s413
          %s416 = sshll.u32 [#allocation15], 4
          %s417 = int_to_ptr.vmem [resolvable:$true] %s416
          %419 = dma.hbm_to_vmem [thread:$0]  %s6, 16, %s417, [#allocation14]
        $region36: #{tpu_custom_call.1} parent=11 // pred_fallthru
          _
        // Predicated region
        $region37: #{tpu_custom_call.1} parent=11 // pred_check
          %p420 = pneg %p204
        $region38: #{tpu_custom_call.1} parent=11 // pred_check_branch
          %422 = sbr.rel (%p420) target = $region40
        $region39: #{tpu_custom_call.1} parent=11 // pred_region
          %s424 = ssub.s32 16, 16
          %425 = vsyncadd [#allocation17], %s424
          %s427 = sshll.u32 [#allocation16], 4
          %s428 = int_to_ptr.vmem [resolvable:$true] %s427
          %430 = dma.hbm_to_vmem [thread:$0]  %s7, 16, %s428, [#allocation17]
        $region40: #{tpu_custom_call.1} parent=11 // pred_fallthru
          _
        // Predicated region
        $region41: #{tpu_custom_call.1} parent=11 // pred_check
          %p431 = pneg %p225
        $region42: #{tpu_custom_call.1} parent=11 // pred_check_branch
          %433 = sbr.rel (%p431) target = $region44
        $region43: #{tpu_custom_call.1} parent=11 // pred_region
          %s435 = ssub.s32 16, 16
          %436 = vsyncadd [#allocation17], %s435
          %s438 = sshll.u32 [#allocation18], 4
          %s439 = int_to_ptr.vmem [resolvable:$true] %s438
          %441 = dma.hbm_to_vmem [thread:$0]  %s8, 16, %s439, [#allocation17]
        $region44: #{tpu_custom_call.1} parent=11 // pred_fallthru
          _
        // Predicated region
        $region45: #{tpu_custom_call.1} parent=11 // pred_check
          %p442 = pneg %p246
        $region46: #{tpu_custom_call.1} parent=11 // pred_check_branch
          %444 = sbr.rel (%p442) target = $region48
        $region47: #{tpu_custom_call.1} parent=11 // pred_region
          %s446 = ssub.s32 4096, 4096
          %447 = vsyncadd [#allocation20], %s446
          %s448 = sshll.u32 [#allocation19], 4
          %s449 = int_to_ptr.vmem [resolvable:$true] %s448
          %454 = dma.hbm_to_vmem [thread:$0]  %s9, 4096, %s449, [#allocation20], 256, 256, 16
        $region48: #{tpu_custom_call.1} parent=11 // pred_fallthru
          _
        // Predicated region
        $region49: #{tpu_custom_call.1} parent=11 // pred_check
          %p455 = pneg %p267
        $region50: #{tpu_custom_call.1} parent=11 // pred_check_branch
          %457 = sbr.rel (%p455) target = $region52
        $region51: #{tpu_custom_call.1} parent=11 // pred_region
          %s459 = ssub.s32 64, 64
          %460 = vsyncadd [#allocation20], %s459
          %s462 = sshll.u32 [#allocation21], 4
          %s463 = int_to_ptr.vmem [resolvable:$true] %s462
          %465 = dma.hbm_to_vmem [thread:$0]  %s10, 64, %s463, [#allocation20]
        $region52: #{tpu_custom_call.1} parent=11 // pred_fallthru
          _
        // Predicated region
        $region53: #{tpu_custom_call.1} parent=11 // pred_check
          %p466 = pneg %p288
        $region54: #{tpu_custom_call.1} parent=11 // pred_check_branch
          %468 = sbr.rel (%p466) target = $region56
        $region55: #{tpu_custom_call.1} parent=11 // pred_region
          %s470 = ssub.s32 4096, 4096
          %471 = vsyncadd [#allocation23], %s470
          %s472 = sshll.u32 [#allocation22], 4
          %s473 = int_to_ptr.vmem [resolvable:$true] %s472
          %478 = dma.hbm_to_vmem [thread:$0]  %s11, 4096, %s473, [#allocation23], 64, 64, 4
        $region56: #{tpu_custom_call.1} parent=11 // pred_fallthru
          _
        // Predicated region
        $region57: #{tpu_custom_call.1} parent=11 // pred_check
          %p479 = pneg %p309
        $region58: #{tpu_custom_call.1} parent=11 // pred_check_branch
          %481 = sbr.rel (%p479) target = $region60
        $region59: #{tpu_custom_call.1} parent=11 // pred_region
          %s483 = ssub.s32 16, 16
          %484 = vsyncadd [#allocation23], %s483
          %s486 = sshll.u32 [#allocation24], 4
          %s487 = int_to_ptr.vmem [resolvable:$true] %s486
          %489 = dma.hbm_to_vmem [thread:$0]  %s12, 16, %s487, [#allocation23]
        $region60: #{tpu_custom_call.1} parent=11 // pred_fallthru
          _
      $region12: #{tpu_custom_call.1} parent=5 // pred_fallthru
        _
      %p490 = scmp.lt.s32.totalorder %s31, 2
      // Predicated region
      $region61: #{tpu_custom_call.1} parent=5 // pred_check
        %p491 = pneg %p490
      $region62: #{tpu_custom_call.1} parent=5 // pred_check_branch
        %493 = sbr.rel (%p491) target = $region64
      $region63: #{tpu_custom_call.1} parent=5 // pred_region
        // Predicated region
        $region65: #{tpu_custom_call.1} parent=63 // pred_check
          %p494 = pneg %p51
        $region66: #{tpu_custom_call.1} parent=63 // pred_check_branch
          %496 = sbr.rel (%p494) target = $region68
        $region67: #{tpu_custom_call.1} parent=63 // pred_region
          %s497 = sand.u32 %s41, 1
          %s498 = scalar_lea.sflag [#allocation5], %s497
          %s499 = sand.u32 %s41, 1
          %s500 = smul.addr %s499, 64
          %s501 = scalar_lea.vmem [#allocation4], %s500
          %s503 = ssub.s32 1024, 1024
          %504 = vsyncadd %s498, %s503
          %s505 = smul.addr %s31, 8
          %s506 = smul.addr %s505, 128
          %s507 = scalar_lea.hbm %s0, %s506
          %s508 = sshll.u32 %s501, 4
          %s509 = int_to_ptr.vmem [resolvable:$true] %s508
          %514 = dma.hbm_to_vmem [thread:$0]  %s507, 1024, %s509, %s498, 128, 128, 8
        $region68: #{tpu_custom_call.1} parent=63 // pred_fallthru
          _
      $region64: #{tpu_custom_call.1} parent=5 // pred_fallthru
        _
      %p515 = scmp.le.s32.totalorder 1, %s31
      %p516 = scmp.lt.s32.totalorder %s31, 3
      %p517 = pnand %p515, %p516
      %p518 = pneg %p517
      // Predicated region
      $region69: #{tpu_custom_call.1} parent=5 // pred_check
        _
      $region70: #{tpu_custom_call.1} parent=5 // pred_check_branch
        %520 = sbr.rel (%p517) target = $region72
      $region71: #{tpu_custom_call.1} parent=5 // pred_region
        %s521 = ssub.s32 %s31, 1
        %s522 = sand.u32 %s44, 1
        %s523 = scalar_lea.sflag [#allocation5], %s522
        %s524 = sand.u32 %s44, 1
        %s525 = smul.addr %s524, 64
        %s526 = scalar_lea.vmem [#allocation4], %s525
        // Predicated region
        $region73: #{tpu_custom_call.1} parent=71 // pred_check
          %p527 = pneg %p57
        $region74: #{tpu_custom_call.1} parent=71 // pred_check_branch
          %529 = sbr.rel (%p527) target = $region76
        $region75: #{tpu_custom_call.1} parent=71 // pred_region
          %530 = dma.done %s523, 1024
        $region76: #{tpu_custom_call.1} parent=71 // pred_fallthru
          _
        // Predicated region
        $region77: #{tpu_custom_call.1} parent=71 // pred_check
          %p531 = pneg %p78
        $region78: #{tpu_custom_call.1} parent=71 // pred_check_branch
          %533 = sbr.rel (%p531) target = $region80
        $region79: #{tpu_custom_call.1} parent=71 // pred_region
          %534 = dma.done [#allocation8], 16
        $region80: #{tpu_custom_call.1} parent=71 // pred_fallthru
          _
        // Predicated region
        $region81: #{tpu_custom_call.1} parent=71 // pred_check
          %p535 = pneg %p99
        $region82: #{tpu_custom_call.1} parent=71 // pred_check_branch
          %537 = sbr.rel (%p535) target = $region84
        $region83: #{tpu_custom_call.1} parent=71 // pred_region
          %538 = dma.done [#allocation8], 16
        $region84: #{tpu_custom_call.1} parent=71 // pred_fallthru
          _
        // Predicated region
        $region85: #{tpu_custom_call.1} parent=71 // pred_check
          %p539 = pneg %p120
        $region86: #{tpu_custom_call.1} parent=71 // pred_check_branch
          %541 = sbr.rel (%p539) target = $region88
        $region87: #{tpu_custom_call.1} parent=71 // pred_region
          %542 = dma.done [#allocation11], 3072
        $region88: #{tpu_custom_call.1} parent=71 // pred_fallthru
          _
        // Predicated region
        $region89: #{tpu_custom_call.1} parent=71 // pred_check
          %p543 = pneg %p141
        $region90: #{tpu_custom_call.1} parent=71 // pred_check_branch
          %545 = sbr.rel (%p543) target = $region92
        $region91: #{tpu_custom_call.1} parent=71 // pred_region
          %546 = dma.done [#allocation11], 48
        $region92: #{tpu_custom_call.1} parent=71 // pred_fallthru
          _
        // Predicated region
        $region93: #{tpu_custom_call.1} parent=71 // pred_check
          %p547 = pneg %p162
        $region94: #{tpu_custom_call.1} parent=71 // pred_check_branch
          %549 = sbr.rel (%p547) target = $region96
        $region95: #{tpu_custom_call.1} parent=71 // pred_region
          %550 = dma.done [#allocation14], 1024
        $region96: #{tpu_custom_call.1} parent=71 // pred_fallthru
          _
        // Predicated region
        $region97: #{tpu_custom_call.1} parent=71 // pred_check
          %p551 = pneg %p183
        $region98: #{tpu_custom_call.1} parent=71 // pred_check_branch
          %553 = sbr.rel (%p551) target = $region100
        $region99: #{tpu_custom_call.1} parent=71 // pred_region
          %554 = dma.done [#allocation14], 16
        $region100: #{tpu_custom_call.1} parent=71 // pred_fallthru
          _
        // Predicated region
        $region101: #{tpu_custom_call.1} parent=71 // pred_check
          %p555 = pneg %p204
        $region102: #{tpu_custom_call.1} parent=71 // pred_check_branch
          %557 = sbr.rel (%p555) target = $region104
        $region103: #{tpu_custom_call.1} parent=71 // pred_region
          %558 = dma.done [#allocation17], 16
        $region104: #{tpu_custom_call.1} parent=71 // pred_fallthru
          _
        // Predicated region
        $region105: #{tpu_custom_call.1} parent=71 // pred_check
          %p559 = pneg %p225
        $region106: #{tpu_custom_call.1} parent=71 // pred_check_branch
          %561 = sbr.rel (%p559) target = $region108
        $region107: #{tpu_custom_call.1} parent=71 // pred_region
          %562 = dma.done [#allocation17], 16
        $region108: #{tpu_custom_call.1} parent=71 // pred_fallthru
          _
        // Predicated region
        $region109: #{tpu_custom_call.1} parent=71 // pred_check
          %p563 = pneg %p246
        $region110: #{tpu_custom_call.1} parent=71 // pred_check_branch
          %565 = sbr.rel (%p563) target = $region112
        $region111: #{tpu_custom_call.1} parent=71 // pred_region
          %566 = dma.done [#allocation20], 4096
        $region112: #{tpu_custom_call.1} parent=71 // pred_fallthru
          _
        // Predicated region
        $region113: #{tpu_custom_call.1} parent=71 // pred_check
          %p567 = pneg %p267
        $region114: #{tpu_custom_call.1} parent=71 // pred_check_branch
          %569 = sbr.rel (%p567) target = $region116
        $region115: #{tpu_custom_call.1} parent=71 // pred_region
          %570 = dma.done [#allocation20], 64
        $region116: #{tpu_custom_call.1} parent=71 // pred_fallthru
          _
        // Predicated region
        $region117: #{tpu_custom_call.1} parent=71 // pred_check
          %p571 = pneg %p288
        $region118: #{tpu_custom_call.1} parent=71 // pred_check_branch
          %573 = sbr.rel (%p571) target = $region120
        $region119: #{tpu_custom_call.1} parent=71 // pred_region
          %574 = dma.done [#allocation23], 4096
        $region120: #{tpu_custom_call.1} parent=71 // pred_fallthru
          _
        // Predicated region
        $region121: #{tpu_custom_call.1} parent=71 // pred_check
          %p575 = pneg %p309
        $region122: #{tpu_custom_call.1} parent=71 // pred_check_branch
          %577 = sbr.rel (%p575) target = $region124
        $region123: #{tpu_custom_call.1} parent=71 // pred_region
          %578 = dma.done [#allocation23], 16
        $region124: #{tpu_custom_call.1} parent=71 // pred_fallthru
          _
        %s579 = sand.u32 %s44, 1
        %s580 = scalar_lea.sflag [#allocation5], %s579
        %s581 = sand.u32 %s44, 1
        %s582 = smul.addr %s581, 64
        %s583 = scalar_lea.vmem [#allocation4], %s582
        %p584 = pneg %p57
        %p585 = pneg %p54
        %p586 = pneg %p78
        %p587 = pneg %p75
        %p588 = pneg %p99
        %p589 = pneg %p96
        %p590 = pneg %p120
        %p591 = pneg %p117
        %p592 = pneg %p141
        %p593 = pneg %p138
        %p594 = pneg %p162
        %p595 = pneg %p159
        %p596 = pneg %p183
        %p597 = pneg %p180
        %p598 = pneg %p204
        %p599 = pneg %p201
        %p600 = pneg %p225
        %p601 = pneg %p222
        %p602 = pneg %p246
        %p603 = pneg %p243
        %p604 = pneg %p267
        %p605 = pneg %p264
        %p606 = pneg %p288
        %p607 = pneg %p285
        %p608 = pneg %p309
        %p609 = pneg %p306
        %p610 = pneg %p335
        %p611 = pneg %p332
        %s612 = sand.u32 %s322, 1
        %s613 = scalar_lea.sflag [#allocation6], %s612
        %s614 = sand.u32 %s322, 1
        %s615 = smul.addr %s614, 64
        %s616 = scalar_lea.vmem [#allocation25], %s615
        %v618 = vld [vmem:[%s526] sm:$0xff]
        %v619 = vld [vmem:[%s526 + $0x8] sm:$0xff]
        %v620 = vld [vmem:[%s526 + $0x10] sm:$0xff]
        %v621 = vld [vmem:[%s526 + $0x18] sm:$0xff]
        %v622 = vld [vmem:[%s526 + $0x20] sm:$0xff]
        %v623 = vld [vmem:[%s526 + $0x28] sm:$0xff]
        %v624 = vld [vmem:[%s526 + $0x30] sm:$0xff]
        %v625 = vld [vmem:[%s526 + $0x38] sm:$0xff]
        %v626 = vld [vmem:[#allocation7] sm:$0x1]
        %v627 = vld [vmem:[#allocation9] sm:$0x1]
        %628 = vadd.xlane.f32.xlu0 %v618
        %v629 = vpop.xlane.xlu0 %628
        %630 = vadd.xlane.f32.xlu0 %v619
        %v631 = vpop.xlane.xlu0 %630
        %632 = vadd.xlane.f32.xlu0 %v620
        %v633 = vpop.xlane.xlu0 %632
        %634 = vadd.xlane.f32.xlu0 %v621
        %v635 = vpop.xlane.xlu0 %634
        %636 = vadd.xlane.f32.xlu0 %v622
        %v637 = vpop.xlane.xlu0 %636
        %638 = vadd.xlane.f32.xlu0 %v623
        %v639 = vpop.xlane.xlu0 %638
        %640 = vadd.xlane.f32.xlu0 %v624
        %v641 = vpop.xlane.xlu0 %640
        %642 = vadd.xlane.f32.xlu0 %v625
        %v643 = vpop.xlane.xlu0 %642
        %v644 = vrcp.pop 128.0
        %v645 = vmul.f32 %v629, %v644
        %v646 = vmul.f32 %v631, %v644
        %v647 = vmul.f32 %v633, %v644
        %v648 = vmul.f32 %v635, %v644
        %v649 = vmul.f32 %v637, %v644
        %v650 = vmul.f32 %v639, %v644
        %v651 = vmul.f32 %v641, %v644
        %v652 = vmul.f32 %v643, %v644
        %v653 = vsub.f32 %v618, %v645
        %v654 = vsub.f32 %v619, %v646
        %v655 = vsub.f32 %v620, %v647
        %v656 = vsub.f32 %v621, %v648
        %v657 = vsub.f32 %v622, %v649
        %v658 = vsub.f32 %v623, %v650
        %v659 = vsub.f32 %v624, %v651
        %v660 = vsub.f32 %v625, %v652
        %v661 = vmul.f32 %v653, %v653
        %v662 = vmul.f32 %v654, %v654
        %v663 = vmul.f32 %v655, %v655
        %v664 = vmul.f32 %v656, %v656
        %v665 = vmul.f32 %v657, %v657
        %v666 = vmul.f32 %v658, %v658
        %v667 = vmul.f32 %v659, %v659
        %v668 = vmul.f32 %v660, %v660
        %669 = vadd.xlane.f32.xlu0 %v661
        %v670 = vpop.xlane.xlu0 %669
        %671 = vadd.xlane.f32.xlu0 %v662
        %v672 = vpop.xlane.xlu0 %671
        %673 = vadd.xlane.f32.xlu0 %v663
        %v674 = vpop.xlane.xlu0 %673
        %675 = vadd.xlane.f32.xlu0 %v664
        %v676 = vpop.xlane.xlu0 %675
        %677 = vadd.xlane.f32.xlu0 %v665
        %v678 = vpop.xlane.xlu0 %677
        %679 = vadd.xlane.f32.xlu0 %v666
        %v680 = vpop.xlane.xlu0 %679
        %681 = vadd.xlane.f32.xlu0 %v667
        %v682 = vpop.xlane.xlu0 %681
        %683 = vadd.xlane.f32.xlu0 %v668
        %v684 = vpop.xlane.xlu0 %683
        %v685 = vmul.f32 %v670, %v644
        %v686 = vmul.f32 %v672, %v644
        %v687 = vmul.f32 %v674, %v644
        %v688 = vmul.f32 %v676, %v644
        %v689 = vmul.f32 %v678, %v644
        %v690 = vmul.f32 %v680, %v644
        %v691 = vmul.f32 %v682, %v644
        %v692 = vmul.f32 %v684, %v644
        %v693 = vadd.f32 %v685, 1e-05
        %v694 = vadd.f32 %v686, 1e-05
        %v695 = vadd.f32 %v687, 1e-05
        %v696 = vadd.f32 %v688, 1e-05
        %v697 = vadd.f32 %v689, 1e-05
        %v698 = vadd.f32 %v690, 1e-05
        %v699 = vadd.f32 %v691, 1e-05
        %v700 = vadd.f32 %v692, 1e-05
        %v701 = vrsqrt.pop %v693
        %v702 = vrsqrt.pop %v694
        %v703 = vrsqrt.pop %v695
        %v704 = vrsqrt.pop %v696
        %v705 = vrsqrt.pop %v697
        %v706 = vrsqrt.pop %v698
        %v707 = vrsqrt.pop %v699
        %v708 = vrsqrt.pop %v700
        %v709 = vmul.f32 %v653, %v701
        %v710 = vmul.f32 %v654, %v702
        %v711 = vmul.f32 %v655, %v703
        %v712 = vmul.f32 %v656, %v704
        %v713 = vmul.f32 %v657, %v705
        %v714 = vmul.f32 %v658, %v706
        %v715 = vmul.f32 %v659, %v707
        %v716 = vmul.f32 %v660, %v708
        %v718 = vlaneseq
        %v719 = vshrl.u32 %v718, 7
        %v720 = vsub.s32 0, %v719
        %v721 = vrot.slane %v626, %v720
        %v723 = vmul.f32 %v709, %v721
        %v724 = vmul.f32 %v710, %v721
        %v725 = vmul.f32 %v711, %v721
        %v726 = vmul.f32 %v712, %v721
        %v727 = vmul.f32 %v713, %v721
        %v728 = vmul.f32 %v714, %v721
        %v729 = vmul.f32 %v715, %v721
        %v730 = vmul.f32 %v716, %v721
        %v732 = vlaneseq
        %v733 = vshrl.u32 %v732, 7
        %v734 = vsub.s32 0, %v733
        %v735 = vrot.slane %v627, %v734
        %v737 = vadd.f32 %v723, %v735
        %v738 = vadd.f32 %v724, %v735
        %v739 = vadd.f32 %v725, %v735
        %v740 = vadd.f32 %v726, %v735
        %v741 = vadd.f32 %v727, %v735
        %v742 = vadd.f32 %v728, %v735
        %v743 = vadd.f32 %v729, %v735
        %v744 = vadd.f32 %v730, %v735
        %v745 = vpack.c.bf16 %v738, %v737
        %v746 = vpack.c.bf16 %v740, %v739
        %v747 = vpack.c.bf16 %v742, %v741
        %v748 = vpack.c.bf16 %v744, %v743
        %v749 = vld [vmem:[#allocation10] sm:$0xf]
        %v750 = vld [vmem:[#allocation10 + $0xc] sm:$0xf]
        %v751 = vld [vmem:[#allocation10 + $0x18] sm:$0xf]
        %v752 = vld [vmem:[#allocation10 + $0x24] sm:$0xf]
        %v753 = vld [vmem:[#allocation10 + $0x30] sm:$0xf]
        %v754 = vld [vmem:[#allocation10 + $0x3c] sm:$0xf]
        %v755 = vld [vmem:[#allocation10 + $0x48] sm:$0xf]
        %v756 = vld [vmem:[#allocation10 + $0x54] sm:$0xf]
        %v757 = vld [vmem:[#allocation10 + $0x60] sm:$0xf]
        %v758 = vld [vmem:[#allocation10 + $0x6c] sm:$0xf]
        %v759 = vld [vmem:[#allocation10 + $0x78] sm:$0xf]
        %v760 = vld [vmem:[#allocation10 + $0x84] sm:$0xf]
        %v761 = vld [vmem:[#allocation10 + $0x90] sm:$0xf]
        %v762 = vld [vmem:[#allocation10 + $0x9c] sm:$0xf]
        %v763 = vld [vmem:[#allocation10 + $0xa8] sm:$0xf]
        %v764 = vld [vmem:[#allocation10 + $0xb4] sm:$0xf]
        %v765 = vld [vmem:[#allocation12] sm:$0x1]
        %v767 = vlaneseq
        %v768 = vshrl.u32 %v767, 7
        %v769 = vsub.s32 0, %v768
        %v770 = vrot.slane %v765, %v769
        %v788 = vunpack.c.l.b16 %v749
        %v789 = vunpack.c.l.b16 %v750
        %v790 = vunpack.c.l.b16 %v751
        %v791 = vunpack.c.l.b16 %v752
        %v792 = vunpack.c.l.b16 %v753
        %v793 = vunpack.c.l.b16 %v754
        %v794 = vunpack.c.l.b16 %v755
        %v795 = vunpack.c.l.b16 %v756
        %v796 = vunpack.c.l.b16 %v757
        %v797 = vunpack.c.l.b16 %v758
        %v798 = vunpack.c.l.b16 %v759
        %v799 = vunpack.c.l.b16 %v760
        %v800 = vunpack.c.l.b16 %v761
        %v801 = vunpack.c.l.b16 %v762
        %v802 = vunpack.c.l.b16 %v763
        %v803 = vunpack.c.l.b16 %v764
        %v804 = vpack.c.b16 %v789, %v788
        %v805 = vpack.c.b16 %v791, %v790
        %v806 = vpack.c.b16 %v793, %v792
        %v807 = vpack.c.b16 %v795, %v794
        %v808 = vpack.c.b16 %v797, %v796
        %v809 = vpack.c.b16 %v799, %v798
        %v810 = vpack.c.b16 %v801, %v800
        %v811 = vpack.c.b16 %v803, %v802
        %820 = vmatprep.subr.bf16.mxu0 0
        %821 = vmatpush1.bf16.msra.mxu0 %v804
        %822 = vmatprep.subr.bf16.mxu0 0
        %823 = vmatpush1.bf16.msra.mxu0 %v805
        %824 = vmatprep.subr.bf16.mxu0 0
        %825 = vmatpush1.bf16.msra.mxu0 %v806
        %826 = vmatprep.subr.bf16.mxu0 0
        %827 = vmatpush1.bf16.msra.mxu0 %v807
        %828 = vmatprep.subr.bf16.mxu0 0
        %829 = vmatpush1.bf16.msra.mxu0 %v808
        %830 = vmatprep.subr.bf16.mxu0 0
        %831 = vmatpush1.bf16.msra.mxu0 %v809
        %832 = vmatprep.subr.bf16.mxu0 0
        %833 = vmatpush1.bf16.msra.mxu0 %v810
        %834 = vmatprep.subr.bf16.mxu0 0
        %835 = vmatpush1.bf16.msra.mxu0 %v811
        %836 = vmatprep.subr.bf16.mxu0 0
        %837 = vmatpush1.bf16.msra.mxu0 0
        %838 = vmatprep.subr.bf16.mxu0 0
        %839 = vmatpush1.bf16.msra.mxu0 0
        %840 = vmatprep.subr.bf16.mxu0 0
        %841 = vmatpush1.bf16.msra.mxu0 0
        %842 = vmatprep.subr.bf16.mxu0 0
        %843 = vmatpush1.bf16.msra.mxu0 0
        %844 = vmatprep.subr.bf16.mxu0 0
        %845 = vmatpush1.bf16.msra.mxu0 0
        %846 = vmatprep.subr.bf16.mxu0 0
        %847 = vmatpush1.bf16.msra.mxu0 0
        %848 = vmatprep.subr.bf16.mxu0 0
        %849 = vmatpush1.bf16.msra.mxu0 0
        %850 = vmatprep.subr.bf16.mxu0 0
        %851 = vmatpush1.bf16.msra.mxu0 0
        %852 = vmatprep.mubr.bf16.mxu0 0
        %853 = vmatmul.mubr.bf16.gmra.mrb[0].mxu0 %v745
        %v854 = vpop.f32.mrb[0].mxu0
        %v855 = vadd.f32 %v770, %v854
        %v856 = vpop.f32.mrb[0].mxu0
        %v857 = vpop.f32.mrb[0].mxu0
        %v858 = vadd.f32 %v770, %v857
        %v859 = vpop.f32.mrb[0].mxu0
        %860 = vmatprep.mubr.bf16.mxu0 0
        %861 = vmatmul.mubr.bf16.gmra.mrb[0].mxu0 %v746
        %v862 = vpop.f32.mrb[0].mxu0
        %v863 = vadd.f32 %v770, %v862
        %v864 = vpop.f32.mrb[0].mxu0
        %v865 = vpop.f32.mrb[0].mxu0
        %v866 = vadd.f32 %v770, %v865
        %v867 = vpop.f32.mrb[0].mxu0
        %868 = vmatprep.mubr.bf16.mxu0 0
        %869 = vmatmul.mubr.bf16.gmra.mrb[0].mxu0 %v747
        %v870 = vpop.f32.mrb[0].mxu0
        %v871 = vadd.f32 %v770, %v870
        %v872 = vpop.f32.mrb[0].mxu0
        %v873 = vpop.f32.mrb[0].mxu0
        %v874 = vadd.f32 %v770, %v873
        %v875 = vpop.f32.mrb[0].mxu0
        %876 = vmatprep.mubr.bf16.mxu0 0
        %877 = vmatmul.mubr.bf16.gmra.mrb[0].mxu0 %v748
        %v878 = vpop.f32.mrb[0].mxu0
        %v879 = vadd.f32 %v770, %v878
        %v880 = vpop.f32.mrb[0].mxu0
        %v881 = vpop.f32.mrb[0].mxu0
        %v882 = vadd.f32 %v770, %v881
        %v883 = vpop.f32.mrb[0].mxu0
        %884 = vdwg.mxu0
        %v885 = vpack.c.bf16 %v858, %v855
        %v886 = vpack.c.bf16 %v866, %v863
        %v887 = vpack.c.bf16 %v874, %v871
        %v888 = vpack.c.bf16 %v882, %v879
        %889 = vst [vmem:[#allocation2] sm:$0xff] %v885
        %890 = vst [vmem:[#allocation2 + $0x18] sm:$0xff] %v886
        %891 = vst [vmem:[#allocation2 + $0x30] sm:$0xff] %v887
        %892 = vst [vmem:[#allocation2 + $0x48] sm:$0xff] %v888
        %v893 = vld [vmem:[#allocation10 + $0x4] sm:$0xf]
        %v894 = vld [vmem:[#allocation10 + $0x10] sm:$0xf]
        %v895 = vld [vmem:[#allocation10 + $0x1c] sm:$0xf]
        %v896 = vld [vmem:[#allocation10 + $0x28] sm:$0xf]
        %v897 = vld [vmem:[#allocation10 + $0x34] sm:$0xf]
        %v898 = vld [vmem:[#allocation10 + $0x40] sm:$0xf]
        %v899 = vld [vmem:[#allocation10 + $0x4c] sm:$0xf]
        %v900 = vld [vmem:[#allocation10 + $0x58] sm:$0xf]
        %v901 = vld [vmem:[#allocation10 + $0x64] sm:$0xf]
        %v902 = vld [vmem:[#allocation10 + $0x70] sm:$0xf]
        %v903 = vld [vmem:[#allocation10 + $0x7c] sm:$0xf]
        %v904 = vld [vmem:[#allocation10 + $0x88] sm:$0xf]
        %v905 = vld [vmem:[#allocation10 + $0x94] sm:$0xf]
        %v906 = vld [vmem:[#allocation10 + $0xa0] sm:$0xf]
        %v907 = vld [vmem:[#allocation10 + $0xac] sm:$0xf]
        %v908 = vld [vmem:[#allocation10 + $0xb8] sm:$0xf]
        %v909 = vld [vmem:[#allocation12 + $0x1] sm:$0x1]
        %v911 = vlaneseq
        %v912 = vshrl.u32 %v911, 7
        %v913 = vsub.s32 0, %v912
        %v914 = vrot.slane %v909, %v913
        %v932 = vunpack.c.l.b16 %v893
        %v933 = vunpack.c.l.b16 %v894
        %v934 = vunpack.c.l.b16 %v895
        %v935 = vunpack.c.l.b16 %v896
        %v936 = vunpack.c.l.b16 %v897
        %v937 = vunpack.c.l.b16 %v898
        %v938 = vunpack.c.l.b16 %v899
        %v939 = vunpack.c.l.b16 %v900
        %v940 = vunpack.c.l.b16 %v901
        %v941 = vunpack.c.l.b16 %v902
        %v942 = vunpack.c.l.b16 %v903
        %v943 = vunpack.c.l.b16 %v904
        %v944 = vunpack.c.l.b16 %v905
        %v945 = vunpack.c.l.b16 %v906
        %v946 = vunpack.c.l.b16 %v907
        %v947 = vunpack.c.l.b16 %v908
        %v948 = vpack.c.b16 %v933, %v932
        %v949 = vpack.c.b16 %v935, %v934
        %v950 = vpack.c.b16 %v937, %v936
        %v951 = vpack.c.b16 %v939, %v938
        %v952 = vpack.c.b16 %v941, %v940
        %v953 = vpack.c.b16 %v943, %v942
        %v954 = vpack.c.b16 %v945, %v944
        %v955 = vpack.c.b16 %v947, %v946
        %964 = vmatprep.subr.bf16.mxu0 0
        %965 = vmatpush1.bf16.msra.mxu0 %v948
        %966 = vmatprep.subr.bf16.mxu0 0
        %967 = vmatpush1.bf16.msra.mxu0 %v949
        %968 = vmatprep.subr.bf16.mxu0 0
        %969 = vmatpush1.bf16.msra.mxu0 %v950
        %970 = vmatprep.subr.bf16.mxu0 0
        %971 = vmatpush1.bf16.msra.mxu0 %v951
        %972 = vmatprep.subr.bf16.mxu0 0
        %973 = vmatpush1.bf16.msra.mxu0 %v952
        %974 = vmatprep.subr.bf16.mxu0 0
        %975 = vmatpush1.bf16.msra.mxu0 %v953
        %976 = vmatprep.subr.bf16.mxu0 0
        %977 = vmatpush1.bf16.msra.mxu0 %v954
        %978 = vmatprep.subr.bf16.mxu0 0
        %979 = vmatpush1.bf16.msra.mxu0 %v955
        %980 = vmatprep.subr.bf16.mxu0 0
        %981 = vmatpush1.bf16.msra.mxu0 0
        %982 = vmatprep.subr.bf16.mxu0 0
        %983 = vmatpush1.bf16.msra.mxu0 0
        %984 = vmatprep.subr.bf16.mxu0 0
        %985 = vmatpush1.bf16.msra.mxu0 0
        %986 = vmatprep.subr.bf16.mxu0 0
        %987 = vmatpush1.bf16.msra.mxu0 0
        %988 = vmatprep.subr.bf16.mxu0 0
        %989 = vmatpush1.bf16.msra.mxu0 0
        %990 = vmatprep.subr.bf16.mxu0 0
        %991 = vmatpush1.bf16.msra.mxu0 0
        %992 = vmatprep.subr.bf16.mxu0 0
        %993 = vmatpush1.bf16.msra.mxu0 0
        %994 = vmatprep.subr.bf16.mxu0 0
        %995 = vmatpush1.bf16.msra.mxu0 0
        %996 = vmatprep.mubr.bf16.mxu0 0
        %997 = vmatmul.mubr.bf16.gmra.mrb[0].mxu0 %v745
        %v998 = vpop.f32.mrb[0].mxu0
        %v999 = vadd.f32 %v914, %v998
        %v1000 = vpop.f32.mrb[0].mxu0
        %v1001 = vpop.f32.mrb[0].mxu0
        %v1002 = vadd.f32 %v914, %v1001
        %v1003 = vpop.f32.mrb[0].mxu0
        %1004 = vmatprep.mubr.bf16.mxu0 0
        %1005 = vmatmul.mubr.bf16.gmra.mrb[0].mxu0 %v746
        %v1006 = vpop.f32.mrb[0].mxu0
        %v1007 = vadd.f32 %v914, %v1006
        %v1008 = vpop.f32.mrb[0].mxu0
        %v1009 = vpop.f32.mrb[0].mxu0
        %v1010 = vadd.f32 %v914, %v1009
        %v1011 = vpop.f32.mrb[0].mxu0
        %1012 = vmatprep.mubr.bf16.mxu0 0
        %1013 = vmatmul.mubr.bf16.gmra.mrb[0].mxu0 %v747
        %v1014 = vpop.f32.mrb[0].mxu0
        %v1015 = vadd.f32 %v914, %v1014
        %v1016 = vpop.f32.mrb[0].mxu0
        %v1017 = vpop.f32.mrb[0].mxu0
        %v1018 = vadd.f32 %v914, %v1017
        %v1019 = vpop.f32.mrb[0].mxu0
        %1020 = vmatprep.mubr.bf16.mxu0 0
        %1021 = vmatmul.mubr.bf16.gmra.mrb[0].mxu0 %v748
        %v1022 = vpop.f32.mrb[0].mxu0
        %v1023 = vadd.f32 %v914, %v1022
        %v1024 = vpop.f32.mrb[0].mxu0
        %v1025 = vpop.f32.mrb[0].mxu0
        %v1026 = vadd.f32 %v914, %v1025
        %v1027 = vpop.f32.mrb[0].mxu0
        %1028 = vdwg.mxu0
        %v1029 = vpack.c.bf16 %v1002, %v999
        %v1030 = vpack.c.bf16 %v1010, %v1007
        %v1031 = vpack.c.bf16 %v1018, %v1015
        %v1032 = vpack.c.bf16 %v1026, %v1023
        %1033 = vst [vmem:[#allocation2 + $0x8] sm:$0xff] %v1029
        %1034 = vst [vmem:[#allocation2 + $0x20] sm:$0xff] %v1030
        %1035 = vst [vmem:[#allocation2 + $0x38] sm:$0xff] %v1031
        %1036 = vst [vmem:[#allocation2 + $0x50] sm:$0xff] %v1032
        %v1037 = vld [vmem:[#allocation10 + $0x8] sm:$0xf]
        %v1038 = vld [vmem:[#allocation10 + $0x14] sm:$0xf]
        %v1039 = vld [vmem:[#allocation10 + $0x20] sm:$0xf]
        %v1040 = vld [vmem:[#allocation10 + $0x2c] sm:$0xf]
        %v1041 = vld [vmem:[#allocation10 + $0x38] sm:$0xf]
        %v1042 = vld [vmem:[#allocation10 + $0x44] sm:$0xf]
        %v1043 = vld [vmem:[#allocation10 + $0x50] sm:$0xf]
        %v1044 = vld [vmem:[#allocation10 + $0x5c] sm:$0xf]
        %v1045 = vld [vmem:[#allocation10 + $0x68] sm:$0xf]
        %v1046 = vld [vmem:[#allocation10 + $0x74] sm:$0xf]
        %v1047 = vld [vmem:[#allocation10 + $0x80] sm:$0xf]
        %v1048 = vld [vmem:[#allocation10 + $0x8c] sm:$0xf]
        %v1049 = vld [vmem:[#allocation10 + $0x98] sm:$0xf]
        %v1050 = vld [vmem:[#allocation10 + $0xa4] sm:$0xf]
        %v1051 = vld [vmem:[#allocation10 + $0xb0] sm:$0xf]
        %v1052 = vld [vmem:[#allocation10 + $0xbc] sm:$0xf]
        %v1053 = vld [vmem:[#allocation12 + $0x2] sm:$0x1]
        %v1055 = vlaneseq
        %v1056 = vshrl.u32 %v1055, 7
        %v1057 = vsub.s32 0, %v1056
        %v1058 = vrot.slane %v1053, %v1057
        %v1076 = vunpack.c.l.b16 %v1037
        %v1077 = vunpack.c.l.b16 %v1038
        %v1078 = vunpack.c.l.b16 %v1039
        %v1079 = vunpack.c.l.b16 %v1040
        %v1080 = vunpack.c.l.b16 %v1041
        %v1081 = vunpack.c.l.b16 %v1042
        %v1082 = vunpack.c.l.b16 %v1043
        %v1083 = vunpack.c.l.b16 %v1044
        %v1084 = vunpack.c.l.b16 %v1045
        %v1085 = vunpack.c.l.b16 %v1046
        %v1086 = vunpack.c.l.b16 %v1047
        %v1087 = vunpack.c.l.b16 %v1048
        %v1088 = vunpack.c.l.b16 %v1049
        %v1089 = vunpack.c.l.b16 %v1050
        %v1090 = vunpack.c.l.b16 %v1051
        %v1091 = vunpack.c.l.b16 %v1052
        %v1092 = vpack.c.b16 %v1077, %v1076
        %v1093 = vpack.c.b16 %v1079, %v1078
        %v1094 = vpack.c.b16 %v1081, %v1080
        %v1095 = vpack.c.b16 %v1083, %v1082
        %v1096 = vpack.c.b16 %v1085, %v1084
        %v1097 = vpack.c.b16 %v1087, %v1086
        %v1098 = vpack.c.b16 %v1089, %v1088
        %v1099 = vpack.c.b16 %v1091, %v1090
        %1108 = vmatprep.subr.bf16.mxu0 0
        %1109 = vmatpush1.bf16.msra.mxu0 %v1092
        %1110 = vmatprep.subr.bf16.mxu0 0
        %1111 = vmatpush1.bf16.msra.mxu0 %v1093
        %1112 = vmatprep.subr.bf16.mxu0 0
        %1113 = vmatpush1.bf16.msra.mxu0 %v1094
        %1114 = vmatprep.subr.bf16.mxu0 0
        %1115 = vmatpush1.bf16.msra.mxu0 %v1095
        %1116 = vmatprep.subr.bf16.mxu0 0
        %1117 = vmatpush1.bf16.msra.mxu0 %v1096
        %1118 = vmatprep.subr.bf16.mxu0 0
        %1119 = vmatpush1.bf16.msra.mxu0 %v1097
        %1120 = vmatprep.subr.bf16.mxu0 0
        %1121 = vmatpush1.bf16.msra.mxu0 %v1098
        %1122 = vmatprep.subr.bf16.mxu0 0
        %1123 = vmatpush1.bf16.msra.mxu0 %v1099
        %1124 = vmatprep.subr.bf16.mxu0 0
        %1125 = vmatpush1.bf16.msra.mxu0 0
        %1126 = vmatprep.subr.bf16.mxu0 0
        %1127 = vmatpush1.bf16.msra.mxu0 0
        %1128 = vmatprep.subr.bf16.mxu0 0
        %1129 = vmatpush1.bf16.msra.mxu0 0
        %1130 = vmatprep.subr.bf16.mxu0 0
        %1131 = vmatpush1.bf16.msra.mxu0 0
        %1132 = vmatprep.subr.bf16.mxu0 0
        %1133 = vmatpush1.bf16.msra.mxu0 0
        %1134 = vmatprep.subr.bf16.mxu0 0
        %1135 = vmatpush1.bf16.msra.mxu0 0
        %1136 = vmatprep.subr.bf16.mxu0 0
        %1137 = vmatpush1.bf16.msra.mxu0 0
        %1138 = vmatprep.subr.bf16.mxu0 0
        %1139 = vmatpush1.bf16.msra.mxu0 0
        %1140 = vmatprep.mubr.bf16.mxu0 0
        %1141 = vmatmul.mubr.bf16.gmra.mrb[0].mxu0 %v745
        %v1142 = vpop.f32.mrb[0].mxu0
        %v1143 = vadd.f32 %v1058, %v1142
        %v1144 = vpop.f32.mrb[0].mxu0
        %v1145 = vpop.f32.mrb[0].mxu0
        %v1146 = vadd.f32 %v1058, %v1145
        %v1147 = vpop.f32.mrb[0].mxu0
        %1148 = vmatprep.mubr.bf16.mxu0 0
        %1149 = vmatmul.mubr.bf16.gmra.mrb[0].mxu0 %v746
        %v1150 = vpop.f32.mrb[0].mxu0
        %v1151 = vadd.f32 %v1058, %v1150
        %v1152 = vpop.f32.mrb[0].mxu0
        %v1153 = vpop.f32.mrb[0].mxu0
        %v1154 = vadd.f32 %v1058, %v1153
        %v1155 = vpop.f32.mrb[0].mxu0
        %1156 = vmatprep.mubr.bf16.mxu0 0
        %1157 = vmatmul.mubr.bf16.gmra.mrb[0].mxu0 %v747
        %v1158 = vpop.f32.mrb[0].mxu0
        %v1159 = vadd.f32 %v1058, %v1158
        %v1160 = vpop.f32.mrb[0].mxu0
        %v1161 = vpop.f32.mrb[0].mxu0
        %v1162 = vadd.f32 %v1058, %v1161
        %v1163 = vpop.f32.mrb[0].mxu0
        %1164 = vmatprep.mubr.bf16.mxu0 0
        %1165 = vmatmul.mubr.bf16.gmra.mrb[0].mxu0 %v748
        %v1166 = vpop.f32.mrb[0].mxu0
        %v1167 = vadd.f32 %v1058, %v1166
        %v1168 = vpop.f32.mrb[0].mxu0
        %v1169 = vpop.f32.mrb[0].mxu0
        %v1170 = vadd.f32 %v1058, %v1169
        %v1171 = vpop.f32.mrb[0].mxu0
        %1172 = vdwg.mxu0
        %v1173 = vpack.c.bf16 %v1146, %v1143
        %v1174 = vpack.c.bf16 %v1154, %v1151
        %v1175 = vpack.c.bf16 %v1162, %v1159
        %v1176 = vpack.c.bf16 %v1170, %v1167
        %1177 = vst [vmem:[#allocation2 + $0x10] sm:$0xff] %v1173
        %1178 = vst [vmem:[#allocation2 + $0x28] sm:$0xff] %v1174
        %1179 = vst [vmem:[#allocation2 + $0x40] sm:$0xff] %v1175
        %1180 = vst [vmem:[#allocation2 + $0x58] sm:$0xff] %v1176
        %v1181 = vlaneseq
        %v1182 = vshrl.u32 %v1181, 7
        %v1183 = vadd.s32 %v1182, 8
        %v1184 = vadd.s32 %v1182, 16
        %v1185 = vadd.s32 %v1182, 24
        loop: start=0, step=1, limit=2
        $region125: #{tpu_custom_call.1} parent=71 // loop_pre_header
          _
        $region126: #{tpu_custom_call.1} parent=71 // loop_header
          %s1187 = sphi 0, %s1191
          %p1188 = scmp.ge.s32.totalorder %s1187, 2
        $region127: #{tpu_custom_call.1} parent=71 // loop_header_branch
          %1190 = sbr.rel (%p1188) target = $region131
        $region128: #{tpu_custom_call.1} parent=71 // loop_body
          %s1192 = smul.u32 %s1187, 32
          %s1193 = sshra.s32 %s1192, 4
          %s1194 = sand.u32 %s1192, 15
          %s1195 = smul.u32 %s1193, 3
          %s1196 = smul.addr %s1195, 8
          %s1197 = scalar_lea.vmem [#allocation2], %s1196
          %v1198 = vld [vmem:[%s1197] sm:$0xff]
          %v1199 = vld [vmem:[%s1197 + $0x18] sm:$0xff]
          loop: start=0, step=1, limit=2
          $region132: #{tpu_custom_call.1} parent=128 // loop_pre_header
            _
          $region133: #{tpu_custom_call.1} parent=128 // loop_header
            %s1201 = sphi 0, %s1205
            %p1202 = scmp.ge.s32.totalorder %s1201, 2
            %v1206 = vphi -1e+30, %v1311
            %v1207 = vphi -1e+30, %v1312
            %v1208 = vphi -1e+30, %v1313
            %v1209 = vphi -1e+30, %v1314
            %v1210 = vphi 0.0, %v1355
            %v1211 = vphi 0.0, %v1356
            %v1212 = vphi 0.0, %v1357
            %v1213 = vphi 0.0, %v1358
            %v1214 = vphi 0.0, %v1420
            %v1215 = vphi 0.0, %v1421
            %v1216 = vphi 0.0, %v1422
            %v1217 = vphi 0.0, %v1423
          $region134: #{tpu_custom_call.1} parent=128 // loop_header_branch
            %1204 = sbr.rel (%p1202) target = $region138
          $region135: #{tpu_custom_call.1} parent=128 // loop_body
            %s1218 = smul.u32 %s1201, 16
            %s1219 = sadd.s32 %s1192, %s1218
            %s1220 = sshra.s32 %s1219, 4
            %s1221 = sand.u32 %s1219, 15
            %s1222 = smul.u32 %s1220, 3
            %s1223 = smul.addr %s1222, 8
            %s1224 = scalar_lea.vmem [#allocation2], %s1223
            %v1225 = vld [vmem:[%s1224 + $0x8] sm:$0xff]
            %v1226 = vld [vmem:[%s1224 + $0x10] sm:$0xff]
            %vm1227 = vcmask 261120
            %v1229 = vsel %vm1227, %v1198, 0
            %v1232 = vsel %vm1227, %v1199, 0
            %v1235 = vsel %vm1227, %v1225, 0
            %1237 = vmatprep.subr.bf16.mxu0 0
            %1238 = vmatpush1.bf16.xpose.msra.mxu0 %v1235
            %1239 = vmatprep.subr.bf16.mxu0 0
            %1240 = vmatpush1.bf16.xpose.msra.mxu0 0
            %1241 = vmatprep.subr.bf16.mxu0 0
            %1242 = vmatpush1.bf16.xpose.msra.mxu0 0
            %1243 = vmatprep.subr.bf16.mxu0 0
            %1244 = vmatpush1.bf16.xpose.msra.mxu0 0
            %1245 = vmatprep.subr.bf16.mxu0 0
            %1246 = vmatpush1.bf16.xpose.msra.mxu0 0
            %1247 = vmatprep.subr.bf16.mxu0 0
            %1248 = vmatpush1.bf16.xpose.msra.mxu0 0
            %1249 = vmatprep.subr.bf16.mxu0 0
            %1250 = vmatpush1.bf16.xpose.msra.mxu0 0
            %1251 = vmatprep.subr.bf16.mxu0 0
            %1252 = vmatpush1.bf16.xpose.msra.mxu0 0
            %1253 = vmatprep.subr.bf16.mxu0 0
            %1254 = vmatpush1.bf16.xpose.msra.mxu0 0
            %1255 = vmatprep.subr.bf16.mxu0 0
            %1256 = vmatpush1.bf16.xpose.msra.mxu0 0
            %1257 = vmatprep.subr.bf16.mxu0 0
            %1258 = vmatpush1.bf16.xpose.msra.mxu0 0
            %1259 = vmatprep.subr.bf16.mxu0 0
            %1260 = vmatpush1.bf16.xpose.msra.mxu0 0
            %1261 = vmatprep.subr.bf16.mxu0 0
            %1262 = vmatpush1.bf16.xpose.msra.mxu0 0
            %1263 = vmatprep.subr.bf16.mxu0 0
            %1264 = vmatpush1.bf16.xpose.msra.mxu0 0
            %1265 = vmatprep.subr.bf16.mxu0 0
            %1266 = vmatpush1.bf16.xpose.msra.mxu0 0
            %1267 = vmatprep.subr.bf16.mxu0 0
            %1268 = vmatpush1.bf16.xpose.msra.mxu0 0
            %1269 = vmatprep.mubr.bf16.mxu0 0
            %1270 = vmatmul.mubr.bf16.gmra.mrb[0].mxu0 %v1229
            %v1271 = vpop.f32.mrb[0].mxu0
            %v1272 = vadd.f32 0.0, %v1271
            %v1273 = vpop.f32.mrb[0].mxu0
            %v1274 = vpop.f32.mrb[0].mxu0
            %v1275 = vadd.f32 0.0, %v1274
            %v1276 = vpop.f32.mrb[0].mxu0
            %1277 = vmatprep.mubr.bf16.mxu0 0
            %1278 = vmatmul.mubr.bf16.gmra.mrb[0].mxu0 %v1232
            %v1279 = vpop.f32.mrb[0].mxu0
            %v1280 = vadd.f32 0.0, %v1279
            %v1281 = vpop.f32.mrb[0].mxu0
            %v1282 = vpop.f32.mrb[0].mxu0
            %v1283 = vadd.f32 0.0, %v1282
            %v1284 = vpop.f32.mrb[0].mxu0
            %1285 = vdwg.mxu0
            %v1286 = vlaneseq
            %v1287 = vand.u32 %v1286, 127
            %v1288 = vstv %s1218
            %v1289 = vadd.s32 %v1288, %v1287
            %vm1290 = vcmp.le.s32.totalorder %v1289, %v1182
            %vm1291 = vcmp.le.s32.totalorder %v1289, %v1183
            %vm1292 = vcmp.le.s32.totalorder %v1289, %v1184
            %vm1293 = vcmp.le.s32.totalorder %v1289, %v1185
            %v1294 = vsel %vm1290, %v1272, -1e+30
            %v1295 = vsel %vm1291, %v1275, -1e+30
            %v1296 = vsel %vm1292, %v1280, -1e+30
            %v1297 = vsel %vm1293, %v1283, -1e+30
            %vm1298 = vcmask 130048
            %v1299 = vsel %vm1298, %v1294, -inf
            %1300 = vmax.xlane.f32.xlu0 %v1299
            %v1301 = vpop.xlane.xlu0 %1300
            %v1302 = vsel %vm1298, %v1295, -inf
            %1303 = vmax.xlane.f32.xlu0 %v1302
            %v1304 = vpop.xlane.xlu0 %1303
            %v1305 = vsel %vm1298, %v1296, -inf
            %1306 = vmax.xlane.f32.xlu0 %v1305
            %v1307 = vpop.xlane.xlu0 %1306
            %v1308 = vsel %vm1298, %v1297, -inf
            %1309 = vmax.xlane.f32.xlu0 %v1308
            %v1310 = vpop.xlane.xlu0 %1309
            %v1311 = vmax.f32 %v1206, %v1301
            %v1312 = vmax.f32 %v1207, %v1304
            %v1313 = vmax.f32 %v1208, %v1307
            %v1314 = vmax.f32 %v1209, %v1310
            %v1315 = vsub.f32 %v1206, %v1311
            %v1316 = vsub.f32 %v1207, %v1312
            %v1317 = vsub.f32 %v1208, %v1313
            %v1318 = vsub.f32 %v1209, %v1314
            %v1319 = vmul.f32 %v1315, 1.442695
            %v1320 = vpow.pop %v1319
            %v1321 = vmul.f32 %v1316, 1.442695
            %v1322 = vpow.pop %v1321
            %v1323 = vmul.f32 %v1317, 1.442695
            %v1324 = vpow.pop %v1323
            %v1325 = vmul.f32 %v1318, 1.442695
            %v1326 = vpow.pop %v1325
            %v1327 = vsub.f32 %v1294, %v1311
            %v1328 = vsub.f32 %v1295, %v1312
            %v1329 = vsub.f32 %v1296, %v1313
            %v1330 = vsub.f32 %v1297, %v1314
            %v1331 = vmul.f32 %v1327, 1.442695
            %v1332 = vpow.pop %v1331
            %v1333 = vmul.f32 %v1328, 1.442695
            %v1334 = vpow.pop %v1333
            %v1335 = vmul.f32 %v1329, 1.442695
            %v1336 = vpow.pop %v1335
            %v1337 = vmul.f32 %v1330, 1.442695
            %v1338 = vpow.pop %v1337
            %v1339 = vmul.f32 %v1320, %v1210
            %v1340 = vmul.f32 %v1322, %v1211
            %v1341 = vmul.f32 %v1324, %v1212
            %v1342 = vmul.f32 %v1326, %v1213
            %v1343 = vsel %vm1298, %v1332, 0.0
            %1344 = vadd.xlane.f32.xlu0 %v1343
            %v1345 = vpop.xlane.xlu0 %1344
            %v1346 = vsel %vm1298, %v1334, 0.0
            %1347 = vadd.xlane.f32.xlu0 %v1346
            %v1348 = vpop.xlane.xlu0 %1347
            %v1349 = vsel %vm1298, %v1336, 0.0
            %1350 = vadd.xlane.f32.xlu0 %v1349
            %v1351 = vpop.xlane.xlu0 %1350
            %v1352 = vsel %vm1298, %v1338, 0.0
            %1353 = vadd.xlane.f32.xlu0 %v1352
            %v1354 = vpop.xlane.xlu0 %1353
            %v1355 = vadd.f32 %v1339, %v1345
            %v1356 = vadd.f32 %v1340, %v1348
            %v1357 = vadd.f32 %v1341, %v1351
            %v1358 = vadd.f32 %v1342, %v1354
            %v1359 = vmul.f32 %v1320, %v1214
            %v1360 = vmul.f32 %v1322, %v1215
            %v1361 = vmul.f32 %v1324, %v1216
            %v1362 = vmul.f32 %v1326, %v1217
            %v1363 = vpack.c.bf16 %v1334, %v1332
            %v1364 = vpack.c.bf16 %v1338, %v1336
            %v1366 = vsel %vm1298, %v1363, 0
            %v1369 = vsel %vm1298, %v1364, 0
            %1371 = vmatprep.subr.bf16.mxu0 0
            %1372 = vmatpush1.bf16.msra.mxu0 %v1226
            %1373 = vmatprep.subr.bf16.mxu0 0
            %1374 = vmatpush1.bf16.msra.mxu0 0
            %1375 = vmatprep.subr.bf16.mxu0 0
            %1376 = vmatpush1.bf16.msra.mxu0 0
            %1377 = vmatprep.subr.bf16.mxu0 0
            %1378 = vmatpush1.bf16.msra.mxu0 0
            %1379 = vmatprep.subr.bf16.mxu0 0
            %1380 = vmatpush1.bf16.msra.mxu0 0
            %1381 = vmatprep.subr.bf16.mxu0 0
            %1382 = vmatpush1.bf16.msra.mxu0 0
            %1383 = vmatprep.subr.bf16.mxu0 0
            %1384 = vmatpush1.bf16.msra.mxu0 0
            %1385 = vmatprep.subr.bf16.mxu0 0
            %1386 = vmatpush1.bf16.msra.mxu0 0
            %1387 = vmatprep.subr.bf16.mxu0 0
            %1388 = vmatpush1.bf16.msra.mxu0 0
            %1389 = vmatprep.subr.bf16.mxu0 0
            %1390 = vmatpush1.bf16.msra.mxu0 0
            %1391 = vmatprep.subr.bf16.mxu0 0
            %1392 = vmatpush1.bf16.msra.mxu0 0
            %1393 = vmatprep.subr.bf16.mxu0 0
            %1394 = vmatpush1.bf16.msra.mxu0 0
            %1395 = vmatprep.subr.bf16.mxu0 0
            %1396 = vmatpush1.bf16.msra.mxu0 0
            %1397 = vmatprep.subr.bf16.mxu0 0
            %1398 = vmatpush1.bf16.msra.mxu0 0
            %1399 = vmatprep.subr.bf16.mxu0 0
            %1400 = vmatpush1.bf16.msra.mxu0 0
            %1401 = vmatprep.subr.bf16.mxu0 0
            %1402 = vmatpush1.bf16.msra.mxu0 0
            %1403 = vmatprep.mubr.bf16.mxu0 0
            %1404 = vmatmul.mubr.bf16.gmra.mrb[0].mxu0 %v1366
            %v1405 = vpop.f32.mrb[0].mxu0
            %v1406 = vadd.f32 0.0, %v1405
            %v1407 = vpop.f32.mrb[0].mxu0
            %v1408 = vpop.f32.mrb[0].mxu0
            %v1409 = vadd.f32 0.0, %v1408
            %v1410 = vpop.f32.mrb[0].mxu0
            %1411 = vmatprep.mubr.bf16.mxu0 0
            %1412 = vmatmul.mubr.bf16.gmra.mrb[0].mxu0 %v1369
            %v1413 = vpop.f32.mrb[0].mxu0
            %v1414 = vadd.f32 0.0, %v1413
            %v1415 = vpop.f32.mrb[0].mxu0
            %v1416 = vpop.f32.mrb[0].mxu0
            %v1417 = vadd.f32 0.0, %v1416
            %v1418 = vpop.f32.mrb[0].mxu0
            %1419 = vdwg.mxu0
            %v1420 = vadd.f32 %v1359, %v1406
            %v1421 = vadd.f32 %v1360, %v1409
            %v1422 = vadd.f32 %v1361, %v1414
            %v1423 = vadd.f32 %v1362, %v1417
          $region136: #{tpu_custom_call.1} parent=128 // loop_footer
            %s1205 = sadd.s32 1, %s1201
          $region137: #{tpu_custom_call.1} parent=128 // loop_footer_branch
            %1200 = sbr.rel target = $region133
          $region138: #{tpu_custom_call.1} parent=128 // loop_exit
            _
          %v1424 = vrcp.pop %v1210
          %v1425 = vrcp.pop %v1211
          %v1426 = vrcp.pop %v1212
          %v1427 = vrcp.pop %v1213
          %v1428 = vmul.f32 %v1214, %v1424
          %v1429 = vmul.f32 %v1215, %v1425
          %v1430 = vmul.f32 %v1216, %v1426
          %v1431 = vmul.f32 %v1217, %v1427
          %v1432 = vpack.c.bf16 %v1429, %v1428
          %v1433 = vpack.c.bf16 %v1431, %v1430
          %s1434 = smul.addr %s1193, 8
          %s1435 = scalar_lea.vmem [#allocation3], %s1434
          %vm1436 = vcmask 261120
          %1437 = vst.msk [vmem:[%s1435] sm:$0xff] %vm1436, %v1432
          %1438 = vst.msk [vmem:[%s1435 + $0x8] sm:$0xff] %vm1436, %v1433
          %v1439 = vld [vmem:[%s1197] sm:$0xff]
          %v1440 = vld [vmem:[%s1197 + $0x18] sm:$0xff]
          loop: start=0, step=1, limit=2
          $region139: #{tpu_custom_call.1} parent=128 // loop_pre_header
            _
          $region140: #{tpu_custom_call.1} parent=128 // loop_header
            %s1442 = sphi 0, %s1446
            %p1443 = scmp.ge.s32.totalorder %s1442, 2
            %v1447 = vphi -1e+30, %v1560
            %v1448 = vphi -1e+30, %v1561
            %v1449 = vphi -1e+30, %v1562
            %v1450 = vphi -1e+30, %v1563
            %v1451 = vphi 0.0, %v1604
            %v1452 = vphi 0.0, %v1605
            %v1453 = vphi 0.0, %v1606
            %v1454 = vphi 0.0, %v1607
            %v1455 = vphi 0.0, %v1673
            %v1456 = vphi 0.0, %v1674
            %v1457 = vphi 0.0, %v1675
            %v1458 = vphi 0.0, %v1676
          $region141: #{tpu_custom_call.1} parent=128 // loop_header_branch
            %1445 = sbr.rel (%p1443) target = $region145
          $region142: #{tpu_custom_call.1} parent=128 // loop_body
            %s1459 = smul.u32 %s1442, 16
            %s1460 = sadd.s32 %s1192, %s1459
            %s1461 = sshra.s32 %s1460, 4
            %s1462 = sand.u32 %s1460, 15
            %s1463 = smul.u32 %s1461, 3
            %s1464 = smul.addr %s1463, 8
            %s1465 = scalar_lea.vmem [#allocation2], %s1464
            %v1466 = vld [vmem:[%s1465 + $0x8] sm:$0xff]
            %v1467 = vld [vmem:[%s1465 + $0x10] sm:$0xff]
            %1470 = vrot.lane.b32.xlu0 %v1439, 96
            %v1471 = vpop.permute.xlu0 %1470
            %1472 = vrot.lane.b32.xlu0 %v1440, 96
            %v1473 = vpop.permute.xlu0 %1472
            %1475 = vrot.lane.b32.xlu0 %v1466, 96
            %v1476 = vpop.permute.xlu0 %1475
            %v1478 = vsel %vm1436, %v1471, 0
            %v1481 = vsel %vm1436, %v1473, 0
            %v1484 = vsel %vm1436, %v1476, 0
            %1486 = vmatprep.subr.bf16.mxu0 0
            %1487 = vmatpush1.bf16.xpose.msra.mxu0 %v1484
            %1488 = vmatprep.subr.bf16.mxu0 0
            %1489 = vmatpush1.bf16.xpose.msra.mxu0 0
            %1490 = vmatprep.subr.bf16.mxu0 0
            %1491 = vmatpush1.bf16.xpose.msra.mxu0 0
            %1492 = vmatprep.subr.bf16.mxu0 0
            %1493 = vmatpush1.bf16.xpose.msra.mxu0 0
            %1494 = vmatprep.subr.bf16.mxu0 0
            %1495 = vmatpush1.bf16.xpose.msra.mxu0 0
            %1496 = vmatprep.subr.bf16.mxu0 0
            %1497 = vmatpush1.bf16.xpose.msra.mxu0 0
            %1498 = vmatprep.subr.bf16.mxu0 0
            %1499 = vmatpush1.bf16.xpose.msra.mxu0 0
            %1500 = vmatprep.subr.bf16.mxu0 0
            %1501 = vmatpush1.bf16.xpose.msra.mxu0 0
            %1502 = vmatprep.subr.bf16.mxu0 0
            %1503 = vmatpush1.bf16.xpose.msra.mxu0 0
            %1504 = vmatprep.subr.bf16.mxu0 0
            %1505 = vmatpush1.bf16.xpose.msra.mxu0 0
            %1506 = vmatprep.subr.bf16.mxu0 0
            %1507 = vmatpush1.bf16.xpose.msra.mxu0 0
            %1508 = vmatprep.subr.bf16.mxu0 0
            %1509 = vmatpush1.bf16.xpose.msra.mxu0 0
            %1510 = vmatprep.subr.bf16.mxu0 0
            %1511 = vmatpush1.bf16.xpose.msra.mxu0 0
            %1512 = vmatprep.subr.bf16.mxu0 0
            %1513 = vmatpush1.bf16.xpose.msra.mxu0 0
            %1514 = vmatprep.subr.bf16.mxu0 0
            %1515 = vmatpush1.bf16.xpose.msra.mxu0 0
            %1516 = vmatprep.subr.bf16.mxu0 0
            %1517 = vmatpush1.bf16.xpose.msra.mxu0 0
            %1518 = vmatprep.mubr.bf16.mxu0 0
            %1519 = vmatmul.mubr.bf16.gmra.mrb[0].mxu0 %v1478
            %v1520 = vpop.f32.mrb[0].mxu0
            %v1521 = vadd.f32 0.0, %v1520
            %v1522 = vpop.f32.mrb[0].mxu0
            %v1523 = vpop.f32.mrb[0].mxu0
            %v1524 = vadd.f32 0.0, %v1523
            %v1525 = vpop.f32.mrb[0].mxu0
            %1526 = vmatprep.mubr.bf16.mxu0 0
            %1527 = vmatmul.mubr.bf16.gmra.mrb[0].mxu0 %v1481
            %v1528 = vpop.f32.mrb[0].mxu0
            %v1529 = vadd.f32 0.0, %v1528
            %v1530 = vpop.f32.mrb[0].mxu0
            %v1531 = vpop.f32.mrb[0].mxu0
            %v1532 = vadd.f32 0.0, %v1531
            %v1533 = vpop.f32.mrb[0].mxu0
            %1534 = vdwg.mxu0
            %v1535 = vlaneseq
            %v1536 = vand.u32 %v1535, 127
            %v1537 = vstv %s1459
            %v1538 = vadd.s32 %v1537, %v1536
            %vm1539 = vcmp.le.s32.totalorder %v1538, %v1182
            %vm1540 = vcmp.le.s32.totalorder %v1538, %v1183
            %vm1541 = vcmp.le.s32.totalorder %v1538, %v1184
            %vm1542 = vcmp.le.s32.totalorder %v1538, %v1185
            %v1543 = vsel %vm1539, %v1521, -1e+30
            %v1544 = vsel %vm1540, %v1524, -1e+30
            %v1545 = vsel %vm1541, %v1529, -1e+30
            %v1546 = vsel %vm1542, %v1532, -1e+30
            %vm1547 = vcmask 130048
            %v1548 = vsel %vm1547, %v1543, -inf
            %1549 = vmax.xlane.f32.xlu0 %v1548
            %v1550 = vpop.xlane.xlu0 %1549
            %v1551 = vsel %vm1547, %v1544, -inf
            %1552 = vmax.xlane.f32.xlu0 %v1551
            %v1553 = vpop.xlane.xlu0 %1552
            %v1554 = vsel %vm1547, %v1545, -inf
            %1555 = vmax.xlane.f32.xlu0 %v1554
            %v1556 = vpop.xlane.xlu0 %1555
            %v1557 = vsel %vm1547, %v1546, -inf
            %1558 = vmax.xlane.f32.xlu0 %v1557
            %v1559 = vpop.xlane.xlu0 %1558
            %v1560 = vmax.f32 %v1447, %v1550
            %v1561 = vmax.f32 %v1448, %v1553
            %v1562 = vmax.f32 %v1449, %v1556
            %v1563 = vmax.f32 %v1450, %v1559
            %v1564 = vsub.f32 %v1447, %v1560
            %v1565 = vsub.f32 %v1448, %v1561
            %v1566 = vsub.f32 %v1449, %v1562
            %v1567 = vsub.f32 %v1450, %v1563
            %v1568 = vmul.f32 %v1564, 1.442695
            %v1569 = vpow.pop %v1568
            %v1570 = vmul.f32 %v1565, 1.442695
            %v1571 = vpow.pop %v1570
            %v1572 = vmul.f32 %v1566, 1.442695
            %v1573 = vpow.pop %v1572
            %v1574 = vmul.f32 %v1567, 1.442695
            %v1575 = vpow.pop %v1574
            %v1576 = vsub.f32 %v1543, %v1560
            %v1577 = vsub.f32 %v1544, %v1561
            %v1578 = vsub.f32 %v1545, %v1562
            %v1579 = vsub.f32 %v1546, %v1563
            %v1580 = vmul.f32 %v1576, 1.442695
            %v1581 = vpow.pop %v1580
            %v1582 = vmul.f32 %v1577, 1.442695
            %v1583 = vpow.pop %v1582
            %v1584 = vmul.f32 %v1578, 1.442695
            %v1585 = vpow.pop %v1584
            %v1586 = vmul.f32 %v1579, 1.442695
            %v1587 = vpow.pop %v1586
            %v1588 = vmul.f32 %v1569, %v1451
            %v1589 = vmul.f32 %v1571, %v1452
            %v1590 = vmul.f32 %v1573, %v1453
            %v1591 = vmul.f32 %v1575, %v1454
            %v1592 = vsel %vm1547, %v1581, 0.0
            %1593 = vadd.xlane.f32.xlu0 %v1592
            %v1594 = vpop.xlane.xlu0 %1593
            %v1595 = vsel %vm1547, %v1583, 0.0
            %1596 = vadd.xlane.f32.xlu0 %v1595
            %v1597 = vpop.xlane.xlu0 %1596
            %v1598 = vsel %vm1547, %v1585, 0.0
            %1599 = vadd.xlane.f32.xlu0 %v1598
            %v1600 = vpop.xlane.xlu0 %1599
            %v1601 = vsel %vm1547, %v1587, 0.0
            %1602 = vadd.xlane.f32.xlu0 %v1601
            %v1603 = vpop.xlane.xlu0 %1602
            %v1604 = vadd.f32 %v1588, %v1594
            %v1605 = vadd.f32 %v1589, %v1597
            %v1606 = vadd.f32 %v1590, %v1600
            %v1607 = vadd.f32 %v1591, %v1603
            %v1608 = vmul.f32 %v1569, %v1455
            %v1609 = vmul.f32 %v1571, %v1456
            %v1610 = vmul.f32 %v1573, %v1457
            %v1611 = vmul.f32 %v1575, %v1458
            %v1612 = vpack.c.bf16 %v1583, %v1581
            %v1613 = vpack.c.bf16 %v1587, %v1585
            %1615 = vrot.lane.b32.xlu0 %v1467, 96
            %v1616 = vpop.permute.xlu0 %1615
            %v1619 = vsel %vm1547, %v1612, 0
            %v1622 = vsel %vm1547, %v1613, 0
            %1624 = vmatprep.subr.bf16.mxu0 0
            %1625 = vmatpush1.bf16.msra.mxu0 %v1616
            %1626 = vmatprep.subr.bf16.mxu0 0
            %1627 = vmatpush1.bf16.msra.mxu0 0
            %1628 = vmatprep.subr.bf16.mxu0 0
            %1629 = vmatpush1.bf16.msra.mxu0 0
            %1630 = vmatprep.subr.bf16.mxu0 0
            %1631 = vmatpush1.bf16.msra.mxu0 0
            %1632 = vmatprep.subr.bf16.mxu0 0
            %1633 = vmatpush1.bf16.msra.mxu0 0
            %1634 = vmatprep.subr.bf16.mxu0 0
            %1635 = vmatpush1.bf16.msra.mxu0 0
            %1636 = vmatprep.subr.bf16.mxu0 0
            %1637 = vmatpush1.bf16.msra.mxu0 0
            %1638 = vmatprep.subr.bf16.mxu0 0
            %1639 = vmatpush1.bf16.msra.mxu0 0
            %1640 = vmatprep.subr.bf16.mxu0 0
            %1641 = vmatpush1.bf16.msra.mxu0 0
            %1642 = vmatprep.subr.bf16.mxu0 0
            %1643 = vmatpush1.bf16.msra.mxu0 0
            %1644 = vmatprep.subr.bf16.mxu0 0
            %1645 = vmatpush1.bf16.msra.mxu0 0
            %1646 = vmatprep.subr.bf16.mxu0 0
            %1647 = vmatpush1.bf16.msra.mxu0 0
            %1648 = vmatprep.subr.bf16.mxu0 0
            %1649 = vmatpush1.bf16.msra.mxu0 0
            %1650 = vmatprep.subr.bf16.mxu0 0
            %1651 = vmatpush1.bf16.msra.mxu0 0
            %1652 = vmatprep.subr.bf16.mxu0 0
            %1653 = vmatpush1.bf16.msra.mxu0 0
            %1654 = vmatprep.subr.bf16.mxu0 0
            %1655 = vmatpush1.bf16.msra.mxu0 0
            %1656 = vmatprep.mubr.bf16.mxu0 0
            %1657 = vmatmul.mubr.bf16.gmra.mrb[0].mxu0 %v1619
            %v1658 = vpop.f32.mrb[0].mxu0
            %v1659 = vadd.f32 0.0, %v1658
            %v1660 = vpop.f32.mrb[0].mxu0
            %v1661 = vpop.f32.mrb[0].mxu0
            %v1662 = vadd.f32 0.0, %v1661
            %v1663 = vpop.f32.mrb[0].mxu0
            %1664 = vmatprep.mubr.bf16.mxu0 0
            %1665 = vmatmul.mubr.bf16.gmra.mrb[0].mxu0 %v1622
            %v1666 = vpop.f32.mrb[0].mxu0
            %v1667 = vadd.f32 0.0, %v1666
            %v1668 = vpop.f32.mrb[0].mxu0
            %v1669 = vpop.f32.mrb[0].mxu0
            %v1670 = vadd.f32 0.0, %v1669
            %v1671 = vpop.f32.mrb[0].mxu0
            %1672 = vdwg.mxu0
            %v1673 = vadd.f32 %v1608, %v1659
            %v1674 = vadd.f32 %v1609, %v1662
            %v1675 = vadd.f32 %v1610, %v1667
            %v1676 = vadd.f32 %v1611, %v1670
          $region143: #{tpu_custom_call.1} parent=128 // loop_footer
            %s1446 = sadd.s32 1, %s1442
          $region144: #{tpu_custom_call.1} parent=128 // loop_footer_branch
            %1441 = sbr.rel target = $region140
          $region145: #{tpu_custom_call.1} parent=128 // loop_exit
            _
          %v1677 = vrcp.pop %v1451
          %v1678 = vrcp.pop %v1452
          %v1679 = vrcp.pop %v1453
          %v1680 = vrcp.pop %v1454
          %v1681 = vmul.f32 %v1455, %v1677
          %v1682 = vmul.f32 %v1456, %v1678
          %v1683 = vmul.f32 %v1457, %v1679
          %v1684 = vmul.f32 %v1458, %v1680
          %v1685 = vpack.c.bf16 %v1682, %v1681
          %v1686 = vpack.c.bf16 %v1684, %v1683
          %1689 = vrot.lane.b32.xlu0 %v1685, 32
          %v1690 = vpop.permute.xlu0 %1689
          %1691 = vrot.lane.b32.xlu0 %v1686, 32
          %v1692 = vpop.permute.xlu0 %1691
          %vm1695 = vcmask 523520
          %1696 = vst.msk [vmem:[%s1435] sm:$0xff] %vm1695, %v1690
          %1697 = vst.msk [vmem:[%s1435 + $0x8] sm:$0xff] %vm1695, %v1692
          %v1698 = vld [vmem:[%s1197] sm:$0xff]
          %v1699 = vld [vmem:[%s1197 + $0x18] sm:$0xff]
          loop: start=0, step=1, limit=2
          $region146: #{tpu_custom_call.1} parent=128 // loop_pre_header
            _
          $region147: #{tpu_custom_call.1} parent=128 // loop_header
            %s1701 = sphi 0, %s1705
            %p1702 = scmp.ge.s32.totalorder %s1701, 2
            %v1706 = vphi -1e+30, %v1819
            %v1707 = vphi -1e+30, %v1820
            %v1708 = vphi -1e+30, %v1821
            %v1709 = vphi -1e+30, %v1822
            %v1710 = vphi 0.0, %v1863
            %v1711 = vphi 0.0, %v1864
            %v1712 = vphi 0.0, %v1865
            %v1713 = vphi 0.0, %v1866
            %v1714 = vphi 0.0, %v1932
            %v1715 = vphi 0.0, %v1933
            %v1716 = vphi 0.0, %v1934
            %v1717 = vphi 0.0, %v1935
          $region148: #{tpu_custom_call.1} parent=128 // loop_header_branch
            %1704 = sbr.rel (%p1702) target = $region152
          $region149: #{tpu_custom_call.1} parent=128 // loop_body
            %s1718 = smul.u32 %s1701, 16
            %s1719 = sadd.s32 %s1192, %s1718
            %s1720 = sshra.s32 %s1719, 4
            %s1721 = sand.u32 %s1719, 15
            %s1722 = smul.u32 %s1720, 3
            %s1723 = smul.addr %s1722, 8
            %s1724 = scalar_lea.vmem [#allocation2], %s1723
            %v1725 = vld [vmem:[%s1724 + $0x8] sm:$0xff]
            %v1726 = vld [vmem:[%s1724 + $0x10] sm:$0xff]
            %1729 = vrot.lane.b32.xlu0 %v1698, 64
            %v1730 = vpop.permute.xlu0 %1729
            %1731 = vrot.lane.b32.xlu0 %v1699, 64
            %v1732 = vpop.permute.xlu0 %1731
            %1734 = vrot.lane.b32.xlu0 %v1725, 64
            %v1735 = vpop.permute.xlu0 %1734
            %v1737 = vsel %vm1436, %v1730, 0
            %v1740 = vsel %vm1436, %v1732, 0
            %v1743 = vsel %vm1436, %v1735, 0
            %1745 = vmatprep.subr.bf16.mxu0 0
            %1746 = vmatpush1.bf16.xpose.msra.mxu0 %v1743
            %1747 = vmatprep.subr.bf16.mxu0 0
            %1748 = vmatpush1.bf16.xpose.msra.mxu0 0
            %1749 = vmatprep.subr.bf16.mxu0 0
            %1750 = vmatpush1.bf16.xpose.msra.mxu0 0
            %1751 = vmatprep.subr.bf16.mxu0 0
            %1752 = vmatpush1.bf16.xpose.msra.mxu0 0
            %1753 = vmatprep.subr.bf16.mxu0 0
            %1754 = vmatpush1.bf16.xpose.msra.mxu0 0
            %1755 = vmatprep.subr.bf16.mxu0 0
            %1756 = vmatpush1.bf16.xpose.msra.mxu0 0
            %1757 = vmatprep.subr.bf16.mxu0 0
            %1758 = vmatpush1.bf16.xpose.msra.mxu0 0
            %1759 = vmatprep.subr.bf16.mxu0 0
            %1760 = vmatpush1.bf16.xpose.msra.mxu0 0
            %1761 = vmatprep.subr.bf16.mxu0 0
            %1762 = vmatpush1.bf16.xpose.msra.mxu0 0
            %1763 = vmatprep.subr.bf16.mxu0 0
            %1764 = vmatpush1.bf16.xpose.msra.mxu0 0
            %1765 = vmatprep.subr.bf16.mxu0 0
            %1766 = vmatpush1.bf16.xpose.msra.mxu0 0
            %1767 = vmatprep.subr.bf16.mxu0 0
            %1768 = vmatpush1.bf16.xpose.msra.mxu0 0
            %1769 = vmatprep.subr.bf16.mxu0 0
            %1770 = vmatpush1.bf16.xpose.msra.mxu0 0
            %1771 = vmatprep.subr.bf16.mxu0 0
            %1772 = vmatpush1.bf16.xpose.msra.mxu0 0
            %1773 = vmatprep.subr.bf16.mxu0 0
            %1774 = vmatpush1.bf16.xpose.msra.mxu0 0
            %1775 = vmatprep.subr.bf16.mxu0 0
            %1776 = vmatpush1.bf16.xpose.msra.mxu0 0
            %1777 = vmatprep.mubr.bf16.mxu0 0
            %1778 = vmatmul.mubr.bf16.gmra.mrb[0].mxu0 %v1737
            %v1779 = vpop.f32.mrb[0].mxu0
            %v1780 = vadd.f32 0.0, %v1779
            %v1781 = vpop.f32.mrb[0].mxu0
            %v1782 = vpop.f32.mrb[0].mxu0
            %v1783 = vadd.f32 0.0, %v1782
            %v1784 = vpop.f32.mrb[0].mxu0
            %1785 = vmatprep.mubr.bf16.mxu0 0
            %1786 = vmatmul.mubr.bf16.gmra.mrb[0].mxu0 %v1740
            %v1787 = vpop.f32.mrb[0].mxu0
            %v1788 = vadd.f32 0.0, %v1787
            %v1789 = vpop.f32.mrb[0].mxu0
            %v1790 = vpop.f32.mrb[0].mxu0
            %v1791 = vadd.f32 0.0, %v1790
            %v1792 = vpop.f32.mrb[0].mxu0
            %1793 = vdwg.mxu0
            %v1794 = vlaneseq
            %v1795 = vand.u32 %v1794, 127
            %v1796 = vstv %s1718
            %v1797 = vadd.s32 %v1796, %v1795
            %vm1798 = vcmp.le.s32.totalorder %v1797, %v1182
            %vm1799 = vcmp.le.s32.totalorder %v1797, %v1183
            %vm1800 = vcmp.le.s32.totalorder %v1797, %v1184
            %vm1801 = vcmp.le.s32.totalorder %v1797, %v1185
            %v1802 = vsel %vm1798, %v1780, -1e+30
            %v1803 = vsel %vm1799, %v1783, -1e+30
            %v1804 = vsel %vm1800, %v1788, -1e+30
            %v1805 = vsel %vm1801, %v1791, -1e+30
            %vm1806 = vcmask 130048
            %v1807 = vsel %vm1806, %v1802, -inf
            %1808 = vmax.xlane.f32.xlu0 %v1807
            %v1809 = vpop.xlane.xlu0 %1808
            %v1810 = vsel %vm1806, %v1803, -inf
            %1811 = vmax.xlane.f32.xlu0 %v1810
            %v1812 = vpop.xlane.xlu0 %1811
            %v1813 = vsel %vm1806, %v1804, -inf
            %1814 = vmax.xlane.f32.xlu0 %v1813
            %v1815 = vpop.xlane.xlu0 %1814
            %v1816 = vsel %vm1806, %v1805, -inf
            %1817 = vmax.xlane.f32.xlu0 %v1816
            %v1818 = vpop.xlane.xlu0 %1817
            %v1819 = vmax.f32 %v1706, %v1809
            %v1820 = vmax.f32 %v1707, %v1812
            %v1821 = vmax.f32 %v1708, %v1815
            %v1822 = vmax.f32 %v1709, %v1818
            %v1823 = vsub.f32 %v1706, %v1819
            %v1824 = vsub.f32 %v1707, %v1820
            %v1825 = vsub.f32 %v1708, %v1821
            %v1826 = vsub.f32 %v1709, %v1822
            %v1827 = vmul.f32 %v1823, 1.442695
            %v1828 = vpow.pop %v1827
            %v1829 = vmul.f32 %v1824, 1.442695
            %v1830 = vpow.pop %v1829
            %v1831 = vmul.f32 %v1825, 1.442695
            %v1832 = vpow.pop %v1831
            %v1833 = vmul.f32 %v1826, 1.442695
            %v1834 = vpow.pop %v1833
            %v1835 = vsub.f32 %v1802, %v1819
            %v1836 = vsub.f32 %v1803, %v1820
            %v1837 = vsub.f32 %v1804, %v1821
            %v1838 = vsub.f32 %v1805, %v1822
            %v1839 = vmul.f32 %v1835, 1.442695
            %v1840 = vpow.pop %v1839
            %v1841 = vmul.f32 %v1836, 1.442695
            %v1842 = vpow.pop %v1841
            %v1843 = vmul.f32 %v1837, 1.442695
            %v1844 = vpow.pop %v1843
            %v1845 = vmul.f32 %v1838, 1.442695
            %v1846 = vpow.pop %v1845
            %v1847 = vmul.f32 %v1828, %v1710
            %v1848 = vmul.f32 %v1830, %v1711
            %v1849 = vmul.f32 %v1832, %v1712
            %v1850 = vmul.f32 %v1834, %v1713
            %v1851 = vsel %vm1806, %v1840, 0.0
            %1852 = vadd.xlane.f32.xlu0 %v1851
            %v1853 = vpop.xlane.xlu0 %1852
            %v1854 = vsel %vm1806, %v1842, 0.0
            %1855 = vadd.xlane.f32.xlu0 %v1854
            %v1856 = vpop.xlane.xlu0 %1855
            %v1857 = vsel %vm1806, %v1844, 0.0
            %1858 = vadd.xlane.f32.xlu0 %v1857
            %v1859 = vpop.xlane.xlu0 %1858
            %v1860 = vsel %vm1806, %v1846, 0.0
            %1861 = vadd.xlane.f32.xlu0 %v1860
            %v1862 = vpop.xlane.xlu0 %1861
            %v1863 = vadd.f32 %v1847, %v1853
            %v1864 = vadd.f32 %v1848, %v1856
            %v1865 = vadd.f32 %v1849, %v1859
            %v1866 = vadd.f32 %v1850, %v1862
            %v1867 = vmul.f32 %v1828, %v1714
            %v1868 = vmul.f32 %v1830, %v1715
            %v1869 = vmul.f32 %v1832, %v1716
            %v1870 = vmul.f32 %v1834, %v1717
            %v1871 = vpack.c.bf16 %v1842, %v1840
            %v1872 = vpack.c.bf16 %v1846, %v1844
            %1874 = vrot.lane.b32.xlu0 %v1726, 64
            %v1875 = vpop.permute.xlu0 %1874
            %v1878 = vsel %vm1806, %v1871, 0
            %v1881 = vsel %vm1806, %v1872, 0
            %1883 = vmatprep.subr.bf16.mxu0 0
            %1884 = vmatpush1.bf16.msra.mxu0 %v1875
            %1885 = vmatprep.subr.bf16.mxu0 0
            %1886 = vmatpush1.bf16.msra.mxu0 0
            %1887 = vmatprep.subr.bf16.mxu0 0
            %1888 = vmatpush1.bf16.msra.mxu0 0
            %1889 = vmatprep.subr.bf16.mxu0 0
            %1890 = vmatpush1.bf16.msra.mxu0 0
            %1891 = vmatprep.subr.bf16.mxu0 0
            %1892 = vmatpush1.bf16.msra.mxu0 0
            %1893 = vmatprep.subr.bf16.mxu0 0
            %1894 = vmatpush1.bf16.msra.mxu0 0
            %1895 = vmatprep.subr.bf16.mxu0 0
            %1896 = vmatpush1.bf16.msra.mxu0 0
            %1897 = vmatprep.subr.bf16.mxu0 0
            %1898 = vmatpush1.bf16.msra.mxu0 0
            %1899 = vmatprep.subr.bf16.mxu0 0
            %1900 = vmatpush1.bf16.msra.mxu0 0
            %1901 = vmatprep.subr.bf16.mxu0 0
            %1902 = vmatpush1.bf16.msra.mxu0 0
            %1903 = vmatprep.subr.bf16.mxu0 0
            %1904 = vmatpush1.bf16.msra.mxu0 0
            %1905 = vmatprep.subr.bf16.mxu0 0
            %1906 = vmatpush1.bf16.msra.mxu0 0
            %1907 = vmatprep.subr.bf16.mxu0 0
            %1908 = vmatpush1.bf16.msra.mxu0 0
            %1909 = vmatprep.subr.bf16.mxu0 0
            %1910 = vmatpush1.bf16.msra.mxu0 0
            %1911 = vmatprep.subr.bf16.mxu0 0
            %1912 = vmatpush1.bf16.msra.mxu0 0
            %1913 = vmatprep.subr.bf16.mxu0 0
            %1914 = vmatpush1.bf16.msra.mxu0 0
            %1915 = vmatprep.mubr.bf16.mxu0 0
            %1916 = vmatmul.mubr.bf16.gmra.mrb[0].mxu0 %v1878
            %v1917 = vpop.f32.mrb[0].mxu0
            %v1918 = vadd.f32 0.0, %v1917
            %v1919 = vpop.f32.mrb[0].mxu0
            %v1920 = vpop.f32.mrb[0].mxu0
            %v1921 = vadd.f32 0.0, %v1920
            %v1922 = vpop.f32.mrb[0].mxu0
            %1923 = vmatprep.mubr.bf16.mxu0 0
            %1924 = vmatmul.mubr.bf16.gmra.mrb[0].mxu0 %v1881
            %v1925 = vpop.f32.mrb[0].mxu0
            %v1926 = vadd.f32 0.0, %v1925
            %v1927 = vpop.f32.mrb[0].mxu0
            %v1928 = vpop.f32.mrb[0].mxu0
            %v1929 = vadd.f32 0.0, %v1928
            %v1930 = vpop.f32.mrb[0].mxu0
            %1931 = vdwg.mxu0
            %v1932 = vadd.f32 %v1867, %v1918
            %v1933 = vadd.f32 %v1868, %v1921
            %v1934 = vadd.f32 %v1869, %v1926
            %v1935 = vadd.f32 %v1870, %v1929
          $region150: #{tpu_custom_call.1} parent=128 // loop_footer
            %s1705 = sadd.s32 1, %s1701
          $region151: #{tpu_custom_call.1} parent=128 // loop_footer_branch
            %1700 = sbr.rel target = $region147
          $region152: #{tpu_custom_call.1} parent=128 // loop_exit
            _
          %v1936 = vrcp.pop %v1710
          %v1937 = vrcp.pop %v1711
          %v1938 = vrcp.pop %v1712
          %v1939 = vrcp.pop %v1713
          %v1940 = vmul.f32 %v1714, %v1936
          %v1941 = vmul.f32 %v1715, %v1937
          %v1942 = vmul.f32 %v1716, %v1938
          %v1943 = vmul.f32 %v1717, %v1939
          %v1944 = vpack.c.bf16 %v1941, %v1940
          %v1945 = vpack.c.bf16 %v1943, %v1942
          %1948 = vrot.lane.b32.xlu0 %v1944, 64
          %v1949 = vpop.permute.xlu0 %1948
          %1950 = vrot.lane.b32.xlu0 %v1945, 64
          %v1951 = vpop.permute.xlu0 %1950
          %vm1954 = vcmask 785920
          %1955 = vst.msk [vmem:[%s1435] sm:$0xff] %vm1954, %v1949
          %1956 = vst.msk [vmem:[%s1435 + $0x8] sm:$0xff] %vm1954, %v1951
          %v1957 = vld [vmem:[%s1197] sm:$0xff]
          %v1958 = vld [vmem:[%s1197 + $0x18] sm:$0xff]
          loop: start=0, step=1, limit=2
          $region153: #{tpu_custom_call.1} parent=128 // loop_pre_header
            _
          $region154: #{tpu_custom_call.1} parent=128 // loop_header
            %s1960 = sphi 0, %s1964
            %p1961 = scmp.ge.s32.totalorder %s1960, 2
            %v1965 = vphi -1e+30, %v2078
            %v1966 = vphi -1e+30, %v2079
            %v1967 = vphi -1e+30, %v2080
            %v1968 = vphi -1e+30, %v2081
            %v1969 = vphi 0.0, %v2122
            %v1970 = vphi 0.0, %v2123
            %v1971 = vphi 0.0, %v2124
            %v1972 = vphi 0.0, %v2125
            %v1973 = vphi 0.0, %v2191
            %v1974 = vphi 0.0, %v2192
            %v1975 = vphi 0.0, %v2193
            %v1976 = vphi 0.0, %v2194
          $region155: #{tpu_custom_call.1} parent=128 // loop_header_branch
            %1963 = sbr.rel (%p1961) target = $region159
          $region156: #{tpu_custom_call.1} parent=128 // loop_body
            %s1977 = smul.u32 %s1960, 16
            %s1978 = sadd.s32 %s1192, %s1977
            %s1979 = sshra.s32 %s1978, 4
            %s1980 = sand.u32 %s1978, 15
            %s1981 = smul.u32 %s1979, 3
            %s1982 = smul.addr %s1981, 8
            %s1983 = scalar_lea.vmem [#allocation2], %s1982
            %v1984 = vld [vmem:[%s1983 + $0x8] sm:$0xff]
            %v1985 = vld [vmem:[%s1983 + $0x10] sm:$0xff]
            %1988 = vrot.lane.b32.xlu0 %v1957, 32
            %v1989 = vpop.permute.xlu0 %1988
            %1990 = vrot.lane.b32.xlu0 %v1958, 32
            %v1991 = vpop.permute.xlu0 %1990
            %1993 = vrot.lane.b32.xlu0 %v1984, 32
            %v1994 = vpop.permute.xlu0 %1993
            %v1996 = vsel %vm1436, %v1989, 0
            %v1999 = vsel %vm1436, %v1991, 0
            %v2002 = vsel %vm1436, %v1994, 0
            %2004 = vmatprep.subr.bf16.mxu0 0
            %2005 = vmatpush1.bf16.xpose.msra.mxu0 %v2002
            %2006 = vmatprep.subr.bf16.mxu0 0
            %2007 = vmatpush1.bf16.xpose.msra.mxu0 0
            %2008 = vmatprep.subr.bf16.mxu0 0
            %2009 = vmatpush1.bf16.xpose.msra.mxu0 0
            %2010 = vmatprep.subr.bf16.mxu0 0
            %2011 = vmatpush1.bf16.xpose.msra.mxu0 0
            %2012 = vmatprep.subr.bf16.mxu0 0
            %2013 = vmatpush1.bf16.xpose.msra.mxu0 0
            %2014 = vmatprep.subr.bf16.mxu0 0
            %2015 = vmatpush1.bf16.xpose.msra.mxu0 0
            %2016 = vmatprep.subr.bf16.mxu0 0
            %2017 = vmatpush1.bf16.xpose.msra.mxu0 0
            %2018 = vmatprep.subr.bf16.mxu0 0
            %2019 = vmatpush1.bf16.xpose.msra.mxu0 0
            %2020 = vmatprep.subr.bf16.mxu0 0
            %2021 = vmatpush1.bf16.xpose.msra.mxu0 0
            %2022 = vmatprep.subr.bf16.mxu0 0
            %2023 = vmatpush1.bf16.xpose.msra.mxu0 0
            %2024 = vmatprep.subr.bf16.mxu0 0
            %2025 = vmatpush1.bf16.xpose.msra.mxu0 0
            %2026 = vmatprep.subr.bf16.mxu0 0
            %2027 = vmatpush1.bf16.xpose.msra.mxu0 0
            %2028 = vmatprep.subr.bf16.mxu0 0
            %2029 = vmatpush1.bf16.xpose.msra.mxu0 0
            %2030 = vmatprep.subr.bf16.mxu0 0
            %2031 = vmatpush1.bf16.xpose.msra.mxu0 0
            %2032 = vmatprep.subr.bf16.mxu0 0
            %2033 = vmatpush1.bf16.xpose.msra.mxu0 0
            %2034 = vmatprep.subr.bf16.mxu0 0
            %2035 = vmatpush1.bf16.xpose.msra.mxu0 0
            %2036 = vmatprep.mubr.bf16.mxu0 0
            %2037 = vmatmul.mubr.bf16.gmra.mrb[0].mxu0 %v1996
            %v2038 = vpop.f32.mrb[0].mxu0
            %v2039 = vadd.f32 0.0, %v2038
            %v2040 = vpop.f32.mrb[0].mxu0
            %v2041 = vpop.f32.mrb[0].mxu0
            %v2042 = vadd.f32 0.0, %v2041
            %v2043 = vpop.f32.mrb[0].mxu0
            %2044 = vmatprep.mubr.bf16.mxu0 0
            %2045 = vmatmul.mubr.bf16.gmra.mrb[0].mxu0 %v1999
            %v2046 = vpop.f32.mrb[0].mxu0
            %v2047 = vadd.f32 0.0, %v2046
            %v2048 = vpop.f32.mrb[0].mxu0
            %v2049 = vpop.f32.mrb[0].mxu0
            %v2050 = vadd.f32 0.0, %v2049
            %v2051 = vpop.f32.mrb[0].mxu0
            %2052 = vdwg.mxu0
            %v2053 = vlaneseq
            %v2054 = vand.u32 %v2053, 127
            %v2055 = vstv %s1977
            %v2056 = vadd.s32 %v2055, %v2054
            %vm2057 = vcmp.le.s32.totalorder %v2056, %v1182
            %vm2058 = vcmp.le.s32.totalorder %v2056, %v1183
            %vm2059 = vcmp.le.s32.totalorder %v2056, %v1184
            %vm2060 = vcmp.le.s32.totalorder %v2056, %v1185
            %v2061 = vsel %vm2057, %v2039, -1e+30
            %v2062 = vsel %vm2058, %v2042, -1e+30
            %v2063 = vsel %vm2059, %v2047, -1e+30
            %v2064 = vsel %vm2060, %v2050, -1e+30
            %vm2065 = vcmask 130048
            %v2066 = vsel %vm2065, %v2061, -inf
            %2067 = vmax.xlane.f32.xlu0 %v2066
            %v2068 = vpop.xlane.xlu0 %2067
            %v2069 = vsel %vm2065, %v2062, -inf
            %2070 = vmax.xlane.f32.xlu0 %v2069
            %v2071 = vpop.xlane.xlu0 %2070
            %v2072 = vsel %vm2065, %v2063, -inf
            %2073 = vmax.xlane.f32.xlu0 %v2072
            %v2074 = vpop.xlane.xlu0 %2073
            %v2075 = vsel %vm2065, %v2064, -inf
            %2076 = vmax.xlane.f32.xlu0 %v2075
            %v2077 = vpop.xlane.xlu0 %2076
            %v2078 = vmax.f32 %v1965, %v2068
            %v2079 = vmax.f32 %v1966, %v2071
            %v2080 = vmax.f32 %v1967, %v2074
            %v2081 = vmax.f32 %v1968, %v2077
            %v2082 = vsub.f32 %v1965, %v2078
            %v2083 = vsub.f32 %v1966, %v2079
            %v2084 = vsub.f32 %v1967, %v2080
            %v2085 = vsub.f32 %v1968, %v2081
            %v2086 = vmul.f32 %v2082, 1.442695
            %v2087 = vpow.pop %v2086
            %v2088 = vmul.f32 %v2083, 1.442695
            %v2089 = vpow.pop %v2088
            %v2090 = vmul.f32 %v2084, 1.442695
            %v2091 = vpow.pop %v2090
            %v2092 = vmul.f32 %v2085, 1.442695
            %v2093 = vpow.pop %v2092
            %v2094 = vsub.f32 %v2061, %v2078
            %v2095 = vsub.f32 %v2062, %v2079
            %v2096 = vsub.f32 %v2063, %v2080
            %v2097 = vsub.f32 %v2064, %v2081
            %v2098 = vmul.f32 %v2094, 1.442695
            %v2099 = vpow.pop %v2098
            %v2100 = vmul.f32 %v2095, 1.442695
            %v2101 = vpow.pop %v2100
            %v2102 = vmul.f32 %v2096, 1.442695
            %v2103 = vpow.pop %v2102
            %v2104 = vmul.f32 %v2097, 1.442695
            %v2105 = vpow.pop %v2104
            %v2106 = vmul.f32 %v2087, %v1969
            %v2107 = vmul.f32 %v2089, %v1970
            %v2108 = vmul.f32 %v2091, %v1971
            %v2109 = vmul.f32 %v2093, %v1972
            %v2110 = vsel %vm2065, %v2099, 0.0
            %2111 = vadd.xlane.f32.xlu0 %v2110
            %v2112 = vpop.xlane.xlu0 %2111
            %v2113 = vsel %vm2065, %v2101, 0.0
            %2114 = vadd.xlane.f32.xlu0 %v2113
            %v2115 = vpop.xlane.xlu0 %2114
            %v2116 = vsel %vm2065, %v2103, 0.0
            %2117 = vadd.xlane.f32.xlu0 %v2116
            %v2118 = vpop.xlane.xlu0 %2117
            %v2119 = vsel %vm2065, %v2105, 0.0
            %2120 = vadd.xlane.f32.xlu0 %v2119
            %v2121 = vpop.xlane.xlu0 %2120
            %v2122 = vadd.f32 %v2106, %v2112
            %v2123 = vadd.f32 %v2107, %v2115
            %v2124 = vadd.f32 %v2108, %v2118
            %v2125 = vadd.f32 %v2109, %v2121
            %v2126 = vmul.f32 %v2087, %v1973
            %v2127 = vmul.f32 %v2089, %v1974
            %v2128 = vmul.f32 %v2091, %v1975
            %v2129 = vmul.f32 %v2093, %v1976
            %v2130 = vpack.c.bf16 %v2101, %v2099
            %v2131 = vpack.c.bf16 %v2105, %v2103
            %2133 = vrot.lane.b32.xlu0 %v1985, 32
            %v2134 = vpop.permute.xlu0 %2133
            %v2137 = vsel %vm2065, %v2130, 0
            %v2140 = vsel %vm2065, %v2131, 0
            %2142 = vmatprep.subr.bf16.mxu0 0
            %2143 = vmatpush1.bf16.msra.mxu0 %v2134
            %2144 = vmatprep.subr.bf16.mxu0 0
            %2145 = vmatpush1.bf16.msra.mxu0 0
            %2146 = vmatprep.subr.bf16.mxu0 0
            %2147 = vmatpush1.bf16.msra.mxu0 0
            %2148 = vmatprep.subr.bf16.mxu0 0
            %2149 = vmatpush1.bf16.msra.mxu0 0
            %2150 = vmatprep.subr.bf16.mxu0 0
            %2151 = vmatpush1.bf16.msra.mxu0 0
            %2152 = vmatprep.subr.bf16.mxu0 0
            %2153 = vmatpush1.bf16.msra.mxu0 0
            %2154 = vmatprep.subr.bf16.mxu0 0
            %2155 = vmatpush1.bf16.msra.mxu0 0
            %2156 = vmatprep.subr.bf16.mxu0 0
            %2157 = vmatpush1.bf16.msra.mxu0 0
            %2158 = vmatprep.subr.bf16.mxu0 0
            %2159 = vmatpush1.bf16.msra.mxu0 0
            %2160 = vmatprep.subr.bf16.mxu0 0
            %2161 = vmatpush1.bf16.msra.mxu0 0
            %2162 = vmatprep.subr.bf16.mxu0 0
            %2163 = vmatpush1.bf16.msra.mxu0 0
            %2164 = vmatprep.subr.bf16.mxu0 0
            %2165 = vmatpush1.bf16.msra.mxu0 0
            %2166 = vmatprep.subr.bf16.mxu0 0
            %2167 = vmatpush1.bf16.msra.mxu0 0
            %2168 = vmatprep.subr.bf16.mxu0 0
            %2169 = vmatpush1.bf16.msra.mxu0 0
            %2170 = vmatprep.subr.bf16.mxu0 0
            %2171 = vmatpush1.bf16.msra.mxu0 0
            %2172 = vmatprep.subr.bf16.mxu0 0
            %2173 = vmatpush1.bf16.msra.mxu0 0
            %2174 = vmatprep.mubr.bf16.mxu0 0
            %2175 = vmatmul.mubr.bf16.gmra.mrb[0].mxu0 %v2137
            %v2176 = vpop.f32.mrb[0].mxu0
            %v2177 = vadd.f32 0.0, %v2176
            %v2178 = vpop.f32.mrb[0].mxu0
            %v2179 = vpop.f32.mrb[0].mxu0
            %v2180 = vadd.f32 0.0, %v2179
            %v2181 = vpop.f32.mrb[0].mxu0
            %2182 = vmatprep.mubr.bf16.mxu0 0
            %2183 = vmatmul.mubr.bf16.gmra.mrb[0].mxu0 %v2140
            %v2184 = vpop.f32.mrb[0].mxu0
            %v2185 = vadd.f32 0.0, %v2184
            %v2186 = vpop.f32.mrb[0].mxu0
            %v2187 = vpop.f32.mrb[0].mxu0
            %v2188 = vadd.f32 0.0, %v2187
            %v2189 = vpop.f32.mrb[0].mxu0
            %2190 = vdwg.mxu0
            %v2191 = vadd.f32 %v2126, %v2177
            %v2192 = vadd.f32 %v2127, %v2180
            %v2193 = vadd.f32 %v2128, %v2185
            %v2194 = vadd.f32 %v2129, %v2188
          $region157: #{tpu_custom_call.1} parent=128 // loop_footer
            %s1964 = sadd.s32 1, %s1960
          $region158: #{tpu_custom_call.1} parent=128 // loop_footer_branch
            %1959 = sbr.rel target = $region154
          $region159: #{tpu_custom_call.1} parent=128 // loop_exit
            _
          %v2195 = vrcp.pop %v1969
          %v2196 = vrcp.pop %v1970
          %v2197 = vrcp.pop %v1971
          %v2198 = vrcp.pop %v1972
          %v2199 = vmul.f32 %v1973, %v2195
          %v2200 = vmul.f32 %v1974, %v2196
          %v2201 = vmul.f32 %v1975, %v2197
          %v2202 = vmul.f32 %v1976, %v2198
          %v2203 = vpack.c.bf16 %v2200, %v2199
          %v2204 = vpack.c.bf16 %v2202, %v2201
          %2207 = vrot.lane.b32.xlu0 %v2203, 96
          %v2208 = vpop.permute.xlu0 %2207
          %2209 = vrot.lane.b32.xlu0 %v2204, 96
          %v2210 = vpop.permute.xlu0 %2209
          %vm2213 = vcmask 1048320
          %2214 = vst.msk [vmem:[%s1435] sm:$0xff] %vm2213, %v2208
          %2215 = vst.msk [vmem:[%s1435 + $0x8] sm:$0xff] %vm2213, %v2210
        $region129: #{tpu_custom_call.1} parent=71 // loop_footer
          %s1191 = sadd.s32 1, %s1187
        $region130: #{tpu_custom_call.1} parent=71 // loop_footer_branch
          %1186 = sbr.rel target = $region126
        $region131: #{tpu_custom_call.1} parent=71 // loop_exit
          _
        loop: start=0, step=1, limit=2
        $region160: #{tpu_custom_call.1} parent=71 // loop_pre_header
          _
        $region161: #{tpu_custom_call.1} parent=71 // loop_header
          %s2217 = sphi 0, %s2221
          %p2218 = scmp.ge.s32.totalorder %s2217, 2
        $region162: #{tpu_custom_call.1} parent=71 // loop_header_branch
          %2220 = sbr.rel (%p2218) target = $region166
        $region163: #{tpu_custom_call.1} parent=71 // loop_body
          %s2222 = smul.u32 %s2217, 32
          %s2223 = scalar_lea.vmem %s526, %s2222 [#allocation4]
          %v2224 = vld [vmem:[%s2223] sm:$0xff]
          %v2225 = vld [vmem:[%s2223 + $0x8] sm:$0xff]
          %v2226 = vld [vmem:[%s2223 + $0x10] sm:$0xff]
          %v2227 = vld [vmem:[%s2223 + $0x18] sm:$0xff]
          %s2228 = sshra.s32 %s2222, 4
          %s2229 = sand.u32 %s2222, 15
          %s2230 = smul.addr %s2228, 8
          %s2231 = scalar_lea.vmem [#allocation3], %s2230
          %v2232 = vld [vmem:[%s2231] sm:$0xff]
          %v2233 = vld [vmem:[%s2231 + $0x8] sm:$0xff]
          %v2234 = vld [vmem:[#allocation13] sm:$0xf]
          %v2235 = vld [vmem:[#allocation13 + $0x4] sm:$0xf]
          %v2236 = vld [vmem:[#allocation13 + $0x8] sm:$0xf]
          %v2237 = vld [vmem:[#allocation13 + $0xc] sm:$0xf]
          %v2238 = vld [vmem:[#allocation13 + $0x10] sm:$0xf]
          %v2239 = vld [vmem:[#allocation13 + $0x14] sm:$0xf]
          %v2240 = vld [vmem:[#allocation13 + $0x18] sm:$0xf]
          %v2241 = vld [vmem:[#allocation13 + $0x1c] sm:$0xf]
          %v2242 = vld [vmem:[#allocation13 + $0x20] sm:$0xf]
          %v2243 = vld [vmem:[#allocation13 + $0x24] sm:$0xf]
          %v2244 = vld [vmem:[#allocation13 + $0x28] sm:$0xf]
          %v2245 = vld [vmem:[#allocation13 + $0x2c] sm:$0xf]
          %v2246 = vld [vmem:[#allocation13 + $0x30] sm:$0xf]
          %v2247 = vld [vmem:[#allocation13 + $0x34] sm:$0xf]
          %v2248 = vld [vmem:[#allocation13 + $0x38] sm:$0xf]
          %v2249 = vld [vmem:[#allocation13 + $0x3c] sm:$0xf]
          %v2266 = vunpack.c.l.b16 %v2234
          %v2267 = vunpack.c.l.b16 %v2235
          %v2268 = vunpack.c.l.b16 %v2236
          %v2269 = vunpack.c.l.b16 %v2237
          %v2270 = vunpack.c.l.b16 %v2238
          %v2271 = vunpack.c.l.b16 %v2239
          %v2272 = vunpack.c.l.b16 %v2240
          %v2273 = vunpack.c.l.b16 %v2241
          %v2274 = vunpack.c.l.b16 %v2242
          %v2275 = vunpack.c.l.b16 %v2243
          %v2276 = vunpack.c.l.b16 %v2244
          %v2277 = vunpack.c.l.b16 %v2245
          %v2278 = vunpack.c.l.b16 %v2246
          %v2279 = vunpack.c.l.b16 %v2247
          %v2280 = vunpack.c.l.b16 %v2248
          %v2281 = vunpack.c.l.b16 %v2249
          %v2282 = vpack.c.b16 %v2267, %v2266
          %v2283 = vpack.c.b16 %v2269, %v2268
          %v2284 = vpack.c.b16 %v2271, %v2270
          %v2285 = vpack.c.b16 %v2273, %v2272
          %v2286 = vpack.c.b16 %v2275, %v2274
          %v2287 = vpack.c.b16 %v2277, %v2276
          %v2288 = vpack.c.b16 %v2279, %v2278
          %v2289 = vpack.c.b16 %v2281, %v2280
          %2298 = vmatprep.subr.bf16.mxu0 0
          %2299 = vmatpush1.bf16.msra.mxu0 %v2282
          %2300 = vmatprep.subr.bf16.mxu0 0
          %2301 = vmatpush1.bf16.msra.mxu0 %v2283
          %2302 = vmatprep.subr.bf16.mxu0 0
          %2303 = vmatpush1.bf16.msra.mxu0 %v2284
          %2304 = vmatprep.subr.bf16.mxu0 0
          %2305 = vmatpush1.bf16.msra.mxu0 %v2285
          %2306 = vmatprep.subr.bf16.mxu0 0
          %2307 = vmatpush1.bf16.msra.mxu0 %v2286
          %2308 = vmatprep.subr.bf16.mxu0 0
          %2309 = vmatpush1.bf16.msra.mxu0 %v2287
          %2310 = vmatprep.subr.bf16.mxu0 0
          %2311 = vmatpush1.bf16.msra.mxu0 %v2288
          %2312 = vmatprep.subr.bf16.mxu0 0
          %2313 = vmatpush1.bf16.msra.mxu0 %v2289
          %2314 = vmatprep.subr.bf16.mxu0 0
          %2315 = vmatpush1.bf16.msra.mxu0 0
          %2316 = vmatprep.subr.bf16.mxu0 0
          %2317 = vmatpush1.bf16.msra.mxu0 0
          %2318 = vmatprep.subr.bf16.mxu0 0
          %2319 = vmatpush1.bf16.msra.mxu0 0
          %2320 = vmatprep.subr.bf16.mxu0 0
          %2321 = vmatpush1.bf16.msra.mxu0 0
          %2322 = vmatprep.subr.bf16.mxu0 0
          %2323 = vmatpush1.bf16.msra.mxu0 0
          %2324 = vmatprep.subr.bf16.mxu0 0
          %2325 = vmatpush1.bf16.msra.mxu0 0
          %2326 = vmatprep.subr.bf16.mxu0 0
          %2327 = vmatpush1.bf16.msra.mxu0 0
          %2328 = vmatprep.subr.bf16.mxu0 0
          %2329 = vmatpush1.bf16.msra.mxu0 0
          %2330 = vmatprep.mubr.bf16.mxu0 0
          %2331 = vmatmul.mubr.bf16.gmra.mrb[0].mxu0 %v2232
          %v2332 = vpop.f32.mrb[0].mxu0
          %v2333 = vadd.f32 0.0, %v2332
          %v2334 = vpop.f32.mrb[0].mxu0
          %v2335 = vpop.f32.mrb[0].mxu0
          %v2336 = vadd.f32 0.0, %v2335
          %v2337 = vpop.f32.mrb[0].mxu0
          %2338 = vmatprep.mubr.bf16.mxu0 0
          %2339 = vmatmul.mubr.bf16.gmra.mrb[0].mxu0 %v2233
          %v2340 = vpop.f32.mrb[0].mxu0
          %v2341 = vadd.f32 0.0, %v2340
          %v2342 = vpop.f32.mrb[0].mxu0
          %v2343 = vpop.f32.mrb[0].mxu0
          %v2344 = vadd.f32 0.0, %v2343
          %v2345 = vpop.f32.mrb[0].mxu0
          %2346 = vdwg.mxu0
          %v2347 = vadd.f32 %v2224, %v2333
          %v2348 = vadd.f32 %v2225, %v2336
          %v2349 = vadd.f32 %v2226, %v2341
          %v2350 = vadd.f32 %v2227, %v2344
          %v2351 = vld [vmem:[#allocation15] sm:$0x1]
          %v2353 = vlaneseq
          %v2354 = vshrl.u32 %v2353, 7
          %v2355 = vsub.s32 0, %v2354
          %v2356 = vrot.slane %v2351, %v2355
          %v2358 = vadd.f32 %v2347, %v2356
          %v2359 = vadd.f32 %v2348, %v2356
          %v2360 = vadd.f32 %v2349, %v2356
          %v2361 = vadd.f32 %v2350, %v2356
          %v2362 = vld [vmem:[#allocation16] sm:$0x1]
          %v2363 = vld [vmem:[#allocation18] sm:$0x1]
          %2364 = vadd.xlane.f32.xlu0 %v2358
          %v2365 = vpop.xlane.xlu0 %2364
          %2366 = vadd.xlane.f32.xlu0 %v2359
          %v2367 = vpop.xlane.xlu0 %2366
          %2368 = vadd.xlane.f32.xlu0 %v2360
          %v2369 = vpop.xlane.xlu0 %2368
          %2370 = vadd.xlane.f32.xlu0 %v2361
          %v2371 = vpop.xlane.xlu0 %2370
          %v2372 = vmul.f32 %v2365, %v644
          %v2373 = vmul.f32 %v2367, %v644
          %v2374 = vmul.f32 %v2369, %v644
          %v2375 = vmul.f32 %v2371, %v644
          %v2376 = vsub.f32 %v2358, %v2372
          %v2377 = vsub.f32 %v2359, %v2373
          %v2378 = vsub.f32 %v2360, %v2374
          %v2379 = vsub.f32 %v2361, %v2375
          %v2380 = vmul.f32 %v2376, %v2376
          %v2381 = vmul.f32 %v2377, %v2377
          %v2382 = vmul.f32 %v2378, %v2378
          %v2383 = vmul.f32 %v2379, %v2379
          %2384 = vadd.xlane.f32.xlu0 %v2380
          %v2385 = vpop.xlane.xlu0 %2384
          %2386 = vadd.xlane.f32.xlu0 %v2381
          %v2387 = vpop.xlane.xlu0 %2386
          %2388 = vadd.xlane.f32.xlu0 %v2382
          %v2389 = vpop.xlane.xlu0 %2388
          %2390 = vadd.xlane.f32.xlu0 %v2383
          %v2391 = vpop.xlane.xlu0 %2390
          %v2392 = vmul.f32 %v2385, %v644
          %v2393 = vmul.f32 %v2387, %v644
          %v2394 = vmul.f32 %v2389, %v644
          %v2395 = vmul.f32 %v2391, %v644
          %v2396 = vadd.f32 %v2392, 1e-05
          %v2397 = vadd.f32 %v2393, 1e-05
          %v2398 = vadd.f32 %v2394, 1e-05
          %v2399 = vadd.f32 %v2395, 1e-05
          %v2400 = vrsqrt.pop %v2396
          %v2401 = vrsqrt.pop %v2397
          %v2402 = vrsqrt.pop %v2398
          %v2403 = vrsqrt.pop %v2399
          %v2404 = vmul.f32 %v2376, %v2400
          %v2405 = vmul.f32 %v2377, %v2401
          %v2406 = vmul.f32 %v2378, %v2402
          %v2407 = vmul.f32 %v2379, %v2403
          %v2409 = vlaneseq
          %v2410 = vshrl.u32 %v2409, 7
          %v2411 = vsub.s32 0, %v2410
          %v2412 = vrot.slane %v2362, %v2411
          %v2414 = vmul.f32 %v2404, %v2412
          %v2415 = vmul.f32 %v2405, %v2412
          %v2416 = vmul.f32 %v2406, %v2412
          %v2417 = vmul.f32 %v2407, %v2412
          %v2419 = vlaneseq
          %v2420 = vshrl.u32 %v2419, 7
          %v2421 = vsub.s32 0, %v2420
          %v2422 = vrot.slane %v2363, %v2421
          %v2424 = vadd.f32 %v2414, %v2422
          %v2425 = vadd.f32 %v2415, %v2422
          %v2426 = vadd.f32 %v2416, %v2422
          %v2427 = vadd.f32 %v2417, %v2422
          %v2428 = vpack.c.bf16 %v2425, %v2424
          %v2429 = vpack.c.bf16 %v2427, %v2426
          %v2430 = vld [vmem:[#allocation19] sm:$0xff]
          %v2431 = vld [vmem:[#allocation19 + $0x8] sm:$0xff]
          %v2432 = vld [vmem:[#allocation19 + $0x10] sm:$0xff]
          %v2433 = vld [vmem:[#allocation19 + $0x18] sm:$0xff]
          %v2434 = vld [vmem:[#allocation19 + $0x20] sm:$0xff]
          %v2435 = vld [vmem:[#allocation19 + $0x28] sm:$0xff]
          %v2436 = vld [vmem:[#allocation19 + $0x30] sm:$0xff]
          %v2437 = vld [vmem:[#allocation19 + $0x38] sm:$0xff]
          %v2438 = vld [vmem:[#allocation19 + $0x40] sm:$0xff]
          %v2439 = vld [vmem:[#allocation19 + $0x48] sm:$0xff]
          %v2440 = vld [vmem:[#allocation19 + $0x50] sm:$0xff]
          %v2441 = vld [vmem:[#allocation19 + $0x58] sm:$0xff]
          %v2442 = vld [vmem:[#allocation19 + $0x60] sm:$0xff]
          %v2443 = vld [vmem:[#allocation19 + $0x68] sm:$0xff]
          %v2444 = vld [vmem:[#allocation19 + $0x70] sm:$0xff]
          %v2445 = vld [vmem:[#allocation19 + $0x78] sm:$0xff]
          %v2446 = vld [vmem:[#allocation19 + $0x80] sm:$0xff]
          %v2447 = vld [vmem:[#allocation19 + $0x88] sm:$0xff]
          %v2448 = vld [vmem:[#allocation19 + $0x90] sm:$0xff]
          %v2449 = vld [vmem:[#allocation19 + $0x98] sm:$0xff]
          %v2450 = vld [vmem:[#allocation19 + $0xa0] sm:$0xff]
          %v2451 = vld [vmem:[#allocation19 + $0xa8] sm:$0xff]
          %v2452 = vld [vmem:[#allocation19 + $0xb0] sm:$0xff]
          %v2453 = vld [vmem:[#allocation19 + $0xb8] sm:$0xff]
          %v2454 = vld [vmem:[#allocation19 + $0xc0] sm:$0xff]
          %v2455 = vld [vmem:[#allocation19 + $0xc8] sm:$0xff]
          %v2456 = vld [vmem:[#allocation19 + $0xd0] sm:$0xff]
          %v2457 = vld [vmem:[#allocation19 + $0xd8] sm:$0xff]
          %v2458 = vld [vmem:[#allocation19 + $0xe0] sm:$0xff]
          %v2459 = vld [vmem:[#allocation19 + $0xe8] sm:$0xff]
          %v2460 = vld [vmem:[#allocation19 + $0xf0] sm:$0xff]
          %v2461 = vld [vmem:[#allocation19 + $0xf8] sm:$0xff]
          %v2462 = vld [vmem:[#allocation21] sm:$0xf]
          %v2464 = vlaneseq
          %v2465 = vshrl.u32 %v2464, 7
          %v2466 = vsub.s32 0, %v2465
          %v2467 = vrot.slane %v2462, %v2466
          %v2468 = vlaneseq
          %v2469 = vshrl.u32 %v2468, 7
          %v2470 = vsub.s32 1, %v2469
          %v2471 = vrot.slane %v2462, %v2470
          %v2472 = vlaneseq
          %v2473 = vshrl.u32 %v2472, 7
          %v2474 = vsub.s32 2, %v2473
          %v2475 = vrot.slane %v2462, %v2474
          %v2476 = vlaneseq
          %v2477 = vshrl.u32 %v2476, 7
          %v2478 = vsub.s32 3, %v2477
          %v2479 = vrot.slane %v2462, %v2478
          %v2516 = vunpack.c.l.b16 %v2430
          %v2517 = vunpack.c.h.b16 %v2430
          %v2518 = vunpack.c.l.b16 %v2431
          %v2519 = vunpack.c.h.b16 %v2431
          %v2520 = vunpack.c.l.b16 %v2432
          %v2521 = vunpack.c.h.b16 %v2432
          %v2522 = vunpack.c.l.b16 %v2433
          %v2523 = vunpack.c.h.b16 %v2433
          %v2524 = vunpack.c.l.b16 %v2434
          %v2525 = vunpack.c.h.b16 %v2434
          %v2526 = vunpack.c.l.b16 %v2435
          %v2527 = vunpack.c.h.b16 %v2435
          %v2528 = vunpack.c.l.b16 %v2436
          %v2529 = vunpack.c.h.b16 %v2436
          %v2530 = vunpack.c.l.b16 %v2437
          %v2531 = vunpack.c.h.b16 %v2437
          %v2532 = vunpack.c.l.b16 %v2438
          %v2533 = vunpack.c.h.b16 %v2438
          %v2534 = vunpack.c.l.b16 %v2439
          %v2535 = vunpack.c.h.b16 %v2439
          %v2536 = vunpack.c.l.b16 %v2440
          %v2537 = vunpack.c.h.b16 %v2440
          %v2538 = vunpack.c.l.b16 %v2441
          %v2539 = vunpack.c.h.b16 %v2441
          %v2540 = vunpack.c.l.b16 %v2442
          %v2541 = vunpack.c.h.b16 %v2442
          %v2542 = vunpack.c.l.b16 %v2443
          %v2543 = vunpack.c.h.b16 %v2443
          %v2544 = vunpack.c.l.b16 %v2444
          %v2545 = vunpack.c.h.b16 %v2444
          %v2546 = vunpack.c.l.b16 %v2445
          %v2547 = vunpack.c.h.b16 %v2445
          %v2548 = vunpack.c.l.b16 %v2446
          %v2549 = vunpack.c.h.b16 %v2446
          %v2550 = vunpack.c.l.b16 %v2447
          %v2551 = vunpack.c.h.b16 %v2447
          %v2552 = vunpack.c.l.b16 %v2448
          %v2553 = vunpack.c.h.b16 %v2448
          %v2554 = vunpack.c.l.b16 %v2449
          %v2555 = vunpack.c.h.b16 %v2449
          %v2556 = vunpack.c.l.b16 %v2450
          %v2557 = vunpack.c.h.b16 %v2450
          %v2558 = vunpack.c.l.b16 %v2451
          %v2559 = vunpack.c.h.b16 %v2451
          %v2560 = vunpack.c.l.b16 %v2452
          %v2561 = vunpack.c.h.b16 %v2452
          %v2562 = vunpack.c.l.b16 %v2453
          %v2563 = vunpack.c.h.b16 %v2453
          %v2564 = vunpack.c.l.b16 %v2454
          %v2565 = vunpack.c.h.b16 %v2454
          %v2566 = vunpack.c.l.b16 %v2455
          %v2567 = vunpack.c.h.b16 %v2455
          %v2568 = vunpack.c.l.b16 %v2456
          %v2569 = vunpack.c.h.b16 %v2456
          %v2570 = vunpack.c.l.b16 %v2457
          %v2571 = vunpack.c.h.b16 %v2457
          %v2572 = vunpack.c.l.b16 %v2458
          %v2573 = vunpack.c.h.b16 %v2458
          %v2574 = vunpack.c.l.b16 %v2459
          %v2575 = vunpack.c.h.b16 %v2459
          %v2576 = vunpack.c.l.b16 %v2460
          %v2577 = vunpack.c.h.b16 %v2460
          %v2578 = vunpack.c.l.b16 %v2461
          %v2579 = vunpack.c.h.b16 %v2461
          %v2580 = vpack.c.b16 %v2520, %v2516
          %v2581 = vpack.c.b16 %v2521, %v2517
          %v2582 = vpack.c.b16 %v2522, %v2518
          %v2583 = vpack.c.b16 %v2523, %v2519
          %v2584 = vpack.c.b16 %v2528, %v2524
          %v2585 = vpack.c.b16 %v2529, %v2525
          %v2586 = vpack.c.b16 %v2530, %v2526
          %v2587 = vpack.c.b16 %v2531, %v2527
          %v2588 = vpack.c.b16 %v2536, %v2532
          %v2589 = vpack.c.b16 %v2537, %v2533
          %v2590 = vpack.c.b16 %v2538, %v2534
          %v2591 = vpack.c.b16 %v2539, %v2535
          %v2592 = vpack.c.b16 %v2544, %v2540
          %v2593 = vpack.c.b16 %v2545, %v2541
          %v2594 = vpack.c.b16 %v2546, %v2542
          %v2595 = vpack.c.b16 %v2547, %v2543
          %v2596 = vpack.c.b16 %v2552, %v2548
          %v2597 = vpack.c.b16 %v2553, %v2549
          %v2598 = vpack.c.b16 %v2554, %v2550
          %v2599 = vpack.c.b16 %v2555, %v2551
          %v2600 = vpack.c.b16 %v2560, %v2556
          %v2601 = vpack.c.b16 %v2561, %v2557
          %v2602 = vpack.c.b16 %v2562, %v2558
          %v2603 = vpack.c.b16 %v2563, %v2559
          %v2604 = vpack.c.b16 %v2568, %v2564
          %v2605 = vpack.c.b16 %v2569, %v2565
          %v2606 = vpack.c.b16 %v2570, %v2566
          %v2607 = vpack.c.b16 %v2571, %v2567
          %v2608 = vpack.c.b16 %v2576, %v2572
          %v2609 = vpack.c.b16 %v2577, %v2573
          %v2610 = vpack.c.b16 %v2578, %v2574
          %v2611 = vpack.c.b16 %v2579, %v2575
          %2644 = vmatprep.subr.bf16.mxu0 %v2581
          %2645 = vmatpush1.bf16.msra.mxu0 %v2580
          %2646 = vmatprep.subr.bf16.mxu0 %v2585
          %2647 = vmatpush1.bf16.msra.mxu0 %v2584
          %2648 = vmatprep.subr.bf16.mxu0 %v2589
          %2649 = vmatpush1.bf16.msra.mxu0 %v2588
          %2650 = vmatprep.subr.bf16.mxu0 %v2593
          %2651 = vmatpush1.bf16.msra.mxu0 %v2592
          %2652 = vmatprep.subr.bf16.mxu0 %v2597
          %2653 = vmatpush1.bf16.msra.mxu0 %v2596
          %2654 = vmatprep.subr.bf16.mxu0 %v2601
          %2655 = vmatpush1.bf16.msra.mxu0 %v2600
          %2656 = vmatprep.subr.bf16.mxu0 %v2605
          %2657 = vmatpush1.bf16.msra.mxu0 %v2604
          %2658 = vmatprep.subr.bf16.mxu0 %v2609
          %2659 = vmatpush1.bf16.msra.mxu0 %v2608
          %2660 = vmatprep.subr.bf16.mxu0 0
          %2661 = vmatpush1.bf16.msra.mxu0 0
          %2662 = vmatprep.subr.bf16.mxu0 0
          %2663 = vmatpush1.bf16.msra.mxu0 0
          %2664 = vmatprep.subr.bf16.mxu0 0
          %2665 = vmatpush1.bf16.msra.mxu0 0
          %2666 = vmatprep.subr.bf16.mxu0 0
          %2667 = vmatpush1.bf16.msra.mxu0 0
          %2668 = vmatprep.subr.bf16.mxu0 0
          %2669 = vmatpush1.bf16.msra.mxu0 0
          %2670 = vmatprep.subr.bf16.mxu0 0
          %2671 = vmatpush1.bf16.msra.mxu0 0
          %2672 = vmatprep.subr.bf16.mxu0 0
          %2673 = vmatpush1.bf16.msra.mxu0 0
          %2674 = vmatprep.subr.bf16.mxu0 0
          %2675 = vmatpush1.bf16.msra.mxu0 0
          %2676 = vmatprep.mubr.bf16.mxu0 0
          %2677 = vmatmul.mubr.bf16.gmra.mrb[0].mxu0 %v2428
          %v2678 = vpop.f32.mrb[0].mxu0
          %v2679 = vadd.f32 %v2467, %v2678
          %v2680 = vpop.f32.mrb[0].mxu0
          %v2681 = vadd.f32 %v2471, %v2680
          %v2682 = vpop.f32.mrb[0].mxu0
          %v2683 = vadd.f32 %v2467, %v2682
          %v2684 = vpop.f32.mrb[0].mxu0
          %v2685 = vadd.f32 %v2471, %v2684
          %2686 = vmatprep.mubr.bf16.mxu0 0
          %2687 = vmatmul.mubr.bf16.gmra.mrb[0].mxu0 %v2429
          %v2688 = vpop.f32.mrb[0].mxu0
          %v2689 = vadd.f32 %v2467, %v2688
          %v2690 = vpop.f32.mrb[0].mxu0
          %v2691 = vadd.f32 %v2471, %v2690
          %v2692 = vpop.f32.mrb[0].mxu0
          %v2693 = vadd.f32 %v2467, %v2692
          %v2694 = vpop.f32.mrb[0].mxu0
          %v2695 = vadd.f32 %v2471, %v2694
          %2696 = vdwg.mxu0
          %2697 = vmatprep.subr.bf16.mxu0 %v2583
          %2698 = vmatpush1.bf16.msra.mxu0 %v2582
          %2699 = vmatprep.subr.bf16.mxu0 %v2587
          %2700 = vmatpush1.bf16.msra.mxu0 %v2586
          %2701 = vmatprep.subr.bf16.mxu0 %v2591
          %2702 = vmatpush1.bf16.msra.mxu0 %v2590
          %2703 = vmatprep.subr.bf16.mxu0 %v2595
          %2704 = vmatpush1.bf16.msra.mxu0 %v2594
          %2705 = vmatprep.subr.bf16.mxu0 %v2599
          %2706 = vmatpush1.bf16.msra.mxu0 %v2598
          %2707 = vmatprep.subr.bf16.mxu0 %v2603
          %2708 = vmatpush1.bf16.msra.mxu0 %v2602
          %2709 = vmatprep.subr.bf16.mxu0 %v2607
          %2710 = vmatpush1.bf16.msra.mxu0 %v2606
          %2711 = vmatprep.subr.bf16.mxu0 %v2611
          %2712 = vmatpush1.bf16.msra.mxu0 %v2610
          %2713 = vmatprep.subr.bf16.mxu0 0
          %2714 = vmatpush1.bf16.msra.mxu0 0
          %2715 = vmatprep.subr.bf16.mxu0 0
          %2716 = vmatpush1.bf16.msra.mxu0 0
          %2717 = vmatprep.subr.bf16.mxu0 0
          %2718 = vmatpush1.bf16.msra.mxu0 0
          %2719 = vmatprep.subr.bf16.mxu0 0
          %2720 = vmatpush1.bf16.msra.mxu0 0
          %2721 = vmatprep.subr.bf16.mxu0 0
          %2722 = vmatpush1.bf16.msra.mxu0 0
          %2723 = vmatprep.subr.bf16.mxu0 0
          %2724 = vmatpush1.bf16.msra.mxu0 0
          %2725 = vmatprep.subr.bf16.mxu0 0
          %2726 = vmatpush1.bf16.msra.mxu0 0
          %2727 = vmatprep.subr.bf16.mxu0 0
          %2728 = vmatpush1.bf16.msra.mxu0 0
          %2729 = vmatprep.mubr.bf16.mxu0 0
          %2730 = vmatmul.mubr.bf16.gmra.mrb[0].mxu0 %v2428
          %v2731 = vpop.f32.mrb[0].mxu0
          %v2732 = vadd.f32 %v2475, %v2731
          %v2733 = vpop.f32.mrb[0].mxu0
          %v2734 = vadd.f32 %v2479, %v2733
          %v2735 = vpop.f32.mrb[0].mxu0
          %v2736 = vadd.f32 %v2475, %v2735
          %v2737 = vpop.f32.mrb[0].mxu0
          %v2738 = vadd.f32 %v2479, %v2737
          %2739 = vmatprep.mubr.bf16.mxu0 0
          %2740 = vmatmul.mubr.bf16.gmra.mrb[0].mxu0 %v2429
          %v2741 = vpop.f32.mrb[0].mxu0
          %v2742 = vadd.f32 %v2475, %v2741
          %v2743 = vpop.f32.mrb[0].mxu0
          %v2744 = vadd.f32 %v2479, %v2743
          %v2745 = vpop.f32.mrb[0].mxu0
          %v2746 = vadd.f32 %v2475, %v2745
          %v2747 = vpop.f32.mrb[0].mxu0
          %v2748 = vadd.f32 %v2479, %v2747
          %2749 = vdwg.mxu0
          %v2750 = vmul.f32 %v2679, 0.5
          %v2751 = vmul.f32 %v2681, 0.5
          %v2752 = vmul.f32 %v2732, 0.5
          %v2753 = vmul.f32 %v2734, 0.5
          %v2754 = vmul.f32 %v2683, 0.5
          %v2755 = vmul.f32 %v2685, 0.5
          %v2756 = vmul.f32 %v2736, 0.5
          %v2757 = vmul.f32 %v2738, 0.5
          %v2758 = vmul.f32 %v2689, 0.5
          %v2759 = vmul.f32 %v2691, 0.5
          %v2760 = vmul.f32 %v2742, 0.5
          %v2761 = vmul.f32 %v2744, 0.5
          %v2762 = vmul.f32 %v2693, 0.5
          %v2763 = vmul.f32 %v2695, 0.5
          %v2764 = vmul.f32 %v2746, 0.5
          %v2765 = vmul.f32 %v2748, 0.5
          %v2766 = vmul.f32 %v2679, 0.044715
          %v2767 = vmul.f32 %v2681, 0.044715
          %v2768 = vmul.f32 %v2732, 0.044715
          %v2769 = vmul.f32 %v2734, 0.044715
          %v2770 = vmul.f32 %v2683, 0.044715
          %v2771 = vmul.f32 %v2685, 0.044715
          %v2772 = vmul.f32 %v2736, 0.044715
          %v2773 = vmul.f32 %v2738, 0.044715
          %v2774 = vmul.f32 %v2689, 0.044715
          %v2775 = vmul.f32 %v2691, 0.044715
          %v2776 = vmul.f32 %v2742, 0.044715
          %v2777 = vmul.f32 %v2744, 0.044715
          %v2778 = vmul.f32 %v2693, 0.044715
          %v2779 = vmul.f32 %v2695, 0.044715
          %v2780 = vmul.f32 %v2746, 0.044715
          %v2781 = vmul.f32 %v2748, 0.044715
          %v2782 = vmul.f32 %v2766, %v2679
          %v2783 = vmul.f32 %v2767, %v2681
          %v2784 = vmul.f32 %v2768, %v2732
          %v2785 = vmul.f32 %v2769, %v2734
          %v2786 = vmul.f32 %v2770, %v2683
          %v2787 = vmul.f32 %v2771, %v2685
          %v2788 = vmul.f32 %v2772, %v2736
          %v2789 = vmul.f32 %v2773, %v2738
          %v2790 = vmul.f32 %v2774, %v2689
          %v2791 = vmul.f32 %v2775, %v2691
          %v2792 = vmul.f32 %v2776, %v2742
          %v2793 = vmul.f32 %v2777, %v2744
          %v2794 = vmul.f32 %v2778, %v2693
          %v2795 = vmul.f32 %v2779, %v2695
          %v2796 = vmul.f32 %v2780, %v2746
          %v2797 = vmul.f32 %v2781, %v2748
          %v2798 = vmul.f32 %v2782, %v2679
          %v2799 = vmul.f32 %v2783, %v2681
          %v2800 = vmul.f32 %v2784, %v2732
          %v2801 = vmul.f32 %v2785, %v2734
          %v2802 = vmul.f32 %v2786, %v2683
          %v2803 = vmul.f32 %v2787, %v2685
          %v2804 = vmul.f32 %v2788, %v2736
          %v2805 = vmul.f32 %v2789, %v2738
          %v2806 = vmul.f32 %v2790, %v2689
          %v2807 = vmul.f32 %v2791, %v2691
          %v2808 = vmul.f32 %v2792, %v2742
          %v2809 = vmul.f32 %v2793, %v2744
          %v2810 = vmul.f32 %v2794, %v2693
          %v2811 = vmul.f32 %v2795, %v2695
          %v2812 = vmul.f32 %v2796, %v2746
          %v2813 = vmul.f32 %v2797, %v2748
          %v2814 = vadd.f32 %v2679, %v2798
          %v2815 = vadd.f32 %v2681, %v2799
          %v2816 = vadd.f32 %v2732, %v2800
          %v2817 = vadd.f32 %v2734, %v2801
          %v2818 = vadd.f32 %v2683, %v2802
          %v2819 = vadd.f32 %v2685, %v2803
          %v2820 = vadd.f32 %v2736, %v2804
          %v2821 = vadd.f32 %v2738, %v2805
          %v2822 = vadd.f32 %v2689, %v2806
          %v2823 = vadd.f32 %v2691, %v2807
          %v2824 = vadd.f32 %v2742, %v2808
          %v2825 = vadd.f32 %v2744, %v2809
          %v2826 = vadd.f32 %v2693, %v2810
          %v2827 = vadd.f32 %v2695, %v2811
          %v2828 = vadd.f32 %v2746, %v2812
          %v2829 = vadd.f32 %v2748, %v2813
          %v2830 = vmul.f32 %v2814, 0.7978846
          %v2831 = vmul.f32 %v2815, 0.7978846
          %v2832 = vmul.f32 %v2816, 0.7978846
          %v2833 = vmul.f32 %v2817, 0.7978846
          %v2834 = vmul.f32 %v2818, 0.7978846
          %v2835 = vmul.f32 %v2819, 0.7978846
          %v2836 = vmul.f32 %v2820, 0.7978846
          %v2837 = vmul.f32 %v2821, 0.7978846
          %v2838 = vmul.f32 %v2822, 0.7978846
          %v2839 = vmul.f32 %v2823, 0.7978846
          %v2840 = vmul.f32 %v2824, 0.7978846
          %v2841 = vmul.f32 %v2825, 0.7978846
          %v2842 = vmul.f32 %v2826, 0.7978846
          %v2843 = vmul.f32 %v2827, 0.7978846
          %v2844 = vmul.f32 %v2828, 0.7978846
          %v2845 = vmul.f32 %v2829, 0.7978846
          %v2846 = vtanh.pop %v2830
          %v2847 = vtanh.pop %v2831
          %v2848 = vtanh.pop %v2832
          %v2849 = vtanh.pop %v2833
          %v2850 = vtanh.pop %v2834
          %v2851 = vtanh.pop %v2835
          %v2852 = vtanh.pop %v2836
          %v2853 = vtanh.pop %v2837
          %v2854 = vtanh.pop %v2838
          %v2855 = vtanh.pop %v2839
          %v2856 = vtanh.pop %v2840
          %v2857 = vtanh.pop %v2841
          %v2858 = vtanh.pop %v2842
          %v2859 = vtanh.pop %v2843
          %v2860 = vtanh.pop %v2844
          %v2861 = vtanh.pop %v2845
          %v2862 = vadd.f32 %v2846, 1.0
          %v2863 = vadd.f32 %v2847, 1.0
          %v2864 = vadd.f32 %v2848, 1.0
          %v2865 = vadd.f32 %v2849, 1.0
          %v2866 = vadd.f32 %v2850, 1.0
          %v2867 = vadd.f32 %v2851, 1.0
          %v2868 = vadd.f32 %v2852, 1.0
          %v2869 = vadd.f32 %v2853, 1.0
          %v2870 = vadd.f32 %v2854, 1.0
          %v2871 = vadd.f32 %v2855, 1.0
          %v2872 = vadd.f32 %v2856, 1.0
          %v2873 = vadd.f32 %v2857, 1.0
          %v2874 = vadd.f32 %v2858, 1.0
          %v2875 = vadd.f32 %v2859, 1.0
          %v2876 = vadd.f32 %v2860, 1.0
          %v2877 = vadd.f32 %v2861, 1.0
          %v2878 = vmul.f32 %v2750, %v2862
          %v2879 = vmul.f32 %v2751, %v2863
          %v2880 = vmul.f32 %v2752, %v2864
          %v2881 = vmul.f32 %v2753, %v2865
          %v2882 = vmul.f32 %v2754, %v2866
          %v2883 = vmul.f32 %v2755, %v2867
          %v2884 = vmul.f32 %v2756, %v2868
          %v2885 = vmul.f32 %v2757, %v2869
          %v2886 = vmul.f32 %v2758, %v2870
          %v2887 = vmul.f32 %v2759, %v2871
          %v2888 = vmul.f32 %v2760, %v2872
          %v2889 = vmul.f32 %v2761, %v2873
          %v2890 = vmul.f32 %v2762, %v2874
          %v2891 = vmul.f32 %v2763, %v2875
          %v2892 = vmul.f32 %v2764, %v2876
          %v2893 = vmul.f32 %v2765, %v2877
          %v2894 = vpack.c.bf16 %v2882, %v2878
          %v2895 = vpack.c.bf16 %v2883, %v2879
          %v2896 = vpack.c.bf16 %v2884, %v2880
          %v2897 = vpack.c.bf16 %v2885, %v2881
          %v2898 = vpack.c.bf16 %v2890, %v2886
          %v2899 = vpack.c.bf16 %v2891, %v2887
          %v2900 = vpack.c.bf16 %v2892, %v2888
          %v2901 = vpack.c.bf16 %v2893, %v2889
          %v2902 = vld [vmem:[#allocation22] sm:$0xf]
          %v2903 = vld [vmem:[#allocation22 + $0x4] sm:$0xf]
          %v2904 = vld [vmem:[#allocation22 + $0x8] sm:$0xf]
          %v2905 = vld [vmem:[#allocation22 + $0xc] sm:$0xf]
          %v2906 = vld [vmem:[#allocation22 + $0x10] sm:$0xf]
          %v2907 = vld [vmem:[#allocation22 + $0x14] sm:$0xf]
          %v2908 = vld [vmem:[#allocation22 + $0x18] sm:$0xf]
          %v2909 = vld [vmem:[#allocation22 + $0x1c] sm:$0xf]
          %v2910 = vld [vmem:[#allocation22 + $0x20] sm:$0xf]
          %v2911 = vld [vmem:[#allocation22 + $0x24] sm:$0xf]
          %v2912 = vld [vmem:[#allocation22 + $0x28] sm:$0xf]
          %v2913 = vld [vmem:[#allocation22 + $0x2c] sm:$0xf]
          %v2914 = vld [vmem:[#allocation22 + $0x30] sm:$0xf]
          %v2915 = vld [vmem:[#allocation22 + $0x34] sm:$0xf]
          %v2916 = vld [vmem:[#allocation22 + $0x38] sm:$0xf]
          %v2917 = vld [vmem:[#allocation22 + $0x3c] sm:$0xf]
          %v2918 = vld [vmem:[#allocation22 + $0x40] sm:$0xf]
          %v2919 = vld [vmem:[#allocation22 + $0x44] sm:$0xf]
          %v2920 = vld [vmem:[#allocation22 + $0x48] sm:$0xf]
          %v2921 = vld [vmem:[#allocation22 + $0x4c] sm:$0xf]
          %v2922 = vld [vmem:[#allocation22 + $0x50] sm:$0xf]
          %v2923 = vld [vmem:[#allocation22 + $0x54] sm:$0xf]
          %v2924 = vld [vmem:[#allocation22 + $0x58] sm:$0xf]
          %v2925 = vld [vmem:[#allocation22 + $0x5c] sm:$0xf]
          %v2926 = vld [vmem:[#allocation22 + $0x60] sm:$0xf]
          %v2927 = vld [vmem:[#allocation22 + $0x64] sm:$0xf]
          %v2928 = vld [vmem:[#allocation22 + $0x68] sm:$0xf]
          %v2929 = vld [vmem:[#allocation22 + $0x6c] sm:$0xf]
          %v2930 = vld [vmem:[#allocation22 + $0x70] sm:$0xf]
          %v2931 = vld [vmem:[#allocation22 + $0x74] sm:$0xf]
          %v2932 = vld [vmem:[#allocation22 + $0x78] sm:$0xf]
          %v2933 = vld [vmem:[#allocation22 + $0x7c] sm:$0xf]
          %v2934 = vld [vmem:[#allocation22 + $0x80] sm:$0xf]
          %v2935 = vld [vmem:[#allocation22 + $0x84] sm:$0xf]
          %v2936 = vld [vmem:[#allocation22 + $0x88] sm:$0xf]
          %v2937 = vld [vmem:[#allocation22 + $0x8c] sm:$0xf]
          %v2938 = vld [vmem:[#allocation22 + $0x90] sm:$0xf]
          %v2939 = vld [vmem:[#allocation22 + $0x94] sm:$0xf]
          %v2940 = vld [vmem:[#allocation22 + $0x98] sm:$0xf]
          %v2941 = vld [vmem:[#allocation22 + $0x9c] sm:$0xf]
          %v2942 = vld [vmem:[#allocation22 + $0xa0] sm:$0xf]
          %v2943 = vld [vmem:[#allocation22 + $0xa4] sm:$0xf]
          %v2944 = vld [vmem:[#allocation22 + $0xa8] sm:$0xf]
          %v2945 = vld [vmem:[#allocation22 + $0xac] sm:$0xf]
          %v2946 = vld [vmem:[#allocation22 + $0xb0] sm:$0xf]
          %v2947 = vld [vmem:[#allocation22 + $0xb4] sm:$0xf]
          %v2948 = vld [vmem:[#allocation22 + $0xb8] sm:$0xf]
          %v2949 = vld [vmem:[#allocation22 + $0xbc] sm:$0xf]
          %v2950 = vld [vmem:[#allocation22 + $0xc0] sm:$0xf]
          %v2951 = vld [vmem:[#allocation22 + $0xc4] sm:$0xf]
          %v2952 = vld [vmem:[#allocation22 + $0xc8] sm:$0xf]
          %v2953 = vld [vmem:[#allocation22 + $0xcc] sm:$0xf]
          %v2954 = vld [vmem:[#allocation22 + $0xd0] sm:$0xf]
          %v2955 = vld [vmem:[#allocation22 + $0xd4] sm:$0xf]
          %v2956 = vld [vmem:[#allocation22 + $0xd8] sm:$0xf]
          %v2957 = vld [vmem:[#allocation22 + $0xdc] sm:$0xf]
          %v2958 = vld [vmem:[#allocation22 + $0xe0] sm:$0xf]
          %v2959 = vld [vmem:[#allocation22 + $0xe4] sm:$0xf]
          %v2960 = vld [vmem:[#allocation22 + $0xe8] sm:$0xf]
          %v2961 = vld [vmem:[#allocation22 + $0xec] sm:$0xf]
          %v2962 = vld [vmem:[#allocation22 + $0xf0] sm:$0xf]
          %v2963 = vld [vmem:[#allocation22 + $0xf4] sm:$0xf]
          %v2964 = vld [vmem:[#allocation22 + $0xf8] sm:$0xf]
          %v2965 = vld [vmem:[#allocation22 + $0xfc] sm:$0xf]
          %v2966 = vld [vmem:[#allocation24] sm:$0x1]
          %v2968 = vlaneseq
          %v2969 = vshrl.u32 %v2968, 7
          %v2970 = vsub.s32 0, %v2969
          %v2971 = vrot.slane %v2966, %v2970
          %v3037 = vunpack.c.l.b16 %v2902
          %v3038 = vunpack.c.l.b16 %v2903
          %v3039 = vunpack.c.l.b16 %v2904
          %v3040 = vunpack.c.l.b16 %v2905
          %v3041 = vunpack.c.l.b16 %v2906
          %v3042 = vunpack.c.l.b16 %v2907
          %v3043 = vunpack.c.l.b16 %v2908
          %v3044 = vunpack.c.l.b16 %v2909
          %v3045 = vunpack.c.l.b16 %v2910
          %v3046 = vunpack.c.l.b16 %v2911
          %v3047 = vunpack.c.l.b16 %v2912
          %v3048 = vunpack.c.l.b16 %v2913
          %v3049 = vunpack.c.l.b16 %v2914
          %v3050 = vunpack.c.l.b16 %v2915
          %v3051 = vunpack.c.l.b16 %v2916
          %v3052 = vunpack.c.l.b16 %v2917
          %v3053 = vunpack.c.l.b16 %v2918
          %v3054 = vunpack.c.l.b16 %v2919
          %v3055 = vunpack.c.l.b16 %v2920
          %v3056 = vunpack.c.l.b16 %v2921
          %v3057 = vunpack.c.l.b16 %v2922
          %v3058 = vunpack.c.l.b16 %v2923
          %v3059 = vunpack.c.l.b16 %v2924
          %v3060 = vunpack.c.l.b16 %v2925
          %v3061 = vunpack.c.l.b16 %v2926
          %v3062 = vunpack.c.l.b16 %v2927
          %v3063 = vunpack.c.l.b16 %v2928
          %v3064 = vunpack.c.l.b16 %v2929
          %v3065 = vunpack.c.l.b16 %v2930
          %v3066 = vunpack.c.l.b16 %v2931
          %v3067 = vunpack.c.l.b16 %v2932
          %v3068 = vunpack.c.l.b16 %v2933
          %v3069 = vunpack.c.l.b16 %v2934
          %v3070 = vunpack.c.l.b16 %v2935
          %v3071 = vunpack.c.l.b16 %v2936
          %v3072 = vunpack.c.l.b16 %v2937
          %v3073 = vunpack.c.l.b16 %v2938
          %v3074 = vunpack.c.l.b16 %v2939
          %v3075 = vunpack.c.l.b16 %v2940
          %v3076 = vunpack.c.l.b16 %v2941
          %v3077 = vunpack.c.l.b16 %v2942
          %v3078 = vunpack.c.l.b16 %v2943
          %v3079 = vunpack.c.l.b16 %v2944
          %v3080 = vunpack.c.l.b16 %v2945
          %v3081 = vunpack.c.l.b16 %v2946
          %v3082 = vunpack.c.l.b16 %v2947
          %v3083 = vunpack.c.l.b16 %v2948
          %v3084 = vunpack.c.l.b16 %v2949
          %v3085 = vunpack.c.l.b16 %v2950
          %v3086 = vunpack.c.l.b16 %v2951
          %v3087 = vunpack.c.l.b16 %v2952
          %v3088 = vunpack.c.l.b16 %v2953
          %v3089 = vunpack.c.l.b16 %v2954
          %v3090 = vunpack.c.l.b16 %v2955
          %v3091 = vunpack.c.l.b16 %v2956
          %v3092 = vunpack.c.l.b16 %v2957
          %v3093 = vunpack.c.l.b16 %v2958
          %v3094 = vunpack.c.l.b16 %v2959
          %v3095 = vunpack.c.l.b16 %v2960
          %v3096 = vunpack.c.l.b16 %v2961
          %v3097 = vunpack.c.l.b16 %v2962
          %v3098 = vunpack.c.l.b16 %v2963
          %v3099 = vunpack.c.l.b16 %v2964
          %v3100 = vunpack.c.l.b16 %v2965
          %v3101 = vpack.c.b16 %v3038, %v3037
          %v3102 = vpack.c.b16 %v3040, %v3039
          %v3103 = vpack.c.b16 %v3042, %v3041
          %v3104 = vpack.c.b16 %v3044, %v3043
          %v3105 = vpack.c.b16 %v3046, %v3045
          %v3106 = vpack.c.b16 %v3048, %v3047
          %v3107 = vpack.c.b16 %v3050, %v3049
          %v3108 = vpack.c.b16 %v3052, %v3051
          %v3109 = vpack.c.b16 %v3054, %v3053
          %v3110 = vpack.c.b16 %v3056, %v3055
          %v3111 = vpack.c.b16 %v3058, %v3057
          %v3112 = vpack.c.b16 %v3060, %v3059
          %v3113 = vpack.c.b16 %v3062, %v3061
          %v3114 = vpack.c.b16 %v3064, %v3063
          %v3115 = vpack.c.b16 %v3066, %v3065
          %v3116 = vpack.c.b16 %v3068, %v3067
          %v3117 = vpack.c.b16 %v3070, %v3069
          %v3118 = vpack.c.b16 %v3072, %v3071
          %v3119 = vpack.c.b16 %v3074, %v3073
          %v3120 = vpack.c.b16 %v3076, %v3075
          %v3121 = vpack.c.b16 %v3078, %v3077
          %v3122 = vpack.c.b16 %v3080, %v3079
          %v3123 = vpack.c.b16 %v3082, %v3081
          %v3124 = vpack.c.b16 %v3084, %v3083
          %v3125 = vpack.c.b16 %v3086, %v3085
          %v3126 = vpack.c.b16 %v3088, %v3087
          %v3127 = vpack.c.b16 %v3090, %v3089
          %v3128 = vpack.c.b16 %v3092, %v3091
          %v3129 = vpack.c.b16 %v3094, %v3093
          %v3130 = vpack.c.b16 %v3096, %v3095
          %v3131 = vpack.c.b16 %v3098, %v3097
          %v3132 = vpack.c.b16 %v3100, %v3099
          %3165 = vmatprep.subr.bf16.mxu0 0
          %3166 = vmatpush1.bf16.msra.mxu0 %v3101
          %3167 = vmatprep.subr.bf16.mxu0 0
          %3168 = vmatpush1.bf16.msra.mxu0 %v3102
          %3169 = vmatprep.subr.bf16.mxu0 0
          %3170 = vmatpush1.bf16.msra.mxu0 %v3103
          %3171 = vmatprep.subr.bf16.mxu0 0
          %3172 = vmatpush1.bf16.msra.mxu0 %v3104
          %3173 = vmatprep.subr.bf16.mxu0 0
          %3174 = vmatpush1.bf16.msra.mxu0 %v3105
          %3175 = vmatprep.subr.bf16.mxu0 0
          %3176 = vmatpush1.bf16.msra.mxu0 %v3106
          %3177 = vmatprep.subr.bf16.mxu0 0
          %3178 = vmatpush1.bf16.msra.mxu0 %v3107
          %3179 = vmatprep.subr.bf16.mxu0 0
          %3180 = vmatpush1.bf16.msra.mxu0 %v3108
          %3181 = vmatprep.subr.bf16.mxu0 0
          %3182 = vmatpush1.bf16.msra.mxu0 %v3109
          %3183 = vmatprep.subr.bf16.mxu0 0
          %3184 = vmatpush1.bf16.msra.mxu0 %v3110
          %3185 = vmatprep.subr.bf16.mxu0 0
          %3186 = vmatpush1.bf16.msra.mxu0 %v3111
          %3187 = vmatprep.subr.bf16.mxu0 0
          %3188 = vmatpush1.bf16.msra.mxu0 %v3112
          %3189 = vmatprep.subr.bf16.mxu0 0
          %3190 = vmatpush1.bf16.msra.mxu0 %v3113
          %3191 = vmatprep.subr.bf16.mxu0 0
          %3192 = vmatpush1.bf16.msra.mxu0 %v3114
          %3193 = vmatprep.subr.bf16.mxu0 0
          %3194 = vmatpush1.bf16.msra.mxu0 %v3115
          %3195 = vmatprep.subr.bf16.mxu0 0
          %3196 = vmatpush1.bf16.msra.mxu0 %v3116
          %3197 = vmatprep.mubr.bf16.mxu0 %v2895
          %3198 = vmatmul.mubr.bf16.gmra.mrb[0].mxu0 %v2894
          %v3199 = vpop.f32.mrb[0].mxu0
          %v3200 = vadd.f32 %v2971, %v3199
          %v3201 = vpop.f32.mrb[0].mxu0
          %v3202 = vpop.f32.mrb[0].mxu0
          %v3203 = vadd.f32 %v2971, %v3202
          %v3204 = vpop.f32.mrb[0].mxu0
          %3205 = vmatprep.mubr.bf16.mxu0 %v2899
          %3206 = vmatmul.mubr.bf16.gmra.mrb[0].mxu0 %v2898
          %v3207 = vpop.f32.mrb[0].mxu0
          %v3208 = vadd.f32 %v2971, %v3207
          %v3209 = vpop.f32.mrb[0].mxu0
          %v3210 = vpop.f32.mrb[0].mxu0
          %v3211 = vadd.f32 %v2971, %v3210
          %v3212 = vpop.f32.mrb[0].mxu0
          %3213 = vdwg.mxu0
          %3214 = vmatprep.subr.bf16.mxu0 0
          %3215 = vmatpush1.bf16.msra.mxu0 %v3117
          %3216 = vmatprep.subr.bf16.mxu0 0
          %3217 = vmatpush1.bf16.msra.mxu0 %v3118
          %3218 = vmatprep.subr.bf16.mxu0 0
          %3219 = vmatpush1.bf16.msra.mxu0 %v3119
          %3220 = vmatprep.subr.bf16.mxu0 0
          %3221 = vmatpush1.bf16.msra.mxu0 %v3120
          %3222 = vmatprep.subr.bf16.mxu0 0
          %3223 = vmatpush1.bf16.msra.mxu0 %v3121
          %3224 = vmatprep.subr.bf16.mxu0 0
          %3225 = vmatpush1.bf16.msra.mxu0 %v3122
          %3226 = vmatprep.subr.bf16.mxu0 0
          %3227 = vmatpush1.bf16.msra.mxu0 %v3123
          %3228 = vmatprep.subr.bf16.mxu0 0
          %3229 = vmatpush1.bf16.msra.mxu0 %v3124
          %3230 = vmatprep.subr.bf16.mxu0 0
          %3231 = vmatpush1.bf16.msra.mxu0 %v3125
          %3232 = vmatprep.subr.bf16.mxu0 0
          %3233 = vmatpush1.bf16.msra.mxu0 %v3126
          %3234 = vmatprep.subr.bf16.mxu0 0
          %3235 = vmatpush1.bf16.msra.mxu0 %v3127
          %3236 = vmatprep.subr.bf16.mxu0 0
          %3237 = vmatpush1.bf16.msra.mxu0 %v3128
          %3238 = vmatprep.subr.bf16.mxu0 0
          %3239 = vmatpush1.bf16.msra.mxu0 %v3129
          %3240 = vmatprep.subr.bf16.mxu0 0
          %3241 = vmatpush1.bf16.msra.mxu0 %v3130
          %3242 = vmatprep.subr.bf16.mxu0 0
          %3243 = vmatpush1.bf16.msra.mxu0 %v3131
          %3244 = vmatprep.subr.bf16.mxu0 0
          %3245 = vmatpush1.bf16.msra.mxu0 %v3132
          %3246 = vmatprep.mubr.bf16.mxu0 %v2897
          %3247 = vmatmul.mubr.bf16.gmra.mrb[0].mxu0 %v2896
          %v3248 = vpop.f32.mrb[0].mxu0
          %v3249 = vadd.f32 %v3200, %v3248
          %v3250 = vpop.f32.mrb[0].mxu0
          %v3251 = vpop.f32.mrb[0].mxu0
          %v3252 = vadd.f32 %v3203, %v3251
          %v3253 = vpop.f32.mrb[0].mxu0
          %3254 = vmatprep.mubr.bf16.mxu0 %v2901
          %3255 = vmatmul.mubr.bf16.gmra.mrb[0].mxu0 %v2900
          %v3256 = vpop.f32.mrb[0].mxu0
          %v3257 = vadd.f32 %v3208, %v3256
          %v3258 = vpop.f32.mrb[0].mxu0
          %v3259 = vpop.f32.mrb[0].mxu0
          %v3260 = vadd.f32 %v3211, %v3259
          %v3261 = vpop.f32.mrb[0].mxu0
          %3262 = vdwg.mxu0
          %v3263 = vadd.f32 %v2358, %v3249
          %v3264 = vadd.f32 %v2359, %v3252
          %v3265 = vadd.f32 %v2360, %v3257
          %v3266 = vadd.f32 %v2361, %v3260
          %s3267 = scalar_lea.vmem %s616, %s2222 [#allocation25]
          %3268 = vst [vmem:[%s3267] sm:$0xff] %v3263
          %3269 = vst [vmem:[%s3267 + $0x8] sm:$0xff] %v3264
          %3270 = vst [vmem:[%s3267 + $0x10] sm:$0xff] %v3265
          %3271 = vst [vmem:[%s3267 + $0x18] sm:$0xff] %v3266
        $region164: #{tpu_custom_call.1} parent=71 // loop_footer
          %s2221 = sadd.s32 1, %s2217
        $region165: #{tpu_custom_call.1} parent=71 // loop_footer_branch
          %2216 = sbr.rel target = $region161
        $region166: #{tpu_custom_call.1} parent=71 // loop_exit
          _
        %s3272 = sand.u32 %s322, 1
        %s3273 = scalar_lea.sflag [#allocation6], %s3272
        %s3274 = sand.u32 %s322, 1
        %s3275 = smul.addr %s3274, 64
        %s3276 = scalar_lea.vmem [#allocation25], %s3275
        // Predicated region
        $region167: #{tpu_custom_call.1} parent=71 // pred_check
          %p3277 = pneg %p332
        $region168: #{tpu_custom_call.1} parent=71 // pred_check_branch
          %3279 = sbr.rel (%p3277) target = $region170
        $region169: #{tpu_custom_call.1} parent=71 // pred_region
          %s3281 = ssub.s32 1024, 1024
          %3282 = vsyncadd %s3273, %s3281
          %s3283 = smul.addr %s36, 8
          %s3284 = smul.addr %s3283, 128
          %s3285 = scalar_lea.hbm %s13, %s3284
          %s3286 = sshll.u32 %s3276, 4
          %s3287 = int_to_ptr.vmem [resolvable:$true] %s3286
          %3292 = dma.vmem_to_hbm [thread:$0]  %s3287, 1024, %s3285, %s3273, 128, 128, 8
        $region170: #{tpu_custom_call.1} parent=71 // pred_fallthru
          _
      $region72: #{tpu_custom_call.1} parent=5 // pred_fallthru
        _
      %p3293 = scmp.le.s32.totalorder 2, %s31
      // Predicated region
      $region171: #{tpu_custom_call.1} parent=5 // pred_check
        %p3294 = pneg %p3293
      $region172: #{tpu_custom_call.1} parent=5 // pred_check_branch
        %3296 = sbr.rel (%p3294) target = $region174
      $region173: #{tpu_custom_call.1} parent=5 // pred_region
        %s3297 = ssub.s32 %s31, 2
        // Predicated region
        $region175: #{tpu_custom_call.1} parent=173 // pred_check
          %p3298 = pneg %p338
        $region176: #{tpu_custom_call.1} parent=173 // pred_check_branch
          %3300 = sbr.rel (%p3298) target = $region178
        $region177: #{tpu_custom_call.1} parent=173 // pred_region
          %s3301 = sand.u32 %s323, 1
          %s3302 = scalar_lea.sflag [#allocation6], %s3301
          %s3303 = sand.u32 %s323, 1
          %s3304 = smul.addr %s3303, 64
          %s3305 = scalar_lea.vmem [#allocation25], %s3304
          %3306 = dma.done %s3302, 1024
        $region178: #{tpu_custom_call.1} parent=173 // pred_fallthru
          _
      $region174: #{tpu_custom_call.1} parent=5 // pred_fallthru
        _
    $region6: #{tpu_custom_call.1} parent=1 // loop_footer
      %s35 = sadd.s32 1, %s31
    $region7: #{tpu_custom_call.1} parent=1 // loop_footer_branch
      %30 = sbr.rel target = $region3
    $region8: #{tpu_custom_call.1} parent=1 // loop_exit
      _
    %3307 = vsyncpa [#allocation5], 1
    %s3308 = scalar_lea.sflag [#allocation5], 1
    %3309 = vsyncpa %s3308, 1
    %3310 = vsyncpa [#allocation8], 1
    %3311 = vsyncpa [#allocation11], 1
    %3312 = vsyncpa [#allocation14], 1
    %3313 = vsyncpa [#allocation17], 1
    %3314 = vsyncpa [#allocation20], 1
    %3315 = vsyncpa [#allocation23], 1
    %3316 = vsyncpa [#allocation6], 1
    %s3317 = scalar_lea.sflag [#allocation6], 1
    %3318 = vsyncpa %s3317, 1

</llo_original>
